<compile_context>
chip_gen: v6e
topology: v6e:2x2x1
jax: 0.10.0
libtpu: 0.0.40
codegen_flags: <defaults>
</compile_context>

<pallas_src>
import jax
import jax.numpy as jnp
from jax.experimental import pallas as pl
from jax.experimental.pallas import tpu as pltpu

# ----------------------------- config (small synthetic sizes) -----------------
INPUT_NC = 4
OUTPUT_NC = 4
NGF = 8
N_BLOCKS = 2
N_DOWN = 2
BN_EPS = 1e-5
LANES = 128


def _round_up(x, m):
    return (x + m - 1) // m * m


def _tpu_vmem_bytes():
    try:
        return int(pltpu.get_tpu_info().vmem_capacity_bytes)
    except Exception:
        return 128 * 1024 * 1024      # safe default (v5e/v6e)


_VMEM_CAP = _tpu_vmem_bytes()
# v7x: 64 MiB VMEM / 2 TensorCores; v5e/v6e: 128 MiB / 1 TC.
_TM_CAP = 512 if _VMEM_CAP <= 64 * 1024 * 1024 else 1024
# Explicitly raise the scoped-VMEM limit (v5e default is only 16 MiB), with headroom.
_VMEM_LIMIT = int(min(96 * 1024 * 1024, (3 * _VMEM_CAP) // 4))


def _pick_tm(m):
    """Megacore-aware M tile: >= 2 blocks on the 'parallel' axis, capped by VMEM gen."""
    m8 = _round_up(m, 8)
    if m8 < 16:
        return m8
    return min(_TM_CAP, _round_up((m8 + 1) // 2, 8))


def _pick_np(ncols):
    """Lane padding: 128 minimum; fill both 256-wide MXU halves (v6e/v7x) when wider."""
    npad = _round_up(ncols, LANES)
    if npad > LANES:
        npad = _round_up(npad, 256)
    return npad


# ---------------- Pallas kernel 1: conv-as-matmul + fused BN statistics -------
def _conv_stats_kernel(a_ref, b_ref, y_ref, st_ref):
    # Whole K reduction in one MXU call; N is padded to a lane-dense tile.
    y = jnp.dot(a_ref[...], b_ref[...], preferred_element_type=jnp.float32)
    y_ref[...] = y.astype(y_ref.dtype)            # bf16 intermediate -> half the HBM bytes
    ssum = jnp.sum(y, axis=0, keepdims=True)      # (1, Np) per-channel sum   (f32)
    ssq = jnp.sum(y * y, axis=0, keepdims=True)   # (1, Np) per-channel sumsq (f32)
    st_ref[...] = jnp.concatenate(
        [ssum, ssq, jnp.zeros((6, y.shape[1]), jnp.float32)], axis=0)


def conv_matmul_stats(a_bf16, b_prepped, tm):
    """a: (M, K) bf16 im2col patches; b: (Kp, Np) pre-padded bf16 weight matrix.
    Returns y_pad (Mp, Np) bf16 and per-M-block stats (mb*8, Np) f32 (rows 0/1 = sum/sumsq)."""
    M, K = a_bf16.shape
    Kp, Np = b_prepped.shape
    Mp = _round_up(M, tm)
    if (Mp, Kp) != (M, K):
        a_bf16 = jnp.pad(a_bf16, ((0, Mp - M), (0, Kp - K)))
    mb = Mp // tm

    a_spec = pl.BlockSpec((tm, Kp), lambda i: (i, 0))
    if mb >= 3:
        # Deeper input pipeline to hide HBM latency on long grids (tiny compute per byte).
        a_spec = pl.BlockSpec((tm, Kp), lambda i: (i, 0), pipeline_mode=pl.Buffered(3))

    cost = pl.CostEstimate(
        flops=2 * Mp * Kp * Np,
        transcendentals=0,
        bytes_accessed=Mp * Kp * 2 + Kp * Np * 2 + Mp * Np * 2 + mb * 8 * Np * 4)
    return pl.pallas_call(
        _conv_stats_kernel,
        out_shape=(jax.ShapeDtypeStruct((Mp, Np), jnp.bfloat16),
                   jax.ShapeDtypeStruct((mb * 8, Np), jnp.float32)),
        grid_spec=pltpu.PrefetchScalarGridSpec(
            num_scalar_prefetch=0,
            grid=(mb,),
            in_specs=[a_spec,
                      pl.BlockSpec((Kp, Np), lambda i: (0, 0))],
            out_specs=(pl.BlockSpec((tm, Np), lambda i: (i, 0)),
                       pl.BlockSpec((8, Np), lambda i: (i, 0)))),
        compiler_params=pltpu.CompilerParams(
            dimension_semantics=("parallel",),
            vmem_limit_bytes=_VMEM_LIMIT),
        cost_estimate=cost,
    )(a_bf16, b_prepped)


# -------- Pallas kernel 2: fused BN-affine + activation (+ residual), lane-dense ----
def pallas_affine_act(y_pad, scale_cols, shift_cols, tm, act="none",
                      residual_pad=None, out_dtype=jnp.bfloat16):
    """out = act(y * scale + shift) [+ residual]; y/residual bf16, math in f32."""
    Mp, Np = y_pad.shape
    assert Mp % tm == 0
    mb = Mp // tm
    s2 = scale_cols.reshape(1, Np).astype(jnp.float32)
    t2 = shift_cols.reshape(1, Np).astype(jnp.float32)

    def _act(y):
        if act == "relu":
            return jnp.maximum(y, 0.0)
        if act == "tanh":
            return jnp.tanh(y)
        return y

    if residual_pad is None:
        def kernel(x_ref, s_ref, t_ref, o_ref):
            y = _act(x_ref[...].astype(jnp.float32) * s_ref[...] + t_ref[...])
            o_ref[...] = y.astype(o_ref.dtype)
        in_specs = [pl.BlockSpec((tm, Np), lambda i: (i, 0)),
                    pl.BlockSpec((1, Np), lambda i: (0, 0)),
                    pl.BlockSpec((1, Np), lambda i: (0, 0))]
        args = (y_pad, s2, t2)
    else:
        def kernel(x_ref, s_ref, t_ref, r_ref, o_ref):
            y = _act(x_ref[...].astype(jnp.float32) * s_ref[...] + t_ref[...])
            o_ref[...] = (y + r_ref[...].astype(jnp.float32)).astype(o_ref.dtype)
        in_specs = [pl.BlockSpec((tm, Np), lambda i: (i, 0)),
                    pl.BlockSpec((1, Np), lambda i: (0, 0)),
                    pl.BlockSpec((1, Np), lambda i: (0, 0)),
                    pl.BlockSpec((tm, Np), lambda i: (i, 0))]
        args = (y_pad, s2, t2, residual_pad)

    return pl.pallas_call(
        kernel,
        out_shape=jax.ShapeDtypeStruct((Mp, Np), out_dtype),
        grid_spec=pltpu.PrefetchScalarGridSpec(
            num_scalar_prefetch=0,
            grid=(mb,),
            in_specs=in_specs,
            out_specs=pl.BlockSpec((tm, Np), lambda i: (i, 0))),
        compiler_params=pltpu.CompilerParams(
            dimension_semantics=("parallel",),
            vmem_limit_bytes=_VMEM_LIMIT),
    )(*args)


# ------------------------ BN scale/shift from fused matmul stats --------------
def bn_affine_act(y_pad, st, m_real, cout, gamma, beta, act, tm,
                  residual_pad=None, phases=1):
    Np = y_pad.shape[1]
    st3 = st.reshape(-1, 8, Np)
    ssum = jnp.sum(st3[:, 0, :], axis=0)
    ssq = jnp.sum(st3[:, 1, :], axis=0)
    ssum = ssum[:phases * cout].reshape(phases, cout).sum(axis=0)
    ssq = ssq[:phases * cout].reshape(phases, cout).sum(axis=0)
    count = float(m_real * phases)
    mean = ssum / count
    # Biased variance (training-mode BN).  Clamped against E[x^2]-E[x]^2 cancellation.
    var = jnp.maximum(ssq / count - mean * mean, 0.0)
    scale = gamma / jnp.sqrt(var + BN_EPS)
    shift = beta - mean * scale
    if phases > 1:
        scale = jnp.tile(scale, phases)
        shift = jnp.tile(shift, phases)
    scale_cols = jnp.pad(scale, (0, Np - scale.shape[0]))   # padded lanes -> scale 0
    shift_cols = jnp.pad(shift, (0, Np - shift.shape[0]))   # so padded output stays 0
    return pallas_affine_act(y_pad, scale_cols, shift_cols, tm, act=act,
                             residual_pad=residual_pad)


# ------------------------------ im2col (plain JAX) -----------------------------
def _im2col(x_nhwc, kh, kw, stride, pad, pad_mode):
    # TODO(synk): fold the kh*kw taps into the matmul grid (shifted-window BlockSpecs or
    # memory_space=pl.ANY + pltpu.make_async_copy) to kill the patch-matrix HBM blowup;
    # kept in JAX for lowering robustness across the layer-shape zoo.
    if pad > 0:
        mode = "reflect" if pad_mode == "reflect" else "constant"
        x = jnp.pad(x_nhwc, ((0, 0), (pad, pad), (pad, pad), (0, 0)), mode=mode)
    else:
        x = x_nhwc
    N, H, W, Cin = x.shape
    Ho = (H - kh) // stride + 1
    Wo = (W - kw) // stride + 1
    cols = []
    for i in range(kh):
        for j in range(kw):
            cols.append(x[:, i:i + stride * Ho:stride, j:j + stride * Wo:stride, :])
    patches = jnp.stack(cols, axis=3)                       # (N, Ho, Wo, kh*kw, Cin)
    a = patches.reshape(N * Ho * Wo, kh * kw * Cin).astype(jnp.bfloat16)
    return a, (N, Ho, Wo)


# --------------------------------- layer helpers -------------------------------
def conv_bn_act(x_nhwc, w_prepped, kh, kw, stride, pad, pad_mode, cout, gamma, beta,
                act="relu", residual_pad=None):
    a, (N, Ho, Wo) = _im2col(x_nhwc, kh, kw, stride, pad, pad_mode)
    m_real = N * Ho * Wo
    tm = _pick_tm(m_real)
    y_pad, st = conv_matmul_stats(a, w_prepped, tm)
    out_pad = bn_affine_act(y_pad, st, m_real, cout, gamma, beta, act, tm, residual_pad)
    x_out = out_pad[:m_real, :cout].reshape(N, Ho, Wo, cout)
    return x_out, out_pad       # out_pad (bf16) reusable as padded residual (extra lanes are 0)


def conv_transpose_bn_act(x_nhwc, w_prepped, cout, gamma, beta):
    # Sub-pixel lowering of ConvTranspose2d(k=3, s=2, p=1, out_pad=1): output phase (r,s)
    # at (2m+r, 2n+s) uses taps (a,b) of x with kernel index (r-2a+1, s-2b+1).  The 4 phases
    # are folded into the matmul N axis, so no zero-dilated intermediate and no wasted MXU work.
    N, H, W, _ = x_nhwc.shape
    xq = jnp.pad(x_nhwc, ((0, 0), (0, 1), (0, 1), (0, 0)))   # one zero row/col for the +1 taps
    a, _ = _im2col(xq, 2, 2, 1, 0, "zero")                   # M = N*H*W, K = 4*Cin
    m_real = N * H * W
    tm = _pick_tm(m_real)
    y_pad, st = conv_matmul_stats(a, w_prepped, tm)
    out_pad = bn_affine_act(y_pad, st, m_real, cout, gamma, beta, "relu", tm, phases=4)
    y = out_pad[:m_real, :4 * cout].reshape(N, H, W, 2, 2, cout)
    y = jnp.transpose(y, (0, 1, 3, 2, 4, 5)).reshape(N, 2 * H, 2 * W, cout)
    return y


def final_conv_tanh(x_nhwc, w_prepped, bias, cout):
    a, (N, Ho, Wo) = _im2col(x_nhwc, 7, 7, 1, 3, "reflect")
    m_real = N * Ho * Wo
    tm = _pick_tm(m_real)
    y_pad, _ = conv_matmul_stats(a, w_prepped, tm)           # stats unused here
    Np = y_pad.shape[1]
    scale_cols = jnp.pad(jnp.ones((cout,), jnp.float32), (0, Np - cout))
    shift_cols = jnp.pad(bias.astype(jnp.float32), (0, Np - cout))
    out_pad = pallas_affine_act(y_pad, scale_cols, shift_cols, tm, act="tanh",
                                out_dtype=jnp.float32)
    return out_pad[:m_real, :cout].reshape(N, Ho, Wo, cout)


# --------------------------------- full generator ------------------------------
def resnet_generator(x_nchw, q):
    x = jnp.transpose(x_nchw, (0, 2, 3, 1)).astype(jnp.float32)   # NCHW -> NHWC

    # initial: ReflectionPad(3) + Conv7x7 (no bias) + BN + ReLU
    x, x_pad = conv_bn_act(x, q["c0_w"], 7, 7, 1, 3, "reflect",
                           NGF, q["bn0_g"], q["bn0_b"], act="relu")

    # downsampling
    for i in range(N_DOWN):
        cout = NGF * (2 ** (i + 1))
        x, x_pad = conv_bn_act(x, q[f"d{i}_w"], 3, 3, 2, 1, "zero",
                               cout, q[f"d{i}_g"], q[f"d{i}_b"], act="relu")

    # resnet blocks (reflect padding, no dropout, no bias)
    dim = NGF * (2 ** N_DOWN)
    for i in range(N_BLOCKS):
        res_pad = x_pad                      # padded bf16 flat form of the block input
        h, _ = conv_bn_act(x, q[f"r{i}_w1"], 3, 3, 1, 1, "reflect",
                           dim, q[f"r{i}_g1"], q[f"r{i}_b1"], act="relu")
        x, x_pad = conv_bn_act(h, q[f"r{i}_w2"], 3, 3, 1, 1, "reflect",
                               dim, q[f"r{i}_g2"], q[f"r{i}_b2"], act="none",
                               residual_pad=res_pad)

    # upsampling (sub-pixel ConvTranspose)
    for i in range(N_DOWN):
        cout = NGF * (2 ** (N_DOWN - i)) // 2
        x = conv_transpose_bn_act(x, q[f"u{i}_w"], cout, q[f"u{i}_g"], q[f"u{i}_b"])

    # final: ReflectionPad(3) + Conv7x7 (bias) + Tanh
    x = final_conv_tanh(x, q["cf_w"], q["cf_b"], OUTPUT_NC)
    return jnp.transpose(x, (0, 3, 1, 2))    # back to NCHW, f32


# --------------------------------- param init / prep ---------------------------
def init_params(key):
    """Raw parameters in PyTorch layouts (Conv: OIHW, ConvTranspose: IOHW)."""
    p = {}
    def nrm(k, shape, s=0.1):
        return s * jax.random.normal(k, shape, jnp.float32)
    keys = iter(jax.random.split(key, 64))
    p["c0_w"] = nrm(next(keys), (NGF, INPUT_NC, 7, 7))
    p["bn0_g"] = 1.0 + nrm(next(keys), (NGF,), 0.05)
    p["bn0_b"] = nrm(next(keys), (NGF,), 0.05)
    for i in range(N_DOWN):
        mult = 2 ** i
        cin, cout = NGF * mult, NGF * mult * 2
        p[f"d{i}_w"] = nrm(next(keys), (cout, cin, 3, 3))
        p[f"d{i}_g"] = 1.0 + nrm(next(keys), (cout,), 0.05)
        p[f"d{i}_b"] = nrm(next(keys), (cout,), 0.05)
    dim = NGF * (2 ** N_DOWN)
    for i in range(N_BLOCKS):
        p[f"r{i}_w1"] = nrm(next(keys), (dim, dim, 3, 3))
        p[f"r{i}_g1"] = 1.0 + nrm(next(keys), (dim,), 0.05)
        p[f"r{i}_b1"] = nrm(next(keys), (dim,), 0.05)
        p[f"r{i}_w2"] = nrm(next(keys), (dim, dim, 3, 3))
        p[f"r{i}_g2"] = 1.0 + nrm(next(keys), (dim,), 0.05)
        p[f"r{i}_b2"] = nrm(next(keys), (dim,), 0.05)
    for i in range(N_DOWN):
        mult = 2 ** (N_DOWN - i)
        cin, cout = NGF * mult, NGF * mult // 2
        p[f"u{i}_w"] = nrm(next(keys), (cin, cout, 3, 3))
        p[f"u{i}_g"] = 1.0 + nrm(next(keys), (cout,), 0.05)
        p[f"u{i}_b"] = nrm(next(keys), (cout,), 0.05)
    p["cf_w"] = nrm(next(keys), (OUTPUT_NC, NGF, 7, 7))
    p["cf_b"] = nrm(next(keys), (OUTPUT_NC,), 0.05)
    return p


def _prep_conv_weight(w_oihw):
    cout, cin, kh, kw = w_oihw.shape
    wmat = jnp.transpose(w_oihw, (2, 3, 1, 0)).reshape(kh * kw * cin, cout)
    K, Ncols = wmat.shape
    Kp, Np = _round_up(K, 128), _pick_np(Ncols)
    return jnp.pad(wmat, ((0, Kp - K), (0, Np - Ncols))).astype(jnp.bfloat16)


def _prep_convT_weight(w_iohw):
    # Sub-pixel weight matrix: K axis = (tap_a, tap_b, cin), N axis = (phase_r, phase_s, cout).
    cin, cout, kh, kw = w_iohw.shape
    wsub = jnp.zeros((2, 2, cin, 2, 2, cout), jnp.float32)
    for a in range(2):
        for b in range(2):
            for r in range(2):
                for s in range(2):
                    ki, kj = r - 2 * a + 1, s - 2 * b + 1
                    if 0 <= ki < kh and 0 <= kj < kw:
                        wsub = wsub.at[a, b, :, r, s, :].set(w_iohw[:, :, ki, kj])
    wmat = wsub.reshape(4 * cin, 4 * cout)
    K, Ncols = wmat.shape
    Kp, Np = _round_up(K, 128), _pick_np(Ncols)
    return jnp.pad(wmat, ((0, Kp - K), (0, Np - Ncols))).astype(jnp.bfloat16)


def prepare_params(p):
    """One-time weight prep (transpose + padding + bf16) hoisted out of the forward pass."""
    q = {"c0_w": _prep_conv_weight(p["c0_w"]), "bn0_g": p["bn0_g"], "bn0_b": p["bn0_b"]}
    for i in range(N_DOWN):
        q[f"d{i}_w"] = _prep_conv_weight(p[f"d{i}_w"])
        q[f"d{i}_g"], q[f"d{i}_b"] = p[f"d{i}_g"], p[f"d{i}_b"]
    for i in range(N_BLOCKS):
        q[f"r{i}_w1"] = _prep_conv_weight(p[f"r{i}_w1"])
        q[f"r{i}_w2"] = _prep_conv_weight(p[f"r{i}_w2"])
        for nm in ("g1", "b1", "g2", "b2"):
            q[f"r{i}_{nm}"] = p[f"r{i}_{nm}"]
    for i in range(N_DOWN):
        q[f"u{i}_w"] = _prep_convT_weight(p[f"u{i}_w"])
        q[f"u{i}_g"], q[f"u{i}_b"] = p[f"u{i}_g"], p[f"u{i}_b"]
    q["cf_w"] = _prep_conv_weight(p["cf_w"])
    q["cf_b"] = p["cf_b"]
    return q


if __name__ == "__main__":
    key = jax.random.PRNGKey(0)
    k_params, k_x = jax.random.split(key)
    params = prepare_params(init_params(k_params))
    x = jax.random.normal(k_x, (2, INPUT_NC, 16, 16), jnp.float32)   # NCHW like PyTorch

    fwd = jax.jit(resnet_generator)
    out = jax.block_until_ready(fwd(x, params))

    assert out.shape == (2, OUTPUT_NC, 16, 16), out.shape
    assert bool(jnp.all(jnp.isfinite(out)))
    assert bool(jnp.all(jnp.abs(out) <= 1.0 + 1e-6))   # tanh range
    print("KERNEL_OK")
</pallas_src>

<mosaic_0001>
module attributes {stable_mosaic.version = 11 : i64} {
  func.func @_conv_stats_kernel(%arg0: i32, %arg1: memref<256x256xbf16, #tpu.memory_space<vmem>>, %arg2: memref<256x128xbf16, #tpu.memory_space<vmem>>, %arg3: memref<256x128xbf16, #tpu.memory_space<vmem>>, %arg4: memref<8x128xf32, #tpu.memory_space<vmem>>) attributes {dimension_semantics = [#tpu.dimension_semantics<parallel>], iteration_bounds = array<i64: 2>, scalar_prefetch = 0 : i64, scratch_operands = 0 : i64, tpu.core_type = #tpu.core_type<tc>, window_params = [{transform_indices = @transform_0, window_bounds = array<i64: 256, 256>}, {pipeline_mode = #tpu.pipeline_mode<synchronous>, transform_indices = @transform_1, window_bounds = array<i64: 256, 128>}, {transform_indices = @transform_2, window_bounds = array<i64: 256, 128>}, {transform_indices = @transform_3, window_bounds = array<i64: 8, 128>}]} {
    %c0 = arith.constant 0 : index
    %c0_0 = arith.constant 0 : index
    %0 = vector.load %arg1[%c0, %c0_0] : memref<256x256xbf16, #tpu.memory_space<vmem>>, vector<256x256xbf16>
    %c0_1 = arith.constant 0 : index
    %c0_2 = arith.constant 0 : index
    %1 = vector.load %arg2[%c0_1, %c0_2] : memref<256x128xbf16, #tpu.memory_space<vmem>>, vector<256x128xbf16>
    %cst = arith.constant dense<0.000000e+00> : vector<256x128xf32>
    %2 = tpu.matmul %0, %1, %cst {dimension_numbers = #tpu.dot_dimension_numbers<[1], [0], [0], [1], [0, 0, 1, 1], [], []>} : vector<256x256xbf16>, vector<256x128xbf16>, vector<256x128xf32> -> vector<256x128xf32>
    %3 = arith.truncf %2 : vector<256x128xf32> to vector<256x128xbf16>
    %c0_3 = arith.constant 0 : index
    %c0_4 = arith.constant 0 : index
    %4 = vector.load %arg3[%c0_3, %c0_4] : memref<256x128xbf16, #tpu.memory_space<vmem>>, vector<256x128xbf16>
    tpu.vector_store %arg3[%c0_3, %c0_4], %3 {strides = array<i32>} : memref<256x128xbf16, #tpu.memory_space<vmem>>, vector<256x128xbf16>,
    %cst_5 = arith.constant dense<0.000000e+00> : vector<128xf32>
    %5 = vector.multi_reduction <add>, %2, %cst_5 [0] : vector<256x128xf32> to vector<128xf32>
    %6 = vector.shape_cast %5 : vector<128xf32> to vector<1x128xf32>
    %7 = arith.mulf %2, %2 : vector<256x128xf32>
    %cst_6 = arith.constant dense<0.000000e+00> : vector<128xf32>
    %8 = vector.multi_reduction <add>, %7, %cst_6 [0] : vector<256x128xf32> to vector<128xf32>
    %9 = vector.shape_cast %8 : vector<128xf32> to vector<1x128xf32>
    %cst_7 = arith.constant 0.000000e+00 : f32
    %10 = vector.broadcast %cst_7 : f32 to vector<6x128xf32>
    %11 = tpu.concatenate %6, %9, %10 in 0 : vector<1x128xf32>, vector<1x128xf32>, vector<6x128xf32> -> vector<8x128xf32>
    %c0_8 = arith.constant 0 : index
    %c0_9 = arith.constant 0 : index
    %12 = vector.load %arg4[%c0_8, %c0_9] : memref<8x128xf32, #tpu.memory_space<vmem>>, vector<8x128xf32>
    tpu.vector_store %arg4[%c0_8, %c0_9], %11 {strides = array<i32>} : memref<8x128xf32, #tpu.memory_space<vmem>>, vector<8x128xf32>,
    return
  }
  func.func @transform_0(%arg0: i32) -> (i32, i32) {
    %c0_i32 = arith.constant 0 : i32
    %c0_i32_0 = arith.constant 0 : i32
    return %arg0, %c0_i32 : i32, i32
  }
  func.func @transform_1(%arg0: i32) -> (i32, i32) {
    %c0_i32 = arith.constant 0 : i32
    %c0_i32_0 = arith.constant 0 : i32
    %c0_i32_1 = arith.constant 0 : i32
    return %c0_i32, %c0_i32_0 : i32, i32
  }
  func.func @transform_2(%arg0: i32) -> (i32, i32) {
    %c0_i32 = arith.constant 0 : i32
    %c0_i32_0 = arith.constant 0 : i32
    return %arg0, %c0_i32 : i32, i32
  }
  func.func @transform_3(%arg0: i32) -> (i32, i32) {
    %c0_i32 = arith.constant 0 : i32
    %c0_i32_0 = arith.constant 0 : i32
    return %arg0, %c0_i32 : i32, i32
  }
}

module attributes {stable_mosaic.version = 11 : i64} {
  func.func @kernel(%arg0: i32, %arg1: memref<256x128xbf16, #tpu.memory_space<vmem>>, %arg2: memref<1x128xf32, #tpu.memory_space<vmem>>, %arg3: memref<1x128xf32, #tpu.memory_space<vmem>>, %arg4: memref<256x128xbf16, #tpu.memory_space<vmem>>) attributes {dimension_semantics = [#tpu.dimension_semantics<parallel>], iteration_bounds = array<i64: 2>, scalar_prefetch = 0 : i64, scratch_operands = 0 : i64, tpu.core_type = #tpu.core_type<tc>, window_params = [{transform_indices = @transform_0, window_bounds = array<i64: 256, 128>}, {pipeline_mode = #tpu.pipeline_mode<synchronous>, transform_indices = @transform_1, window_bounds = array<i64: 1, 128>}, {pipeline_mode = #tpu.pipeline_mode<synchronous>, transform_indices = @transform_2, window_bounds = array<i64: 1, 128>}, {transform_indices = @transform_3, window_bounds = array<i64: 256, 128>}]} {
    %c0 = arith.constant 0 : index
    %c0_0 = arith.constant 0 : index
    %0 = vector.load %arg1[%c0, %c0_0] : memref<256x128xbf16, #tpu.memory_space<vmem>>, vector<256x128xbf16>
    %1 = arith.extf %0 : vector<256x128xbf16> to vector<256x128xf32>
    %c0_1 = arith.constant 0 : index
    %c0_2 = arith.constant 0 : index
    %2 = vector.load %arg2[%c0_1, %c0_2] : memref<1x128xf32, #tpu.memory_space<vmem>>, vector<1x128xf32>
    %3 = vector.broadcast %2 : vector<1x128xf32> to vector<256x128xf32>
    %4 = arith.mulf %1, %3 : vector<256x128xf32>
    %c0_3 = arith.constant 0 : index
    %c0_4 = arith.constant 0 : index
    %5 = vector.load %arg3[%c0_3, %c0_4] : memref<1x128xf32, #tpu.memory_space<vmem>>, vector<1x128xf32>
    %6 = vector.broadcast %5 : vector<1x128xf32> to vector<256x128xf32>
    %7 = arith.addf %4, %6 : vector<256x128xf32>
    %cst = arith.constant 0.000000e+00 : f32
    %8 = vector.broadcast %cst : f32 to vector<256x128xf32>
    %9 = arith.maximumf %7, %8 : vector<256x128xf32>
    %10 = arith.truncf %9 : vector<256x128xf32> to vector<256x128xbf16>
    %c0_5 = arith.constant 0 : index
    %c0_6 = arith.constant 0 : index
    %11 = vector.load %arg4[%c0_5, %c0_6] : memref<256x128xbf16, #tpu.memory_space<vmem>>, vector<256x128xbf16>
    tpu.vector_store %arg4[%c0_5, %c0_6], %10 {strides = array<i32>} : memref<256x128xbf16, #tpu.memory_space<vmem>>, vector<256x128xbf16>,
    return
  }
  func.func @transform_0(%arg0: i32) -> (i32, i32) {
    %c0_i32 = arith.constant 0 : i32
    %c0_i32_0 = arith.constant 0 : i32
    return %arg0, %c0_i32 : i32, i32
  }
  func.func @transform_1(%arg0: i32) -> (i32, i32) {
    %c0_i32 = arith.constant 0 : i32
    %c0_i32_0 = arith.constant 0 : i32
    %c0_i32_1 = arith.constant 0 : i32
    return %c0_i32, %c0_i32_0 : i32, i32
  }
  func.func @transform_2(%arg0: i32) -> (i32, i32) {
    %c0_i32 = arith.constant 0 : i32
    %c0_i32_0 = arith.constant 0 : i32
    %c0_i32_1 = arith.constant 0 : i32
    return %c0_i32, %c0_i32_0 : i32, i32
  }
  func.func @transform_3(%arg0: i32) -> (i32, i32) {
    %c0_i32 = arith.constant 0 : i32
    %c0_i32_0 = arith.constant 0 : i32
    return %arg0, %c0_i32 : i32, i32
  }
}

module attributes {stable_mosaic.version = 11 : i64} {
  func.func @_conv_stats_kernel(%arg0: i32, %arg1: memref<64x128xbf16, #tpu.memory_space<vmem>>, %arg2: memref<128x128xbf16, #tpu.memory_space<vmem>>, %arg3: memref<64x128xbf16, #tpu.memory_space<vmem>>, %arg4: memref<8x128xf32, #tpu.memory_space<vmem>>) attributes {dimension_semantics = [#tpu.dimension_semantics<parallel>], iteration_bounds = array<i64: 2>, scalar_prefetch = 0 : i64, scratch_operands = 0 : i64, tpu.core_type = #tpu.core_type<tc>, window_params = [{transform_indices = @transform_0, window_bounds = array<i64: 64, 128>}, {pipeline_mode = #tpu.pipeline_mode<synchronous>, transform_indices = @transform_1, window_bounds = array<i64: 128, 128>}, {transform_indices = @transform_2, window_bounds = array<i64: 64, 128>}, {transform_indices = @transform_3, window_bounds = array<i64: 8, 128>}]} {
    %c0 = arith.constant 0 : index
    %c0_0 = arith.constant 0 : index
    %0 = vector.load %arg1[%c0, %c0_0] : memref<64x128xbf16, #tpu.memory_space<vmem>>, vector<64x128xbf16>
    %c0_1 = arith.constant 0 : index
    %c0_2 = arith.constant 0 : index
    %1 = vector.load %arg2[%c0_1, %c0_2] : memref<128x128xbf16, #tpu.memory_space<vmem>>, vector<128x128xbf16>
    %cst = arith.constant dense<0.000000e+00> : vector<64x128xf32>
    %2 = tpu.matmul %0, %1, %cst {dimension_numbers = #tpu.dot_dimension_numbers<[1], [0], [0], [1], [0, 0, 1, 1], [], []>} : vector<64x128xbf16>, vector<128x128xbf16>, vector<64x128xf32> -> vector<64x128xf32>
    %3 = arith.truncf %2 : vector<64x128xf32> to vector<64x128xbf16>
    %c0_3 = arith.constant 0 : index
    %c0_4 = arith.constant 0 : index
    %4 = vector.load %arg3[%c0_3, %c0_4] : memref<64x128xbf16, #tpu.memory_space<vmem>>, vector<64x128xbf16>
    tpu.vector_store %arg3[%c0_3, %c0_4], %3 {strides = array<i32>} : memref<64x128xbf16, #tpu.memory_space<vmem>>, vector<64x128xbf16>,
    %cst_5 = arith.constant dense<0.000000e+00> : vector<128xf32>
    %5 = vector.multi_reduction <add>, %2, %cst_5 [0] : vector<64x128xf32> to vector<128xf32>
    %6 = vector.shape_cast %5 : vector<128xf32> to vector<1x128xf32>
    %7 = arith.mulf %2, %2 : vector<64x128xf32>
    %cst_6 = arith.constant dense<0.000000e+00> : vector<128xf32>
    %8 = vector.multi_reduction <add>, %7, %cst_6 [0] : vector<64x128xf32> to vector<128xf32>
    %9 = vector.shape_cast %8 : vector<128xf32> to vector<1x128xf32>
    %cst_7 = arith.constant 0.000000e+00 : f32
    %10 = vector.broadcast %cst_7 : f32 to vector<6x128xf32>
    %11 = tpu.concatenate %6, %9, %10 in 0 : vector<1x128xf32>, vector<1x128xf32>, vector<6x128xf32> -> vector<8x128xf32>
    %c0_8 = arith.constant 0 : index
    %c0_9 = arith.constant 0 : index
    %12 = vector.load %arg4[%c0_8, %c0_9] : memref<8x128xf32, #tpu.memory_space<vmem>>, vector<8x128xf32>
    tpu.vector_store %arg4[%c0_8, %c0_9], %11 {strides = array<i32>} : memref<8x128xf32, #tpu.memory_space<vmem>>, vector<8x128xf32>,
    return
  }
  func.func @transform_0(%arg0: i32) -> (i32, i32) {
    %c0_i32 = arith.constant 0 : i32
    %c0_i32_0 = arith.constant 0 : i32
    return %arg0, %c0_i32 : i32, i32
  }
  func.func @transform_1(%arg0: i32) -> (i32, i32) {
    %c0_i32 = arith.constant 0 : i32
    %c0_i32_0 = arith.constant 0 : i32
    %c0_i32_1 = arith.constant 0 : i32
    return %c0_i32, %c0_i32_0 : i32, i32
  }
  func.func @transform_2(%arg0: i32) -> (i32, i32) {
    %c0_i32 = arith.constant 0 : i32
    %c0_i32_0 = arith.constant 0 : i32
    return %arg0, %c0_i32 : i32, i32
  }
  func.func @transform_3(%arg0: i32) -> (i32, i32) {
    %c0_i32 = arith.constant 0 : i32
    %c0_i32_0 = arith.constant 0 : i32
    return %arg0, %c0_i32 : i32, i32
  }
}

module attributes {stable_mosaic.version = 11 : i64} {
  func.func @kernel(%arg0: i32, %arg1: memref<64x128xbf16, #tpu.memory_space<vmem>>, %arg2: memref<1x128xf32, #tpu.memory_space<vmem>>, %arg3: memref<1x128xf32, #tpu.memory_space<vmem>>, %arg4: memref<64x128xbf16, #tpu.memory_space<vmem>>) attributes {dimension_semantics = [#tpu.dimension_semantics<parallel>], iteration_bounds = array<i64: 2>, scalar_prefetch = 0 : i64, scratch_operands = 0 : i64, tpu.core_type = #tpu.core_type<tc>, window_params = [{transform_indices = @transform_0, window_bounds = array<i64: 64, 128>}, {pipeline_mode = #tpu.pipeline_mode<synchronous>, transform_indices = @transform_1, window_bounds = array<i64: 1, 128>}, {pipeline_mode = #tpu.pipeline_mode<synchronous>, transform_indices = @transform_2, window_bounds = array<i64: 1, 128>}, {transform_indices = @transform_3, window_bounds = array<i64: 64, 128>}]} {
    %c0 = arith.constant 0 : index
    %c0_0 = arith.constant 0 : index
    %0 = vector.load %arg1[%c0, %c0_0] : memref<64x128xbf16, #tpu.memory_space<vmem>>, vector<64x128xbf16>
    %1 = arith.extf %0 : vector<64x128xbf16> to vector<64x128xf32>
    %c0_1 = arith.constant 0 : index
    %c0_2 = arith.constant 0 : index
    %2 = vector.load %arg2[%c0_1, %c0_2] : memref<1x128xf32, #tpu.memory_space<vmem>>, vector<1x128xf32>
    %3 = vector.broadcast %2 : vector<1x128xf32> to vector<64x128xf32>
    %4 = arith.mulf %1, %3 : vector<64x128xf32>
    %c0_3 = arith.constant 0 : index
    %c0_4 = arith.constant 0 : index
    %5 = vector.load %arg3[%c0_3, %c0_4] : memref<1x128xf32, #tpu.memory_space<vmem>>, vector<1x128xf32>
    %6 = vector.broadcast %5 : vector<1x128xf32> to vector<64x128xf32>
    %7 = arith.addf %4, %6 : vector<64x128xf32>
    %cst = arith.constant 0.000000e+00 : f32
    %8 = vector.broadcast %cst : f32 to vector<64x128xf32>
    %9 = arith.maximumf %7, %8 : vector<64x128xf32>
    %10 = arith.truncf %9 : vector<64x128xf32> to vector<64x128xbf16>
    %c0_5 = arith.constant 0 : index
    %c0_6 = arith.constant 0 : index
    %11 = vector.load %arg4[%c0_5, %c0_6] : memref<64x128xbf16, #tpu.memory_space<vmem>>, vector<64x128xbf16>
    tpu.vector_store %arg4[%c0_5, %c0_6], %10 {strides = array<i32>} : memref<64x128xbf16, #tpu.memory_space<vmem>>, vector<64x128xbf16>,
    return
  }
  func.func @transform_0(%arg0: i32) -> (i32, i32) {
    %c0_i32 = arith.constant 0 : i32
    %c0_i32_0 = arith.constant 0 : i32
    return %arg0, %c0_i32 : i32, i32
  }
  func.func @transform_1(%arg0: i32) -> (i32, i32) {
    %c0_i32 = arith.constant 0 : i32
    %c0_i32_0 = arith.constant 0 : i32
    %c0_i32_1 = arith.constant 0 : i32
    return %c0_i32, %c0_i32_0 : i32, i32
  }
  func.func @transform_2(%arg0: i32) -> (i32, i32) {
    %c0_i32 = arith.constant 0 : i32
    %c0_i32_0 = arith.constant 0 : i32
    %c0_i32_1 = arith.constant 0 : i32
    return %c0_i32, %c0_i32_0 : i32, i32
  }
  func.func @transform_3(%arg0: i32) -> (i32, i32) {
    %c0_i32 = arith.constant 0 : i32
    %c0_i32_0 = arith.constant 0 : i32
    return %arg0, %c0_i32 : i32, i32
  }
}

module attributes {stable_mosaic.version = 11 : i64} {
  func.func @kernel(%arg0: i32, %arg1: memref<16x128xbf16, #tpu.memory_space<vmem>>, %arg2: memref<1x128xf32, #tpu.memory_space<vmem>>, %arg3: memref<1x128xf32, #tpu.memory_space<vmem>>, %arg4: memref<16x128xbf16, #tpu.memory_space<vmem>>) attributes {dimension_semantics = [#tpu.dimension_semantics<parallel>], iteration_bounds = array<i64: 2>, scalar_prefetch = 0 : i64, scratch_operands = 0 : i64, tpu.core_type = #tpu.core_type<tc>, window_params = [{transform_indices = @transform_0, window_bounds = array<i64: 16, 128>}, {pipeline_mode = #tpu.pipeline_mode<synchronous>, transform_indices = @transform_1, window_bounds = array<i64: 1, 128>}, {pipeline_mode = #tpu.pipeline_mode<synchronous>, transform_indices = @transform_2, window_bounds = array<i64: 1, 128>}, {transform_indices = @transform_3, window_bounds = array<i64: 16, 128>}]} {
    %c0 = arith.constant 0 : index
    %c0_0 = arith.constant 0 : index
    %0 = vector.load %arg1[%c0, %c0_0] : memref<16x128xbf16, #tpu.memory_space<vmem>>, vector<16x128xbf16>
    %1 = arith.extf %0 : vector<16x128xbf16> to vector<16x128xf32>
    %c0_1 = arith.constant 0 : index
    %c0_2 = arith.constant 0 : index
    %2 = vector.load %arg2[%c0_1, %c0_2] : memref<1x128xf32, #tpu.memory_space<vmem>>, vector<1x128xf32>
    %3 = vector.broadcast %2 : vector<1x128xf32> to vector<16x128xf32>
    %4 = arith.mulf %1, %3 : vector<16x128xf32>
    %c0_3 = arith.constant 0 : index
    %c0_4 = arith.constant 0 : index
    %5 = vector.load %arg3[%c0_3, %c0_4] : memref<1x128xf32, #tpu.memory_space<vmem>>, vector<1x128xf32>
    %6 = vector.broadcast %5 : vector<1x128xf32> to vector<16x128xf32>
    %7 = arith.addf %4, %6 : vector<16x128xf32>
    %cst = arith.constant 0.000000e+00 : f32
    %8 = vector.broadcast %cst : f32 to vector<16x128xf32>
    %9 = arith.maximumf %7, %8 : vector<16x128xf32>
    %10 = arith.truncf %9 : vector<16x128xf32> to vector<16x128xbf16>
    %c0_5 = arith.constant 0 : index
    %c0_6 = arith.constant 0 : index
    %11 = vector.load %arg4[%c0_5, %c0_6] : memref<16x128xbf16, #tpu.memory_space<vmem>>, vector<16x128xbf16>
    tpu.vector_store %arg4[%c0_5, %c0_6], %10 {strides = array<i32>} : memref<16x128xbf16, #tpu.memory_space<vmem>>, vector<16x128xbf16>,
    return
  }
  func.func @transform_0(%arg0: i32) -> (i32, i32) {
    %c0_i32 = arith.constant 0 : i32
    %c0_i32_0 = arith.constant 0 : i32
    return %arg0, %c0_i32 : i32, i32
  }
  func.func @transform_1(%arg0: i32) -> (i32, i32) {
    %c0_i32 = arith.constant 0 : i32
    %c0_i32_0 = arith.constant 0 : i32
    %c0_i32_1 = arith.constant 0 : i32
    return %c0_i32, %c0_i32_0 : i32, i32
  }
  func.func @transform_2(%arg0: i32) -> (i32, i32) {
    %c0_i32 = arith.constant 0 : i32
    %c0_i32_0 = arith.constant 0 : i32
    %c0_i32_1 = arith.constant 0 : i32
    return %c0_i32, %c0_i32_0 : i32, i32
  }
  func.func @transform_3(%arg0: i32) -> (i32, i32) {
    %c0_i32 = arith.constant 0 : i32
    %c0_i32_0 = arith.constant 0 : i32
    return %arg0, %c0_i32 : i32, i32
  }
}

module attributes {stable_mosaic.version = 11 : i64} {
  func.func @_conv_stats_kernel(%arg0: i32, %arg1: memref<16x256xbf16, #tpu.memory_space<vmem>>, %arg2: memref<256x128xbf16, #tpu.memory_space<vmem>>, %arg3: memref<16x128xbf16, #tpu.memory_space<vmem>>, %arg4: memref<8x128xf32, #tpu.memory_space<vmem>>) attributes {dimension_semantics = [#tpu.dimension_semantics<parallel>], iteration_bounds = array<i64: 2>, scalar_prefetch = 0 : i64, scratch_operands = 0 : i64, tpu.core_type = #tpu.core_type<tc>, window_params = [{transform_indices = @transform_0, window_bounds = array<i64: 16, 256>}, {pipeline_mode = #tpu.pipeline_mode<synchronous>, transform_indices = @transform_1, window_bounds = array<i64: 256, 128>}, {transform_indices = @transform_2, window_bounds = array<i64: 16, 128>}, {transform_indices = @transform_3, window_bounds = array<i64: 8, 128>}]} {
    %c0 = arith.constant 0 : index
    %c0_0 = arith.constant 0 : index
    %0 = vector.load %arg1[%c0, %c0_0] : memref<16x256xbf16, #tpu.memory_space<vmem>>, vector<16x256xbf16>
    %c0_1 = arith.constant 0 : index
    %c0_2 = arith.constant 0 : index
    %1 = vector.load %arg2[%c0_1, %c0_2] : memref<256x128xbf16, #tpu.memory_space<vmem>>, vector<256x128xbf16>
    %cst = arith.constant dense<0.000000e+00> : vector<16x128xf32>
    %2 = tpu.matmul %0, %1, %cst {dimension_numbers = #tpu.dot_dimension_numbers<[1], [0], [0], [1], [0, 0, 1, 1], [], []>} : vector<16x256xbf16>, vector<256x128xbf16>, vector<16x128xf32> -> vector<16x128xf32>
    %3 = arith.truncf %2 : vector<16x128xf32> to vector<16x128xbf16>
    %c0_3 = arith.constant 0 : index
    %c0_4 = arith.constant 0 : index
    %4 = vector.load %arg3[%c0_3, %c0_4] : memref<16x128xbf16, #tpu.memory_space<vmem>>, vector<16x128xbf16>
    tpu.vector_store %arg3[%c0_3, %c0_4], %3 {strides = array<i32>} : memref<16x128xbf16, #tpu.memory_space<vmem>>, vector<16x128xbf16>,
    %cst_5 = arith.constant dense<0.000000e+00> : vector<128xf32>
    %5 = vector.multi_reduction <add>, %2, %cst_5 [0] : vector<16x128xf32> to vector<128xf32>
    %6 = vector.shape_cast %5 : vector<128xf32> to vector<1x128xf32>
    %7 = arith.mulf %2, %2 : vector<16x128xf32>
    %cst_6 = arith.constant dense<0.000000e+00> : vector<128xf32>
    %8 = vector.multi_reduction <add>, %7, %cst_6 [0] : vector<16x128xf32> to vector<128xf32>
    %9 = vector.shape_cast %8 : vector<128xf32> to vector<1x128xf32>
    %cst_7 = arith.constant 0.000000e+00 : f32
    %10 = vector.broadcast %cst_7 : f32 to vector<6x128xf32>
    %11 = tpu.concatenate %6, %9, %10 in 0 : vector<1x128xf32>, vector<1x128xf32>, vector<6x128xf32> -> vector<8x128xf32>
    %c0_8 = arith.constant 0 : index
    %c0_9 = arith.constant 0 : index
    %12 = vector.load %arg4[%c0_8, %c0_9] : memref<8x128xf32, #tpu.memory_space<vmem>>, vector<8x128xf32>
    tpu.vector_store %arg4[%c0_8, %c0_9], %11 {strides = array<i32>} : memref<8x128xf32, #tpu.memory_space<vmem>>, vector<8x128xf32>,
    return
  }
  func.func @transform_0(%arg0: i32) -> (i32, i32) {
    %c0_i32 = arith.constant 0 : i32
    %c0_i32_0 = arith.constant 0 : i32
    return %arg0, %c0_i32 : i32, i32
  }
  func.func @transform_1(%arg0: i32) -> (i32, i32) {
    %c0_i32 = arith.constant 0 : i32
    %c0_i32_0 = arith.constant 0 : i32
    %c0_i32_1 = arith.constant 0 : i32
    return %c0_i32, %c0_i32_0 : i32, i32
  }
  func.func @transform_2(%arg0: i32) -> (i32, i32) {
    %c0_i32 = arith.constant 0 : i32
    %c0_i32_0 = arith.constant 0 : i32
    return %arg0, %c0_i32 : i32, i32
  }
  func.func @transform_3(%arg0: i32) -> (i32, i32) {
    %c0_i32 = arith.constant 0 : i32
    %c0_i32_0 = arith.constant 0 : i32
    return %arg0, %c0_i32 : i32, i32
  }
}

module attributes {stable_mosaic.version = 11 : i64} {
  func.func @_conv_stats_kernel(%arg0: i32, %arg1: memref<16x384xbf16, #tpu.memory_space<vmem>>, %arg2: memref<384x128xbf16, #tpu.memory_space<vmem>>, %arg3: memref<16x128xbf16, #tpu.memory_space<vmem>>, %arg4: memref<8x128xf32, #tpu.memory_space<vmem>>) attributes {dimension_semantics = [#tpu.dimension_semantics<parallel>], iteration_bounds = array<i64: 2>, scalar_prefetch = 0 : i64, scratch_operands = 0 : i64, tpu.core_type = #tpu.core_type<tc>, window_params = [{transform_indices = @transform_0, window_bounds = array<i64: 16, 384>}, {pipeline_mode = #tpu.pipeline_mode<synchronous>, transform_indices = @transform_1, window_bounds = array<i64: 384, 128>}, {transform_indices = @transform_2, window_bounds = array<i64: 16, 128>}, {transform_indices = @transform_3, window_bounds = array<i64: 8, 128>}]} {
    %c0 = arith.constant 0 : index
    %c0_0 = arith.constant 0 : index
    %0 = vector.load %arg1[%c0, %c0_0] : memref<16x384xbf16, #tpu.memory_space<vmem>>, vector<16x384xbf16>
    %c0_1 = arith.constant 0 : index
    %c0_2 = arith.constant 0 : index
    %1 = vector.load %arg2[%c0_1, %c0_2] : memref<384x128xbf16, #tpu.memory_space<vmem>>, vector<384x128xbf16>
    %cst = arith.constant dense<0.000000e+00> : vector<16x128xf32>
    %2 = tpu.matmul %0, %1, %cst {dimension_numbers = #tpu.dot_dimension_numbers<[1], [0], [0], [1], [0, 0, 1, 1], [], []>} : vector<16x384xbf16>, vector<384x128xbf16>, vector<16x128xf32> -> vector<16x128xf32>
    %3 = arith.truncf %2 : vector<16x128xf32> to vector<16x128xbf16>
    %c0_3 = arith.constant 0 : index
    %c0_4 = arith.constant 0 : index
    %4 = vector.load %arg3[%c0_3, %c0_4] : memref<16x128xbf16, #tpu.memory_space<vmem>>, vector<16x128xbf16>
    tpu.vector_store %arg3[%c0_3, %c0_4], %3 {strides = array<i32>} : memref<16x128xbf16, #tpu.memory_space<vmem>>, vector<16x128xbf16>,
    %cst_5 = arith.constant dense<0.000000e+00> : vector<128xf32>
    %5 = vector.multi_reduction <add>, %2, %cst_5 [0] : vector<16x128xf32> to vector<128xf32>
    %6 = vector.shape_cast %5 : vector<128xf32> to vector<1x128xf32>
    %7 = arith.mulf %2, %2 : vector<16x128xf32>
    %cst_6 = arith.constant dense<0.000000e+00> : vector<128xf32>
    %8 = vector.multi_reduction <add>, %7, %cst_6 [0] : vector<16x128xf32> to vector<128xf32>
    %9 = vector.shape_cast %8 : vector<128xf32> to vector<1x128xf32>
    %cst_7 = arith.constant 0.000000e+00 : f32
    %10 = vector.broadcast %cst_7 : f32 to vector<6x128xf32>
    %11 = tpu.concatenate %6, %9, %10 in 0 : vector<1x128xf32>, vector<1x128xf32>, vector<6x128xf32> -> vector<8x128xf32>
    %c0_8 = arith.constant 0 : index
    %c0_9 = arith.constant 0 : index
    %12 = vector.load %arg4[%c0_8, %c0_9] : memref<8x128xf32, #tpu.memory_space<vmem>>, vector<8x128xf32>
    tpu.vector_store %arg4[%c0_8, %c0_9], %11 {strides = array<i32>} : memref<8x128xf32, #tpu.memory_space<vmem>>, vector<8x128xf32>,
    return
  }
  func.func @transform_0(%arg0: i32) -> (i32, i32) {
    %c0_i32 = arith.constant 0 : i32
    %c0_i32_0 = arith.constant 0 : i32
    return %arg0, %c0_i32 : i32, i32
  }
  func.func @transform_1(%arg0: i32) -> (i32, i32) {
    %c0_i32 = arith.constant 0 : i32
    %c0_i32_0 = arith.constant 0 : i32
    %c0_i32_1 = arith.constant 0 : i32
    return %c0_i32, %c0_i32_0 : i32, i32
  }
  func.func @transform_2(%arg0: i32) -> (i32, i32) {
    %c0_i32 = arith.constant 0 : i32
    %c0_i32_0 = arith.constant 0 : i32
    return %arg0, %c0_i32 : i32, i32
  }
  func.func @transform_3(%arg0: i32) -> (i32, i32) {
    %c0_i32 = arith.constant 0 : i32
    %c0_i32_0 = arith.constant 0 : i32
    return %arg0, %c0_i32 : i32, i32
  }
}

module attributes {stable_mosaic.version = 11 : i64} {
  func.func @kernel(%arg0: i32, %arg1: memref<16x128xbf16, #tpu.memory_space<vmem>>, %arg2: memref<1x128xf32, #tpu.memory_space<vmem>>, %arg3: memref<1x128xf32, #tpu.memory_space<vmem>>, %arg4: memref<16x128xbf16, #tpu.memory_space<vmem>>, %arg5: memref<16x128xbf16, #tpu.memory_space<vmem>>) attributes {dimension_semantics = [#tpu.dimension_semantics<parallel>], iteration_bounds = array<i64: 2>, scalar_prefetch = 0 : i64, scratch_operands = 0 : i64, tpu.core_type = #tpu.core_type<tc>, window_params = [{transform_indices = @transform_0, window_bounds = array<i64: 16, 128>}, {pipeline_mode = #tpu.pipeline_mode<synchronous>, transform_indices = @transform_1, window_bounds = array<i64: 1, 128>}, {pipeline_mode = #tpu.pipeline_mode<synchronous>, transform_indices = @transform_2, window_bounds = array<i64: 1, 128>}, {transform_indices = @transform_3, window_bounds = array<i64: 16, 128>}, {transform_indices = @transform_4, window_bounds = array<i64: 16, 128>}]} {
    %c0 = arith.constant 0 : index
    %c0_0 = arith.constant 0 : index
    %0 = vector.load %arg1[%c0, %c0_0] : memref<16x128xbf16, #tpu.memory_space<vmem>>, vector<16x128xbf16>
    %1 = arith.extf %0 : vector<16x128xbf16> to vector<16x128xf32>
    %c0_1 = arith.constant 0 : index
    %c0_2 = arith.constant 0 : index
    %2 = vector.load %arg2[%c0_1, %c0_2] : memref<1x128xf32, #tpu.memory_space<vmem>>, vector<1x128xf32>
    %3 = vector.broadcast %2 : vector<1x128xf32> to vector<16x128xf32>
    %4 = arith.mulf %1, %3 : vector<16x128xf32>
    %c0_3 = arith.constant 0 : index
    %c0_4 = arith.constant 0 : index
    %5 = vector.load %arg3[%c0_3, %c0_4] : memref<1x128xf32, #tpu.memory_space<vmem>>, vector<1x128xf32>
    %6 = vector.broadcast %5 : vector<1x128xf32> to vector<16x128xf32>
    %7 = arith.addf %4, %6 : vector<16x128xf32>
    %c0_5 = arith.constant 0 : index
    %c0_6 = arith.constant 0 : index
    %8 = vector.load %arg4[%c0_5, %c0_6] : memref<16x128xbf16, #tpu.memory_space<vmem>>, vector<16x128xbf16>
    %9 = arith.extf %8 : vector<16x128xbf16> to vector<16x128xf32>
    %10 = arith.addf %7, %9 : vector<16x128xf32>
    %11 = arith.truncf %10 : vector<16x128xf32> to vector<16x128xbf16>
    %c0_7 = arith.constant 0 : index
    %c0_8 = arith.constant 0 : index
    %12 = vector.load %arg5[%c0_7, %c0_8] : memref<16x128xbf16, #tpu.memory_space<vmem>>, vector<16x128xbf16>
    tpu.vector_store %arg5[%c0_7, %c0_8], %11 {strides = array<i32>} : memref<16x128xbf16, #tpu.memory_space<vmem>>, vector<16x128xbf16>,
    return
  }
  func.func @transform_0(%arg0: i32) -> (i32, i32) {
    %c0_i32 = arith.constant 0 : i32
    %c0_i32_0 = arith.constant 0 : i32
    return %arg0, %c0_i32 : i32, i32
  }
  func.func @transform_1(%arg0: i32) -> (i32, i32) {
    %c0_i32 = arith.constant 0 : i32
    %c0_i32_0 = arith.constant 0 : i32
    %c0_i32_1 = arith.constant 0 : i32
    return %c0_i32, %c0_i32_0 : i32, i32
  }
  func.func @transform_2(%arg0: i32) -> (i32, i32) {
    %c0_i32 = arith.constant 0 : i32
    %c0_i32_0 = arith.constant 0 : i32
    %c0_i32_1 = arith.constant 0 : i32
    return %c0_i32, %c0_i32_0 : i32, i32
  }
  func.func @transform_3(%arg0: i32) -> (i32, i32) {
    %c0_i32 = arith.constant 0 : i32
    %c0_i32_0 = arith.constant 0 : i32
    return %arg0, %c0_i32 : i32, i32
  }
  func.func @transform_4(%arg0: i32) -> (i32, i32) {
    %c0_i32 = arith.constant 0 : i32
    %c0_i32_0 = arith.constant 0 : i32
    return %arg0, %c0_i32 : i32, i32
  }
}

module attributes {stable_mosaic.version = 11 : i64} {
  func.func @_conv_stats_kernel(%arg0: i32, %arg1: memref<16x128xbf16, #tpu.memory_space<vmem>>, %arg2: memref<128x128xbf16, #tpu.memory_space<vmem>>, %arg3: memref<16x128xbf16, #tpu.memory_space<vmem>>, %arg4: memref<8x128xf32, #tpu.memory_space<vmem>>) attributes {dimension_semantics = [#tpu.dimension_semantics<parallel>], iteration_bounds = array<i64: 2>, scalar_prefetch = 0 : i64, scratch_operands = 0 : i64, tpu.core_type = #tpu.core_type<tc>, window_params = [{transform_indices = @transform_0, window_bounds = array<i64: 16, 128>}, {pipeline_mode = #tpu.pipeline_mode<synchronous>, transform_indices = @transform_1, window_bounds = array<i64: 128, 128>}, {transform_indices = @transform_2, window_bounds = array<i64: 16, 128>}, {transform_indices = @transform_3, window_bounds = array<i64: 8, 128>}]} {
    %c0 = arith.constant 0 : index
    %c0_0 = arith.constant 0 : index
    %0 = vector.load %arg1[%c0, %c0_0] : memref<16x128xbf16, #tpu.memory_space<vmem>>, vector<16x128xbf16>
    %c0_1 = arith.constant 0 : index
    %c0_2 = arith.constant 0 : index
    %1 = vector.load %arg2[%c0_1, %c0_2] : memref<128x128xbf16, #tpu.memory_space<vmem>>, vector<128x128xbf16>
    %cst = arith.constant dense<0.000000e+00> : vector<16x128xf32>
    %2 = tpu.matmul %0, %1, %cst {dimension_numbers = #tpu.dot_dimension_numbers<[1], [0], [0], [1], [0, 0, 1, 1], [], []>} : vector<16x128xbf16>, vector<128x128xbf16>, vector<16x128xf32> -> vector<16x128xf32>
    %3 = arith.truncf %2 : vector<16x128xf32> to vector<16x128xbf16>
    %c0_3 = arith.constant 0 : index
    %c0_4 = arith.constant 0 : index
    %4 = vector.load %arg3[%c0_3, %c0_4] : memref<16x128xbf16, #tpu.memory_space<vmem>>, vector<16x128xbf16>
    tpu.vector_store %arg3[%c0_3, %c0_4], %3 {strides = array<i32>} : memref<16x128xbf16, #tpu.memory_space<vmem>>, vector<16x128xbf16>,
    %cst_5 = arith.constant dense<0.000000e+00> : vector<128xf32>
    %5 = vector.multi_reduction <add>, %2, %cst_5 [0] : vector<16x128xf32> to vector<128xf32>
    %6 = vector.shape_cast %5 : vector<128xf32> to vector<1x128xf32>
    %7 = arith.mulf %2, %2 : vector<16x128xf32>
    %cst_6 = arith.constant dense<0.000000e+00> : vector<128xf32>
    %8 = vector.multi_reduction <add>, %7, %cst_6 [0] : vector<16x128xf32> to vector<128xf32>
    %9 = vector.shape_cast %8 : vector<128xf32> to vector<1x128xf32>
    %cst_7 = arith.constant 0.000000e+00 : f32
    %10 = vector.broadcast %cst_7 : f32 to vector<6x128xf32>
    %11 = tpu.concatenate %6, %9, %10 in 0 : vector<1x128xf32>, vector<1x128xf32>, vector<6x128xf32> -> vector<8x128xf32>
    %c0_8 = arith.constant 0 : index
    %c0_9 = arith.constant 0 : index
    %12 = vector.load %arg4[%c0_8, %c0_9] : memref<8x128xf32, #tpu.memory_space<vmem>>, vector<8x128xf32>
    tpu.vector_store %arg4[%c0_8, %c0_9], %11 {strides = array<i32>} : memref<8x128xf32, #tpu.memory_space<vmem>>, vector<8x128xf32>,
    return
  }
  func.func @transform_0(%arg0: i32) -> (i32, i32) {
    %c0_i32 = arith.constant 0 : i32
    %c0_i32_0 = arith.constant 0 : i32
    return %arg0, %c0_i32 : i32, i32
  }
  func.func @transform_1(%arg0: i32) -> (i32, i32) {
    %c0_i32 = arith.constant 0 : i32
    %c0_i32_0 = arith.constant 0 : i32
    %c0_i32_1 = arith.constant 0 : i32
    return %c0_i32, %c0_i32_0 : i32, i32
  }
  func.func @transform_2(%arg0: i32) -> (i32, i32) {
    %c0_i32 = arith.constant 0 : i32
    %c0_i32_0 = arith.constant 0 : i32
    return %arg0, %c0_i32 : i32, i32
  }
  func.func @transform_3(%arg0: i32) -> (i32, i32) {
    %c0_i32 = arith.constant 0 : i32
    %c0_i32_0 = arith.constant 0 : i32
    return %arg0, %c0_i32 : i32, i32
  }
}

module attributes {stable_mosaic.version = 11 : i64} {
  func.func @_conv_stats_kernel(%arg0: i32, %arg1: memref<256x512xbf16, #tpu.memory_space<vmem>>, %arg2: memref<512x128xbf16, #tpu.memory_space<vmem>>, %arg3: memref<256x128xbf16, #tpu.memory_space<vmem>>, %arg4: memref<8x128xf32, #tpu.memory_space<vmem>>) attributes {dimension_semantics = [#tpu.dimension_semantics<parallel>], iteration_bounds = array<i64: 2>, scalar_prefetch = 0 : i64, scratch_operands = 0 : i64, tpu.core_type = #tpu.core_type<tc>, window_params = [{transform_indices = @transform_0, window_bounds = array<i64: 256, 512>}, {pipeline_mode = #tpu.pipeline_mode<synchronous>, transform_indices = @transform_1, window_bounds = array<i64: 512, 128>}, {transform_indices = @transform_2, window_bounds = array<i64: 256, 128>}, {transform_indices = @transform_3, window_bounds = array<i64: 8, 128>}]} {
    %c0 = arith.constant 0 : index
    %c0_0 = arith.constant 0 : index
    %0 = vector.load %arg1[%c0, %c0_0] : memref<256x512xbf16, #tpu.memory_space<vmem>>, vector<256x512xbf16>
    %c0_1 = arith.constant 0 : index
    %c0_2 = arith.constant 0 : index
    %1 = vector.load %arg2[%c0_1, %c0_2] : memref<512x128xbf16, #tpu.memory_space<vmem>>, vector<512x128xbf16>
    %cst = arith.constant dense<0.000000e+00> : vector<256x128xf32>
    %2 = tpu.matmul %0, %1, %cst {dimension_numbers = #tpu.dot_dimension_numbers<[1], [0], [0], [1], [0, 0, 1, 1], [], []>} : vector<256x512xbf16>, vector<512x128xbf16>, vector<256x128xf32> -> vector<256x128xf32>
    %3 = arith.truncf %2 : vector<256x128xf32> to vector<256x128xbf16>
    %c0_3 = arith.constant 0 : index
    %c0_4 = arith.constant 0 : index
    %4 = vector.load %arg3[%c0_3, %c0_4] : memref<256x128xbf16, #tpu.memory_space<vmem>>, vector<256x128xbf16>
    tpu.vector_store %arg3[%c0_3, %c0_4], %3 {strides = array<i32>} : memref<256x128xbf16, #tpu.memory_space<vmem>>, vector<256x128xbf16>,
    %cst_5 = arith.constant dense<0.000000e+00> : vector<128xf32>
    %5 = vector.multi_reduction <add>, %2, %cst_5 [0] : vector<256x128xf32> to vector<128xf32>
    %6 = vector.shape_cast %5 : vector<128xf32> to vector<1x128xf32>
    %7 = arith.mulf %2, %2 : vector<256x128xf32>
    %cst_6 = arith.constant dense<0.000000e+00> : vector<128xf32>
    %8 = vector.multi_reduction <add>, %7, %cst_6 [0] : vector<256x128xf32> to vector<128xf32>
    %9 = vector.shape_cast %8 : vector<128xf32> to vector<1x128xf32>
    %cst_7 = arith.constant 0.000000e+00 : f32
    %10 = vector.broadcast %cst_7 : f32 to vector<6x128xf32>
    %11 = tpu.concatenate %6, %9, %10 in 0 : vector<1x128xf32>, vector<1x128xf32>, vector<6x128xf32> -> vector<8x128xf32>
    %c0_8 = arith.constant 0 : index
    %c0_9 = arith.constant 0 : index
    %12 = vector.load %arg4[%c0_8, %c0_9] : memref<8x128xf32, #tpu.memory_space<vmem>>, vector<8x128xf32>
    tpu.vector_store %arg4[%c0_8, %c0_9], %11 {strides = array<i32>} : memref<8x128xf32, #tpu.memory_space<vmem>>, vector<8x128xf32>,
    return
  }
  func.func @transform_0(%arg0: i32) -> (i32, i32) {
    %c0_i32 = arith.constant 0 : i32
    %c0_i32_0 = arith.constant 0 : i32
    return %arg0, %c0_i32 : i32, i32
  }
  func.func @transform_1(%arg0: i32) -> (i32, i32) {
    %c0_i32 = arith.constant 0 : i32
    %c0_i32_0 = arith.constant 0 : i32
    %c0_i32_1 = arith.constant 0 : i32
    return %c0_i32, %c0_i32_0 : i32, i32
  }
  func.func @transform_2(%arg0: i32) -> (i32, i32) {
    %c0_i32 = arith.constant 0 : i32
    %c0_i32_0 = arith.constant 0 : i32
    return %arg0, %c0_i32 : i32, i32
  }
  func.func @transform_3(%arg0: i32) -> (i32, i32) {
    %c0_i32 = arith.constant 0 : i32
    %c0_i32_0 = arith.constant 0 : i32
    return %arg0, %c0_i32 : i32, i32
  }
}

module attributes {stable_mosaic.version = 11 : i64} {
  func.func @kernel(%arg0: i32, %arg1: memref<256x128xbf16, #tpu.memory_space<vmem>>, %arg2: memref<1x128xf32, #tpu.memory_space<vmem>>, %arg3: memref<1x128xf32, #tpu.memory_space<vmem>>, %arg4: memref<256x128xf32, #tpu.memory_space<vmem>>) attributes {dimension_semantics = [#tpu.dimension_semantics<parallel>], iteration_bounds = array<i64: 2>, scalar_prefetch = 0 : i64, scratch_operands = 0 : i64, tpu.core_type = #tpu.core_type<tc>, window_params = [{transform_indices = @transform_0, window_bounds = array<i64: 256, 128>}, {pipeline_mode = #tpu.pipeline_mode<synchronous>, transform_indices = @transform_1, window_bounds = array<i64: 1, 128>}, {pipeline_mode = #tpu.pipeline_mode<synchronous>, transform_indices = @transform_2, window_bounds = array<i64: 1, 128>}, {transform_indices = @transform_3, window_bounds = array<i64: 256, 128>}]} {
    %c0 = arith.constant 0 : index
    %c0_0 = arith.constant 0 : index
    %0 = vector.load %arg1[%c0, %c0_0] : memref<256x128xbf16, #tpu.memory_space<vmem>>, vector<256x128xbf16>
    %1 = arith.extf %0 : vector<256x128xbf16> to vector<256x128xf32>
    %c0_1 = arith.constant 0 : index
    %c0_2 = arith.constant 0 : index
    %2 = vector.load %arg2[%c0_1, %c0_2] : memref<1x128xf32, #tpu.memory_space<vmem>>, vector<1x128xf32>
    %3 = vector.broadcast %2 : vector<1x128xf32> to vector<256x128xf32>
    %4 = arith.mulf %1, %3 : vector<256x128xf32>
    %c0_3 = arith.constant 0 : index
    %c0_4 = arith.constant 0 : index
    %5 = vector.load %arg3[%c0_3, %c0_4] : memref<1x128xf32, #tpu.memory_space<vmem>>, vector<1x128xf32>
    %6 = vector.broadcast %5 : vector<1x128xf32> to vector<256x128xf32>
    %7 = arith.addf %4, %6 : vector<256x128xf32>
    %8 = math.tanh %7 : vector<256x128xf32>
    %c0_5 = arith.constant 0 : index
    %c0_6 = arith.constant 0 : index
    %9 = vector.load %arg4[%c0_5, %c0_6] : memref<256x128xf32, #tpu.memory_space<vmem>>, vector<256x128xf32>
    tpu.vector_store %arg4[%c0_5, %c0_6], %8 {strides = array<i32>} : memref<256x128xf32, #tpu.memory_space<vmem>>, vector<256x128xf32>,
    return
  }
  func.func @transform_0(%arg0: i32) -> (i32, i32) {
    %c0_i32 = arith.constant 0 : i32
    %c0_i32_0 = arith.constant 0 : i32
    return %arg0, %c0_i32 : i32, i32
  }
  func.func @transform_1(%arg0: i32) -> (i32, i32) {
    %c0_i32 = arith.constant 0 : i32
    %c0_i32_0 = arith.constant 0 : i32
    %c0_i32_1 = arith.constant 0 : i32
    return %c0_i32, %c0_i32_0 : i32, i32
  }
  func.func @transform_2(%arg0: i32) -> (i32, i32) {
    %c0_i32 = arith.constant 0 : i32
    %c0_i32_0 = arith.constant 0 : i32
    %c0_i32_1 = arith.constant 0 : i32
    return %c0_i32, %c0_i32_0 : i32, i32
  }
  func.func @transform_3(%arg0: i32) -> (i32, i32) {
    %c0_i32 = arith.constant 0 : i32
    %c0_i32_0 = arith.constant 0 : i32
    return %arg0, %c0_i32 : i32, i32
  }
}

</mosaic_0001>

<llo_original>
// kernel: resnet_generator.21
$region0: #{resnet_generator.21}
  #allocation0 [shape = 'u32[]', space=smem, size = 0x4, offset = 0x4, fixed_abs, tag = 'smem constant byte address 0x4 - core index']
  #allocation1 [shape = 'u32[144,128]{1,0:T(1,128)}', space=vmem, size = 0x12000, scoped, tag = 'internal scratch']
  %s0 = inlined_call_operand.vmem [shape: bf16[512,128], index: 0, kind: input, shape index: {}]
  %s1 = inlined_call_operand.vmem [shape: f32[1,128], index: 1, kind: input, shape index: {}]
  %s2 = inlined_call_operand.vmem [shape: f32[1,128], index: 2, kind: input, shape index: {}]
  %s3 = inlined_call_operand.vmem [shape: bf16[512,128], index: 3, kind: output, shape index: {}]
  %s4 = sld [smem:[#allocation0]]
  $region45: #{resnet_generator.21} parent=0
    _
  %s6 = ssub.s32 1, %s4
  %s7 = scalar_select 0, %s6, %s4
  loop: start=0, step=1, limit=4
  $region2: #{resnet_generator.21} parent=0 // loop_pre_header
    _
  $region3: #{resnet_generator.21} parent=0 // loop_header
    %s9 = sphi 0, %s13
    %p10 = scmp.ge.s32.totalorder %s9, 4
    %s19 = sphi 0, %s21
    %s22 = sphi 0, %s19
    %s23 = sphi 0, %s22
    %s39 = sphi 0, %s23
    %s43 = sphi 0, %s43
    %s45 = sphi 0, %s43
    %s46 = sphi 0, %s45
    %s60 = sphi 0, %s46
    %s64 = sphi 0, %s64
    %s66 = sphi 0, %s64
    %s67 = sphi 0, %s66
    %s81 = sphi 0, %s67
    %s87 = sphi 0, %s89
    %s90 = sphi 0, %s87
    %s91 = sphi 0, %s90
    %s107 = sphi 0, %s91
  $region4: #{resnet_generator.21} parent=0 // loop_header_branch
    %12 = sbr.rel (%p10) target = $region8
  $region5: #{resnet_generator.21} parent=0 // loop_body
    %s14 = ssub.s32 %s9, 1
    %s15 = ssub.s32 %s9, 2
    %s16 = sadd.s32 %s9, 1
    %s17 = ssub.s32 %s9, %s16
    %p18 = scmp.eq.s32.totalorder %s17, 0
    %s20 = sadd.s32 %s19, 1
    %s21 = scalar_select %p18, %s19, %s20
    %p24 = pneg %p18
    %p25 = scmp.eq.s32.totalorder %s9, 1
    %p26 = por %p24, %p25
    %p27 = scmp.ne.s32.totalorder %s19, %s22
    %p28 = scmp.eq.s32.totalorder %s9, 0
    %p29 = por %p27, %p28
    %p30 = scmp.ne.s32.totalorder %s19, %s22
    %p31 = scmp.eq.s32.totalorder %s14, 1
    %p32 = por %p30, %p31
    %p33 = scmp.ne.s32.totalorder %s22, %s23
    %p34 = scmp.eq.s32.totalorder %s14, 0
    %p35 = por %p33, %p34
    %p36 = scmp.ne.s32.totalorder %s22, %s23
    %p37 = scmp.eq.s32.totalorder %s15, 1
    %p38 = por %p36, %p37
    %p40 = scmp.ne.s32.totalorder %s23, %s39
    %p41 = scmp.eq.s32.totalorder %s15, 0
    %p42 = por %p40, %p41
    %s44 = sadd.s32 %s43, 1
    %p47 = scmp.eq.s32.totalorder %s9, 1
    %p48 = scmp.ne.s32.totalorder %s43, %s45
    %p49 = scmp.eq.s32.totalorder %s9, 0
    %p50 = por %p48, %p49
    %p51 = scmp.ne.s32.totalorder %s43, %s45
    %p52 = scmp.eq.s32.totalorder %s14, 1
    %p53 = por %p51, %p52
    %p54 = scmp.ne.s32.totalorder %s45, %s46
    %p55 = scmp.eq.s32.totalorder %s14, 0
    %p56 = por %p54, %p55
    %p57 = scmp.ne.s32.totalorder %s45, %s46
    %p58 = scmp.eq.s32.totalorder %s15, 1
    %p59 = por %p57, %p58
    %p61 = scmp.ne.s32.totalorder %s46, %s60
    %p62 = scmp.eq.s32.totalorder %s15, 0
    %p63 = por %p61, %p62
    %s65 = sadd.s32 %s64, 1
    %p68 = scmp.eq.s32.totalorder %s9, 1
    %p69 = scmp.ne.s32.totalorder %s64, %s66
    %p70 = scmp.eq.s32.totalorder %s9, 0
    %p71 = por %p69, %p70
    %p72 = scmp.ne.s32.totalorder %s64, %s66
    %p73 = scmp.eq.s32.totalorder %s14, 1
    %p74 = por %p72, %p73
    %p75 = scmp.ne.s32.totalorder %s66, %s67
    %p76 = scmp.eq.s32.totalorder %s14, 0
    %p77 = por %p75, %p76
    %p78 = scmp.ne.s32.totalorder %s66, %s67
    %p79 = scmp.eq.s32.totalorder %s15, 1
    %p80 = por %p78, %p79
    %p82 = scmp.ne.s32.totalorder %s67, %s81
    %p83 = scmp.eq.s32.totalorder %s15, 0
    %p84 = por %p82, %p83
    %s85 = ssub.s32 %s9, %s16
    %p86 = scmp.eq.s32.totalorder %s85, 0
    %s88 = sadd.s32 %s87, 1
    %s89 = scalar_select %p86, %s87, %s88
    %p92 = pneg %p86
    %p93 = scmp.eq.s32.totalorder %s9, 1
    %p94 = por %p92, %p93
    %p95 = scmp.ne.s32.totalorder %s87, %s90
    %p96 = scmp.eq.s32.totalorder %s9, 0
    %p97 = por %p95, %p96
    %p98 = scmp.ne.s32.totalorder %s87, %s90
    %p99 = scmp.eq.s32.totalorder %s14, 1
    %p100 = por %p98, %p99
    %p101 = scmp.ne.s32.totalorder %s90, %s91
    %p102 = scmp.eq.s32.totalorder %s14, 0
    %p103 = por %p101, %p102
    %p104 = scmp.ne.s32.totalorder %s90, %s91
    %p105 = scmp.eq.s32.totalorder %s15, 1
    %p106 = por %p104, %p105
    %p108 = scmp.ne.s32.totalorder %s91, %s107
    %p109 = scmp.eq.s32.totalorder %s15, 0
    %p110 = por %p108, %p109
    %p111 = scmp.le.s32.totalorder 1, %s9
    %p112 = scmp.lt.s32.totalorder %s9, 3
    %p113 = pnand %p111, %p112
    %p114 = pneg %p113
    // Predicated region
    $region9: #{resnet_generator.21} parent=5 // pred_check
      _
    $region10: #{resnet_generator.21} parent=5 // pred_check_branch
      %116 = sbr.rel (%p113) target = $region12
    $region11: #{resnet_generator.21} parent=5 // pred_region
      %s117 = ssub.s32 %s9, 1
      // Predicated region
      $region13: #{resnet_generator.21} parent=11 // pred_check
        %p118 = pneg %p56
      $region14: #{resnet_generator.21} parent=11 // pred_check_branch
        %120 = sbr.rel (%p118) target = $region16
      $region15: #{resnet_generator.21} parent=11 // pred_region
        _
      $region16: #{resnet_generator.21} parent=11 // pred_fallthru
        _
      // Predicated region
      $region17: #{resnet_generator.21} parent=11 // pred_check
        %p121 = pneg %p77
      $region18: #{resnet_generator.21} parent=11 // pred_check_branch
        %123 = sbr.rel (%p121) target = $region20
      $region19: #{resnet_generator.21} parent=11 // pred_region
        _
      $region20: #{resnet_generator.21} parent=11 // pred_fallthru
        _
    $region12: #{resnet_generator.21} parent=5 // pred_fallthru
      _
    %p124 = scmp.lt.s32.totalorder %s9, 2
    // Predicated region
    $region21: #{resnet_generator.21} parent=5 // pred_check
      %p125 = pneg %p124
    $region22: #{resnet_generator.21} parent=5 // pred_check_branch
      %127 = sbr.rel (%p125) target = $region24
    $region23: #{resnet_generator.21} parent=5 // pred_region
      // Predicated region
      $region25: #{resnet_generator.21} parent=23 // pred_check
        %p128 = pneg %p29
      $region26: #{resnet_generator.21} parent=23 // pred_check_branch
        %130 = sbr.rel (%p128) target = $region28
      $region27: #{resnet_generator.21} parent=23 // pred_region
        %s131 = smul.u32 32, %s9
        %p132 = scmp.lt.s32.totalorder %s131, 63
        %s133 = scalar_select %p132, %s131, 63
        %s134 = smul.addr %s133, 4
        %s135 = scalar_lea.vmem %s0, %s134
        %s136 = smul.u32 32, %s9
      $region28: #{resnet_generator.21} parent=23 // pred_fallthru
        _
    $region24: #{resnet_generator.21} parent=5 // pred_fallthru
      _
    %p137 = scmp.le.s32.totalorder 1, %s9
    %p138 = scmp.lt.s32.totalorder %s9, 3
    %p139 = pnand %p137, %p138
    %p140 = pneg %p139
    // Predicated region
    $region29: #{resnet_generator.21} parent=5 // pred_check
      _
    $region30: #{resnet_generator.21} parent=5 // pred_check_branch
      %142 = sbr.rel (%p139) target = $region32
    $region31: #{resnet_generator.21} parent=5 // pred_region
      %s143 = ssub.s32 %s9, 1
      %s144 = smul.u32 32, %s14
      %p145 = scmp.lt.s32.totalorder %s144, 63
      %s146 = scalar_select %p145, %s144, 63
      %s147 = smul.addr %s146, 4
      %s148 = scalar_lea.vmem %s0, %s147
      %p149 = pneg %p35
      %p150 = pneg %p32
      %p151 = pneg %p56
      %p152 = pneg %p53
      %p153 = pneg %p77
      %p154 = pneg %p74
      %p155 = pneg %p103
      %p156 = pneg %p100
      %s157 = smul.u32 32, %s14
      %p158 = scmp.lt.s32.totalorder %s157, 63
      %s159 = scalar_select %p158, %s157, 63
      %s160 = smul.addr %s159, 4
      %s161 = scalar_lea.vmem %s3, %s160
      %s162 = smul.u32 32, %s14
      %p163 = scmp.lt.s32.totalorder %s162, 63
      %s164 = scalar_select %p163, %s162, 63
      %s165 = smul.addr %s164, 4
      %s166 = scalar_lea.vmem %s0, %s165
      %s167 = smul.u32 32, %s14
      %s168 = smul.u32 32, %s14
      %p169 = scmp.lt.s32.totalorder %s168, 63
      %s170 = scalar_select %p169, %s168, 63
      %s171 = smul.addr %s170, 4
      %s172 = scalar_lea.vmem %s3, %s171
      %s173 = smul.u32 32, %s14
      %v174 = vld [vmem:[%s166] sm:$0xf]
      %v175 = vld [vmem:[%s166 + $0x4] sm:$0xf]
      %v176 = vld [vmem:[%s166 + $0x8] sm:$0xf]
      %v177 = vld [vmem:[%s166 + $0xc] sm:$0xf]
      %v178 = vld [vmem:[%s166 + $0x10] sm:$0xf]
      %v179 = vld [vmem:[%s166 + $0x14] sm:$0xf]
      %v180 = vld [vmem:[%s166 + $0x18] sm:$0xf]
      %v181 = vld [vmem:[%s166 + $0x1c] sm:$0xf]
      %v182 = vld [vmem:[%s166 + $0x20] sm:$0xf]
      %v183 = vld [vmem:[%s166 + $0x24] sm:$0xf]
      %v184 = vld [vmem:[%s166 + $0x28] sm:$0xf]
      %v185 = vld [vmem:[%s166 + $0x2c] sm:$0xf]
      %v186 = vld [vmem:[%s166 + $0x30] sm:$0xf]
      %v187 = vld [vmem:[%s166 + $0x34] sm:$0xf]
      %v188 = vld [vmem:[%s166 + $0x38] sm:$0xf]
      %v189 = vld [vmem:[%s166 + $0x3c] sm:$0xf]
      %v190 = vld [vmem:[%s166 + $0x40] sm:$0xf]
      %v191 = vld [vmem:[%s166 + $0x44] sm:$0xf]
      %v192 = vld [vmem:[%s166 + $0x48] sm:$0xf]
      %v193 = vld [vmem:[%s166 + $0x4c] sm:$0xf]
      %v194 = vld [vmem:[%s166 + $0x50] sm:$0xf]
      %v195 = vld [vmem:[%s166 + $0x54] sm:$0xf]
      %v196 = vld [vmem:[%s166 + $0x58] sm:$0xf]
      %v197 = vld [vmem:[%s166 + $0x5c] sm:$0xf]
      %v198 = vld [vmem:[%s166 + $0x60] sm:$0xf]
      %v199 = vld [vmem:[%s166 + $0x64] sm:$0xf]
      %v200 = vld [vmem:[%s166 + $0x68] sm:$0xf]
      %v201 = vld [vmem:[%s166 + $0x6c] sm:$0xf]
      %v202 = vld [vmem:[%s166 + $0x70] sm:$0xf]
      %v203 = vld [vmem:[%s166 + $0x74] sm:$0xf]
      %v204 = vld [vmem:[%s166 + $0x78] sm:$0xf]
      %v205 = vld [vmem:[%s166 + $0x7c] sm:$0xf]
      %v206 = vunpack.c.l.bf16 %v174
      %v207 = vunpack.c.l.bf16 %v175
      %v208 = vunpack.c.l.bf16 %v176
      %v209 = vunpack.c.l.bf16 %v177
      %v210 = vunpack.c.l.bf16 %v178
      %v211 = vunpack.c.l.bf16 %v179
      %v212 = vunpack.c.l.bf16 %v180
      %v213 = vunpack.c.l.bf16 %v181
      %v214 = vunpack.c.l.bf16 %v182
      %v215 = vunpack.c.l.bf16 %v183
      %v216 = vunpack.c.l.bf16 %v184
      %v217 = vunpack.c.l.bf16 %v185
      %v218 = vunpack.c.l.bf16 %v186
      %v219 = vunpack.c.l.bf16 %v187
      %v220 = vunpack.c.l.bf16 %v188
      %v221 = vunpack.c.l.bf16 %v189
      %v222 = vunpack.c.l.bf16 %v190
      %v223 = vunpack.c.l.bf16 %v191
      %v224 = vunpack.c.l.bf16 %v192
      %v225 = vunpack.c.l.bf16 %v193
      %v226 = vunpack.c.l.bf16 %v194
      %v227 = vunpack.c.l.bf16 %v195
      %v228 = vunpack.c.l.bf16 %v196
      %v229 = vunpack.c.l.bf16 %v197
      %v230 = vunpack.c.l.bf16 %v198
      %v231 = vunpack.c.l.bf16 %v199
      %v232 = vunpack.c.l.bf16 %v200
      %v233 = vunpack.c.l.bf16 %v201
      %v234 = vunpack.c.l.bf16 %v202
      %v235 = vunpack.c.l.bf16 %v203
      %v236 = vunpack.c.l.bf16 %v204
      %v237 = vunpack.c.l.bf16 %v205
      %v238 = vld [vmem:[%s1] sm:$0x1]
      %v240 = vlaneseq
      %v241 = vshrl.u32 %v240, 7
      %v242 = vsub.s32 0, %v241
      %v243 = vrot.slane %v238, %v242
      %v245 = vmul.f32 %v206, %v243
      %v246 = vmul.f32 %v207, %v243
      %v247 = vmul.f32 %v208, %v243
      %v248 = vmul.f32 %v209, %v243
      %v249 = vmul.f32 %v210, %v243
      %v250 = vmul.f32 %v211, %v243
      %v251 = vmul.f32 %v212, %v243
      %v252 = vmul.f32 %v213, %v243
      %v253 = vmul.f32 %v214, %v243
      %v254 = vmul.f32 %v215, %v243
      %v255 = vmul.f32 %v216, %v243
      %v256 = vmul.f32 %v217, %v243
      %v257 = vmul.f32 %v218, %v243
      %v258 = vmul.f32 %v219, %v243
      %v259 = vmul.f32 %v220, %v243
      %v260 = vmul.f32 %v221, %v243
      %v261 = vmul.f32 %v222, %v243
      %v262 = vmul.f32 %v223, %v243
      %v263 = vmul.f32 %v224, %v243
      %v264 = vmul.f32 %v225, %v243
      %v265 = vmul.f32 %v226, %v243
      %v266 = vmul.f32 %v227, %v243
      %v267 = vmul.f32 %v228, %v243
      %v268 = vmul.f32 %v229, %v243
      %v269 = vmul.f32 %v230, %v243
      %v270 = vmul.f32 %v231, %v243
      %v271 = vmul.f32 %v232, %v243
      %v272 = vmul.f32 %v233, %v243
      %v273 = vmul.f32 %v234, %v243
      %v274 = vmul.f32 %v235, %v243
      %v275 = vmul.f32 %v236, %v243
      %v276 = vmul.f32 %v237, %v243
      %v277 = vld [vmem:[%s2] sm:$0x1]
      %v279 = vlaneseq
      %v280 = vshrl.u32 %v279, 7
      %v281 = vsub.s32 0, %v280
      %v282 = vrot.slane %v277, %v281
      %v284 = vadd.f32 %v245, %v282
      %v285 = vadd.f32 %v246, %v282
      %v286 = vadd.f32 %v247, %v282
      %v287 = vadd.f32 %v248, %v282
      %v288 = vadd.f32 %v249, %v282
      %v289 = vadd.f32 %v250, %v282
      %v290 = vadd.f32 %v251, %v282
      %v291 = vadd.f32 %v252, %v282
      %v292 = vadd.f32 %v253, %v282
      %v293 = vadd.f32 %v254, %v282
      %v294 = vadd.f32 %v255, %v282
      %v295 = vadd.f32 %v256, %v282
      %v296 = vadd.f32 %v257, %v282
      %v297 = vadd.f32 %v258, %v282
      %v298 = vadd.f32 %v259, %v282
      %v299 = vadd.f32 %v260, %v282
      %v300 = vadd.f32 %v261, %v282
      %v301 = vadd.f32 %v262, %v282
      %v302 = vadd.f32 %v263, %v282
      %v303 = vadd.f32 %v264, %v282
      %v304 = vadd.f32 %v265, %v282
      %v305 = vadd.f32 %v266, %v282
      %v306 = vadd.f32 %v267, %v282
      %v307 = vadd.f32 %v268, %v282
      %v308 = vadd.f32 %v269, %v282
      %v309 = vadd.f32 %v270, %v282
      %v310 = vadd.f32 %v271, %v282
      %v311 = vadd.f32 %v272, %v282
      %v312 = vadd.f32 %v273, %v282
      %v313 = vadd.f32 %v274, %v282
      %v314 = vadd.f32 %v275, %v282
      %v315 = vadd.f32 %v276, %v282
      %v316 = vmax.f32 %v284, 0.0
      %v317 = vmax.f32 %v285, 0.0
      %v318 = vmax.f32 %v286, 0.0
      %v319 = vmax.f32 %v287, 0.0
      %v320 = vmax.f32 %v288, 0.0
      %v321 = vmax.f32 %v289, 0.0
      %v322 = vmax.f32 %v290, 0.0
      %v323 = vmax.f32 %v291, 0.0
      %v324 = vmax.f32 %v292, 0.0
      %v325 = vmax.f32 %v293, 0.0
      %v326 = vmax.f32 %v294, 0.0
      %v327 = vmax.f32 %v295, 0.0
      %v328 = vmax.f32 %v296, 0.0
      %v329 = vmax.f32 %v297, 0.0
      %v330 = vmax.f32 %v298, 0.0
      %v331 = vmax.f32 %v299, 0.0
      %v332 = vmax.f32 %v300, 0.0
      %v333 = vmax.f32 %v301, 0.0
      %v334 = vmax.f32 %v302, 0.0
      %v335 = vmax.f32 %v303, 0.0
      %v336 = vmax.f32 %v304, 0.0
      %v337 = vmax.f32 %v305, 0.0
      %v338 = vmax.f32 %v306, 0.0
      %v339 = vmax.f32 %v307, 0.0
      %v340 = vmax.f32 %v308, 0.0
      %v341 = vmax.f32 %v309, 0.0
      %v342 = vmax.f32 %v310, 0.0
      %v343 = vmax.f32 %v311, 0.0
      %v344 = vmax.f32 %v312, 0.0
      %v345 = vmax.f32 %v313, 0.0
      %v346 = vmax.f32 %v314, 0.0
      %v347 = vmax.f32 %v315, 0.0
      %v348 = vpack.c.bf16 %v317, %v316
      %v349 = vpack.c.bf16 %v319, %v318
      %v350 = vpack.c.bf16 %v321, %v320
      %v351 = vpack.c.bf16 %v323, %v322
      %v352 = vpack.c.bf16 %v325, %v324
      %v353 = vpack.c.bf16 %v327, %v326
      %v354 = vpack.c.bf16 %v329, %v328
      %v355 = vpack.c.bf16 %v331, %v330
      %v356 = vpack.c.bf16 %v333, %v332
      %v357 = vpack.c.bf16 %v335, %v334
      %v358 = vpack.c.bf16 %v337, %v336
      %v359 = vpack.c.bf16 %v339, %v338
      %v360 = vpack.c.bf16 %v341, %v340
      %v361 = vpack.c.bf16 %v343, %v342
      %v362 = vpack.c.bf16 %v345, %v344
      %v363 = vpack.c.bf16 %v347, %v346
      %v380 = vunpack.c.l.b16 %v348
      %v381 = vunpack.c.h.b16 %v348
      %v382 = vunpack.c.l.b16 %v349
      %v383 = vunpack.c.h.b16 %v349
      %v384 = vunpack.c.l.b16 %v350
      %v385 = vunpack.c.h.b16 %v350
      %v386 = vunpack.c.l.b16 %v351
      %v387 = vunpack.c.h.b16 %v351
      %v388 = vunpack.c.l.b16 %v352
      %v389 = vunpack.c.h.b16 %v352
      %v390 = vunpack.c.l.b16 %v353
      %v391 = vunpack.c.h.b16 %v353
      %v392 = vunpack.c.l.b16 %v354
      %v393 = vunpack.c.h.b16 %v354
      %v394 = vunpack.c.l.b16 %v355
      %v395 = vunpack.c.h.b16 %v355
      %v396 = vunpack.c.l.b16 %v356
      %v397 = vunpack.c.h.b16 %v356
      %v398 = vunpack.c.l.b16 %v357
      %v399 = vunpack.c.h.b16 %v357
      %v400 = vunpack.c.l.b16 %v358
      %v401 = vunpack.c.h.b16 %v358
      %v402 = vunpack.c.l.b16 %v359
      %v403 = vunpack.c.h.b16 %v359
      %v404 = vunpack.c.l.b16 %v360
      %v405 = vunpack.c.h.b16 %v360
      %v406 = vunpack.c.l.b16 %v361
      %v407 = vunpack.c.h.b16 %v361
      %v408 = vunpack.c.l.b16 %v362
      %v409 = vunpack.c.h.b16 %v362
      %v410 = vunpack.c.l.b16 %v363
      %v411 = vunpack.c.h.b16 %v363
      %v412 = vpack.c.b16 %v380, %v380
      %v413 = vpack.c.b16 %v381, %v381
      %v414 = vpack.c.b16 %v382, %v382
      %v415 = vpack.c.b16 %v383, %v383
      %v416 = vpack.c.b16 %v384, %v384
      %v417 = vpack.c.b16 %v385, %v385
      %v418 = vpack.c.b16 %v386, %v386
      %v419 = vpack.c.b16 %v387, %v387
      %v420 = vpack.c.b16 %v388, %v388
      %v421 = vpack.c.b16 %v389, %v389
      %v422 = vpack.c.b16 %v390, %v390
      %v423 = vpack.c.b16 %v391, %v391
      %v424 = vpack.c.b16 %v392, %v392
      %v425 = vpack.c.b16 %v393, %v393
      %v426 = vpack.c.b16 %v394, %v394
      %v427 = vpack.c.b16 %v395, %v395
      %v428 = vpack.c.b16 %v396, %v396
      %v429 = vpack.c.b16 %v397, %v397
      %v430 = vpack.c.b16 %v398, %v398
      %v431 = vpack.c.b16 %v399, %v399
      %v432 = vpack.c.b16 %v400, %v400
      %v433 = vpack.c.b16 %v401, %v401
      %v434 = vpack.c.b16 %v402, %v402
      %v435 = vpack.c.b16 %v403, %v403
      %v436 = vpack.c.b16 %v404, %v404
      %v437 = vpack.c.b16 %v405, %v405
      %v438 = vpack.c.b16 %v406, %v406
      %v439 = vpack.c.b16 %v407, %v407
      %v440 = vpack.c.b16 %v408, %v408
      %v441 = vpack.c.b16 %v409, %v409
      %v442 = vpack.c.b16 %v410, %v410
      %v443 = vpack.c.b16 %v411, %v411
      %476 = vst [vmem:[%s172] sm:$0xf] %v412
      %477 = vst [vmem:[%s172 + $0x4] sm:$0xf] %v413
      %478 = vst [vmem:[%s172 + $0x8] sm:$0xf] %v414
      %479 = vst [vmem:[%s172 + $0xc] sm:$0xf] %v415
      %480 = vst [vmem:[%s172 + $0x10] sm:$0xf] %v416
      %481 = vst [vmem:[%s172 + $0x14] sm:$0xf] %v417
      %482 = vst [vmem:[%s172 + $0x18] sm:$0xf] %v418
      %483 = vst [vmem:[%s172 + $0x1c] sm:$0xf] %v419
      %484 = vst [vmem:[%s172 + $0x20] sm:$0xf] %v420
      %485 = vst [vmem:[%s172 + $0x24] sm:$0xf] %v421
      %486 = vst [vmem:[%s172 + $0x28] sm:$0xf] %v422
      %487 = vst [vmem:[%s172 + $0x2c] sm:$0xf] %v423
      %488 = vst [vmem:[%s172 + $0x30] sm:$0xf] %v424
      %489 = vst [vmem:[%s172 + $0x34] sm:$0xf] %v425
      %490 = vst [vmem:[%s172 + $0x38] sm:$0xf] %v426
      %491 = vst [vmem:[%s172 + $0x3c] sm:$0xf] %v427
      %492 = vst [vmem:[%s172 + $0x40] sm:$0xf] %v428
      %493 = vst [vmem:[%s172 + $0x44] sm:$0xf] %v429
      %494 = vst [vmem:[%s172 + $0x48] sm:$0xf] %v430
      %495 = vst [vmem:[%s172 + $0x4c] sm:$0xf] %v431
      %496 = vst [vmem:[%s172 + $0x50] sm:$0xf] %v432
      %497 = vst [vmem:[%s172 + $0x54] sm:$0xf] %v433
      %498 = vst [vmem:[%s172 + $0x58] sm:$0xf] %v434
      %499 = vst [vmem:[%s172 + $0x5c] sm:$0xf] %v435
      %500 = vst [vmem:[%s172 + $0x60] sm:$0xf] %v436
      %501 = vst [vmem:[%s172 + $0x64] sm:$0xf] %v437
      %502 = vst [vmem:[%s172 + $0x68] sm:$0xf] %v438
      %503 = vst [vmem:[%s172 + $0x6c] sm:$0xf] %v439
      %504 = vst [vmem:[%s172 + $0x70] sm:$0xf] %v440
      %505 = vst [vmem:[%s172 + $0x74] sm:$0xf] %v441
      %506 = vst [vmem:[%s172 + $0x78] sm:$0xf] %v442
      %507 = vst [vmem:[%s172 + $0x7c] sm:$0xf] %v443
      %s508 = smul.u32 32, %s14
      %p509 = scmp.lt.s32.totalorder %s508, 63
      %s510 = scalar_select %p509, %s508, 63
      %s511 = smul.addr %s510, 4
      %s512 = scalar_lea.vmem %s3, %s511
      // Predicated region
      $region33: #{resnet_generator.21} parent=31 // pred_check
        %p513 = pneg %p100
      $region34: #{resnet_generator.21} parent=31 // pred_check_branch
        %515 = sbr.rel (%p513) target = $region36
      $region35: #{resnet_generator.21} parent=31 // pred_region
        %s516 = smul.u32 32, %s14
      $region36: #{resnet_generator.21} parent=31 // pred_fallthru
        _
    $region32: #{resnet_generator.21} parent=5 // pred_fallthru
      _
    %p517 = scmp.le.s32.totalorder 2, %s9
    // Predicated region
    $region37: #{resnet_generator.21} parent=5 // pred_check
      %p518 = pneg %p517
    $region38: #{resnet_generator.21} parent=5 // pred_check_branch
      %520 = sbr.rel (%p518) target = $region40
    $region39: #{resnet_generator.21} parent=5 // pred_region
      %s521 = ssub.s32 %s9, 2
      // Predicated region
      $region41: #{resnet_generator.21} parent=39 // pred_check
        %p522 = pneg %p106
      $region42: #{resnet_generator.21} parent=39 // pred_check_branch
        %524 = sbr.rel (%p522) target = $region44
      $region43: #{resnet_generator.21} parent=39 // pred_region
        %s525 = smul.u32 32, %s15
        %p526 = scmp.lt.s32.totalorder %s525, 63
        %s527 = scalar_select %p526, %s525, 63
        %s528 = smul.addr %s527, 4
        %s529 = scalar_lea.vmem %s3, %s528
      $region44: #{resnet_generator.21} parent=39 // pred_fallthru
        _
    $region40: #{resnet_generator.21} parent=5 // pred_fallthru
      _
  $region6: #{resnet_generator.21} parent=0 // loop_footer
    %s13 = sadd.s32 1, %s9
  $region7: #{resnet_generator.21} parent=0 // loop_footer_branch
    %8 = sbr.rel target = $region3
  $region8: #{resnet_generator.21} parent=0 // loop_exit
    _

// kernel: resnet_generator.20
$region0: #{resnet_generator.20}
  #allocation0 [shape = 'u32[]', space=smem, size = 0x4, offset = 0x4, fixed_abs, tag = 'smem constant byte address 0x4 - core index']
  #allocation1 [shape = 'u32[144,128]{1,0:T(1,128)}', space=vmem, size = 0x12000, scoped, tag = 'internal scratch']
  %s0 = inlined_call_operand.vmem [shape: bf16[512,256], index: 0, kind: input, shape index: {}]
  %s1 = inlined_call_operand.vmem [shape: bf16[256,128], index: 1, kind: input, shape index: {}]
  %s2 = inlined_call_operand.vmem [shape: bf16[512,128], index: 2, kind: output, shape index: {0}]
  %s3 = inlined_call_operand.vmem [shape: f32[16,128], index: 3, kind: output, shape index: {1}]
  %4 = xla_tuple %s2, %s3
  %s5 = sld [smem:[#allocation0]]
  $region49: #{resnet_generator.20} parent=0
    _
  %s7 = ssub.s32 1, %s5
  %s8 = scalar_select 0, %s7, %s5
  loop: start=0, step=1, limit=4
  $region2: #{resnet_generator.20} parent=0 // loop_pre_header
    _
  $region3: #{resnet_generator.20} parent=0 // loop_header
    %s10 = sphi 0, %s14
    %p11 = scmp.ge.s32.totalorder %s10, 4
    %s20 = sphi 0, %s22
    %s23 = sphi 0, %s20
    %s24 = sphi 0, %s23
    %s40 = sphi 0, %s24
    %s44 = sphi 0, %s44
    %s46 = sphi 0, %s44
    %s47 = sphi 0, %s46
    %s61 = sphi 0, %s47
    %s67 = sphi 0, %s69
    %s70 = sphi 0, %s67
    %s71 = sphi 0, %s70
    %s87 = sphi 0, %s71
    %s93 = sphi 0, %s95
    %s96 = sphi 0, %s93
    %s97 = sphi 0, %s96
    %s113 = sphi 0, %s97
  $region4: #{resnet_generator.20} parent=0 // loop_header_branch
    %13 = sbr.rel (%p11) target = $region8
  $region5: #{resnet_generator.20} parent=0 // loop_body
    %s15 = ssub.s32 %s10, 1
    %s16 = ssub.s32 %s10, 2
    %s17 = sadd.s32 %s10, 1
    %s18 = ssub.s32 %s10, %s17
    %p19 = scmp.eq.s32.totalorder %s18, 0
    %s21 = sadd.s32 %s20, 1
    %s22 = scalar_select %p19, %s20, %s21
    %p25 = pneg %p19
    %p26 = scmp.eq.s32.totalorder %s10, 1
    %p27 = por %p25, %p26
    %p28 = scmp.ne.s32.totalorder %s20, %s23
    %p29 = scmp.eq.s32.totalorder %s10, 0
    %p30 = por %p28, %p29
    %p31 = scmp.ne.s32.totalorder %s20, %s23
    %p32 = scmp.eq.s32.totalorder %s15, 1
    %p33 = por %p31, %p32
    %p34 = scmp.ne.s32.totalorder %s23, %s24
    %p35 = scmp.eq.s32.totalorder %s15, 0
    %p36 = por %p34, %p35
    %p37 = scmp.ne.s32.totalorder %s23, %s24
    %p38 = scmp.eq.s32.totalorder %s16, 1
    %p39 = por %p37, %p38
    %p41 = scmp.ne.s32.totalorder %s24, %s40
    %p42 = scmp.eq.s32.totalorder %s16, 0
    %p43 = por %p41, %p42
    %s45 = sadd.s32 %s44, 1
    %p48 = scmp.eq.s32.totalorder %s10, 1
    %p49 = scmp.ne.s32.totalorder %s44, %s46
    %p50 = scmp.eq.s32.totalorder %s10, 0
    %p51 = por %p49, %p50
    %p52 = scmp.ne.s32.totalorder %s44, %s46
    %p53 = scmp.eq.s32.totalorder %s15, 1
    %p54 = por %p52, %p53
    %p55 = scmp.ne.s32.totalorder %s46, %s47
    %p56 = scmp.eq.s32.totalorder %s15, 0
    %p57 = por %p55, %p56
    %p58 = scmp.ne.s32.totalorder %s46, %s47
    %p59 = scmp.eq.s32.totalorder %s16, 1
    %p60 = por %p58, %p59
    %p62 = scmp.ne.s32.totalorder %s47, %s61
    %p63 = scmp.eq.s32.totalorder %s16, 0
    %p64 = por %p62, %p63
    %s65 = ssub.s32 %s10, %s17
    %p66 = scmp.eq.s32.totalorder %s65, 0
    %s68 = sadd.s32 %s67, 1
    %s69 = scalar_select %p66, %s67, %s68
    %p72 = pneg %p66
    %p73 = scmp.eq.s32.totalorder %s10, 1
    %p74 = por %p72, %p73
    %p75 = scmp.ne.s32.totalorder %s67, %s70
    %p76 = scmp.eq.s32.totalorder %s10, 0
    %p77 = por %p75, %p76
    %p78 = scmp.ne.s32.totalorder %s67, %s70
    %p79 = scmp.eq.s32.totalorder %s15, 1
    %p80 = por %p78, %p79
    %p81 = scmp.ne.s32.totalorder %s70, %s71
    %p82 = scmp.eq.s32.totalorder %s15, 0
    %p83 = por %p81, %p82
    %p84 = scmp.ne.s32.totalorder %s70, %s71
    %p85 = scmp.eq.s32.totalorder %s16, 1
    %p86 = por %p84, %p85
    %p88 = scmp.ne.s32.totalorder %s71, %s87
    %p89 = scmp.eq.s32.totalorder %s16, 0
    %p90 = por %p88, %p89
    %s91 = ssub.s32 %s10, %s17
    %p92 = scmp.eq.s32.totalorder %s91, 0
    %s94 = sadd.s32 %s93, 1
    %s95 = scalar_select %p92, %s93, %s94
    %p98 = pneg %p92
    %p99 = scmp.eq.s32.totalorder %s10, 1
    %p100 = por %p98, %p99
    %p101 = scmp.ne.s32.totalorder %s93, %s96
    %p102 = scmp.eq.s32.totalorder %s10, 0
    %p103 = por %p101, %p102
    %p104 = scmp.ne.s32.totalorder %s93, %s96
    %p105 = scmp.eq.s32.totalorder %s15, 1
    %p106 = por %p104, %p105
    %p107 = scmp.ne.s32.totalorder %s96, %s97
    %p108 = scmp.eq.s32.totalorder %s15, 0
    %p109 = por %p107, %p108
    %p110 = scmp.ne.s32.totalorder %s96, %s97
    %p111 = scmp.eq.s32.totalorder %s16, 1
    %p112 = por %p110, %p111
    %p114 = scmp.ne.s32.totalorder %s97, %s113
    %p115 = scmp.eq.s32.totalorder %s16, 0
    %p116 = por %p114, %p115
    %p117 = scmp.le.s32.totalorder 1, %s10
    %p118 = scmp.lt.s32.totalorder %s10, 3
    %p119 = pnand %p117, %p118
    %p120 = pneg %p119
    // Predicated region
    $region9: #{resnet_generator.20} parent=5 // pred_check
      _
    $region10: #{resnet_generator.20} parent=5 // pred_check_branch
      %122 = sbr.rel (%p119) target = $region12
    $region11: #{resnet_generator.20} parent=5 // pred_region
      %s123 = ssub.s32 %s10, 1
      // Predicated region
      $region13: #{resnet_generator.20} parent=11 // pred_check
        %p124 = pneg %p57
      $region14: #{resnet_generator.20} parent=11 // pred_check_branch
        %126 = sbr.rel (%p124) target = $region16
      $region15: #{resnet_generator.20} parent=11 // pred_region
        _
      $region16: #{resnet_generator.20} parent=11 // pred_fallthru
        _
    $region12: #{resnet_generator.20} parent=5 // pred_fallthru
      _
    %p127 = scmp.lt.s32.totalorder %s10, 2
    // Predicated region
    $region17: #{resnet_generator.20} parent=5 // pred_check
      %p128 = pneg %p127
    $region18: #{resnet_generator.20} parent=5 // pred_check_branch
      %130 = sbr.rel (%p128) target = $region20
    $region19: #{resnet_generator.20} parent=5 // pred_region
      // Predicated region
      $region21: #{resnet_generator.20} parent=19 // pred_check
        %p131 = pneg %p30
      $region22: #{resnet_generator.20} parent=19 // pred_check_branch
        %133 = sbr.rel (%p131) target = $region24
      $region23: #{resnet_generator.20} parent=19 // pred_region
        %s134 = smul.u32 32, %s10
        %p135 = scmp.lt.s32.totalorder %s134, 63
        %s136 = scalar_select %p135, %s134, 63
        %s137 = smul.addr %s136, 2
        %s138 = smul.addr %s137, 4
        %s139 = scalar_lea.vmem %s0, %s138
        %s140 = smul.u32 32, %s10
      $region24: #{resnet_generator.20} parent=19 // pred_fallthru
        _
    $region20: #{resnet_generator.20} parent=5 // pred_fallthru
      _
    %p141 = scmp.le.s32.totalorder 1, %s10
    %p142 = scmp.lt.s32.totalorder %s10, 3
    %p143 = pnand %p141, %p142
    %p144 = pneg %p143
    // Predicated region
    $region25: #{resnet_generator.20} parent=5 // pred_check
      _
    $region26: #{resnet_generator.20} parent=5 // pred_check_branch
      %146 = sbr.rel (%p143) target = $region28
    $region27: #{resnet_generator.20} parent=5 // pred_region
      %s147 = ssub.s32 %s10, 1
      %s148 = smul.u32 32, %s15
      %p149 = scmp.lt.s32.totalorder %s148, 63
      %s150 = scalar_select %p149, %s148, 63
      %s151 = smul.addr %s150, 2
      %s152 = smul.addr %s151, 4
      %s153 = scalar_lea.vmem %s0, %s152
      %p154 = pneg %p36
      %p155 = pneg %p33
      %p156 = pneg %p57
      %p157 = pneg %p54
      %p158 = pneg %p83
      %p159 = pneg %p80
      %s160 = smul.u32 32, %s15
      %p161 = scmp.lt.s32.totalorder %s160, 63
      %s162 = scalar_select %p161, %s160, 63
      %s163 = smul.addr %s162, 4
      %s164 = scalar_lea.vmem %s2, %s163
      %p165 = pneg %p109
      %p166 = pneg %p106
      %p167 = scmp.lt.s32.totalorder %s15, 1
      %s168 = scalar_select %p167, %s15, 1
      %s169 = smul.addr %s168, 8
      %s170 = scalar_lea.vmem %s3, %s169
      %s171 = smul.u32 32, %s15
      %p172 = scmp.lt.s32.totalorder %s171, 63
      %s173 = scalar_select %p172, %s171, 63
      %s174 = smul.addr %s173, 2
      %s175 = smul.addr %s174, 4
      %s176 = scalar_lea.vmem %s0, %s175
      %s177 = smul.u32 32, %s15
      %s178 = smul.u32 32, %s15
      %p179 = scmp.lt.s32.totalorder %s178, 63
      %s180 = scalar_select %p179, %s178, 63
      %s181 = smul.addr %s180, 4
      %s182 = scalar_lea.vmem %s2, %s181
      %s183 = smul.u32 32, %s15
      %p184 = scmp.lt.s32.totalorder %s15, 1
      %s185 = scalar_select %p184, %s15, 1
      %s186 = smul.addr %s185, 8
      %s187 = scalar_lea.vmem %s3, %s186
      %v189 = vld [vmem:[%s176] sm:$0xff]
      %v190 = vld [vmem:[%s176 + $0x8] sm:$0xff]
      %v191 = vld [vmem:[%s176 + $0x10] sm:$0xff]
      %v192 = vld [vmem:[%s176 + $0x18] sm:$0xff]
      %v193 = vld [vmem:[%s176 + $0x20] sm:$0xff]
      %v194 = vld [vmem:[%s176 + $0x28] sm:$0xff]
      %v195 = vld [vmem:[%s176 + $0x30] sm:$0xff]
      %v196 = vld [vmem:[%s176 + $0x38] sm:$0xff]
      %v197 = vld [vmem:[%s176 + $0x40] sm:$0xff]
      %v198 = vld [vmem:[%s176 + $0x48] sm:$0xff]
      %v199 = vld [vmem:[%s176 + $0x50] sm:$0xff]
      %v200 = vld [vmem:[%s176 + $0x58] sm:$0xff]
      %v201 = vld [vmem:[%s176 + $0x60] sm:$0xff]
      %v202 = vld [vmem:[%s176 + $0x68] sm:$0xff]
      %v203 = vld [vmem:[%s176 + $0x70] sm:$0xff]
      %v204 = vld [vmem:[%s176 + $0x78] sm:$0xff]
      %v205 = vld [vmem:[%s176 + $0x80] sm:$0xff]
      %v206 = vld [vmem:[%s176 + $0x88] sm:$0xff]
      %v207 = vld [vmem:[%s176 + $0x90] sm:$0xff]
      %v208 = vld [vmem:[%s176 + $0x98] sm:$0xff]
      %v209 = vld [vmem:[%s176 + $0xa0] sm:$0xff]
      %v210 = vld [vmem:[%s176 + $0xa8] sm:$0xff]
      %v211 = vld [vmem:[%s176 + $0xb0] sm:$0xff]
      %v212 = vld [vmem:[%s176 + $0xb8] sm:$0xff]
      %v213 = vld [vmem:[%s176 + $0xc0] sm:$0xff]
      %v214 = vld [vmem:[%s176 + $0xc8] sm:$0xff]
      %v215 = vld [vmem:[%s176 + $0xd0] sm:$0xff]
      %v216 = vld [vmem:[%s176 + $0xd8] sm:$0xff]
      %v217 = vld [vmem:[%s176 + $0xe0] sm:$0xff]
      %v218 = vld [vmem:[%s176 + $0xe8] sm:$0xff]
      %v219 = vld [vmem:[%s176 + $0xf0] sm:$0xff]
      %v220 = vld [vmem:[%s176 + $0xf8] sm:$0xff]
      %v221 = vld [vmem:[%s1] sm:$0xf]
      %v222 = vld [vmem:[%s1 + $0x4] sm:$0xf]
      %v223 = vld [vmem:[%s1 + $0x8] sm:$0xf]
      %v224 = vld [vmem:[%s1 + $0xc] sm:$0xf]
      %v225 = vld [vmem:[%s1 + $0x10] sm:$0xf]
      %v226 = vld [vmem:[%s1 + $0x14] sm:$0xf]
      %v227 = vld [vmem:[%s1 + $0x18] sm:$0xf]
      %v228 = vld [vmem:[%s1 + $0x1c] sm:$0xf]
      %v229 = vld [vmem:[%s1 + $0x20] sm:$0xf]
      %v230 = vld [vmem:[%s1 + $0x24] sm:$0xf]
      %v231 = vld [vmem:[%s1 + $0x28] sm:$0xf]
      %v232 = vld [vmem:[%s1 + $0x2c] sm:$0xf]
      %v233 = vld [vmem:[%s1 + $0x30] sm:$0xf]
      %v234 = vld [vmem:[%s1 + $0x34] sm:$0xf]
      %v235 = vld [vmem:[%s1 + $0x38] sm:$0xf]
      %v236 = vld [vmem:[%s1 + $0x3c] sm:$0xf]
      %v237 = vld [vmem:[%s1 + $0x40] sm:$0xf]
      %v238 = vld [vmem:[%s1 + $0x44] sm:$0xf]
      %v239 = vld [vmem:[%s1 + $0x48] sm:$0xf]
      %v240 = vld [vmem:[%s1 + $0x4c] sm:$0xf]
      %v241 = vld [vmem:[%s1 + $0x50] sm:$0xf]
      %v242 = vld [vmem:[%s1 + $0x54] sm:$0xf]
      %v243 = vld [vmem:[%s1 + $0x58] sm:$0xf]
      %v244 = vld [vmem:[%s1 + $0x5c] sm:$0xf]
      %v245 = vld [vmem:[%s1 + $0x60] sm:$0xf]
      %v246 = vld [vmem:[%s1 + $0x64] sm:$0xf]
      %v247 = vld [vmem:[%s1 + $0x68] sm:$0xf]
      %v248 = vld [vmem:[%s1 + $0x6c] sm:$0xf]
      %v249 = vld [vmem:[%s1 + $0x70] sm:$0xf]
      %v250 = vld [vmem:[%s1 + $0x74] sm:$0xf]
      %v251 = vld [vmem:[%s1 + $0x78] sm:$0xf]
      %v252 = vld [vmem:[%s1 + $0x7c] sm:$0xf]
      %v285 = vunpack.c.l.b16 %v189
      %v286 = vunpack.c.h.b16 %v189
      %v287 = vunpack.c.l.b16 %v190
      %v288 = vunpack.c.h.b16 %v190
      %v289 = vunpack.c.l.b16 %v191
      %v290 = vunpack.c.h.b16 %v191
      %v291 = vunpack.c.l.b16 %v192
      %v292 = vunpack.c.h.b16 %v192
      %v293 = vunpack.c.l.b16 %v193
      %v294 = vunpack.c.h.b16 %v193
      %v295 = vunpack.c.l.b16 %v194
      %v296 = vunpack.c.h.b16 %v194
      %v297 = vunpack.c.l.b16 %v195
      %v298 = vunpack.c.h.b16 %v195
      %v299 = vunpack.c.l.b16 %v196
      %v300 = vunpack.c.h.b16 %v196
      %v301 = vunpack.c.l.b16 %v197
      %v302 = vunpack.c.h.b16 %v197
      %v303 = vunpack.c.l.b16 %v198
      %v304 = vunpack.c.h.b16 %v198
      %v305 = vunpack.c.l.b16 %v199
      %v306 = vunpack.c.h.b16 %v199
      %v307 = vunpack.c.l.b16 %v200
      %v308 = vunpack.c.h.b16 %v200
      %v309 = vunpack.c.l.b16 %v201
      %v310 = vunpack.c.h.b16 %v201
      %v311 = vunpack.c.l.b16 %v202
      %v312 = vunpack.c.h.b16 %v202
      %v313 = vunpack.c.l.b16 %v203
      %v314 = vunpack.c.h.b16 %v203
      %v315 = vunpack.c.l.b16 %v204
      %v316 = vunpack.c.h.b16 %v204
      %v317 = vunpack.c.l.b16 %v205
      %v318 = vunpack.c.h.b16 %v205
      %v319 = vunpack.c.l.b16 %v206
      %v320 = vunpack.c.h.b16 %v206
      %v321 = vunpack.c.l.b16 %v207
      %v322 = vunpack.c.h.b16 %v207
      %v323 = vunpack.c.l.b16 %v208
      %v324 = vunpack.c.h.b16 %v208
      %v325 = vunpack.c.l.b16 %v209
      %v326 = vunpack.c.h.b16 %v209
      %v327 = vunpack.c.l.b16 %v210
      %v328 = vunpack.c.h.b16 %v210
      %v329 = vunpack.c.l.b16 %v211
      %v330 = vunpack.c.h.b16 %v211
      %v331 = vunpack.c.l.b16 %v212
      %v332 = vunpack.c.h.b16 %v212
      %v333 = vunpack.c.l.b16 %v213
      %v334 = vunpack.c.h.b16 %v213
      %v335 = vunpack.c.l.b16 %v214
      %v336 = vunpack.c.h.b16 %v214
      %v337 = vunpack.c.l.b16 %v215
      %v338 = vunpack.c.h.b16 %v215
      %v339 = vunpack.c.l.b16 %v216
      %v340 = vunpack.c.h.b16 %v216
      %v341 = vunpack.c.l.b16 %v217
      %v342 = vunpack.c.h.b16 %v217
      %v343 = vunpack.c.l.b16 %v218
      %v344 = vunpack.c.h.b16 %v218
      %v345 = vunpack.c.l.b16 %v219
      %v346 = vunpack.c.h.b16 %v219
      %v347 = vunpack.c.l.b16 %v220
      %v348 = vunpack.c.h.b16 %v220
      %v349 = vpack.c.b16 %v287, %v285
      %v350 = vpack.c.b16 %v288, %v286
      %v351 = vpack.c.b16 %v291, %v289
      %v352 = vpack.c.b16 %v292, %v290
      %v353 = vpack.c.b16 %v295, %v293
      %v354 = vpack.c.b16 %v296, %v294
      %v355 = vpack.c.b16 %v299, %v297
      %v356 = vpack.c.b16 %v300, %v298
      %v357 = vpack.c.b16 %v303, %v301
      %v358 = vpack.c.b16 %v304, %v302
      %v359 = vpack.c.b16 %v307, %v305
      %v360 = vpack.c.b16 %v308, %v306
      %v361 = vpack.c.b16 %v311, %v309
      %v362 = vpack.c.b16 %v312, %v310
      %v363 = vpack.c.b16 %v315, %v313
      %v364 = vpack.c.b16 %v316, %v314
      %v365 = vpack.c.b16 %v319, %v317
      %v366 = vpack.c.b16 %v320, %v318
      %v367 = vpack.c.b16 %v323, %v321
      %v368 = vpack.c.b16 %v324, %v322
      %v369 = vpack.c.b16 %v327, %v325
      %v370 = vpack.c.b16 %v328, %v326
      %v371 = vpack.c.b16 %v331, %v329
      %v372 = vpack.c.b16 %v332, %v330
      %v373 = vpack.c.b16 %v335, %v333
      %v374 = vpack.c.b16 %v336, %v334
      %v375 = vpack.c.b16 %v339, %v337
      %v376 = vpack.c.b16 %v340, %v338
      %v377 = vpack.c.b16 %v343, %v341
      %v378 = vpack.c.b16 %v344, %v342
      %v379 = vpack.c.b16 %v347, %v345
      %v380 = vpack.c.b16 %v348, %v346
      %v445 = vunpack.c.l.b16 %v221
      %v446 = vunpack.c.l.b16 %v222
      %v447 = vunpack.c.l.b16 %v223
      %v448 = vunpack.c.l.b16 %v224
      %v449 = vunpack.c.l.b16 %v225
      %v450 = vunpack.c.l.b16 %v226
      %v451 = vunpack.c.l.b16 %v227
      %v452 = vunpack.c.l.b16 %v228
      %v453 = vunpack.c.l.b16 %v229
      %v454 = vunpack.c.l.b16 %v230
      %v455 = vunpack.c.l.b16 %v231
      %v456 = vunpack.c.l.b16 %v232
      %v457 = vunpack.c.l.b16 %v233
      %v458 = vunpack.c.l.b16 %v234
      %v459 = vunpack.c.l.b16 %v235
      %v460 = vunpack.c.l.b16 %v236
      %v461 = vunpack.c.l.b16 %v237
      %v462 = vunpack.c.l.b16 %v238
      %v463 = vunpack.c.l.b16 %v239
      %v464 = vunpack.c.l.b16 %v240
      %v465 = vunpack.c.l.b16 %v241
      %v466 = vunpack.c.l.b16 %v242
      %v467 = vunpack.c.l.b16 %v243
      %v468 = vunpack.c.l.b16 %v244
      %v469 = vunpack.c.l.b16 %v245
      %v470 = vunpack.c.l.b16 %v246
      %v471 = vunpack.c.l.b16 %v247
      %v472 = vunpack.c.l.b16 %v248
      %v473 = vunpack.c.l.b16 %v249
      %v474 = vunpack.c.l.b16 %v250
      %v475 = vunpack.c.l.b16 %v251
      %v476 = vunpack.c.l.b16 %v252
      %v477 = vpack.c.b16 %v446, %v445
      %v478 = vpack.c.b16 %v448, %v447
      %v479 = vpack.c.b16 %v450, %v449
      %v480 = vpack.c.b16 %v452, %v451
      %v481 = vpack.c.b16 %v454, %v453
      %v482 = vpack.c.b16 %v456, %v455
      %v483 = vpack.c.b16 %v458, %v457
      %v484 = vpack.c.b16 %v460, %v459
      %v485 = vpack.c.b16 %v462, %v461
      %v486 = vpack.c.b16 %v464, %v463
      %v487 = vpack.c.b16 %v466, %v465
      %v488 = vpack.c.b16 %v468, %v467
      %v489 = vpack.c.b16 %v470, %v469
      %v490 = vpack.c.b16 %v472, %v471
      %v491 = vpack.c.b16 %v474, %v473
      %v492 = vpack.c.b16 %v476, %v475
      %509 = vmatprep.subr.bf16.mxu0 0
      %510 = vmatpush1.bf16.msra.mxu0 %v484
      %511 = vmatprep.subr.bf16.mxu0 0
      %512 = vmatpush1.bf16.msra.mxu0 %v483
      %513 = vmatprep.subr.bf16.mxu0 0
      %514 = vmatpush1.bf16.msra.mxu0 %v482
      %515 = vmatprep.subr.bf16.mxu0 0
      %516 = vmatpush1.bf16.msra.mxu0 %v481
      %517 = vmatprep.subr.bf16.mxu0 0
      %518 = vmatpush1.bf16.msra.mxu0 %v480
      %519 = vmatprep.subr.bf16.mxu0 0
      %520 = vmatpush1.bf16.msra.mxu0 %v479
      %521 = vmatprep.subr.bf16.mxu0 0
      %522 = vmatpush1.bf16.msra.mxu0 %v478
      %523 = vmatprep.subr.bf16.mxu0 0
      %524 = vmatpush1.bf16.msra.mxu0 %v477
      %525 = vmatprep.subr.bf16.mxu0 0
      %526 = vmatpush2.bf16.msra.mxu0 %v492
      %527 = vmatprep.subr.bf16.mxu0 0
      %528 = vmatpush2.bf16.msra.mxu0 %v491
      %529 = vmatprep.subr.bf16.mxu0 0
      %530 = vmatpush2.bf16.msra.mxu0 %v490
      %531 = vmatprep.subr.bf16.mxu0 0
      %532 = vmatpush2.bf16.msra.mxu0 %v489
      %533 = vmatprep.subr.bf16.mxu0 0
      %534 = vmatpush2.bf16.msra.mxu0 %v488
      %535 = vmatprep.subr.bf16.mxu0 0
      %536 = vmatpush2.bf16.msra.mxu0 %v487
      %537 = vmatprep.subr.bf16.mxu0 0
      %538 = vmatpush2.bf16.msra.mxu0 %v486
      %539 = vmatprep.subr.bf16.mxu0 0
      %540 = vmatpush2.bf16.msra.mxu0 %v485
      %541 = vmatprep.mubr.bf16.mxu0 %v350
      %542 = vmatmul.mubr.bf16.gmra.mxu0 %v349
      %v543 = vpop.f32.mrf.mxu0
      %v544 = vadd.f32 0.0, %v543
      %v545 = vpop.f32.mrf.mxu0
      %v546 = vpop.f32.mrf.mxu0
      %v547 = vadd.f32 0.0, %v546
      %v548 = vpop.f32.mrf.mxu0
      %549 = vmatprep.mubr.bf16.mxu0 %v352
      %550 = vmatmul.mubr.bf16.gmra.mxu0 %v351
      %v551 = vpop.f32.mrf.mxu0
      %v552 = vadd.f32 0.0, %v551
      %v553 = vpop.f32.mrf.mxu0
      %v554 = vpop.f32.mrf.mxu0
      %v555 = vadd.f32 0.0, %v554
      %v556 = vpop.f32.mrf.mxu0
      %557 = vmatprep.mubr.bf16.mxu0 %v354
      %558 = vmatmul.mubr.bf16.gmra.mxu0 %v353
      %v559 = vpop.f32.mrf.mxu0
      %v560 = vadd.f32 0.0, %v559
      %v561 = vpop.f32.mrf.mxu0
      %v562 = vpop.f32.mrf.mxu0
      %v563 = vadd.f32 0.0, %v562
      %v564 = vpop.f32.mrf.mxu0
      %565 = vmatprep.mubr.bf16.mxu0 %v356
      %566 = vmatmul.mubr.bf16.gmra.mxu0 %v355
      %v567 = vpop.f32.mrf.mxu0
      %v568 = vadd.f32 0.0, %v567
      %v569 = vpop.f32.mrf.mxu0
      %v570 = vpop.f32.mrf.mxu0
      %v571 = vadd.f32 0.0, %v570
      %v572 = vpop.f32.mrf.mxu0
      %573 = vmatprep.mubr.bf16.mxu0 %v358
      %574 = vmatmul.mubr.bf16.gmra.mxu0 %v357
      %v575 = vpop.f32.mrf.mxu0
      %v576 = vadd.f32 0.0, %v575
      %v577 = vpop.f32.mrf.mxu0
      %v578 = vpop.f32.mrf.mxu0
      %v579 = vadd.f32 0.0, %v578
      %v580 = vpop.f32.mrf.mxu0
      %581 = vmatprep.mubr.bf16.mxu0 %v360
      %582 = vmatmul.mubr.bf16.gmra.mxu0 %v359
      %v583 = vpop.f32.mrf.mxu0
      %v584 = vadd.f32 0.0, %v583
      %v585 = vpop.f32.mrf.mxu0
      %v586 = vpop.f32.mrf.mxu0
      %v587 = vadd.f32 0.0, %v586
      %v588 = vpop.f32.mrf.mxu0
      %589 = vmatprep.mubr.bf16.mxu0 %v362
      %590 = vmatmul.mubr.bf16.gmra.mxu0 %v361
      %v591 = vpop.f32.mrf.mxu0
      %v592 = vadd.f32 0.0, %v591
      %v593 = vpop.f32.mrf.mxu0
      %v594 = vpop.f32.mrf.mxu0
      %v595 = vadd.f32 0.0, %v594
      %v596 = vpop.f32.mrf.mxu0
      %597 = vmatprep.mubr.bf16.mxu0 %v364
      %598 = vmatmul.mubr.bf16.gmra.mxu0 %v363
      %v599 = vpop.f32.mrf.mxu0
      %v600 = vadd.f32 0.0, %v599
      %v601 = vpop.f32.mrf.mxu0
      %v602 = vpop.f32.mrf.mxu0
      %v603 = vadd.f32 0.0, %v602
      %v604 = vpop.f32.mrf.mxu0
      %605 = vmatprep.mubr.bf16.mxu0 %v366
      %606 = vmatmul.mubr.bf16.gmra.mxu0 %v365
      %v607 = vpop.f32.mrf.mxu0
      %v608 = vadd.f32 0.0, %v607
      %v609 = vpop.f32.mrf.mxu0
      %v610 = vpop.f32.mrf.mxu0
      %v611 = vadd.f32 0.0, %v610
      %v612 = vpop.f32.mrf.mxu0
      %613 = vmatprep.mubr.bf16.mxu0 %v368
      %614 = vmatmul.mubr.bf16.gmra.mxu0 %v367
      %v615 = vpop.f32.mrf.mxu0
      %v616 = vadd.f32 0.0, %v615
      %v617 = vpop.f32.mrf.mxu0
      %v618 = vpop.f32.mrf.mxu0
      %v619 = vadd.f32 0.0, %v618
      %v620 = vpop.f32.mrf.mxu0
      %621 = vmatprep.mubr.bf16.mxu0 %v370
      %622 = vmatmul.mubr.bf16.gmra.mxu0 %v369
      %v623 = vpop.f32.mrf.mxu0
      %v624 = vadd.f32 0.0, %v623
      %v625 = vpop.f32.mrf.mxu0
      %v626 = vpop.f32.mrf.mxu0
      %v627 = vadd.f32 0.0, %v626
      %v628 = vpop.f32.mrf.mxu0
      %629 = vmatprep.mubr.bf16.mxu0 %v372
      %630 = vmatmul.mubr.bf16.gmra.mxu0 %v371
      %v631 = vpop.f32.mrf.mxu0
      %v632 = vadd.f32 0.0, %v631
      %v633 = vpop.f32.mrf.mxu0
      %v634 = vpop.f32.mrf.mxu0
      %v635 = vadd.f32 0.0, %v634
      %v636 = vpop.f32.mrf.mxu0
      %637 = vmatprep.mubr.bf16.mxu0 %v374
      %638 = vmatmul.mubr.bf16.gmra.mxu0 %v373
      %v639 = vpop.f32.mrf.mxu0
      %v640 = vadd.f32 0.0, %v639
      %v641 = vpop.f32.mrf.mxu0
      %v642 = vpop.f32.mrf.mxu0
      %v643 = vadd.f32 0.0, %v642
      %v644 = vpop.f32.mrf.mxu0
      %645 = vmatprep.mubr.bf16.mxu0 %v376
      %646 = vmatmul.mubr.bf16.gmra.mxu0 %v375
      %v647 = vpop.f32.mrf.mxu0
      %v648 = vadd.f32 0.0, %v647
      %v649 = vpop.f32.mrf.mxu0
      %v650 = vpop.f32.mrf.mxu0
      %v651 = vadd.f32 0.0, %v650
      %v652 = vpop.f32.mrf.mxu0
      %653 = vmatprep.mubr.bf16.mxu0 %v378
      %654 = vmatmul.mubr.bf16.gmra.mxu0 %v377
      %v655 = vpop.f32.mrf.mxu0
      %v656 = vadd.f32 0.0, %v655
      %v657 = vpop.f32.mrf.mxu0
      %v658 = vpop.f32.mrf.mxu0
      %v659 = vadd.f32 0.0, %v658
      %v660 = vpop.f32.mrf.mxu0
      %661 = vmatprep.mubr.bf16.mxu0 %v380
      %662 = vmatmul.mubr.bf16.gmra.mxu0 %v379
      %v663 = vpop.f32.mrf.mxu0
      %v664 = vadd.f32 0.0, %v663
      %v665 = vpop.f32.mrf.mxu0
      %v666 = vpop.f32.mrf.mxu0
      %v667 = vadd.f32 0.0, %v666
      %v668 = vpop.f32.mrf.mxu0
      %669 = vdwg.mxu0
      %v670 = vpack.c.bf16 %v547, %v544
      %v671 = vpack.c.bf16 %v555, %v552
      %v672 = vpack.c.bf16 %v563, %v560
      %v673 = vpack.c.bf16 %v571, %v568
      %v674 = vpack.c.bf16 %v579, %v576
      %v675 = vpack.c.bf16 %v587, %v584
      %v676 = vpack.c.bf16 %v595, %v592
      %v677 = vpack.c.bf16 %v603, %v600
      %v678 = vpack.c.bf16 %v611, %v608
      %v679 = vpack.c.bf16 %v619, %v616
      %v680 = vpack.c.bf16 %v627, %v624
      %v681 = vpack.c.bf16 %v635, %v632
      %v682 = vpack.c.bf16 %v643, %v640
      %v683 = vpack.c.bf16 %v651, %v648
      %v684 = vpack.c.bf16 %v659, %v656
      %v685 = vpack.c.bf16 %v667, %v664
      %v702 = vunpack.c.l.b16 %v670
      %v703 = vunpack.c.h.b16 %v670
      %v704 = vunpack.c.l.b16 %v671
      %v705 = vunpack.c.h.b16 %v671
      %v706 = vunpack.c.l.b16 %v672
      %v707 = vunpack.c.h.b16 %v672
      %v708 = vunpack.c.l.b16 %v673
      %v709 = vunpack.c.h.b16 %v673
      %v710 = vunpack.c.l.b16 %v674
      %v711 = vunpack.c.h.b16 %v674
      %v712 = vunpack.c.l.b16 %v675
      %v713 = vunpack.c.h.b16 %v675
      %v714 = vunpack.c.l.b16 %v676
      %v715 = vunpack.c.h.b16 %v676
      %v716 = vunpack.c.l.b16 %v677
      %v717 = vunpack.c.h.b16 %v677
      %v718 = vunpack.c.l.b16 %v678
      %v719 = vunpack.c.h.b16 %v678
      %v720 = vunpack.c.l.b16 %v679
      %v721 = vunpack.c.h.b16 %v679
      %v722 = vunpack.c.l.b16 %v680
      %v723 = vunpack.c.h.b16 %v680
      %v724 = vunpack.c.l.b16 %v681
      %v725 = vunpack.c.h.b16 %v681
      %v726 = vunpack.c.l.b16 %v682
      %v727 = vunpack.c.h.b16 %v682
      %v728 = vunpack.c.l.b16 %v683
      %v729 = vunpack.c.h.b16 %v683
      %v730 = vunpack.c.l.b16 %v684
      %v731 = vunpack.c.h.b16 %v684
      %v732 = vunpack.c.l.b16 %v685
      %v733 = vunpack.c.h.b16 %v685
      %v734 = vpack.c.b16 %v702, %v702
      %v735 = vpack.c.b16 %v703, %v703
      %v736 = vpack.c.b16 %v704, %v704
      %v737 = vpack.c.b16 %v705, %v705
      %v738 = vpack.c.b16 %v706, %v706
      %v739 = vpack.c.b16 %v707, %v707
      %v740 = vpack.c.b16 %v708, %v708
      %v741 = vpack.c.b16 %v709, %v709
      %v742 = vpack.c.b16 %v710, %v710
      %v743 = vpack.c.b16 %v711, %v711
      %v744 = vpack.c.b16 %v712, %v712
      %v745 = vpack.c.b16 %v713, %v713
      %v746 = vpack.c.b16 %v714, %v714
      %v747 = vpack.c.b16 %v715, %v715
      %v748 = vpack.c.b16 %v716, %v716
      %v749 = vpack.c.b16 %v717, %v717
      %v750 = vpack.c.b16 %v718, %v718
      %v751 = vpack.c.b16 %v719, %v719
      %v752 = vpack.c.b16 %v720, %v720
      %v753 = vpack.c.b16 %v721, %v721
      %v754 = vpack.c.b16 %v722, %v722
      %v755 = vpack.c.b16 %v723, %v723
      %v756 = vpack.c.b16 %v724, %v724
      %v757 = vpack.c.b16 %v725, %v725
      %v758 = vpack.c.b16 %v726, %v726
      %v759 = vpack.c.b16 %v727, %v727
      %v760 = vpack.c.b16 %v728, %v728
      %v761 = vpack.c.b16 %v729, %v729
      %v762 = vpack.c.b16 %v730, %v730
      %v763 = vpack.c.b16 %v731, %v731
      %v764 = vpack.c.b16 %v732, %v732
      %v765 = vpack.c.b16 %v733, %v733
      %798 = vst [vmem:[%s182] sm:$0xf] %v734
      %799 = vst [vmem:[%s182 + $0x4] sm:$0xf] %v735
      %800 = vst [vmem:[%s182 + $0x8] sm:$0xf] %v736
      %801 = vst [vmem:[%s182 + $0xc] sm:$0xf] %v737
      %802 = vst [vmem:[%s182 + $0x10] sm:$0xf] %v738
      %803 = vst [vmem:[%s182 + $0x14] sm:$0xf] %v739
      %804 = vst [vmem:[%s182 + $0x18] sm:$0xf] %v740
      %805 = vst [vmem:[%s182 + $0x1c] sm:$0xf] %v741
      %806 = vst [vmem:[%s182 + $0x20] sm:$0xf] %v742
      %807 = vst [vmem:[%s182 + $0x24] sm:$0xf] %v743
      %808 = vst [vmem:[%s182 + $0x28] sm:$0xf] %v744
      %809 = vst [vmem:[%s182 + $0x2c] sm:$0xf] %v745
      %810 = vst [vmem:[%s182 + $0x30] sm:$0xf] %v746
      %811 = vst [vmem:[%s182 + $0x34] sm:$0xf] %v747
      %812 = vst [vmem:[%s182 + $0x38] sm:$0xf] %v748
      %813 = vst [vmem:[%s182 + $0x3c] sm:$0xf] %v749
      %814 = vst [vmem:[%s182 + $0x40] sm:$0xf] %v750
      %815 = vst [vmem:[%s182 + $0x44] sm:$0xf] %v751
      %816 = vst [vmem:[%s182 + $0x48] sm:$0xf] %v752
      %817 = vst [vmem:[%s182 + $0x4c] sm:$0xf] %v753
      %818 = vst [vmem:[%s182 + $0x50] sm:$0xf] %v754
      %819 = vst [vmem:[%s182 + $0x54] sm:$0xf] %v755
      %820 = vst [vmem:[%s182 + $0x58] sm:$0xf] %v756
      %821 = vst [vmem:[%s182 + $0x5c] sm:$0xf] %v757
      %822 = vst [vmem:[%s182 + $0x60] sm:$0xf] %v758
      %823 = vst [vmem:[%s182 + $0x64] sm:$0xf] %v759
      %824 = vst [vmem:[%s182 + $0x68] sm:$0xf] %v760
      %825 = vst [vmem:[%s182 + $0x6c] sm:$0xf] %v761
      %826 = vst [vmem:[%s182 + $0x70] sm:$0xf] %v762
      %827 = vst [vmem:[%s182 + $0x74] sm:$0xf] %v763
      %828 = vst [vmem:[%s182 + $0x78] sm:$0xf] %v764
      %829 = vst [vmem:[%s182 + $0x7c] sm:$0xf] %v765
      %v830 = vadd.f32 %v544, %v547
      %v831 = vadd.f32 %v830, %v552
      %v832 = vadd.f32 %v831, %v555
      %v833 = vadd.f32 %v832, %v560
      %v834 = vadd.f32 %v833, %v563
      %v835 = vadd.f32 %v834, %v568
      %v836 = vadd.f32 %v835, %v571
      %v837 = vadd.f32 %v836, %v576
      %v838 = vadd.f32 %v837, %v579
      %v839 = vadd.f32 %v838, %v584
      %v840 = vadd.f32 %v839, %v587
      %v841 = vadd.f32 %v840, %v592
      %v842 = vadd.f32 %v841, %v595
      %v843 = vadd.f32 %v842, %v600
      %v844 = vadd.f32 %v843, %v603
      %v845 = vadd.f32 %v844, %v608
      %v846 = vadd.f32 %v845, %v611
      %v847 = vadd.f32 %v846, %v616
      %v848 = vadd.f32 %v847, %v619
      %v849 = vadd.f32 %v848, %v624
      %v850 = vadd.f32 %v849, %v627
      %v851 = vadd.f32 %v850, %v632
      %v852 = vadd.f32 %v851, %v635
      %v853 = vadd.f32 %v852, %v640
      %v854 = vadd.f32 %v853, %v643
      %v855 = vadd.f32 %v854, %v648
      %v856 = vadd.f32 %v855, %v651
      %v857 = vadd.f32 %v856, %v656
      %v858 = vadd.f32 %v857, %v659
      %v859 = vadd.f32 %v858, %v664
      %v860 = vadd.f32 %v859, %v667
      %v861 = vrot.slane %v860, 4
      %v862 = vadd.f32 %v860, %v861
      %v863 = vrot.slane %v862, 2
      %v864 = vadd.f32 %v862, %v863
      %v865 = vrot.slane %v864, 1
      %v866 = vadd.f32 %v864, %v865
      %v867 = vmul.f32 %v544, %v544
      %v868 = vmul.f32 %v547, %v547
      %v869 = vmul.f32 %v552, %v552
      %v870 = vmul.f32 %v555, %v555
      %v871 = vmul.f32 %v560, %v560
      %v872 = vmul.f32 %v563, %v563
      %v873 = vmul.f32 %v568, %v568
      %v874 = vmul.f32 %v571, %v571
      %v875 = vmul.f32 %v576, %v576
      %v876 = vmul.f32 %v579, %v579
      %v877 = vmul.f32 %v584, %v584
      %v878 = vmul.f32 %v587, %v587
      %v879 = vmul.f32 %v592, %v592
      %v880 = vmul.f32 %v595, %v595
      %v881 = vmul.f32 %v600, %v600
      %v882 = vmul.f32 %v603, %v603
      %v883 = vmul.f32 %v608, %v608
      %v884 = vmul.f32 %v611, %v611
      %v885 = vmul.f32 %v616, %v616
      %v886 = vmul.f32 %v619, %v619
      %v887 = vmul.f32 %v624, %v624
      %v888 = vmul.f32 %v627, %v627
      %v889 = vmul.f32 %v632, %v632
      %v890 = vmul.f32 %v635, %v635
      %v891 = vmul.f32 %v640, %v640
      %v892 = vmul.f32 %v643, %v643
      %v893 = vmul.f32 %v648, %v648
      %v894 = vmul.f32 %v651, %v651
      %v895 = vmul.f32 %v656, %v656
      %v896 = vmul.f32 %v659, %v659
      %v897 = vmul.f32 %v664, %v664
      %v898 = vmul.f32 %v667, %v667
      %v899 = vadd.f32 %v867, %v868
      %v900 = vadd.f32 %v899, %v869
      %v901 = vadd.f32 %v900, %v870
      %v902 = vadd.f32 %v901, %v871
      %v903 = vadd.f32 %v902, %v872
      %v904 = vadd.f32 %v903, %v873
      %v905 = vadd.f32 %v904, %v874
      %v906 = vadd.f32 %v905, %v875
      %v907 = vadd.f32 %v906, %v876
      %v908 = vadd.f32 %v907, %v877
      %v909 = vadd.f32 %v908, %v878
      %v910 = vadd.f32 %v909, %v879
      %v911 = vadd.f32 %v910, %v880
      %v912 = vadd.f32 %v911, %v881
      %v913 = vadd.f32 %v912, %v882
      %v914 = vadd.f32 %v913, %v883
      %v915 = vadd.f32 %v914, %v884
      %v916 = vadd.f32 %v915, %v885
      %v917 = vadd.f32 %v916, %v886
      %v918 = vadd.f32 %v917, %v887
      %v919 = vadd.f32 %v918, %v888
      %v920 = vadd.f32 %v919, %v889
      %v921 = vadd.f32 %v920, %v890
      %v922 = vadd.f32 %v921, %v891
      %v923 = vadd.f32 %v922, %v892
      %v924 = vadd.f32 %v923, %v893
      %v925 = vadd.f32 %v924, %v894
      %v926 = vadd.f32 %v925, %v895
      %v927 = vadd.f32 %v926, %v896
      %v928 = vadd.f32 %v927, %v897
      %v929 = vadd.f32 %v928, %v898
      %v930 = vrot.slane %v929, 4
      %v931 = vadd.f32 %v929, %v930
      %v932 = vrot.slane %v931, 2
      %v933 = vadd.f32 %v931, %v932
      %v934 = vrot.slane %v933, 1
      %v935 = vadd.f32 %v933, %v934
      %vm936 = vcmask 1040384
      %v937 = vsel %vm936, %v866, %v935
      %vm938 = vcmask 1041408
      %v939 = vsel %vm938, %v937, 0.0
      %940 = vst [vmem:[%s187] sm:$0xff] %v939
      %s941 = smul.u32 32, %s15
      %p942 = scmp.lt.s32.totalorder %s941, 63
      %s943 = scalar_select %p942, %s941, 63
      %s944 = smul.addr %s943, 4
      %s945 = scalar_lea.vmem %s2, %s944
      %p946 = scmp.lt.s32.totalorder %s15, 1
      %s947 = scalar_select %p946, %s15, 1
      %s948 = smul.addr %s947, 8
      %s949 = scalar_lea.vmem %s3, %s948
      // Predicated region
      $region29: #{resnet_generator.20} parent=27 // pred_check
        %p950 = pneg %p80
      $region30: #{resnet_generator.20} parent=27 // pred_check_branch
        %952 = sbr.rel (%p950) target = $region32
      $region31: #{resnet_generator.20} parent=27 // pred_region
        %s953 = smul.u32 32, %s15
      $region32: #{resnet_generator.20} parent=27 // pred_fallthru
        _
      // Predicated region
      $region33: #{resnet_generator.20} parent=27 // pred_check
        %p954 = pneg %p106
      $region34: #{resnet_generator.20} parent=27 // pred_check_branch
        %956 = sbr.rel (%p954) target = $region36
      $region35: #{resnet_generator.20} parent=27 // pred_region
        _
      $region36: #{resnet_generator.20} parent=27 // pred_fallthru
        _
    $region28: #{resnet_generator.20} parent=5 // pred_fallthru
      _
    %p957 = scmp.le.s32.totalorder 2, %s10
    // Predicated region
    $region37: #{resnet_generator.20} parent=5 // pred_check
      %p958 = pneg %p957
    $region38: #{resnet_generator.20} parent=5 // pred_check_branch
      %960 = sbr.rel (%p958) target = $region40
    $region39: #{resnet_generator.20} parent=5 // pred_region
      %s961 = ssub.s32 %s10, 2
      // Predicated region
      $region41: #{resnet_generator.20} parent=39 // pred_check
        %p962 = pneg %p86
      $region42: #{resnet_generator.20} parent=39 // pred_check_branch
        %964 = sbr.rel (%p962) target = $region44
      $region43: #{resnet_generator.20} parent=39 // pred_region
        %s965 = smul.u32 32, %s16
        %p966 = scmp.lt.s32.totalorder %s965, 63
        %s967 = scalar_select %p966, %s965, 63
        %s968 = smul.addr %s967, 4
        %s969 = scalar_lea.vmem %s2, %s968
      $region44: #{resnet_generator.20} parent=39 // pred_fallthru
        _
      // Predicated region
      $region45: #{resnet_generator.20} parent=39 // pred_check
        %p970 = pneg %p112
      $region46: #{resnet_generator.20} parent=39 // pred_check_branch
        %972 = sbr.rel (%p970) target = $region48
      $region47: #{resnet_generator.20} parent=39 // pred_region
        %p973 = scmp.lt.s32.totalorder %s16, 1
        %s974 = scalar_select %p973, %s16, 1
        %s975 = smul.addr %s974, 8
        %s976 = scalar_lea.vmem %s3, %s975
      $region48: #{resnet_generator.20} parent=39 // pred_fallthru
        _
    $region40: #{resnet_generator.20} parent=5 // pred_fallthru
      _
  $region6: #{resnet_generator.20} parent=0 // loop_footer
    %s14 = sadd.s32 1, %s10
  $region7: #{resnet_generator.20} parent=0 // loop_footer_branch
    %9 = sbr.rel target = $region3
  $region8: #{resnet_generator.20} parent=0 // loop_exit
    _

// kernel: resnet_generator.22
$region0: #{resnet_generator.22}
  #allocation0 [shape = 'u32[]', space=smem, size = 0x4, offset = 0x4, fixed_abs, tag = 'smem constant byte address 0x4 - core index']
  #allocation1 [shape = 'u32[144,128]{1,0:T(1,128)}', space=vmem, size = 0x12000, scoped, tag = 'internal scratch']
  %s0 = inlined_call_operand.vmem [shape: bf16[128,128], index: 0, kind: input, shape index: {}]
  %s1 = inlined_call_operand.vmem [shape: bf16[128,128], index: 1, kind: input, shape index: {}]
  %s2 = inlined_call_operand.vmem [shape: bf16[128,128], index: 2, kind: output, shape index: {0}]
  %s3 = inlined_call_operand.vmem [shape: f32[16,128], index: 3, kind: output, shape index: {1}]
  %4 = xla_tuple %s2, %s3
  %s5 = sld [smem:[#allocation0]]
  $region49: #{resnet_generator.22} parent=0
    _
  %s7 = ssub.s32 1, %s5
  %s8 = scalar_select 0, %s7, %s5
  loop: start=0, step=1, limit=4
  $region2: #{resnet_generator.22} parent=0 // loop_pre_header
    _
  $region3: #{resnet_generator.22} parent=0 // loop_header
    %s10 = sphi 0, %s14
    %p11 = scmp.ge.s32.totalorder %s10, 4
    %s20 = sphi 0, %s22
    %s23 = sphi 0, %s20
    %s24 = sphi 0, %s23
    %s40 = sphi 0, %s24
    %s44 = sphi 0, %s44
    %s46 = sphi 0, %s44
    %s47 = sphi 0, %s46
    %s61 = sphi 0, %s47
    %s67 = sphi 0, %s69
    %s70 = sphi 0, %s67
    %s71 = sphi 0, %s70
    %s87 = sphi 0, %s71
    %s93 = sphi 0, %s95
    %s96 = sphi 0, %s93
    %s97 = sphi 0, %s96
    %s113 = sphi 0, %s97
  $region4: #{resnet_generator.22} parent=0 // loop_header_branch
    %13 = sbr.rel (%p11) target = $region8
  $region5: #{resnet_generator.22} parent=0 // loop_body
    %s15 = ssub.s32 %s10, 1
    %s16 = ssub.s32 %s10, 2
    %s17 = sadd.s32 %s10, 1
    %s18 = ssub.s32 %s10, %s17
    %p19 = scmp.eq.s32.totalorder %s18, 0
    %s21 = sadd.s32 %s20, 1
    %s22 = scalar_select %p19, %s20, %s21
    %p25 = pneg %p19
    %p26 = scmp.eq.s32.totalorder %s10, 1
    %p27 = por %p25, %p26
    %p28 = scmp.ne.s32.totalorder %s20, %s23
    %p29 = scmp.eq.s32.totalorder %s10, 0
    %p30 = por %p28, %p29
    %p31 = scmp.ne.s32.totalorder %s20, %s23
    %p32 = scmp.eq.s32.totalorder %s15, 1
    %p33 = por %p31, %p32
    %p34 = scmp.ne.s32.totalorder %s23, %s24
    %p35 = scmp.eq.s32.totalorder %s15, 0
    %p36 = por %p34, %p35
    %p37 = scmp.ne.s32.totalorder %s23, %s24
    %p38 = scmp.eq.s32.totalorder %s16, 1
    %p39 = por %p37, %p38
    %p41 = scmp.ne.s32.totalorder %s24, %s40
    %p42 = scmp.eq.s32.totalorder %s16, 0
    %p43 = por %p41, %p42
    %s45 = sadd.s32 %s44, 1
    %p48 = scmp.eq.s32.totalorder %s10, 1
    %p49 = scmp.ne.s32.totalorder %s44, %s46
    %p50 = scmp.eq.s32.totalorder %s10, 0
    %p51 = por %p49, %p50
    %p52 = scmp.ne.s32.totalorder %s44, %s46
    %p53 = scmp.eq.s32.totalorder %s15, 1
    %p54 = por %p52, %p53
    %p55 = scmp.ne.s32.totalorder %s46, %s47
    %p56 = scmp.eq.s32.totalorder %s15, 0
    %p57 = por %p55, %p56
    %p58 = scmp.ne.s32.totalorder %s46, %s47
    %p59 = scmp.eq.s32.totalorder %s16, 1
    %p60 = por %p58, %p59
    %p62 = scmp.ne.s32.totalorder %s47, %s61
    %p63 = scmp.eq.s32.totalorder %s16, 0
    %p64 = por %p62, %p63
    %s65 = ssub.s32 %s10, %s17
    %p66 = scmp.eq.s32.totalorder %s65, 0
    %s68 = sadd.s32 %s67, 1
    %s69 = scalar_select %p66, %s67, %s68
    %p72 = pneg %p66
    %p73 = scmp.eq.s32.totalorder %s10, 1
    %p74 = por %p72, %p73
    %p75 = scmp.ne.s32.totalorder %s67, %s70
    %p76 = scmp.eq.s32.totalorder %s10, 0
    %p77 = por %p75, %p76
    %p78 = scmp.ne.s32.totalorder %s67, %s70
    %p79 = scmp.eq.s32.totalorder %s15, 1
    %p80 = por %p78, %p79
    %p81 = scmp.ne.s32.totalorder %s70, %s71
    %p82 = scmp.eq.s32.totalorder %s15, 0
    %p83 = por %p81, %p82
    %p84 = scmp.ne.s32.totalorder %s70, %s71
    %p85 = scmp.eq.s32.totalorder %s16, 1
    %p86 = por %p84, %p85
    %p88 = scmp.ne.s32.totalorder %s71, %s87
    %p89 = scmp.eq.s32.totalorder %s16, 0
    %p90 = por %p88, %p89
    %s91 = ssub.s32 %s10, %s17
    %p92 = scmp.eq.s32.totalorder %s91, 0
    %s94 = sadd.s32 %s93, 1
    %s95 = scalar_select %p92, %s93, %s94
    %p98 = pneg %p92
    %p99 = scmp.eq.s32.totalorder %s10, 1
    %p100 = por %p98, %p99
    %p101 = scmp.ne.s32.totalorder %s93, %s96
    %p102 = scmp.eq.s32.totalorder %s10, 0
    %p103 = por %p101, %p102
    %p104 = scmp.ne.s32.totalorder %s93, %s96
    %p105 = scmp.eq.s32.totalorder %s15, 1
    %p106 = por %p104, %p105
    %p107 = scmp.ne.s32.totalorder %s96, %s97
    %p108 = scmp.eq.s32.totalorder %s15, 0
    %p109 = por %p107, %p108
    %p110 = scmp.ne.s32.totalorder %s96, %s97
    %p111 = scmp.eq.s32.totalorder %s16, 1
    %p112 = por %p110, %p111
    %p114 = scmp.ne.s32.totalorder %s97, %s113
    %p115 = scmp.eq.s32.totalorder %s16, 0
    %p116 = por %p114, %p115
    %p117 = scmp.le.s32.totalorder 1, %s10
    %p118 = scmp.lt.s32.totalorder %s10, 3
    %p119 = pnand %p117, %p118
    %p120 = pneg %p119
    // Predicated region
    $region9: #{resnet_generator.22} parent=5 // pred_check
      _
    $region10: #{resnet_generator.22} parent=5 // pred_check_branch
      %122 = sbr.rel (%p119) target = $region12
    $region11: #{resnet_generator.22} parent=5 // pred_region
      %s123 = ssub.s32 %s10, 1
      // Predicated region
      $region13: #{resnet_generator.22} parent=11 // pred_check
        %p124 = pneg %p57
      $region14: #{resnet_generator.22} parent=11 // pred_check_branch
        %126 = sbr.rel (%p124) target = $region16
      $region15: #{resnet_generator.22} parent=11 // pred_region
        _
      $region16: #{resnet_generator.22} parent=11 // pred_fallthru
        _
    $region12: #{resnet_generator.22} parent=5 // pred_fallthru
      _
    %p127 = scmp.lt.s32.totalorder %s10, 2
    // Predicated region
    $region17: #{resnet_generator.22} parent=5 // pred_check
      %p128 = pneg %p127
    $region18: #{resnet_generator.22} parent=5 // pred_check_branch
      %130 = sbr.rel (%p128) target = $region20
    $region19: #{resnet_generator.22} parent=5 // pred_region
      // Predicated region
      $region21: #{resnet_generator.22} parent=19 // pred_check
        %p131 = pneg %p30
      $region22: #{resnet_generator.22} parent=19 // pred_check_branch
        %133 = sbr.rel (%p131) target = $region24
      $region23: #{resnet_generator.22} parent=19 // pred_region
        %s134 = smul.u32 8, %s10
        %p135 = scmp.lt.s32.totalorder %s134, 15
        %s136 = scalar_select %p135, %s134, 15
        %s137 = smul.addr %s136, 4
        %s138 = scalar_lea.vmem %s0, %s137
        %s139 = smul.u32 8, %s10
      $region24: #{resnet_generator.22} parent=19 // pred_fallthru
        _
    $region20: #{resnet_generator.22} parent=5 // pred_fallthru
      _
    %p140 = scmp.le.s32.totalorder 1, %s10
    %p141 = scmp.lt.s32.totalorder %s10, 3
    %p142 = pnand %p140, %p141
    %p143 = pneg %p142
    // Predicated region
    $region25: #{resnet_generator.22} parent=5 // pred_check
      _
    $region26: #{resnet_generator.22} parent=5 // pred_check_branch
      %145 = sbr.rel (%p142) target = $region28
    $region27: #{resnet_generator.22} parent=5 // pred_region
      %s146 = ssub.s32 %s10, 1
      %s147 = smul.u32 8, %s15
      %p148 = scmp.lt.s32.totalorder %s147, 15
      %s149 = scalar_select %p148, %s147, 15
      %s150 = smul.addr %s149, 4
      %s151 = scalar_lea.vmem %s0, %s150
      %p152 = pneg %p36
      %p153 = pneg %p33
      %p154 = pneg %p57
      %p155 = pneg %p54
      %p156 = pneg %p83
      %p157 = pneg %p80
      %s158 = smul.u32 8, %s15
      %p159 = scmp.lt.s32.totalorder %s158, 15
      %s160 = scalar_select %p159, %s158, 15
      %s161 = smul.addr %s160, 4
      %s162 = scalar_lea.vmem %s2, %s161
      %p163 = pneg %p109
      %p164 = pneg %p106
      %p165 = scmp.lt.s32.totalorder %s15, 1
      %s166 = scalar_select %p165, %s15, 1
      %s167 = smul.addr %s166, 8
      %s168 = scalar_lea.vmem %s3, %s167
      %s169 = smul.u32 8, %s15
      %p170 = scmp.lt.s32.totalorder %s169, 15
      %s171 = scalar_select %p170, %s169, 15
      %s172 = smul.addr %s171, 4
      %s173 = scalar_lea.vmem %s0, %s172
      %s174 = smul.u32 8, %s15
      %s175 = smul.u32 8, %s15
      %p176 = scmp.lt.s32.totalorder %s175, 15
      %s177 = scalar_select %p176, %s175, 15
      %s178 = smul.addr %s177, 4
      %s179 = scalar_lea.vmem %s2, %s178
      %s180 = smul.u32 8, %s15
      %p181 = scmp.lt.s32.totalorder %s15, 1
      %s182 = scalar_select %p181, %s15, 1
      %s183 = smul.addr %s182, 8
      %s184 = scalar_lea.vmem %s3, %s183
      %v186 = vld [vmem:[%s173] sm:$0xf]
      %v187 = vld [vmem:[%s173 + $0x4] sm:$0xf]
      %v188 = vld [vmem:[%s173 + $0x8] sm:$0xf]
      %v189 = vld [vmem:[%s173 + $0xc] sm:$0xf]
      %v190 = vld [vmem:[%s173 + $0x10] sm:$0xf]
      %v191 = vld [vmem:[%s173 + $0x14] sm:$0xf]
      %v192 = vld [vmem:[%s173 + $0x18] sm:$0xf]
      %v193 = vld [vmem:[%s173 + $0x1c] sm:$0xf]
      %v194 = vld [vmem:[%s1] sm:$0xf]
      %v195 = vld [vmem:[%s1 + $0x4] sm:$0xf]
      %v196 = vld [vmem:[%s1 + $0x8] sm:$0xf]
      %v197 = vld [vmem:[%s1 + $0xc] sm:$0xf]
      %v198 = vld [vmem:[%s1 + $0x10] sm:$0xf]
      %v199 = vld [vmem:[%s1 + $0x14] sm:$0xf]
      %v200 = vld [vmem:[%s1 + $0x18] sm:$0xf]
      %v201 = vld [vmem:[%s1 + $0x1c] sm:$0xf]
      %v202 = vld [vmem:[%s1 + $0x20] sm:$0xf]
      %v203 = vld [vmem:[%s1 + $0x24] sm:$0xf]
      %v204 = vld [vmem:[%s1 + $0x28] sm:$0xf]
      %v205 = vld [vmem:[%s1 + $0x2c] sm:$0xf]
      %v206 = vld [vmem:[%s1 + $0x30] sm:$0xf]
      %v207 = vld [vmem:[%s1 + $0x34] sm:$0xf]
      %v208 = vld [vmem:[%s1 + $0x38] sm:$0xf]
      %v209 = vld [vmem:[%s1 + $0x3c] sm:$0xf]
      %v218 = vunpack.c.l.b16 %v186
      %v219 = vunpack.c.l.b16 %v187
      %v220 = vunpack.c.l.b16 %v188
      %v221 = vunpack.c.l.b16 %v189
      %v222 = vunpack.c.l.b16 %v190
      %v223 = vunpack.c.l.b16 %v191
      %v224 = vunpack.c.l.b16 %v192
      %v225 = vunpack.c.l.b16 %v193
      %v226 = vpack.c.b16 %v219, %v218
      %v227 = vpack.c.b16 %v221, %v220
      %v228 = vpack.c.b16 %v223, %v222
      %v229 = vpack.c.b16 %v225, %v224
      %v250 = vunpack.c.l.b16 %v194
      %v251 = vunpack.c.l.b16 %v195
      %v252 = vunpack.c.l.b16 %v196
      %v253 = vunpack.c.l.b16 %v197
      %v254 = vunpack.c.l.b16 %v198
      %v255 = vunpack.c.l.b16 %v199
      %v256 = vunpack.c.l.b16 %v200
      %v257 = vunpack.c.l.b16 %v201
      %v258 = vunpack.c.l.b16 %v202
      %v259 = vunpack.c.l.b16 %v203
      %v260 = vunpack.c.l.b16 %v204
      %v261 = vunpack.c.l.b16 %v205
      %v262 = vunpack.c.l.b16 %v206
      %v263 = vunpack.c.l.b16 %v207
      %v264 = vunpack.c.l.b16 %v208
      %v265 = vunpack.c.l.b16 %v209
      %v266 = vpack.c.b16 %v251, %v250
      %v267 = vpack.c.b16 %v253, %v252
      %v268 = vpack.c.b16 %v255, %v254
      %v269 = vpack.c.b16 %v257, %v256
      %v270 = vpack.c.b16 %v259, %v258
      %v271 = vpack.c.b16 %v261, %v260
      %v272 = vpack.c.b16 %v263, %v262
      %v273 = vpack.c.b16 %v265, %v264
      %282 = vmatprep.subr.bf16.mxu0 0
      %283 = vmatpush1.bf16.msra.mxu0 %v273
      %284 = vmatprep.subr.bf16.mxu0 0
      %285 = vmatpush1.bf16.msra.mxu0 %v272
      %286 = vmatprep.subr.bf16.mxu0 0
      %287 = vmatpush1.bf16.msra.mxu0 %v271
      %288 = vmatprep.subr.bf16.mxu0 0
      %289 = vmatpush1.bf16.msra.mxu0 %v270
      %290 = vmatprep.subr.bf16.mxu0 0
      %291 = vmatpush1.bf16.msra.mxu0 %v269
      %292 = vmatprep.subr.bf16.mxu0 0
      %293 = vmatpush1.bf16.msra.mxu0 %v268
      %294 = vmatprep.subr.bf16.mxu0 0
      %295 = vmatpush1.bf16.msra.mxu0 %v267
      %296 = vmatprep.subr.bf16.mxu0 0
      %297 = vmatpush1.bf16.msra.mxu0 %v266
      %298 = vmatprep.subr.bf16.mxu0 0
      %299 = vmatpush2.bf16.msra.mxu0 0
      %300 = vmatprep.subr.bf16.mxu0 0
      %301 = vmatpush2.bf16.msra.mxu0 0
      %302 = vmatprep.subr.bf16.mxu0 0
      %303 = vmatpush2.bf16.msra.mxu0 0
      %304 = vmatprep.subr.bf16.mxu0 0
      %305 = vmatpush2.bf16.msra.mxu0 0
      %306 = vmatprep.subr.bf16.mxu0 0
      %307 = vmatpush2.bf16.msra.mxu0 0
      %308 = vmatprep.subr.bf16.mxu0 0
      %309 = vmatpush2.bf16.msra.mxu0 0
      %310 = vmatprep.subr.bf16.mxu0 0
      %311 = vmatpush2.bf16.msra.mxu0 0
      %312 = vmatprep.subr.bf16.mxu0 0
      %313 = vmatpush2.bf16.msra.mxu0 0
      %314 = vmatprep.mubr.bf16.mxu0 0
      %315 = vmatmul.mubr.bf16.gmra.mxu0 %v226
      %v316 = vpop.f32.mrf.mxu0
      %v317 = vadd.f32 0.0, %v316
      %v318 = vpop.f32.mrf.mxu0
      %v319 = vpop.f32.mrf.mxu0
      %v320 = vadd.f32 0.0, %v319
      %v321 = vpop.f32.mrf.mxu0
      %322 = vmatprep.mubr.bf16.mxu0 0
      %323 = vmatmul.mubr.bf16.gmra.mxu0 %v227
      %v324 = vpop.f32.mrf.mxu0
      %v325 = vadd.f32 0.0, %v324
      %v326 = vpop.f32.mrf.mxu0
      %v327 = vpop.f32.mrf.mxu0
      %v328 = vadd.f32 0.0, %v327
      %v329 = vpop.f32.mrf.mxu0
      %330 = vmatprep.mubr.bf16.mxu0 0
      %331 = vmatmul.mubr.bf16.gmra.mxu0 %v228
      %v332 = vpop.f32.mrf.mxu0
      %v333 = vadd.f32 0.0, %v332
      %v334 = vpop.f32.mrf.mxu0
      %v335 = vpop.f32.mrf.mxu0
      %v336 = vadd.f32 0.0, %v335
      %v337 = vpop.f32.mrf.mxu0
      %338 = vmatprep.mubr.bf16.mxu0 0
      %339 = vmatmul.mubr.bf16.gmra.mxu0 %v229
      %v340 = vpop.f32.mrf.mxu0
      %v341 = vadd.f32 0.0, %v340
      %v342 = vpop.f32.mrf.mxu0
      %v343 = vpop.f32.mrf.mxu0
      %v344 = vadd.f32 0.0, %v343
      %v345 = vpop.f32.mrf.mxu0
      %346 = vdwg.mxu0
      %v347 = vpack.c.bf16 %v320, %v317
      %v348 = vpack.c.bf16 %v328, %v325
      %v349 = vpack.c.bf16 %v336, %v333
      %v350 = vpack.c.bf16 %v344, %v341
      %v355 = vunpack.c.l.b16 %v347
      %v356 = vunpack.c.h.b16 %v347
      %v357 = vunpack.c.l.b16 %v348
      %v358 = vunpack.c.h.b16 %v348
      %v359 = vunpack.c.l.b16 %v349
      %v360 = vunpack.c.h.b16 %v349
      %v361 = vunpack.c.l.b16 %v350
      %v362 = vunpack.c.h.b16 %v350
      %v363 = vpack.c.b16 %v355, %v355
      %v364 = vpack.c.b16 %v356, %v356
      %v365 = vpack.c.b16 %v357, %v357
      %v366 = vpack.c.b16 %v358, %v358
      %v367 = vpack.c.b16 %v359, %v359
      %v368 = vpack.c.b16 %v360, %v360
      %v369 = vpack.c.b16 %v361, %v361
      %v370 = vpack.c.b16 %v362, %v362
      %379 = vst [vmem:[%s179] sm:$0xf] %v363
      %380 = vst [vmem:[%s179 + $0x4] sm:$0xf] %v364
      %381 = vst [vmem:[%s179 + $0x8] sm:$0xf] %v365
      %382 = vst [vmem:[%s179 + $0xc] sm:$0xf] %v366
      %383 = vst [vmem:[%s179 + $0x10] sm:$0xf] %v367
      %384 = vst [vmem:[%s179 + $0x14] sm:$0xf] %v368
      %385 = vst [vmem:[%s179 + $0x18] sm:$0xf] %v369
      %386 = vst [vmem:[%s179 + $0x1c] sm:$0xf] %v370
      %v387 = vadd.f32 %v317, %v320
      %v388 = vadd.f32 %v387, %v325
      %v389 = vadd.f32 %v388, %v328
      %v390 = vadd.f32 %v389, %v333
      %v391 = vadd.f32 %v390, %v336
      %v392 = vadd.f32 %v391, %v341
      %v393 = vadd.f32 %v392, %v344
      %v394 = vrot.slane %v393, 4
      %v395 = vadd.f32 %v393, %v394
      %v396 = vrot.slane %v395, 2
      %v397 = vadd.f32 %v395, %v396
      %v398 = vrot.slane %v397, 1
      %v399 = vadd.f32 %v397, %v398
      %v400 = vmul.f32 %v317, %v317
      %v401 = vmul.f32 %v320, %v320
      %v402 = vmul.f32 %v325, %v325
      %v403 = vmul.f32 %v328, %v328
      %v404 = vmul.f32 %v333, %v333
      %v405 = vmul.f32 %v336, %v336
      %v406 = vmul.f32 %v341, %v341
      %v407 = vmul.f32 %v344, %v344
      %v408 = vadd.f32 %v400, %v401
      %v409 = vadd.f32 %v408, %v402
      %v410 = vadd.f32 %v409, %v403
      %v411 = vadd.f32 %v410, %v404
      %v412 = vadd.f32 %v411, %v405
      %v413 = vadd.f32 %v412, %v406
      %v414 = vadd.f32 %v413, %v407
      %v415 = vrot.slane %v414, 4
      %v416 = vadd.f32 %v414, %v415
      %v417 = vrot.slane %v416, 2
      %v418 = vadd.f32 %v416, %v417
      %v419 = vrot.slane %v418, 1
      %v420 = vadd.f32 %v418, %v419
      %vm421 = vcmask 1040384
      %v422 = vsel %vm421, %v399, %v420
      %vm423 = vcmask 1041408
      %v424 = vsel %vm423, %v422, 0.0
      %425 = vst [vmem:[%s184] sm:$0xff] %v424
      %s426 = smul.u32 8, %s15
      %p427 = scmp.lt.s32.totalorder %s426, 15
      %s428 = scalar_select %p427, %s426, 15
      %s429 = smul.addr %s428, 4
      %s430 = scalar_lea.vmem %s2, %s429
      %p431 = scmp.lt.s32.totalorder %s15, 1
      %s432 = scalar_select %p431, %s15, 1
      %s433 = smul.addr %s432, 8
      %s434 = scalar_lea.vmem %s3, %s433
      // Predicated region
      $region29: #{resnet_generator.22} parent=27 // pred_check
        %p435 = pneg %p80
      $region30: #{resnet_generator.22} parent=27 // pred_check_branch
        %437 = sbr.rel (%p435) target = $region32
      $region31: #{resnet_generator.22} parent=27 // pred_region
        %s438 = smul.u32 8, %s15
      $region32: #{resnet_generator.22} parent=27 // pred_fallthru
        _
      // Predicated region
      $region33: #{resnet_generator.22} parent=27 // pred_check
        %p439 = pneg %p106
      $region34: #{resnet_generator.22} parent=27 // pred_check_branch
        %441 = sbr.rel (%p439) target = $region36
      $region35: #{resnet_generator.22} parent=27 // pred_region
        _
      $region36: #{resnet_generator.22} parent=27 // pred_fallthru
        _
    $region28: #{resnet_generator.22} parent=5 // pred_fallthru
      _
    %p442 = scmp.le.s32.totalorder 2, %s10
    // Predicated region
    $region37: #{resnet_generator.22} parent=5 // pred_check
      %p443 = pneg %p442
    $region38: #{resnet_generator.22} parent=5 // pred_check_branch
      %445 = sbr.rel (%p443) target = $region40
    $region39: #{resnet_generator.22} parent=5 // pred_region
      %s446 = ssub.s32 %s10, 2
      // Predicated region
      $region41: #{resnet_generator.22} parent=39 // pred_check
        %p447 = pneg %p86
      $region42: #{resnet_generator.22} parent=39 // pred_check_branch
        %449 = sbr.rel (%p447) target = $region44
      $region43: #{resnet_generator.22} parent=39 // pred_region
        %s450 = smul.u32 8, %s16
        %p451 = scmp.lt.s32.totalorder %s450, 15
        %s452 = scalar_select %p451, %s450, 15
        %s453 = smul.addr %s452, 4
        %s454 = scalar_lea.vmem %s2, %s453
      $region44: #{resnet_generator.22} parent=39 // pred_fallthru
        _
      // Predicated region
      $region45: #{resnet_generator.22} parent=39 // pred_check
        %p455 = pneg %p112
      $region46: #{resnet_generator.22} parent=39 // pred_check_branch
        %457 = sbr.rel (%p455) target = $region48
      $region47: #{resnet_generator.22} parent=39 // pred_region
        %p458 = scmp.lt.s32.totalorder %s16, 1
        %s459 = scalar_select %p458, %s16, 1
        %s460 = smul.addr %s459, 8
        %s461 = scalar_lea.vmem %s3, %s460
      $region48: #{resnet_generator.22} parent=39 // pred_fallthru
        _
    $region40: #{resnet_generator.22} parent=5 // pred_fallthru
      _
  $region6: #{resnet_generator.22} parent=0 // loop_footer
    %s14 = sadd.s32 1, %s10
  $region7: #{resnet_generator.22} parent=0 // loop_footer_branch
    %9 = sbr.rel target = $region3
  $region8: #{resnet_generator.22} parent=0 // loop_exit
    _

// kernel: resnet_generator.23
$region0: #{resnet_generator.23}
  #allocation0 [shape = 'u32[]', space=smem, size = 0x4, offset = 0x4, fixed_abs, tag = 'smem constant byte address 0x4 - core index']
  #allocation1 [shape = 'u32[144,128]{1,0:T(1,128)}', space=vmem, size = 0x12000, scoped, tag = 'internal scratch']
  %s0 = inlined_call_operand.vmem [shape: bf16[128,128], index: 0, kind: input, shape index: {}]
  %s1 = inlined_call_operand.vmem [shape: f32[1,128], index: 1, kind: input, shape index: {}]
  %s2 = inlined_call_operand.vmem [shape: f32[1,128], index: 2, kind: input, shape index: {}]
  %s3 = inlined_call_operand.vmem [shape: bf16[128,128], index: 3, kind: output, shape index: {}]
  %s4 = sld [smem:[#allocation0]]
  $region45: #{resnet_generator.23} parent=0
    _
  %s6 = ssub.s32 1, %s4
  %s7 = scalar_select 0, %s6, %s4
  loop: start=0, step=1, limit=4
  $region2: #{resnet_generator.23} parent=0 // loop_pre_header
    _
  $region3: #{resnet_generator.23} parent=0 // loop_header
    %s9 = sphi 0, %s13
    %p10 = scmp.ge.s32.totalorder %s9, 4
    %s19 = sphi 0, %s21
    %s22 = sphi 0, %s19
    %s23 = sphi 0, %s22
    %s39 = sphi 0, %s23
    %s43 = sphi 0, %s43
    %s45 = sphi 0, %s43
    %s46 = sphi 0, %s45
    %s60 = sphi 0, %s46
    %s64 = sphi 0, %s64
    %s66 = sphi 0, %s64
    %s67 = sphi 0, %s66
    %s81 = sphi 0, %s67
    %s87 = sphi 0, %s89
    %s90 = sphi 0, %s87
    %s91 = sphi 0, %s90
    %s107 = sphi 0, %s91
  $region4: #{resnet_generator.23} parent=0 // loop_header_branch
    %12 = sbr.rel (%p10) target = $region8
  $region5: #{resnet_generator.23} parent=0 // loop_body
    %s14 = ssub.s32 %s9, 1
    %s15 = ssub.s32 %s9, 2
    %s16 = sadd.s32 %s9, 1
    %s17 = ssub.s32 %s9, %s16
    %p18 = scmp.eq.s32.totalorder %s17, 0
    %s20 = sadd.s32 %s19, 1
    %s21 = scalar_select %p18, %s19, %s20
    %p24 = pneg %p18
    %p25 = scmp.eq.s32.totalorder %s9, 1
    %p26 = por %p24, %p25
    %p27 = scmp.ne.s32.totalorder %s19, %s22
    %p28 = scmp.eq.s32.totalorder %s9, 0
    %p29 = por %p27, %p28
    %p30 = scmp.ne.s32.totalorder %s19, %s22
    %p31 = scmp.eq.s32.totalorder %s14, 1
    %p32 = por %p30, %p31
    %p33 = scmp.ne.s32.totalorder %s22, %s23
    %p34 = scmp.eq.s32.totalorder %s14, 0
    %p35 = por %p33, %p34
    %p36 = scmp.ne.s32.totalorder %s22, %s23
    %p37 = scmp.eq.s32.totalorder %s15, 1
    %p38 = por %p36, %p37
    %p40 = scmp.ne.s32.totalorder %s23, %s39
    %p41 = scmp.eq.s32.totalorder %s15, 0
    %p42 = por %p40, %p41
    %s44 = sadd.s32 %s43, 1
    %p47 = scmp.eq.s32.totalorder %s9, 1
    %p48 = scmp.ne.s32.totalorder %s43, %s45
    %p49 = scmp.eq.s32.totalorder %s9, 0
    %p50 = por %p48, %p49
    %p51 = scmp.ne.s32.totalorder %s43, %s45
    %p52 = scmp.eq.s32.totalorder %s14, 1
    %p53 = por %p51, %p52
    %p54 = scmp.ne.s32.totalorder %s45, %s46
    %p55 = scmp.eq.s32.totalorder %s14, 0
    %p56 = por %p54, %p55
    %p57 = scmp.ne.s32.totalorder %s45, %s46
    %p58 = scmp.eq.s32.totalorder %s15, 1
    %p59 = por %p57, %p58
    %p61 = scmp.ne.s32.totalorder %s46, %s60
    %p62 = scmp.eq.s32.totalorder %s15, 0
    %p63 = por %p61, %p62
    %s65 = sadd.s32 %s64, 1
    %p68 = scmp.eq.s32.totalorder %s9, 1
    %p69 = scmp.ne.s32.totalorder %s64, %s66
    %p70 = scmp.eq.s32.totalorder %s9, 0
    %p71 = por %p69, %p70
    %p72 = scmp.ne.s32.totalorder %s64, %s66
    %p73 = scmp.eq.s32.totalorder %s14, 1
    %p74 = por %p72, %p73
    %p75 = scmp.ne.s32.totalorder %s66, %s67
    %p76 = scmp.eq.s32.totalorder %s14, 0
    %p77 = por %p75, %p76
    %p78 = scmp.ne.s32.totalorder %s66, %s67
    %p79 = scmp.eq.s32.totalorder %s15, 1
    %p80 = por %p78, %p79
    %p82 = scmp.ne.s32.totalorder %s67, %s81
    %p83 = scmp.eq.s32.totalorder %s15, 0
    %p84 = por %p82, %p83
    %s85 = ssub.s32 %s9, %s16
    %p86 = scmp.eq.s32.totalorder %s85, 0
    %s88 = sadd.s32 %s87, 1
    %s89 = scalar_select %p86, %s87, %s88
    %p92 = pneg %p86
    %p93 = scmp.eq.s32.totalorder %s9, 1
    %p94 = por %p92, %p93
    %p95 = scmp.ne.s32.totalorder %s87, %s90
    %p96 = scmp.eq.s32.totalorder %s9, 0
    %p97 = por %p95, %p96
    %p98 = scmp.ne.s32.totalorder %s87, %s90
    %p99 = scmp.eq.s32.totalorder %s14, 1
    %p100 = por %p98, %p99
    %p101 = scmp.ne.s32.totalorder %s90, %s91
    %p102 = scmp.eq.s32.totalorder %s14, 0
    %p103 = por %p101, %p102
    %p104 = scmp.ne.s32.totalorder %s90, %s91
    %p105 = scmp.eq.s32.totalorder %s15, 1
    %p106 = por %p104, %p105
    %p108 = scmp.ne.s32.totalorder %s91, %s107
    %p109 = scmp.eq.s32.totalorder %s15, 0
    %p110 = por %p108, %p109
    %p111 = scmp.le.s32.totalorder 1, %s9
    %p112 = scmp.lt.s32.totalorder %s9, 3
    %p113 = pnand %p111, %p112
    %p114 = pneg %p113
    // Predicated region
    $region9: #{resnet_generator.23} parent=5 // pred_check
      _
    $region10: #{resnet_generator.23} parent=5 // pred_check_branch
      %116 = sbr.rel (%p113) target = $region12
    $region11: #{resnet_generator.23} parent=5 // pred_region
      %s117 = ssub.s32 %s9, 1
      // Predicated region
      $region13: #{resnet_generator.23} parent=11 // pred_check
        %p118 = pneg %p56
      $region14: #{resnet_generator.23} parent=11 // pred_check_branch
        %120 = sbr.rel (%p118) target = $region16
      $region15: #{resnet_generator.23} parent=11 // pred_region
        _
      $region16: #{resnet_generator.23} parent=11 // pred_fallthru
        _
      // Predicated region
      $region17: #{resnet_generator.23} parent=11 // pred_check
        %p121 = pneg %p77
      $region18: #{resnet_generator.23} parent=11 // pred_check_branch
        %123 = sbr.rel (%p121) target = $region20
      $region19: #{resnet_generator.23} parent=11 // pred_region
        _
      $region20: #{resnet_generator.23} parent=11 // pred_fallthru
        _
    $region12: #{resnet_generator.23} parent=5 // pred_fallthru
      _
    %p124 = scmp.lt.s32.totalorder %s9, 2
    // Predicated region
    $region21: #{resnet_generator.23} parent=5 // pred_check
      %p125 = pneg %p124
    $region22: #{resnet_generator.23} parent=5 // pred_check_branch
      %127 = sbr.rel (%p125) target = $region24
    $region23: #{resnet_generator.23} parent=5 // pred_region
      // Predicated region
      $region25: #{resnet_generator.23} parent=23 // pred_check
        %p128 = pneg %p29
      $region26: #{resnet_generator.23} parent=23 // pred_check_branch
        %130 = sbr.rel (%p128) target = $region28
      $region27: #{resnet_generator.23} parent=23 // pred_region
        %s131 = smul.u32 8, %s9
        %p132 = scmp.lt.s32.totalorder %s131, 15
        %s133 = scalar_select %p132, %s131, 15
        %s134 = smul.addr %s133, 4
        %s135 = scalar_lea.vmem %s0, %s134
        %s136 = smul.u32 8, %s9
      $region28: #{resnet_generator.23} parent=23 // pred_fallthru
        _
    $region24: #{resnet_generator.23} parent=5 // pred_fallthru
      _
    %p137 = scmp.le.s32.totalorder 1, %s9
    %p138 = scmp.lt.s32.totalorder %s9, 3
    %p139 = pnand %p137, %p138
    %p140 = pneg %p139
    // Predicated region
    $region29: #{resnet_generator.23} parent=5 // pred_check
      _
    $region30: #{resnet_generator.23} parent=5 // pred_check_branch
      %142 = sbr.rel (%p139) target = $region32
    $region31: #{resnet_generator.23} parent=5 // pred_region
      %s143 = ssub.s32 %s9, 1
      %s144 = smul.u32 8, %s14
      %p145 = scmp.lt.s32.totalorder %s144, 15
      %s146 = scalar_select %p145, %s144, 15
      %s147 = smul.addr %s146, 4
      %s148 = scalar_lea.vmem %s0, %s147
      %p149 = pneg %p35
      %p150 = pneg %p32
      %p151 = pneg %p56
      %p152 = pneg %p53
      %p153 = pneg %p77
      %p154 = pneg %p74
      %p155 = pneg %p103
      %p156 = pneg %p100
      %s157 = smul.u32 8, %s14
      %p158 = scmp.lt.s32.totalorder %s157, 15
      %s159 = scalar_select %p158, %s157, 15
      %s160 = smul.addr %s159, 4
      %s161 = scalar_lea.vmem %s3, %s160
      %s162 = smul.u32 8, %s14
      %p163 = scmp.lt.s32.totalorder %s162, 15
      %s164 = scalar_select %p163, %s162, 15
      %s165 = smul.addr %s164, 4
      %s166 = scalar_lea.vmem %s0, %s165
      %s167 = smul.u32 8, %s14
      %s168 = smul.u32 8, %s14
      %p169 = scmp.lt.s32.totalorder %s168, 15
      %s170 = scalar_select %p169, %s168, 15
      %s171 = smul.addr %s170, 4
      %s172 = scalar_lea.vmem %s3, %s171
      %s173 = smul.u32 8, %s14
      %v174 = vld [vmem:[%s166] sm:$0xf]
      %v175 = vld [vmem:[%s166 + $0x4] sm:$0xf]
      %v176 = vld [vmem:[%s166 + $0x8] sm:$0xf]
      %v177 = vld [vmem:[%s166 + $0xc] sm:$0xf]
      %v178 = vld [vmem:[%s166 + $0x10] sm:$0xf]
      %v179 = vld [vmem:[%s166 + $0x14] sm:$0xf]
      %v180 = vld [vmem:[%s166 + $0x18] sm:$0xf]
      %v181 = vld [vmem:[%s166 + $0x1c] sm:$0xf]
      %v182 = vunpack.c.l.bf16 %v174
      %v183 = vunpack.c.l.bf16 %v175
      %v184 = vunpack.c.l.bf16 %v176
      %v185 = vunpack.c.l.bf16 %v177
      %v186 = vunpack.c.l.bf16 %v178
      %v187 = vunpack.c.l.bf16 %v179
      %v188 = vunpack.c.l.bf16 %v180
      %v189 = vunpack.c.l.bf16 %v181
      %v190 = vld [vmem:[%s1] sm:$0x1]
      %v192 = vlaneseq
      %v193 = vshrl.u32 %v192, 7
      %v194 = vsub.s32 0, %v193
      %v195 = vrot.slane %v190, %v194
      %v197 = vmul.f32 %v182, %v195
      %v198 = vmul.f32 %v183, %v195
      %v199 = vmul.f32 %v184, %v195
      %v200 = vmul.f32 %v185, %v195
      %v201 = vmul.f32 %v186, %v195
      %v202 = vmul.f32 %v187, %v195
      %v203 = vmul.f32 %v188, %v195
      %v204 = vmul.f32 %v189, %v195
      %v205 = vld [vmem:[%s2] sm:$0x1]
      %v207 = vlaneseq
      %v208 = vshrl.u32 %v207, 7
      %v209 = vsub.s32 0, %v208
      %v210 = vrot.slane %v205, %v209
      %v212 = vadd.f32 %v197, %v210
      %v213 = vadd.f32 %v198, %v210
      %v214 = vadd.f32 %v199, %v210
      %v215 = vadd.f32 %v200, %v210
      %v216 = vadd.f32 %v201, %v210
      %v217 = vadd.f32 %v202, %v210
      %v218 = vadd.f32 %v203, %v210
      %v219 = vadd.f32 %v204, %v210
      %v220 = vmax.f32 %v212, 0.0
      %v221 = vmax.f32 %v213, 0.0
      %v222 = vmax.f32 %v214, 0.0
      %v223 = vmax.f32 %v215, 0.0
      %v224 = vmax.f32 %v216, 0.0
      %v225 = vmax.f32 %v217, 0.0
      %v226 = vmax.f32 %v218, 0.0
      %v227 = vmax.f32 %v219, 0.0
      %v228 = vpack.c.bf16 %v221, %v220
      %v229 = vpack.c.bf16 %v223, %v222
      %v230 = vpack.c.bf16 %v225, %v224
      %v231 = vpack.c.bf16 %v227, %v226
      %v236 = vunpack.c.l.b16 %v228
      %v237 = vunpack.c.h.b16 %v228
      %v238 = vunpack.c.l.b16 %v229
      %v239 = vunpack.c.h.b16 %v229
      %v240 = vunpack.c.l.b16 %v230
      %v241 = vunpack.c.h.b16 %v230
      %v242 = vunpack.c.l.b16 %v231
      %v243 = vunpack.c.h.b16 %v231
      %v244 = vpack.c.b16 %v236, %v236
      %v245 = vpack.c.b16 %v237, %v237
      %v246 = vpack.c.b16 %v238, %v238
      %v247 = vpack.c.b16 %v239, %v239
      %v248 = vpack.c.b16 %v240, %v240
      %v249 = vpack.c.b16 %v241, %v241
      %v250 = vpack.c.b16 %v242, %v242
      %v251 = vpack.c.b16 %v243, %v243
      %260 = vst [vmem:[%s172] sm:$0xf] %v244
      %261 = vst [vmem:[%s172 + $0x4] sm:$0xf] %v245
      %262 = vst [vmem:[%s172 + $0x8] sm:$0xf] %v246
      %263 = vst [vmem:[%s172 + $0xc] sm:$0xf] %v247
      %264 = vst [vmem:[%s172 + $0x10] sm:$0xf] %v248
      %265 = vst [vmem:[%s172 + $0x14] sm:$0xf] %v249
      %266 = vst [vmem:[%s172 + $0x18] sm:$0xf] %v250
      %267 = vst [vmem:[%s172 + $0x1c] sm:$0xf] %v251
      %s268 = smul.u32 8, %s14
      %p269 = scmp.lt.s32.totalorder %s268, 15
      %s270 = scalar_select %p269, %s268, 15
      %s271 = smul.addr %s270, 4
      %s272 = scalar_lea.vmem %s3, %s271
      // Predicated region
      $region33: #{resnet_generator.23} parent=31 // pred_check
        %p273 = pneg %p100
      $region34: #{resnet_generator.23} parent=31 // pred_check_branch
        %275 = sbr.rel (%p273) target = $region36
      $region35: #{resnet_generator.23} parent=31 // pred_region
        %s276 = smul.u32 8, %s14
      $region36: #{resnet_generator.23} parent=31 // pred_fallthru
        _
    $region32: #{resnet_generator.23} parent=5 // pred_fallthru
      _
    %p277 = scmp.le.s32.totalorder 2, %s9
    // Predicated region
    $region37: #{resnet_generator.23} parent=5 // pred_check
      %p278 = pneg %p277
    $region38: #{resnet_generator.23} parent=5 // pred_check_branch
      %280 = sbr.rel (%p278) target = $region40
    $region39: #{resnet_generator.23} parent=5 // pred_region
      %s281 = ssub.s32 %s9, 2
      // Predicated region
      $region41: #{resnet_generator.23} parent=39 // pred_check
        %p282 = pneg %p106
      $region42: #{resnet_generator.23} parent=39 // pred_check_branch
        %284 = sbr.rel (%p282) target = $region44
      $region43: #{resnet_generator.23} parent=39 // pred_region
        %s285 = smul.u32 8, %s15
        %p286 = scmp.lt.s32.totalorder %s285, 15
        %s287 = scalar_select %p286, %s285, 15
        %s288 = smul.addr %s287, 4
        %s289 = scalar_lea.vmem %s3, %s288
      $region44: #{resnet_generator.23} parent=39 // pred_fallthru
        _
    $region40: #{resnet_generator.23} parent=5 // pred_fallthru
      _
  $region6: #{resnet_generator.23} parent=0 // loop_footer
    %s13 = sadd.s32 1, %s9
  $region7: #{resnet_generator.23} parent=0 // loop_footer_branch
    %8 = sbr.rel target = $region3
  $region8: #{resnet_generator.23} parent=0 // loop_exit
    _

// kernel: resnet_generator.25
$region0: #{resnet_generator.25}
  #allocation0 [shape = 'u32[]', space=smem, size = 0x4, offset = 0x4, fixed_abs, tag = 'smem constant byte address 0x4 - core index']
  #allocation1 [shape = 'u32[144,128]{1,0:T(1,128)}', space=vmem, size = 0x12000, scoped, tag = 'internal scratch']
  %s0 = inlined_call_operand.vmem [shape: bf16[32,128], index: 0, kind: input, shape index: {}]
  %s1 = inlined_call_operand.vmem [shape: f32[1,128], index: 1, kind: input, shape index: {}]
  %s2 = inlined_call_operand.vmem [shape: f32[1,128], index: 2, kind: input, shape index: {}]
  %s3 = inlined_call_operand.vmem [shape: bf16[32,128], index: 3, kind: output, shape index: {}]
  %s4 = sld [smem:[#allocation0]]
  $region45: #{resnet_generator.25} parent=0
    _
  %s6 = ssub.s32 1, %s4
  %s7 = scalar_select 0, %s6, %s4
  loop: start=0, step=1, limit=4
  $region2: #{resnet_generator.25} parent=0 // loop_pre_header
    _
  $region3: #{resnet_generator.25} parent=0 // loop_header
    %s9 = sphi 0, %s13
    %p10 = scmp.ge.s32.totalorder %s9, 4
    %s19 = sphi 0, %s21
    %s22 = sphi 0, %s19
    %s23 = sphi 0, %s22
    %s39 = sphi 0, %s23
    %s43 = sphi 0, %s43
    %s45 = sphi 0, %s43
    %s46 = sphi 0, %s45
    %s60 = sphi 0, %s46
    %s64 = sphi 0, %s64
    %s66 = sphi 0, %s64
    %s67 = sphi 0, %s66
    %s81 = sphi 0, %s67
    %s87 = sphi 0, %s89
    %s90 = sphi 0, %s87
    %s91 = sphi 0, %s90
    %s107 = sphi 0, %s91
  $region4: #{resnet_generator.25} parent=0 // loop_header_branch
    %12 = sbr.rel (%p10) target = $region8
  $region5: #{resnet_generator.25} parent=0 // loop_body
    %s14 = ssub.s32 %s9, 1
    %s15 = ssub.s32 %s9, 2
    %s16 = sadd.s32 %s9, 1
    %s17 = ssub.s32 %s9, %s16
    %p18 = scmp.eq.s32.totalorder %s17, 0
    %s20 = sadd.s32 %s19, 1
    %s21 = scalar_select %p18, %s19, %s20
    %p24 = pneg %p18
    %p25 = scmp.eq.s32.totalorder %s9, 1
    %p26 = por %p24, %p25
    %p27 = scmp.ne.s32.totalorder %s19, %s22
    %p28 = scmp.eq.s32.totalorder %s9, 0
    %p29 = por %p27, %p28
    %p30 = scmp.ne.s32.totalorder %s19, %s22
    %p31 = scmp.eq.s32.totalorder %s14, 1
    %p32 = por %p30, %p31
    %p33 = scmp.ne.s32.totalorder %s22, %s23
    %p34 = scmp.eq.s32.totalorder %s14, 0
    %p35 = por %p33, %p34
    %p36 = scmp.ne.s32.totalorder %s22, %s23
    %p37 = scmp.eq.s32.totalorder %s15, 1
    %p38 = por %p36, %p37
    %p40 = scmp.ne.s32.totalorder %s23, %s39
    %p41 = scmp.eq.s32.totalorder %s15, 0
    %p42 = por %p40, %p41
    %s44 = sadd.s32 %s43, 1
    %p47 = scmp.eq.s32.totalorder %s9, 1
    %p48 = scmp.ne.s32.totalorder %s43, %s45
    %p49 = scmp.eq.s32.totalorder %s9, 0
    %p50 = por %p48, %p49
    %p51 = scmp.ne.s32.totalorder %s43, %s45
    %p52 = scmp.eq.s32.totalorder %s14, 1
    %p53 = por %p51, %p52
    %p54 = scmp.ne.s32.totalorder %s45, %s46
    %p55 = scmp.eq.s32.totalorder %s14, 0
    %p56 = por %p54, %p55
    %p57 = scmp.ne.s32.totalorder %s45, %s46
    %p58 = scmp.eq.s32.totalorder %s15, 1
    %p59 = por %p57, %p58
    %p61 = scmp.ne.s32.totalorder %s46, %s60
    %p62 = scmp.eq.s32.totalorder %s15, 0
    %p63 = por %p61, %p62
    %s65 = sadd.s32 %s64, 1
    %p68 = scmp.eq.s32.totalorder %s9, 1
    %p69 = scmp.ne.s32.totalorder %s64, %s66
    %p70 = scmp.eq.s32.totalorder %s9, 0
    %p71 = por %p69, %p70
    %p72 = scmp.ne.s32.totalorder %s64, %s66
    %p73 = scmp.eq.s32.totalorder %s14, 1
    %p74 = por %p72, %p73
    %p75 = scmp.ne.s32.totalorder %s66, %s67
    %p76 = scmp.eq.s32.totalorder %s14, 0
    %p77 = por %p75, %p76
    %p78 = scmp.ne.s32.totalorder %s66, %s67
    %p79 = scmp.eq.s32.totalorder %s15, 1
    %p80 = por %p78, %p79
    %p82 = scmp.ne.s32.totalorder %s67, %s81
    %p83 = scmp.eq.s32.totalorder %s15, 0
    %p84 = por %p82, %p83
    %s85 = ssub.s32 %s9, %s16
    %p86 = scmp.eq.s32.totalorder %s85, 0
    %s88 = sadd.s32 %s87, 1
    %s89 = scalar_select %p86, %s87, %s88
    %p92 = pneg %p86
    %p93 = scmp.eq.s32.totalorder %s9, 1
    %p94 = por %p92, %p93
    %p95 = scmp.ne.s32.totalorder %s87, %s90
    %p96 = scmp.eq.s32.totalorder %s9, 0
    %p97 = por %p95, %p96
    %p98 = scmp.ne.s32.totalorder %s87, %s90
    %p99 = scmp.eq.s32.totalorder %s14, 1
    %p100 = por %p98, %p99
    %p101 = scmp.ne.s32.totalorder %s90, %s91
    %p102 = scmp.eq.s32.totalorder %s14, 0
    %p103 = por %p101, %p102
    %p104 = scmp.ne.s32.totalorder %s90, %s91
    %p105 = scmp.eq.s32.totalorder %s15, 1
    %p106 = por %p104, %p105
    %p108 = scmp.ne.s32.totalorder %s91, %s107
    %p109 = scmp.eq.s32.totalorder %s15, 0
    %p110 = por %p108, %p109
    %p111 = scmp.le.s32.totalorder 1, %s9
    %p112 = scmp.lt.s32.totalorder %s9, 3
    %p113 = pnand %p111, %p112
    %p114 = pneg %p113
    // Predicated region
    $region9: #{resnet_generator.25} parent=5 // pred_check
      _
    $region10: #{resnet_generator.25} parent=5 // pred_check_branch
      %116 = sbr.rel (%p113) target = $region12
    $region11: #{resnet_generator.25} parent=5 // pred_region
      %s117 = ssub.s32 %s9, 1
      // Predicated region
      $region13: #{resnet_generator.25} parent=11 // pred_check
        %p118 = pneg %p56
      $region14: #{resnet_generator.25} parent=11 // pred_check_branch
        %120 = sbr.rel (%p118) target = $region16
      $region15: #{resnet_generator.25} parent=11 // pred_region
        _
      $region16: #{resnet_generator.25} parent=11 // pred_fallthru
        _
      // Predicated region
      $region17: #{resnet_generator.25} parent=11 // pred_check
        %p121 = pneg %p77
      $region18: #{resnet_generator.25} parent=11 // pred_check_branch
        %123 = sbr.rel (%p121) target = $region20
      $region19: #{resnet_generator.25} parent=11 // pred_region
        _
      $region20: #{resnet_generator.25} parent=11 // pred_fallthru
        _
    $region12: #{resnet_generator.25} parent=5 // pred_fallthru
      _
    %p124 = scmp.lt.s32.totalorder %s9, 2
    // Predicated region
    $region21: #{resnet_generator.25} parent=5 // pred_check
      %p125 = pneg %p124
    $region22: #{resnet_generator.25} parent=5 // pred_check_branch
      %127 = sbr.rel (%p125) target = $region24
    $region23: #{resnet_generator.25} parent=5 // pred_region
      // Predicated region
      $region25: #{resnet_generator.25} parent=23 // pred_check
        %p128 = pneg %p29
      $region26: #{resnet_generator.25} parent=23 // pred_check_branch
        %130 = sbr.rel (%p128) target = $region28
      $region27: #{resnet_generator.25} parent=23 // pred_region
        %s131 = smul.u32 2, %s9
        %p132 = scmp.lt.s32.totalorder %s131, 3
        %s133 = scalar_select %p132, %s131, 3
        %s134 = smul.addr %s133, 4
        %s135 = scalar_lea.vmem %s0, %s134
        %s136 = smul.u32 2, %s9
      $region28: #{resnet_generator.25} parent=23 // pred_fallthru
        _
    $region24: #{resnet_generator.25} parent=5 // pred_fallthru
      _
    %p137 = scmp.le.s32.totalorder 1, %s9
    %p138 = scmp.lt.s32.totalorder %s9, 3
    %p139 = pnand %p137, %p138
    %p140 = pneg %p139
    // Predicated region
    $region29: #{resnet_generator.25} parent=5 // pred_check
      _
    $region30: #{resnet_generator.25} parent=5 // pred_check_branch
      %142 = sbr.rel (%p139) target = $region32
    $region31: #{resnet_generator.25} parent=5 // pred_region
      %s143 = ssub.s32 %s9, 1
      %s144 = smul.u32 2, %s14
      %p145 = scmp.lt.s32.totalorder %s144, 3
      %s146 = scalar_select %p145, %s144, 3
      %s147 = smul.addr %s146, 4
      %s148 = scalar_lea.vmem %s0, %s147
      %p149 = pneg %p35
      %p150 = pneg %p32
      %p151 = pneg %p56
      %p152 = pneg %p53
      %p153 = pneg %p77
      %p154 = pneg %p74
      %p155 = pneg %p103
      %p156 = pneg %p100
      %s157 = smul.u32 2, %s14
      %p158 = scmp.lt.s32.totalorder %s157, 3
      %s159 = scalar_select %p158, %s157, 3
      %s160 = smul.addr %s159, 4
      %s161 = scalar_lea.vmem %s3, %s160
      %s162 = smul.u32 2, %s14
      %p163 = scmp.lt.s32.totalorder %s162, 3
      %s164 = scalar_select %p163, %s162, 3
      %s165 = smul.addr %s164, 4
      %s166 = scalar_lea.vmem %s0, %s165
      %s167 = smul.u32 2, %s14
      %s168 = smul.u32 2, %s14
      %p169 = scmp.lt.s32.totalorder %s168, 3
      %s170 = scalar_select %p169, %s168, 3
      %s171 = smul.addr %s170, 4
      %s172 = scalar_lea.vmem %s3, %s171
      %s173 = smul.u32 2, %s14
      %v174 = vld [vmem:[%s166] sm:$0xf]
      %v175 = vld [vmem:[%s166 + $0x4] sm:$0xf]
      %v176 = vunpack.c.l.bf16 %v174
      %v177 = vunpack.c.l.bf16 %v175
      %v178 = vld [vmem:[%s1] sm:$0x1]
      %v180 = vlaneseq
      %v181 = vshrl.u32 %v180, 7
      %v182 = vsub.s32 0, %v181
      %v183 = vrot.slane %v178, %v182
      %v185 = vmul.f32 %v176, %v183
      %v186 = vmul.f32 %v177, %v183
      %v187 = vld [vmem:[%s2] sm:$0x1]
      %v189 = vlaneseq
      %v190 = vshrl.u32 %v189, 7
      %v191 = vsub.s32 0, %v190
      %v192 = vrot.slane %v187, %v191
      %v194 = vadd.f32 %v185, %v192
      %v195 = vadd.f32 %v186, %v192
      %v196 = vmax.f32 %v194, 0.0
      %v197 = vmax.f32 %v195, 0.0
      %v198 = vpack.c.bf16 %v197, %v196
      %v200 = vunpack.c.l.b16 %v198
      %v201 = vunpack.c.h.b16 %v198
      %v202 = vpack.c.b16 %v200, %v200
      %v203 = vpack.c.b16 %v201, %v201
      %206 = vst [vmem:[%s172] sm:$0xf] %v202
      %207 = vst [vmem:[%s172 + $0x4] sm:$0xf] %v203
      %s208 = smul.u32 2, %s14
      %p209 = scmp.lt.s32.totalorder %s208, 3
      %s210 = scalar_select %p209, %s208, 3
      %s211 = smul.addr %s210, 4
      %s212 = scalar_lea.vmem %s3, %s211
      // Predicated region
      $region33: #{resnet_generator.25} parent=31 // pred_check
        %p213 = pneg %p100
      $region34: #{resnet_generator.25} parent=31 // pred_check_branch
        %215 = sbr.rel (%p213) target = $region36
      $region35: #{resnet_generator.25} parent=31 // pred_region
        %s216 = smul.u32 2, %s14
      $region36: #{resnet_generator.25} parent=31 // pred_fallthru
        _
    $region32: #{resnet_generator.25} parent=5 // pred_fallthru
      _
    %p217 = scmp.le.s32.totalorder 2, %s9
    // Predicated region
    $region37: #{resnet_generator.25} parent=5 // pred_check
      %p218 = pneg %p217
    $region38: #{resnet_generator.25} parent=5 // pred_check_branch
      %220 = sbr.rel (%p218) target = $region40
    $region39: #{resnet_generator.25} parent=5 // pred_region
      %s221 = ssub.s32 %s9, 2
      // Predicated region
      $region41: #{resnet_generator.25} parent=39 // pred_check
        %p222 = pneg %p106
      $region42: #{resnet_generator.25} parent=39 // pred_check_branch
        %224 = sbr.rel (%p222) target = $region44
      $region43: #{resnet_generator.25} parent=39 // pred_region
        %s225 = smul.u32 2, %s15
        %p226 = scmp.lt.s32.totalorder %s225, 3
        %s227 = scalar_select %p226, %s225, 3
        %s228 = smul.addr %s227, 4
        %s229 = scalar_lea.vmem %s3, %s228
      $region44: #{resnet_generator.25} parent=39 // pred_fallthru
        _
    $region40: #{resnet_generator.25} parent=5 // pred_fallthru
      _
  $region6: #{resnet_generator.25} parent=0 // loop_footer
    %s13 = sadd.s32 1, %s9
  $region7: #{resnet_generator.25} parent=0 // loop_footer_branch
    %8 = sbr.rel target = $region3
  $region8: #{resnet_generator.25} parent=0 // loop_exit
    _

// kernel: resnet_generator.24
$region0: #{resnet_generator.24}
  #allocation0 [shape = 'u32[]', space=smem, size = 0x4, offset = 0x4, fixed_abs, tag = 'smem constant byte address 0x4 - core index']
  #allocation1 [shape = 'u32[144,128]{1,0:T(1,128)}', space=vmem, size = 0x12000, scoped, tag = 'internal scratch']
  %s0 = inlined_call_operand.vmem [shape: bf16[32,256], index: 0, kind: input, shape index: {}]
  %s1 = inlined_call_operand.vmem [shape: bf16[256,128], index: 1, kind: input, shape index: {}]
  %s2 = inlined_call_operand.vmem [shape: bf16[32,128], index: 2, kind: output, shape index: {0}]
  %s3 = inlined_call_operand.vmem [shape: f32[16,128], index: 3, kind: output, shape index: {1}]
  %4 = xla_tuple %s2, %s3
  %s5 = sld [smem:[#allocation0]]
  $region49: #{resnet_generator.24} parent=0
    _
  %s7 = ssub.s32 1, %s5
  %s8 = scalar_select 0, %s7, %s5
  loop: start=0, step=1, limit=4
  $region2: #{resnet_generator.24} parent=0 // loop_pre_header
    _
  $region3: #{resnet_generator.24} parent=0 // loop_header
    %s10 = sphi 0, %s14
    %p11 = scmp.ge.s32.totalorder %s10, 4
    %s20 = sphi 0, %s22
    %s23 = sphi 0, %s20
    %s24 = sphi 0, %s23
    %s40 = sphi 0, %s24
    %s44 = sphi 0, %s44
    %s46 = sphi 0, %s44
    %s47 = sphi 0, %s46
    %s61 = sphi 0, %s47
    %s67 = sphi 0, %s69
    %s70 = sphi 0, %s67
    %s71 = sphi 0, %s70
    %s87 = sphi 0, %s71
    %s93 = sphi 0, %s95
    %s96 = sphi 0, %s93
    %s97 = sphi 0, %s96
    %s113 = sphi 0, %s97
  $region4: #{resnet_generator.24} parent=0 // loop_header_branch
    %13 = sbr.rel (%p11) target = $region8
  $region5: #{resnet_generator.24} parent=0 // loop_body
    %s15 = ssub.s32 %s10, 1
    %s16 = ssub.s32 %s10, 2
    %s17 = sadd.s32 %s10, 1
    %s18 = ssub.s32 %s10, %s17
    %p19 = scmp.eq.s32.totalorder %s18, 0
    %s21 = sadd.s32 %s20, 1
    %s22 = scalar_select %p19, %s20, %s21
    %p25 = pneg %p19
    %p26 = scmp.eq.s32.totalorder %s10, 1
    %p27 = por %p25, %p26
    %p28 = scmp.ne.s32.totalorder %s20, %s23
    %p29 = scmp.eq.s32.totalorder %s10, 0
    %p30 = por %p28, %p29
    %p31 = scmp.ne.s32.totalorder %s20, %s23
    %p32 = scmp.eq.s32.totalorder %s15, 1
    %p33 = por %p31, %p32
    %p34 = scmp.ne.s32.totalorder %s23, %s24
    %p35 = scmp.eq.s32.totalorder %s15, 0
    %p36 = por %p34, %p35
    %p37 = scmp.ne.s32.totalorder %s23, %s24
    %p38 = scmp.eq.s32.totalorder %s16, 1
    %p39 = por %p37, %p38
    %p41 = scmp.ne.s32.totalorder %s24, %s40
    %p42 = scmp.eq.s32.totalorder %s16, 0
    %p43 = por %p41, %p42
    %s45 = sadd.s32 %s44, 1
    %p48 = scmp.eq.s32.totalorder %s10, 1
    %p49 = scmp.ne.s32.totalorder %s44, %s46
    %p50 = scmp.eq.s32.totalorder %s10, 0
    %p51 = por %p49, %p50
    %p52 = scmp.ne.s32.totalorder %s44, %s46
    %p53 = scmp.eq.s32.totalorder %s15, 1
    %p54 = por %p52, %p53
    %p55 = scmp.ne.s32.totalorder %s46, %s47
    %p56 = scmp.eq.s32.totalorder %s15, 0
    %p57 = por %p55, %p56
    %p58 = scmp.ne.s32.totalorder %s46, %s47
    %p59 = scmp.eq.s32.totalorder %s16, 1
    %p60 = por %p58, %p59
    %p62 = scmp.ne.s32.totalorder %s47, %s61
    %p63 = scmp.eq.s32.totalorder %s16, 0
    %p64 = por %p62, %p63
    %s65 = ssub.s32 %s10, %s17
    %p66 = scmp.eq.s32.totalorder %s65, 0
    %s68 = sadd.s32 %s67, 1
    %s69 = scalar_select %p66, %s67, %s68
    %p72 = pneg %p66
    %p73 = scmp.eq.s32.totalorder %s10, 1
    %p74 = por %p72, %p73
    %p75 = scmp.ne.s32.totalorder %s67, %s70
    %p76 = scmp.eq.s32.totalorder %s10, 0
    %p77 = por %p75, %p76
    %p78 = scmp.ne.s32.totalorder %s67, %s70
    %p79 = scmp.eq.s32.totalorder %s15, 1
    %p80 = por %p78, %p79
    %p81 = scmp.ne.s32.totalorder %s70, %s71
    %p82 = scmp.eq.s32.totalorder %s15, 0
    %p83 = por %p81, %p82
    %p84 = scmp.ne.s32.totalorder %s70, %s71
    %p85 = scmp.eq.s32.totalorder %s16, 1
    %p86 = por %p84, %p85
    %p88 = scmp.ne.s32.totalorder %s71, %s87
    %p89 = scmp.eq.s32.totalorder %s16, 0
    %p90 = por %p88, %p89
    %s91 = ssub.s32 %s10, %s17
    %p92 = scmp.eq.s32.totalorder %s91, 0
    %s94 = sadd.s32 %s93, 1
    %s95 = scalar_select %p92, %s93, %s94
    %p98 = pneg %p92
    %p99 = scmp.eq.s32.totalorder %s10, 1
    %p100 = por %p98, %p99
    %p101 = scmp.ne.s32.totalorder %s93, %s96
    %p102 = scmp.eq.s32.totalorder %s10, 0
    %p103 = por %p101, %p102
    %p104 = scmp.ne.s32.totalorder %s93, %s96
    %p105 = scmp.eq.s32.totalorder %s15, 1
    %p106 = por %p104, %p105
    %p107 = scmp.ne.s32.totalorder %s96, %s97
    %p108 = scmp.eq.s32.totalorder %s15, 0
    %p109 = por %p107, %p108
    %p110 = scmp.ne.s32.totalorder %s96, %s97
    %p111 = scmp.eq.s32.totalorder %s16, 1
    %p112 = por %p110, %p111
    %p114 = scmp.ne.s32.totalorder %s97, %s113
    %p115 = scmp.eq.s32.totalorder %s16, 0
    %p116 = por %p114, %p115
    %p117 = scmp.le.s32.totalorder 1, %s10
    %p118 = scmp.lt.s32.totalorder %s10, 3
    %p119 = pnand %p117, %p118
    %p120 = pneg %p119
    // Predicated region
    $region9: #{resnet_generator.24} parent=5 // pred_check
      _
    $region10: #{resnet_generator.24} parent=5 // pred_check_branch
      %122 = sbr.rel (%p119) target = $region12
    $region11: #{resnet_generator.24} parent=5 // pred_region
      %s123 = ssub.s32 %s10, 1
      // Predicated region
      $region13: #{resnet_generator.24} parent=11 // pred_check
        %p124 = pneg %p57
      $region14: #{resnet_generator.24} parent=11 // pred_check_branch
        %126 = sbr.rel (%p124) target = $region16
      $region15: #{resnet_generator.24} parent=11 // pred_region
        _
      $region16: #{resnet_generator.24} parent=11 // pred_fallthru
        _
    $region12: #{resnet_generator.24} parent=5 // pred_fallthru
      _
    %p127 = scmp.lt.s32.totalorder %s10, 2
    // Predicated region
    $region17: #{resnet_generator.24} parent=5 // pred_check
      %p128 = pneg %p127
    $region18: #{resnet_generator.24} parent=5 // pred_check_branch
      %130 = sbr.rel (%p128) target = $region20
    $region19: #{resnet_generator.24} parent=5 // pred_region
      // Predicated region
      $region21: #{resnet_generator.24} parent=19 // pred_check
        %p131 = pneg %p30
      $region22: #{resnet_generator.24} parent=19 // pred_check_branch
        %133 = sbr.rel (%p131) target = $region24
      $region23: #{resnet_generator.24} parent=19 // pred_region
        %s134 = smul.u32 2, %s10
        %p135 = scmp.lt.s32.totalorder %s134, 3
        %s136 = scalar_select %p135, %s134, 3
        %s137 = smul.addr %s136, 2
        %s138 = smul.addr %s137, 4
        %s139 = scalar_lea.vmem %s0, %s138
        %s140 = smul.u32 2, %s10
      $region24: #{resnet_generator.24} parent=19 // pred_fallthru
        _
    $region20: #{resnet_generator.24} parent=5 // pred_fallthru
      _
    %p141 = scmp.le.s32.totalorder 1, %s10
    %p142 = scmp.lt.s32.totalorder %s10, 3
    %p143 = pnand %p141, %p142
    %p144 = pneg %p143
    // Predicated region
    $region25: #{resnet_generator.24} parent=5 // pred_check
      _
    $region26: #{resnet_generator.24} parent=5 // pred_check_branch
      %146 = sbr.rel (%p143) target = $region28
    $region27: #{resnet_generator.24} parent=5 // pred_region
      %s147 = ssub.s32 %s10, 1
      %s148 = smul.u32 2, %s15
      %p149 = scmp.lt.s32.totalorder %s148, 3
      %s150 = scalar_select %p149, %s148, 3
      %s151 = smul.addr %s150, 2
      %s152 = smul.addr %s151, 4
      %s153 = scalar_lea.vmem %s0, %s152
      %p154 = pneg %p36
      %p155 = pneg %p33
      %p156 = pneg %p57
      %p157 = pneg %p54
      %p158 = pneg %p83
      %p159 = pneg %p80
      %s160 = smul.u32 2, %s15
      %p161 = scmp.lt.s32.totalorder %s160, 3
      %s162 = scalar_select %p161, %s160, 3
      %s163 = smul.addr %s162, 4
      %s164 = scalar_lea.vmem %s2, %s163
      %p165 = pneg %p109
      %p166 = pneg %p106
      %p167 = scmp.lt.s32.totalorder %s15, 1
      %s168 = scalar_select %p167, %s15, 1
      %s169 = smul.addr %s168, 8
      %s170 = scalar_lea.vmem %s3, %s169
      %s171 = smul.u32 2, %s15
      %p172 = scmp.lt.s32.totalorder %s171, 3
      %s173 = scalar_select %p172, %s171, 3
      %s174 = smul.addr %s173, 2
      %s175 = smul.addr %s174, 4
      %s176 = scalar_lea.vmem %s0, %s175
      %s177 = smul.u32 2, %s15
      %s178 = smul.u32 2, %s15
      %p179 = scmp.lt.s32.totalorder %s178, 3
      %s180 = scalar_select %p179, %s178, 3
      %s181 = smul.addr %s180, 4
      %s182 = scalar_lea.vmem %s2, %s181
      %s183 = smul.u32 2, %s15
      %p184 = scmp.lt.s32.totalorder %s15, 1
      %s185 = scalar_select %p184, %s15, 1
      %s186 = smul.addr %s185, 8
      %s187 = scalar_lea.vmem %s3, %s186
      %v189 = vld [vmem:[%s176] sm:$0xff]
      %v190 = vld [vmem:[%s176 + $0x8] sm:$0xff]
      %v191 = vld [vmem:[%s1] sm:$0xf]
      %v192 = vld [vmem:[%s1 + $0x4] sm:$0xf]
      %v193 = vld [vmem:[%s1 + $0x8] sm:$0xf]
      %v194 = vld [vmem:[%s1 + $0xc] sm:$0xf]
      %v195 = vld [vmem:[%s1 + $0x10] sm:$0xf]
      %v196 = vld [vmem:[%s1 + $0x14] sm:$0xf]
      %v197 = vld [vmem:[%s1 + $0x18] sm:$0xf]
      %v198 = vld [vmem:[%s1 + $0x1c] sm:$0xf]
      %v199 = vld [vmem:[%s1 + $0x20] sm:$0xf]
      %v200 = vld [vmem:[%s1 + $0x24] sm:$0xf]
      %v201 = vld [vmem:[%s1 + $0x28] sm:$0xf]
      %v202 = vld [vmem:[%s1 + $0x2c] sm:$0xf]
      %v203 = vld [vmem:[%s1 + $0x30] sm:$0xf]
      %v204 = vld [vmem:[%s1 + $0x34] sm:$0xf]
      %v205 = vld [vmem:[%s1 + $0x38] sm:$0xf]
      %v206 = vld [vmem:[%s1 + $0x3c] sm:$0xf]
      %v207 = vld [vmem:[%s1 + $0x40] sm:$0xf]
      %v208 = vld [vmem:[%s1 + $0x44] sm:$0xf]
      %v209 = vld [vmem:[%s1 + $0x48] sm:$0xf]
      %v210 = vld [vmem:[%s1 + $0x4c] sm:$0xf]
      %v211 = vld [vmem:[%s1 + $0x50] sm:$0xf]
      %v212 = vld [vmem:[%s1 + $0x54] sm:$0xf]
      %v213 = vld [vmem:[%s1 + $0x58] sm:$0xf]
      %v214 = vld [vmem:[%s1 + $0x5c] sm:$0xf]
      %v215 = vld [vmem:[%s1 + $0x60] sm:$0xf]
      %v216 = vld [vmem:[%s1 + $0x64] sm:$0xf]
      %v217 = vld [vmem:[%s1 + $0x68] sm:$0xf]
      %v218 = vld [vmem:[%s1 + $0x6c] sm:$0xf]
      %v219 = vld [vmem:[%s1 + $0x70] sm:$0xf]
      %v220 = vld [vmem:[%s1 + $0x74] sm:$0xf]
      %v221 = vld [vmem:[%s1 + $0x78] sm:$0xf]
      %v222 = vld [vmem:[%s1 + $0x7c] sm:$0xf]
      %v225 = vunpack.c.l.b16 %v189
      %v226 = vunpack.c.h.b16 %v189
      %v227 = vunpack.c.l.b16 %v190
      %v228 = vunpack.c.h.b16 %v190
      %v229 = vpack.c.b16 %v227, %v225
      %v230 = vpack.c.b16 %v228, %v226
      %v265 = vunpack.c.l.b16 %v191
      %v266 = vunpack.c.l.b16 %v192
      %v267 = vunpack.c.l.b16 %v193
      %v268 = vunpack.c.l.b16 %v194
      %v269 = vunpack.c.l.b16 %v195
      %v270 = vunpack.c.l.b16 %v196
      %v271 = vunpack.c.l.b16 %v197
      %v272 = vunpack.c.l.b16 %v198
      %v273 = vunpack.c.l.b16 %v199
      %v274 = vunpack.c.l.b16 %v200
      %v275 = vunpack.c.l.b16 %v201
      %v276 = vunpack.c.l.b16 %v202
      %v277 = vunpack.c.l.b16 %v203
      %v278 = vunpack.c.l.b16 %v204
      %v279 = vunpack.c.l.b16 %v205
      %v280 = vunpack.c.l.b16 %v206
      %v281 = vunpack.c.l.b16 %v207
      %v282 = vunpack.c.l.b16 %v208
      %v283 = vunpack.c.l.b16 %v209
      %v284 = vunpack.c.l.b16 %v210
      %v285 = vunpack.c.l.b16 %v211
      %v286 = vunpack.c.l.b16 %v212
      %v287 = vunpack.c.l.b16 %v213
      %v288 = vunpack.c.l.b16 %v214
      %v289 = vunpack.c.l.b16 %v215
      %v290 = vunpack.c.l.b16 %v216
      %v291 = vunpack.c.l.b16 %v217
      %v292 = vunpack.c.l.b16 %v218
      %v293 = vunpack.c.l.b16 %v219
      %v294 = vunpack.c.l.b16 %v220
      %v295 = vunpack.c.l.b16 %v221
      %v296 = vunpack.c.l.b16 %v222
      %v297 = vpack.c.b16 %v266, %v265
      %v298 = vpack.c.b16 %v268, %v267
      %v299 = vpack.c.b16 %v270, %v269
      %v300 = vpack.c.b16 %v272, %v271
      %v301 = vpack.c.b16 %v274, %v273
      %v302 = vpack.c.b16 %v276, %v275
      %v303 = vpack.c.b16 %v278, %v277
      %v304 = vpack.c.b16 %v280, %v279
      %v305 = vpack.c.b16 %v282, %v281
      %v306 = vpack.c.b16 %v284, %v283
      %v307 = vpack.c.b16 %v286, %v285
      %v308 = vpack.c.b16 %v288, %v287
      %v309 = vpack.c.b16 %v290, %v289
      %v310 = vpack.c.b16 %v292, %v291
      %v311 = vpack.c.b16 %v294, %v293
      %v312 = vpack.c.b16 %v296, %v295
      %329 = vmatprep.subr.bf16.mxu0 0
      %330 = vmatpush1.bf16.msra.mxu0 %v304
      %331 = vmatprep.subr.bf16.mxu0 0
      %332 = vmatpush1.bf16.msra.mxu0 %v303
      %333 = vmatprep.subr.bf16.mxu0 0
      %334 = vmatpush1.bf16.msra.mxu0 %v302
      %335 = vmatprep.subr.bf16.mxu0 0
      %336 = vmatpush1.bf16.msra.mxu0 %v301
      %337 = vmatprep.subr.bf16.mxu0 0
      %338 = vmatpush1.bf16.msra.mxu0 %v300
      %339 = vmatprep.subr.bf16.mxu0 0
      %340 = vmatpush1.bf16.msra.mxu0 %v299
      %341 = vmatprep.subr.bf16.mxu0 0
      %342 = vmatpush1.bf16.msra.mxu0 %v298
      %343 = vmatprep.subr.bf16.mxu0 0
      %344 = vmatpush1.bf16.msra.mxu0 %v297
      %345 = vmatprep.subr.bf16.mxu0 0
      %346 = vmatpush2.bf16.msra.mxu0 %v312
      %347 = vmatprep.subr.bf16.mxu0 0
      %348 = vmatpush2.bf16.msra.mxu0 %v311
      %349 = vmatprep.subr.bf16.mxu0 0
      %350 = vmatpush2.bf16.msra.mxu0 %v310
      %351 = vmatprep.subr.bf16.mxu0 0
      %352 = vmatpush2.bf16.msra.mxu0 %v309
      %353 = vmatprep.subr.bf16.mxu0 0
      %354 = vmatpush2.bf16.msra.mxu0 %v308
      %355 = vmatprep.subr.bf16.mxu0 0
      %356 = vmatpush2.bf16.msra.mxu0 %v307
      %357 = vmatprep.subr.bf16.mxu0 0
      %358 = vmatpush2.bf16.msra.mxu0 %v306
      %359 = vmatprep.subr.bf16.mxu0 0
      %360 = vmatpush2.bf16.msra.mxu0 %v305
      %361 = vmatprep.mubr.bf16.mxu0 %v230
      %362 = vmatmul.mubr.bf16.gmra.mxu0 %v229
      %v363 = vpop.f32.mrf.mxu0
      %v364 = vadd.f32 0.0, %v363
      %v365 = vpop.f32.mrf.mxu0
      %v366 = vpop.f32.mrf.mxu0
      %v367 = vadd.f32 0.0, %v366
      %v368 = vpop.f32.mrf.mxu0
      %369 = vdwg.mxu0
      %v370 = vpack.c.bf16 %v367, %v364
      %v372 = vunpack.c.l.b16 %v370
      %v373 = vunpack.c.h.b16 %v370
      %v374 = vpack.c.b16 %v372, %v372
      %v375 = vpack.c.b16 %v373, %v373
      %378 = vst [vmem:[%s182] sm:$0xf] %v374
      %379 = vst [vmem:[%s182 + $0x4] sm:$0xf] %v375
      %v380 = vadd.f32 %v364, %v367
      %v381 = vrot.slane %v380, 4
      %v382 = vadd.f32 %v380, %v381
      %v383 = vrot.slane %v382, 2
      %v384 = vadd.f32 %v382, %v383
      %v385 = vrot.slane %v384, 1
      %v386 = vadd.f32 %v384, %v385
      %v387 = vmul.f32 %v364, %v364
      %v388 = vmul.f32 %v367, %v367
      %v389 = vadd.f32 %v387, %v388
      %v390 = vrot.slane %v389, 4
      %v391 = vadd.f32 %v389, %v390
      %v392 = vrot.slane %v391, 2
      %v393 = vadd.f32 %v391, %v392
      %v394 = vrot.slane %v393, 1
      %v395 = vadd.f32 %v393, %v394
      %vm396 = vcmask 1040384
      %v397 = vsel %vm396, %v386, %v395
      %vm398 = vcmask 1041408
      %v399 = vsel %vm398, %v397, 0.0
      %400 = vst [vmem:[%s187] sm:$0xff] %v399
      %s401 = smul.u32 2, %s15
      %p402 = scmp.lt.s32.totalorder %s401, 3
      %s403 = scalar_select %p402, %s401, 3
      %s404 = smul.addr %s403, 4
      %s405 = scalar_lea.vmem %s2, %s404
      %p406 = scmp.lt.s32.totalorder %s15, 1
      %s407 = scalar_select %p406, %s15, 1
      %s408 = smul.addr %s407, 8
      %s409 = scalar_lea.vmem %s3, %s408
      // Predicated region
      $region29: #{resnet_generator.24} parent=27 // pred_check
        %p410 = pneg %p80
      $region30: #{resnet_generator.24} parent=27 // pred_check_branch
        %412 = sbr.rel (%p410) target = $region32
      $region31: #{resnet_generator.24} parent=27 // pred_region
        %s413 = smul.u32 2, %s15
      $region32: #{resnet_generator.24} parent=27 // pred_fallthru
        _
      // Predicated region
      $region33: #{resnet_generator.24} parent=27 // pred_check
        %p414 = pneg %p106
      $region34: #{resnet_generator.24} parent=27 // pred_check_branch
        %416 = sbr.rel (%p414) target = $region36
      $region35: #{resnet_generator.24} parent=27 // pred_region
        _
      $region36: #{resnet_generator.24} parent=27 // pred_fallthru
        _
    $region28: #{resnet_generator.24} parent=5 // pred_fallthru
      _
    %p417 = scmp.le.s32.totalorder 2, %s10
    // Predicated region
    $region37: #{resnet_generator.24} parent=5 // pred_check
      %p418 = pneg %p417
    $region38: #{resnet_generator.24} parent=5 // pred_check_branch
      %420 = sbr.rel (%p418) target = $region40
    $region39: #{resnet_generator.24} parent=5 // pred_region
      %s421 = ssub.s32 %s10, 2
      // Predicated region
      $region41: #{resnet_generator.24} parent=39 // pred_check
        %p422 = pneg %p86
      $region42: #{resnet_generator.24} parent=39 // pred_check_branch
        %424 = sbr.rel (%p422) target = $region44
      $region43: #{resnet_generator.24} parent=39 // pred_region
        %s425 = smul.u32 2, %s16
        %p426 = scmp.lt.s32.totalorder %s425, 3
        %s427 = scalar_select %p426, %s425, 3
        %s428 = smul.addr %s427, 4
        %s429 = scalar_lea.vmem %s2, %s428
      $region44: #{resnet_generator.24} parent=39 // pred_fallthru
        _
      // Predicated region
      $region45: #{resnet_generator.24} parent=39 // pred_check
        %p430 = pneg %p112
      $region46: #{resnet_generator.24} parent=39 // pred_check_branch
        %432 = sbr.rel (%p430) target = $region48
      $region47: #{resnet_generator.24} parent=39 // pred_region
        %p433 = scmp.lt.s32.totalorder %s16, 1
        %s434 = scalar_select %p433, %s16, 1
        %s435 = smul.addr %s434, 8
        %s436 = scalar_lea.vmem %s3, %s435
      $region48: #{resnet_generator.24} parent=39 // pred_fallthru
        _
    $region40: #{resnet_generator.24} parent=5 // pred_fallthru
      _
  $region6: #{resnet_generator.24} parent=0 // loop_footer
    %s14 = sadd.s32 1, %s10
  $region7: #{resnet_generator.24} parent=0 // loop_footer_branch
    %9 = sbr.rel target = $region3
  $region8: #{resnet_generator.24} parent=0 // loop_exit
    _

// kernel: resnet_generator.26
$region0: #{resnet_generator.26}
  #allocation0 [shape = 'u32[]', space=smem, size = 0x4, offset = 0x4, fixed_abs, tag = 'smem constant byte address 0x4 - core index']
  #allocation1 [shape = 'u32[144,128]{1,0:T(1,128)}', space=vmem, size = 0x12000, scoped, tag = 'internal scratch']
  %s0 = inlined_call_operand.vmem [shape: bf16[32,384], index: 0, kind: input, shape index: {}]
  %s1 = inlined_call_operand.vmem [shape: bf16[384,128], index: 1, kind: input, shape index: {}]
  %s2 = inlined_call_operand.vmem [shape: bf16[32,128], index: 2, kind: output, shape index: {0}]
  %s3 = inlined_call_operand.vmem [shape: f32[16,128], index: 3, kind: output, shape index: {1}]
  %4 = xla_tuple %s2, %s3
  %s5 = sld [smem:[#allocation0]]
  $region49: #{resnet_generator.26} parent=0
    _
  %s7 = ssub.s32 1, %s5
  %s8 = scalar_select 0, %s7, %s5
  loop: start=0, step=1, limit=4
  $region2: #{resnet_generator.26} parent=0 // loop_pre_header
    _
  $region3: #{resnet_generator.26} parent=0 // loop_header
    %s10 = sphi 0, %s14
    %p11 = scmp.ge.s32.totalorder %s10, 4
    %s20 = sphi 0, %s22
    %s23 = sphi 0, %s20
    %s24 = sphi 0, %s23
    %s40 = sphi 0, %s24
    %s44 = sphi 0, %s44
    %s46 = sphi 0, %s44
    %s47 = sphi 0, %s46
    %s61 = sphi 0, %s47
    %s67 = sphi 0, %s69
    %s70 = sphi 0, %s67
    %s71 = sphi 0, %s70
    %s87 = sphi 0, %s71
    %s93 = sphi 0, %s95
    %s96 = sphi 0, %s93
    %s97 = sphi 0, %s96
    %s113 = sphi 0, %s97
  $region4: #{resnet_generator.26} parent=0 // loop_header_branch
    %13 = sbr.rel (%p11) target = $region8
  $region5: #{resnet_generator.26} parent=0 // loop_body
    %s15 = ssub.s32 %s10, 1
    %s16 = ssub.s32 %s10, 2
    %s17 = sadd.s32 %s10, 1
    %s18 = ssub.s32 %s10, %s17
    %p19 = scmp.eq.s32.totalorder %s18, 0
    %s21 = sadd.s32 %s20, 1
    %s22 = scalar_select %p19, %s20, %s21
    %p25 = pneg %p19
    %p26 = scmp.eq.s32.totalorder %s10, 1
    %p27 = por %p25, %p26
    %p28 = scmp.ne.s32.totalorder %s20, %s23
    %p29 = scmp.eq.s32.totalorder %s10, 0
    %p30 = por %p28, %p29
    %p31 = scmp.ne.s32.totalorder %s20, %s23
    %p32 = scmp.eq.s32.totalorder %s15, 1
    %p33 = por %p31, %p32
    %p34 = scmp.ne.s32.totalorder %s23, %s24
    %p35 = scmp.eq.s32.totalorder %s15, 0
    %p36 = por %p34, %p35
    %p37 = scmp.ne.s32.totalorder %s23, %s24
    %p38 = scmp.eq.s32.totalorder %s16, 1
    %p39 = por %p37, %p38
    %p41 = scmp.ne.s32.totalorder %s24, %s40
    %p42 = scmp.eq.s32.totalorder %s16, 0
    %p43 = por %p41, %p42
    %s45 = sadd.s32 %s44, 1
    %p48 = scmp.eq.s32.totalorder %s10, 1
    %p49 = scmp.ne.s32.totalorder %s44, %s46
    %p50 = scmp.eq.s32.totalorder %s10, 0
    %p51 = por %p49, %p50
    %p52 = scmp.ne.s32.totalorder %s44, %s46
    %p53 = scmp.eq.s32.totalorder %s15, 1
    %p54 = por %p52, %p53
    %p55 = scmp.ne.s32.totalorder %s46, %s47
    %p56 = scmp.eq.s32.totalorder %s15, 0
    %p57 = por %p55, %p56
    %p58 = scmp.ne.s32.totalorder %s46, %s47
    %p59 = scmp.eq.s32.totalorder %s16, 1
    %p60 = por %p58, %p59
    %p62 = scmp.ne.s32.totalorder %s47, %s61
    %p63 = scmp.eq.s32.totalorder %s16, 0
    %p64 = por %p62, %p63
    %s65 = ssub.s32 %s10, %s17
    %p66 = scmp.eq.s32.totalorder %s65, 0
    %s68 = sadd.s32 %s67, 1
    %s69 = scalar_select %p66, %s67, %s68
    %p72 = pneg %p66
    %p73 = scmp.eq.s32.totalorder %s10, 1
    %p74 = por %p72, %p73
    %p75 = scmp.ne.s32.totalorder %s67, %s70
    %p76 = scmp.eq.s32.totalorder %s10, 0
    %p77 = por %p75, %p76
    %p78 = scmp.ne.s32.totalorder %s67, %s70
    %p79 = scmp.eq.s32.totalorder %s15, 1
    %p80 = por %p78, %p79
    %p81 = scmp.ne.s32.totalorder %s70, %s71
    %p82 = scmp.eq.s32.totalorder %s15, 0
    %p83 = por %p81, %p82
    %p84 = scmp.ne.s32.totalorder %s70, %s71
    %p85 = scmp.eq.s32.totalorder %s16, 1
    %p86 = por %p84, %p85
    %p88 = scmp.ne.s32.totalorder %s71, %s87
    %p89 = scmp.eq.s32.totalorder %s16, 0
    %p90 = por %p88, %p89
    %s91 = ssub.s32 %s10, %s17
    %p92 = scmp.eq.s32.totalorder %s91, 0
    %s94 = sadd.s32 %s93, 1
    %s95 = scalar_select %p92, %s93, %s94
    %p98 = pneg %p92
    %p99 = scmp.eq.s32.totalorder %s10, 1
    %p100 = por %p98, %p99
    %p101 = scmp.ne.s32.totalorder %s93, %s96
    %p102 = scmp.eq.s32.totalorder %s10, 0
    %p103 = por %p101, %p102
    %p104 = scmp.ne.s32.totalorder %s93, %s96
    %p105 = scmp.eq.s32.totalorder %s15, 1
    %p106 = por %p104, %p105
    %p107 = scmp.ne.s32.totalorder %s96, %s97
    %p108 = scmp.eq.s32.totalorder %s15, 0
    %p109 = por %p107, %p108
    %p110 = scmp.ne.s32.totalorder %s96, %s97
    %p111 = scmp.eq.s32.totalorder %s16, 1
    %p112 = por %p110, %p111
    %p114 = scmp.ne.s32.totalorder %s97, %s113
    %p115 = scmp.eq.s32.totalorder %s16, 0
    %p116 = por %p114, %p115
    %p117 = scmp.le.s32.totalorder 1, %s10
    %p118 = scmp.lt.s32.totalorder %s10, 3
    %p119 = pnand %p117, %p118
    %p120 = pneg %p119
    // Predicated region
    $region9: #{resnet_generator.26} parent=5 // pred_check
      _
    $region10: #{resnet_generator.26} parent=5 // pred_check_branch
      %122 = sbr.rel (%p119) target = $region12
    $region11: #{resnet_generator.26} parent=5 // pred_region
      %s123 = ssub.s32 %s10, 1
      // Predicated region
      $region13: #{resnet_generator.26} parent=11 // pred_check
        %p124 = pneg %p57
      $region14: #{resnet_generator.26} parent=11 // pred_check_branch
        %126 = sbr.rel (%p124) target = $region16
      $region15: #{resnet_generator.26} parent=11 // pred_region
        _
      $region16: #{resnet_generator.26} parent=11 // pred_fallthru
        _
    $region12: #{resnet_generator.26} parent=5 // pred_fallthru
      _
    %p127 = scmp.lt.s32.totalorder %s10, 2
    // Predicated region
    $region17: #{resnet_generator.26} parent=5 // pred_check
      %p128 = pneg %p127
    $region18: #{resnet_generator.26} parent=5 // pred_check_branch
      %130 = sbr.rel (%p128) target = $region20
    $region19: #{resnet_generator.26} parent=5 // pred_region
      // Predicated region
      $region21: #{resnet_generator.26} parent=19 // pred_check
        %p131 = pneg %p30
      $region22: #{resnet_generator.26} parent=19 // pred_check_branch
        %133 = sbr.rel (%p131) target = $region24
      $region23: #{resnet_generator.26} parent=19 // pred_region
        %s134 = smul.u32 2, %s10
        %p135 = scmp.lt.s32.totalorder %s134, 3
        %s136 = scalar_select %p135, %s134, 3
        %s137 = smul.addr %s136, 3
        %s138 = smul.addr %s137, 4
        %s139 = scalar_lea.vmem %s0, %s138
        %s140 = smul.u32 2, %s10
      $region24: #{resnet_generator.26} parent=19 // pred_fallthru
        _
    $region20: #{resnet_generator.26} parent=5 // pred_fallthru
      _
    %p141 = scmp.le.s32.totalorder 1, %s10
    %p142 = scmp.lt.s32.totalorder %s10, 3
    %p143 = pnand %p141, %p142
    %p144 = pneg %p143
    // Predicated region
    $region25: #{resnet_generator.26} parent=5 // pred_check
      _
    $region26: #{resnet_generator.26} parent=5 // pred_check_branch
      %146 = sbr.rel (%p143) target = $region28
    $region27: #{resnet_generator.26} parent=5 // pred_region
      %s147 = ssub.s32 %s10, 1
      %s148 = smul.u32 2, %s15
      %p149 = scmp.lt.s32.totalorder %s148, 3
      %s150 = scalar_select %p149, %s148, 3
      %s151 = smul.addr %s150, 3
      %s152 = smul.addr %s151, 4
      %s153 = scalar_lea.vmem %s0, %s152
      %p154 = pneg %p36
      %p155 = pneg %p33
      %p156 = pneg %p57
      %p157 = pneg %p54
      %p158 = pneg %p83
      %p159 = pneg %p80
      %s160 = smul.u32 2, %s15
      %p161 = scmp.lt.s32.totalorder %s160, 3
      %s162 = scalar_select %p161, %s160, 3
      %s163 = smul.addr %s162, 4
      %s164 = scalar_lea.vmem %s2, %s163
      %p165 = pneg %p109
      %p166 = pneg %p106
      %p167 = scmp.lt.s32.totalorder %s15, 1
      %s168 = scalar_select %p167, %s15, 1
      %s169 = smul.addr %s168, 8
      %s170 = scalar_lea.vmem %s3, %s169
      %s171 = smul.u32 2, %s15
      %p172 = scmp.lt.s32.totalorder %s171, 3
      %s173 = scalar_select %p172, %s171, 3
      %s174 = smul.addr %s173, 3
      %s175 = smul.addr %s174, 4
      %s176 = scalar_lea.vmem %s0, %s175
      %s177 = smul.u32 2, %s15
      %s178 = smul.u32 2, %s15
      %p179 = scmp.lt.s32.totalorder %s178, 3
      %s180 = scalar_select %p179, %s178, 3
      %s181 = smul.addr %s180, 4
      %s182 = scalar_lea.vmem %s2, %s181
      %s183 = smul.u32 2, %s15
      %p184 = scmp.lt.s32.totalorder %s15, 1
      %s185 = scalar_select %p184, %s15, 1
      %s186 = smul.addr %s185, 8
      %s187 = scalar_lea.vmem %s3, %s186
      %v189 = vld [vmem:[%s176] sm:$0xff]
      %v190 = vld [vmem:[%s176 + $0x8] sm:$0xf]
      %v191 = vld [vmem:[%s176 + $0xc] sm:$0xff]
      %v192 = vld [vmem:[%s176 + $0x14] sm:$0xf]
      %v193 = vld [vmem:[%s1] sm:$0xf]
      %v194 = vld [vmem:[%s1 + $0x4] sm:$0xf]
      %v195 = vld [vmem:[%s1 + $0x8] sm:$0xf]
      %v196 = vld [vmem:[%s1 + $0xc] sm:$0xf]
      %v197 = vld [vmem:[%s1 + $0x10] sm:$0xf]
      %v198 = vld [vmem:[%s1 + $0x14] sm:$0xf]
      %v199 = vld [vmem:[%s1 + $0x18] sm:$0xf]
      %v200 = vld [vmem:[%s1 + $0x1c] sm:$0xf]
      %v201 = vld [vmem:[%s1 + $0x20] sm:$0xf]
      %v202 = vld [vmem:[%s1 + $0x24] sm:$0xf]
      %v203 = vld [vmem:[%s1 + $0x28] sm:$0xf]
      %v204 = vld [vmem:[%s1 + $0x2c] sm:$0xf]
      %v205 = vld [vmem:[%s1 + $0x30] sm:$0xf]
      %v206 = vld [vmem:[%s1 + $0x34] sm:$0xf]
      %v207 = vld [vmem:[%s1 + $0x38] sm:$0xf]
      %v208 = vld [vmem:[%s1 + $0x3c] sm:$0xf]
      %v209 = vld [vmem:[%s1 + $0x40] sm:$0xf]
      %v210 = vld [vmem:[%s1 + $0x44] sm:$0xf]
      %v211 = vld [vmem:[%s1 + $0x48] sm:$0xf]
      %v212 = vld [vmem:[%s1 + $0x4c] sm:$0xf]
      %v213 = vld [vmem:[%s1 + $0x50] sm:$0xf]
      %v214 = vld [vmem:[%s1 + $0x54] sm:$0xf]
      %v215 = vld [vmem:[%s1 + $0x58] sm:$0xf]
      %v216 = vld [vmem:[%s1 + $0x5c] sm:$0xf]
      %v217 = vld [vmem:[%s1 + $0x60] sm:$0xf]
      %v218 = vld [vmem:[%s1 + $0x64] sm:$0xf]
      %v219 = vld [vmem:[%s1 + $0x68] sm:$0xf]
      %v220 = vld [vmem:[%s1 + $0x6c] sm:$0xf]
      %v221 = vld [vmem:[%s1 + $0x70] sm:$0xf]
      %v222 = vld [vmem:[%s1 + $0x74] sm:$0xf]
      %v223 = vld [vmem:[%s1 + $0x78] sm:$0xf]
      %v224 = vld [vmem:[%s1 + $0x7c] sm:$0xf]
      %v225 = vld [vmem:[%s1 + $0x80] sm:$0xf]
      %v226 = vld [vmem:[%s1 + $0x84] sm:$0xf]
      %v227 = vld [vmem:[%s1 + $0x88] sm:$0xf]
      %v228 = vld [vmem:[%s1 + $0x8c] sm:$0xf]
      %v229 = vld [vmem:[%s1 + $0x90] sm:$0xf]
      %v230 = vld [vmem:[%s1 + $0x94] sm:$0xf]
      %v231 = vld [vmem:[%s1 + $0x98] sm:$0xf]
      %v232 = vld [vmem:[%s1 + $0x9c] sm:$0xf]
      %v233 = vld [vmem:[%s1 + $0xa0] sm:$0xf]
      %v234 = vld [vmem:[%s1 + $0xa4] sm:$0xf]
      %v235 = vld [vmem:[%s1 + $0xa8] sm:$0xf]
      %v236 = vld [vmem:[%s1 + $0xac] sm:$0xf]
      %v237 = vld [vmem:[%s1 + $0xb0] sm:$0xf]
      %v238 = vld [vmem:[%s1 + $0xb4] sm:$0xf]
      %v239 = vld [vmem:[%s1 + $0xb8] sm:$0xf]
      %v240 = vld [vmem:[%s1 + $0xbc] sm:$0xf]
      %v245 = vunpack.c.l.b16 %v189
      %v246 = vunpack.c.h.b16 %v189
      %v247 = vunpack.c.l.b16 %v190
      %v248 = vunpack.c.l.b16 %v191
      %v249 = vunpack.c.h.b16 %v191
      %v250 = vunpack.c.l.b16 %v192
      %v251 = vpack.c.b16 %v248, %v245
      %v252 = vpack.c.b16 %v249, %v246
      %v253 = vpack.c.b16 %v250, %v247
      %v305 = vunpack.c.l.b16 %v193
      %v306 = vunpack.c.l.b16 %v194
      %v307 = vunpack.c.l.b16 %v195
      %v308 = vunpack.c.l.b16 %v196
      %v309 = vunpack.c.l.b16 %v197
      %v310 = vunpack.c.l.b16 %v198
      %v311 = vunpack.c.l.b16 %v199
      %v312 = vunpack.c.l.b16 %v200
      %v313 = vunpack.c.l.b16 %v201
      %v314 = vunpack.c.l.b16 %v202
      %v315 = vunpack.c.l.b16 %v203
      %v316 = vunpack.c.l.b16 %v204
      %v317 = vunpack.c.l.b16 %v205
      %v318 = vunpack.c.l.b16 %v206
      %v319 = vunpack.c.l.b16 %v207
      %v320 = vunpack.c.l.b16 %v208
      %v321 = vunpack.c.l.b16 %v209
      %v322 = vunpack.c.l.b16 %v210
      %v323 = vunpack.c.l.b16 %v211
      %v324 = vunpack.c.l.b16 %v212
      %v325 = vunpack.c.l.b16 %v213
      %v326 = vunpack.c.l.b16 %v214
      %v327 = vunpack.c.l.b16 %v215
      %v328 = vunpack.c.l.b16 %v216
      %v329 = vunpack.c.l.b16 %v217
      %v330 = vunpack.c.l.b16 %v218
      %v331 = vunpack.c.l.b16 %v219
      %v332 = vunpack.c.l.b16 %v220
      %v333 = vunpack.c.l.b16 %v221
      %v334 = vunpack.c.l.b16 %v222
      %v335 = vunpack.c.l.b16 %v223
      %v336 = vunpack.c.l.b16 %v224
      %v337 = vunpack.c.l.b16 %v225
      %v338 = vunpack.c.l.b16 %v226
      %v339 = vunpack.c.l.b16 %v227
      %v340 = vunpack.c.l.b16 %v228
      %v341 = vunpack.c.l.b16 %v229
      %v342 = vunpack.c.l.b16 %v230
      %v343 = vunpack.c.l.b16 %v231
      %v344 = vunpack.c.l.b16 %v232
      %v345 = vunpack.c.l.b16 %v233
      %v346 = vunpack.c.l.b16 %v234
      %v347 = vunpack.c.l.b16 %v235
      %v348 = vunpack.c.l.b16 %v236
      %v349 = vunpack.c.l.b16 %v237
      %v350 = vunpack.c.l.b16 %v238
      %v351 = vunpack.c.l.b16 %v239
      %v352 = vunpack.c.l.b16 %v240
      %v353 = vpack.c.b16 %v306, %v305
      %v354 = vpack.c.b16 %v308, %v307
      %v355 = vpack.c.b16 %v310, %v309
      %v356 = vpack.c.b16 %v312, %v311
      %v357 = vpack.c.b16 %v314, %v313
      %v358 = vpack.c.b16 %v316, %v315
      %v359 = vpack.c.b16 %v318, %v317
      %v360 = vpack.c.b16 %v320, %v319
      %v361 = vpack.c.b16 %v322, %v321
      %v362 = vpack.c.b16 %v324, %v323
      %v363 = vpack.c.b16 %v326, %v325
      %v364 = vpack.c.b16 %v328, %v327
      %v365 = vpack.c.b16 %v330, %v329
      %v366 = vpack.c.b16 %v332, %v331
      %v367 = vpack.c.b16 %v334, %v333
      %v368 = vpack.c.b16 %v336, %v335
      %v369 = vpack.c.b16 %v338, %v337
      %v370 = vpack.c.b16 %v340, %v339
      %v371 = vpack.c.b16 %v342, %v341
      %v372 = vpack.c.b16 %v344, %v343
      %v373 = vpack.c.b16 %v346, %v345
      %v374 = vpack.c.b16 %v348, %v347
      %v375 = vpack.c.b16 %v350, %v349
      %v376 = vpack.c.b16 %v352, %v351
      %401 = vmatprep.subr.bf16.mxu0 0
      %402 = vmatpush1.bf16.msra.mxu0 %v360
      %403 = vmatprep.subr.bf16.mxu0 0
      %404 = vmatpush1.bf16.msra.mxu0 %v359
      %405 = vmatprep.subr.bf16.mxu0 0
      %406 = vmatpush1.bf16.msra.mxu0 %v358
      %407 = vmatprep.subr.bf16.mxu0 0
      %408 = vmatpush1.bf16.msra.mxu0 %v357
      %409 = vmatprep.subr.bf16.mxu0 0
      %410 = vmatpush1.bf16.msra.mxu0 %v356
      %411 = vmatprep.subr.bf16.mxu0 0
      %412 = vmatpush1.bf16.msra.mxu0 %v355
      %413 = vmatprep.subr.bf16.mxu0 0
      %414 = vmatpush1.bf16.msra.mxu0 %v354
      %415 = vmatprep.subr.bf16.mxu0 0
      %416 = vmatpush1.bf16.msra.mxu0 %v353
      %417 = vmatprep.subr.bf16.mxu0 0
      %418 = vmatpush2.bf16.msra.mxu0 %v368
      %419 = vmatprep.subr.bf16.mxu0 0
      %420 = vmatpush2.bf16.msra.mxu0 %v367
      %421 = vmatprep.subr.bf16.mxu0 0
      %422 = vmatpush2.bf16.msra.mxu0 %v366
      %423 = vmatprep.subr.bf16.mxu0 0
      %424 = vmatpush2.bf16.msra.mxu0 %v365
      %425 = vmatprep.subr.bf16.mxu0 0
      %426 = vmatpush2.bf16.msra.mxu0 %v364
      %427 = vmatprep.subr.bf16.mxu0 0
      %428 = vmatpush2.bf16.msra.mxu0 %v363
      %429 = vmatprep.subr.bf16.mxu0 0
      %430 = vmatpush2.bf16.msra.mxu0 %v362
      %431 = vmatprep.subr.bf16.mxu0 0
      %432 = vmatpush2.bf16.msra.mxu0 %v361
      %433 = vmatprep.mubr.bf16.mxu0 %v252
      %434 = vmatmul.mubr.bf16.gmra.mxu0 %v251
      %v435 = vpop.f32.mrf.mxu0
      %v436 = vadd.f32 0.0, %v435
      %v437 = vpop.f32.mrf.mxu0
      %v438 = vpop.f32.mrf.mxu0
      %v439 = vadd.f32 0.0, %v438
      %v440 = vpop.f32.mrf.mxu0
      %441 = vdwg.mxu0
      %442 = vmatprep.subr.bf16.mxu0 0
      %443 = vmatpush1.bf16.msra.mxu0 %v376
      %444 = vmatprep.subr.bf16.mxu0 0
      %445 = vmatpush1.bf16.msra.mxu0 %v375
      %446 = vmatprep.subr.bf16.mxu0 0
      %447 = vmatpush1.bf16.msra.mxu0 %v374
      %448 = vmatprep.subr.bf16.mxu0 0
      %449 = vmatpush1.bf16.msra.mxu0 %v373
      %450 = vmatprep.subr.bf16.mxu0 0
      %451 = vmatpush1.bf16.msra.mxu0 %v372
      %452 = vmatprep.subr.bf16.mxu0 0
      %453 = vmatpush1.bf16.msra.mxu0 %v371
      %454 = vmatprep.subr.bf16.mxu0 0
      %455 = vmatpush1.bf16.msra.mxu0 %v370
      %456 = vmatprep.subr.bf16.mxu0 0
      %457 = vmatpush1.bf16.msra.mxu0 %v369
      %458 = vmatprep.subr.bf16.mxu0 0
      %459 = vmatpush2.bf16.msra.mxu0 0
      %460 = vmatprep.subr.bf16.mxu0 0
      %461 = vmatpush2.bf16.msra.mxu0 0
      %462 = vmatprep.subr.bf16.mxu0 0
      %463 = vmatpush2.bf16.msra.mxu0 0
      %464 = vmatprep.subr.bf16.mxu0 0
      %465 = vmatpush2.bf16.msra.mxu0 0
      %466 = vmatprep.subr.bf16.mxu0 0
      %467 = vmatpush2.bf16.msra.mxu0 0
      %468 = vmatprep.subr.bf16.mxu0 0
      %469 = vmatpush2.bf16.msra.mxu0 0
      %470 = vmatprep.subr.bf16.mxu0 0
      %471 = vmatpush2.bf16.msra.mxu0 0
      %472 = vmatprep.subr.bf16.mxu0 0
      %473 = vmatpush2.bf16.msra.mxu0 0
      %474 = vmatprep.mubr.bf16.mxu0 0
      %475 = vmatmul.mubr.bf16.gmra.mxu0 %v253
      %v476 = vpop.f32.mrf.mxu0
      %v477 = vadd.f32 %v436, %v476
      %v478 = vpop.f32.mrf.mxu0
      %v479 = vpop.f32.mrf.mxu0
      %v480 = vadd.f32 %v439, %v479
      %v481 = vpop.f32.mrf.mxu0
      %482 = vdwg.mxu0
      %v483 = vpack.c.bf16 %v480, %v477
      %v485 = vunpack.c.l.b16 %v483
      %v486 = vunpack.c.h.b16 %v483
      %v487 = vpack.c.b16 %v485, %v485
      %v488 = vpack.c.b16 %v486, %v486
      %491 = vst [vmem:[%s182] sm:$0xf] %v487
      %492 = vst [vmem:[%s182 + $0x4] sm:$0xf] %v488
      %v493 = vadd.f32 %v477, %v480
      %v494 = vrot.slane %v493, 4
      %v495 = vadd.f32 %v493, %v494
      %v496 = vrot.slane %v495, 2
      %v497 = vadd.f32 %v495, %v496
      %v498 = vrot.slane %v497, 1
      %v499 = vadd.f32 %v497, %v498
      %v500 = vmul.f32 %v477, %v477
      %v501 = vmul.f32 %v480, %v480
      %v502 = vadd.f32 %v500, %v501
      %v503 = vrot.slane %v502, 4
      %v504 = vadd.f32 %v502, %v503
      %v505 = vrot.slane %v504, 2
      %v506 = vadd.f32 %v504, %v505
      %v507 = vrot.slane %v506, 1
      %v508 = vadd.f32 %v506, %v507
      %vm509 = vcmask 1040384
      %v510 = vsel %vm509, %v499, %v508
      %vm511 = vcmask 1041408
      %v512 = vsel %vm511, %v510, 0.0
      %513 = vst [vmem:[%s187] sm:$0xff] %v512
      %s514 = smul.u32 2, %s15
      %p515 = scmp.lt.s32.totalorder %s514, 3
      %s516 = scalar_select %p515, %s514, 3
      %s517 = smul.addr %s516, 4
      %s518 = scalar_lea.vmem %s2, %s517
      %p519 = scmp.lt.s32.totalorder %s15, 1
      %s520 = scalar_select %p519, %s15, 1
      %s521 = smul.addr %s520, 8
      %s522 = scalar_lea.vmem %s3, %s521
      // Predicated region
      $region29: #{resnet_generator.26} parent=27 // pred_check
        %p523 = pneg %p80
      $region30: #{resnet_generator.26} parent=27 // pred_check_branch
        %525 = sbr.rel (%p523) target = $region32
      $region31: #{resnet_generator.26} parent=27 // pred_region
        %s526 = smul.u32 2, %s15
      $region32: #{resnet_generator.26} parent=27 // pred_fallthru
        _
      // Predicated region
      $region33: #{resnet_generator.26} parent=27 // pred_check
        %p527 = pneg %p106
      $region34: #{resnet_generator.26} parent=27 // pred_check_branch
        %529 = sbr.rel (%p527) target = $region36
      $region35: #{resnet_generator.26} parent=27 // pred_region
        _
      $region36: #{resnet_generator.26} parent=27 // pred_fallthru
        _
    $region28: #{resnet_generator.26} parent=5 // pred_fallthru
      _
    %p530 = scmp.le.s32.totalorder 2, %s10
    // Predicated region
    $region37: #{resnet_generator.26} parent=5 // pred_check
      %p531 = pneg %p530
    $region38: #{resnet_generator.26} parent=5 // pred_check_branch
      %533 = sbr.rel (%p531) target = $region40
    $region39: #{resnet_generator.26} parent=5 // pred_region
      %s534 = ssub.s32 %s10, 2
      // Predicated region
      $region41: #{resnet_generator.26} parent=39 // pred_check
        %p535 = pneg %p86
      $region42: #{resnet_generator.26} parent=39 // pred_check_branch
        %537 = sbr.rel (%p535) target = $region44
      $region43: #{resnet_generator.26} parent=39 // pred_region
        %s538 = smul.u32 2, %s16
        %p539 = scmp.lt.s32.totalorder %s538, 3
        %s540 = scalar_select %p539, %s538, 3
        %s541 = smul.addr %s540, 4
        %s542 = scalar_lea.vmem %s2, %s541
      $region44: #{resnet_generator.26} parent=39 // pred_fallthru
        _
      // Predicated region
      $region45: #{resnet_generator.26} parent=39 // pred_check
        %p543 = pneg %p112
      $region46: #{resnet_generator.26} parent=39 // pred_check_branch
        %545 = sbr.rel (%p543) target = $region48
      $region47: #{resnet_generator.26} parent=39 // pred_region
        %p546 = scmp.lt.s32.totalorder %s16, 1
        %s547 = scalar_select %p546, %s16, 1
        %s548 = smul.addr %s547, 8
        %s549 = scalar_lea.vmem %s3, %s548
      $region48: #{resnet_generator.26} parent=39 // pred_fallthru
        _
    $region40: #{resnet_generator.26} parent=5 // pred_fallthru
      _
  $region6: #{resnet_generator.26} parent=0 // loop_footer
    %s14 = sadd.s32 1, %s10
  $region7: #{resnet_generator.26} parent=0 // loop_footer_branch
    %9 = sbr.rel target = $region3
  $region8: #{resnet_generator.26} parent=0 // loop_exit
    _

// kernel: resnet_generator.29
$region0: #{resnet_generator.29}
  #allocation0 [shape = 'u32[]', space=smem, size = 0x4, offset = 0x4, fixed_abs, tag = 'smem constant byte address 0x4 - core index']
  #allocation1 [shape = 'u32[144,128]{1,0:T(1,128)}', space=vmem, size = 0x12000, scoped, tag = 'internal scratch']
  %s0 = inlined_call_operand.vmem [shape: bf16[32,128], index: 0, kind: input, shape index: {}]
  %s1 = inlined_call_operand.vmem [shape: f32[1,128], index: 1, kind: input, shape index: {}]
  %s2 = inlined_call_operand.vmem [shape: f32[1,128], index: 2, kind: input, shape index: {}]
  %s3 = inlined_call_operand.vmem [shape: bf16[32,128], index: 3, kind: input, shape index: {}]
  %s4 = inlined_call_operand.vmem [shape: bf16[32,128], index: 4, kind: output, shape index: {}]
  %s5 = sld [smem:[#allocation0]]
  $region49: #{resnet_generator.29} parent=0
    _
  %s7 = ssub.s32 1, %s5
  %s8 = scalar_select 0, %s7, %s5
  loop: start=0, step=1, limit=4
  $region2: #{resnet_generator.29} parent=0 // loop_pre_header
    _
  $region3: #{resnet_generator.29} parent=0 // loop_header
    %s10 = sphi 0, %s14
    %p11 = scmp.ge.s32.totalorder %s10, 4
    %s20 = sphi 0, %s22
    %s23 = sphi 0, %s20
    %s24 = sphi 0, %s23
    %s40 = sphi 0, %s24
    %s44 = sphi 0, %s44
    %s46 = sphi 0, %s44
    %s47 = sphi 0, %s46
    %s61 = sphi 0, %s47
    %s65 = sphi 0, %s65
    %s67 = sphi 0, %s65
    %s68 = sphi 0, %s67
    %s82 = sphi 0, %s68
    %s88 = sphi 0, %s90
    %s91 = sphi 0, %s88
    %s92 = sphi 0, %s91
    %s108 = sphi 0, %s92
    %s114 = sphi 0, %s116
    %s117 = sphi 0, %s114
    %s118 = sphi 0, %s117
    %s134 = sphi 0, %s118
  $region4: #{resnet_generator.29} parent=0 // loop_header_branch
    %13 = sbr.rel (%p11) target = $region8
  $region5: #{resnet_generator.29} parent=0 // loop_body
    %s15 = ssub.s32 %s10, 1
    %s16 = ssub.s32 %s10, 2
    %s17 = sadd.s32 %s10, 1
    %s18 = ssub.s32 %s10, %s17
    %p19 = scmp.eq.s32.totalorder %s18, 0
    %s21 = sadd.s32 %s20, 1
    %s22 = scalar_select %p19, %s20, %s21
    %p25 = pneg %p19
    %p26 = scmp.eq.s32.totalorder %s10, 1
    %p27 = por %p25, %p26
    %p28 = scmp.ne.s32.totalorder %s20, %s23
    %p29 = scmp.eq.s32.totalorder %s10, 0
    %p30 = por %p28, %p29
    %p31 = scmp.ne.s32.totalorder %s20, %s23
    %p32 = scmp.eq.s32.totalorder %s15, 1
    %p33 = por %p31, %p32
    %p34 = scmp.ne.s32.totalorder %s23, %s24
    %p35 = scmp.eq.s32.totalorder %s15, 0
    %p36 = por %p34, %p35
    %p37 = scmp.ne.s32.totalorder %s23, %s24
    %p38 = scmp.eq.s32.totalorder %s16, 1
    %p39 = por %p37, %p38
    %p41 = scmp.ne.s32.totalorder %s24, %s40
    %p42 = scmp.eq.s32.totalorder %s16, 0
    %p43 = por %p41, %p42
    %s45 = sadd.s32 %s44, 1
    %p48 = scmp.eq.s32.totalorder %s10, 1
    %p49 = scmp.ne.s32.totalorder %s44, %s46
    %p50 = scmp.eq.s32.totalorder %s10, 0
    %p51 = por %p49, %p50
    %p52 = scmp.ne.s32.totalorder %s44, %s46
    %p53 = scmp.eq.s32.totalorder %s15, 1
    %p54 = por %p52, %p53
    %p55 = scmp.ne.s32.totalorder %s46, %s47
    %p56 = scmp.eq.s32.totalorder %s15, 0
    %p57 = por %p55, %p56
    %p58 = scmp.ne.s32.totalorder %s46, %s47
    %p59 = scmp.eq.s32.totalorder %s16, 1
    %p60 = por %p58, %p59
    %p62 = scmp.ne.s32.totalorder %s47, %s61
    %p63 = scmp.eq.s32.totalorder %s16, 0
    %p64 = por %p62, %p63
    %s66 = sadd.s32 %s65, 1
    %p69 = scmp.eq.s32.totalorder %s10, 1
    %p70 = scmp.ne.s32.totalorder %s65, %s67
    %p71 = scmp.eq.s32.totalorder %s10, 0
    %p72 = por %p70, %p71
    %p73 = scmp.ne.s32.totalorder %s65, %s67
    %p74 = scmp.eq.s32.totalorder %s15, 1
    %p75 = por %p73, %p74
    %p76 = scmp.ne.s32.totalorder %s67, %s68
    %p77 = scmp.eq.s32.totalorder %s15, 0
    %p78 = por %p76, %p77
    %p79 = scmp.ne.s32.totalorder %s67, %s68
    %p80 = scmp.eq.s32.totalorder %s16, 1
    %p81 = por %p79, %p80
    %p83 = scmp.ne.s32.totalorder %s68, %s82
    %p84 = scmp.eq.s32.totalorder %s16, 0
    %p85 = por %p83, %p84
    %s86 = ssub.s32 %s10, %s17
    %p87 = scmp.eq.s32.totalorder %s86, 0
    %s89 = sadd.s32 %s88, 1
    %s90 = scalar_select %p87, %s88, %s89
    %p93 = pneg %p87
    %p94 = scmp.eq.s32.totalorder %s10, 1
    %p95 = por %p93, %p94
    %p96 = scmp.ne.s32.totalorder %s88, %s91
    %p97 = scmp.eq.s32.totalorder %s10, 0
    %p98 = por %p96, %p97
    %p99 = scmp.ne.s32.totalorder %s88, %s91
    %p100 = scmp.eq.s32.totalorder %s15, 1
    %p101 = por %p99, %p100
    %p102 = scmp.ne.s32.totalorder %s91, %s92
    %p103 = scmp.eq.s32.totalorder %s15, 0
    %p104 = por %p102, %p103
    %p105 = scmp.ne.s32.totalorder %s91, %s92
    %p106 = scmp.eq.s32.totalorder %s16, 1
    %p107 = por %p105, %p106
    %p109 = scmp.ne.s32.totalorder %s92, %s108
    %p110 = scmp.eq.s32.totalorder %s16, 0
    %p111 = por %p109, %p110
    %s112 = ssub.s32 %s10, %s17
    %p113 = scmp.eq.s32.totalorder %s112, 0
    %s115 = sadd.s32 %s114, 1
    %s116 = scalar_select %p113, %s114, %s115
    %p119 = pneg %p113
    %p120 = scmp.eq.s32.totalorder %s10, 1
    %p121 = por %p119, %p120
    %p122 = scmp.ne.s32.totalorder %s114, %s117
    %p123 = scmp.eq.s32.totalorder %s10, 0
    %p124 = por %p122, %p123
    %p125 = scmp.ne.s32.totalorder %s114, %s117
    %p126 = scmp.eq.s32.totalorder %s15, 1
    %p127 = por %p125, %p126
    %p128 = scmp.ne.s32.totalorder %s117, %s118
    %p129 = scmp.eq.s32.totalorder %s15, 0
    %p130 = por %p128, %p129
    %p131 = scmp.ne.s32.totalorder %s117, %s118
    %p132 = scmp.eq.s32.totalorder %s16, 1
    %p133 = por %p131, %p132
    %p135 = scmp.ne.s32.totalorder %s118, %s134
    %p136 = scmp.eq.s32.totalorder %s16, 0
    %p137 = por %p135, %p136
    %p138 = scmp.le.s32.totalorder 1, %s10
    %p139 = scmp.lt.s32.totalorder %s10, 3
    %p140 = pnand %p138, %p139
    %p141 = pneg %p140
    // Predicated region
    $region9: #{resnet_generator.29} parent=5 // pred_check
      _
    $region10: #{resnet_generator.29} parent=5 // pred_check_branch
      %143 = sbr.rel (%p140) target = $region12
    $region11: #{resnet_generator.29} parent=5 // pred_region
      %s144 = ssub.s32 %s10, 1
      // Predicated region
      $region13: #{resnet_generator.29} parent=11 // pred_check
        %p145 = pneg %p57
      $region14: #{resnet_generator.29} parent=11 // pred_check_branch
        %147 = sbr.rel (%p145) target = $region16
      $region15: #{resnet_generator.29} parent=11 // pred_region
        _
      $region16: #{resnet_generator.29} parent=11 // pred_fallthru
        _
      // Predicated region
      $region17: #{resnet_generator.29} parent=11 // pred_check
        %p148 = pneg %p78
      $region18: #{resnet_generator.29} parent=11 // pred_check_branch
        %150 = sbr.rel (%p148) target = $region20
      $region19: #{resnet_generator.29} parent=11 // pred_region
        _
      $region20: #{resnet_generator.29} parent=11 // pred_fallthru
        _
    $region12: #{resnet_generator.29} parent=5 // pred_fallthru
      _
    %p151 = scmp.lt.s32.totalorder %s10, 2
    // Predicated region
    $region21: #{resnet_generator.29} parent=5 // pred_check
      %p152 = pneg %p151
    $region22: #{resnet_generator.29} parent=5 // pred_check_branch
      %154 = sbr.rel (%p152) target = $region24
    $region23: #{resnet_generator.29} parent=5 // pred_region
      // Predicated region
      $region25: #{resnet_generator.29} parent=23 // pred_check
        %p155 = pneg %p30
      $region26: #{resnet_generator.29} parent=23 // pred_check_branch
        %157 = sbr.rel (%p155) target = $region28
      $region27: #{resnet_generator.29} parent=23 // pred_region
        %s158 = smul.u32 2, %s10
        %p159 = scmp.lt.s32.totalorder %s158, 3
        %s160 = scalar_select %p159, %s158, 3
        %s161 = smul.addr %s160, 4
        %s162 = scalar_lea.vmem %s0, %s161
        %s163 = smul.u32 2, %s10
      $region28: #{resnet_generator.29} parent=23 // pred_fallthru
        _
      // Predicated region
      $region29: #{resnet_generator.29} parent=23 // pred_check
        %p164 = pneg %p98
      $region30: #{resnet_generator.29} parent=23 // pred_check_branch
        %166 = sbr.rel (%p164) target = $region32
      $region31: #{resnet_generator.29} parent=23 // pred_region
        %s167 = smul.u32 2, %s10
        %p168 = scmp.lt.s32.totalorder %s167, 3
        %s169 = scalar_select %p168, %s167, 3
        %s170 = smul.addr %s169, 4
        %s171 = scalar_lea.vmem %s3, %s170
        %s172 = smul.u32 2, %s10
      $region32: #{resnet_generator.29} parent=23 // pred_fallthru
        _
    $region24: #{resnet_generator.29} parent=5 // pred_fallthru
      _
    %p173 = scmp.le.s32.totalorder 1, %s10
    %p174 = scmp.lt.s32.totalorder %s10, 3
    %p175 = pnand %p173, %p174
    %p176 = pneg %p175
    // Predicated region
    $region33: #{resnet_generator.29} parent=5 // pred_check
      _
    $region34: #{resnet_generator.29} parent=5 // pred_check_branch
      %178 = sbr.rel (%p175) target = $region36
    $region35: #{resnet_generator.29} parent=5 // pred_region
      %s179 = ssub.s32 %s10, 1
      %s180 = smul.u32 2, %s15
      %p181 = scmp.lt.s32.totalorder %s180, 3
      %s182 = scalar_select %p181, %s180, 3
      %s183 = smul.addr %s182, 4
      %s184 = scalar_lea.vmem %s0, %s183
      %p185 = pneg %p36
      %p186 = pneg %p33
      %p187 = pneg %p57
      %p188 = pneg %p54
      %p189 = pneg %p78
      %p190 = pneg %p75
      %s191 = smul.u32 2, %s15
      %p192 = scmp.lt.s32.totalorder %s191, 3
      %s193 = scalar_select %p192, %s191, 3
      %s194 = smul.addr %s193, 4
      %s195 = scalar_lea.vmem %s3, %s194
      %p196 = pneg %p104
      %p197 = pneg %p101
      %p198 = pneg %p130
      %p199 = pneg %p127
      %s200 = smul.u32 2, %s15
      %p201 = scmp.lt.s32.totalorder %s200, 3
      %s202 = scalar_select %p201, %s200, 3
      %s203 = smul.addr %s202, 4
      %s204 = scalar_lea.vmem %s4, %s203
      %s205 = smul.u32 2, %s15
      %p206 = scmp.lt.s32.totalorder %s205, 3
      %s207 = scalar_select %p206, %s205, 3
      %s208 = smul.addr %s207, 4
      %s209 = scalar_lea.vmem %s0, %s208
      %s210 = smul.u32 2, %s15
      %s211 = smul.u32 2, %s15
      %p212 = scmp.lt.s32.totalorder %s211, 3
      %s213 = scalar_select %p212, %s211, 3
      %s214 = smul.addr %s213, 4
      %s215 = scalar_lea.vmem %s3, %s214
      %s216 = smul.u32 2, %s15
      %s217 = smul.u32 2, %s15
      %p218 = scmp.lt.s32.totalorder %s217, 3
      %s219 = scalar_select %p218, %s217, 3
      %s220 = smul.addr %s219, 4
      %s221 = scalar_lea.vmem %s4, %s220
      %s222 = smul.u32 2, %s15
      %v223 = vld [vmem:[%s209] sm:$0xf]
      %v224 = vld [vmem:[%s209 + $0x4] sm:$0xf]
      %v225 = vunpack.c.l.bf16 %v223
      %v226 = vunpack.c.l.bf16 %v224
      %v227 = vld [vmem:[%s1] sm:$0x1]
      %v229 = vlaneseq
      %v230 = vshrl.u32 %v229, 7
      %v231 = vsub.s32 0, %v230
      %v232 = vrot.slane %v227, %v231
      %v234 = vmul.f32 %v225, %v232
      %v235 = vmul.f32 %v226, %v232
      %v236 = vld [vmem:[%s2] sm:$0x1]
      %v238 = vlaneseq
      %v239 = vshrl.u32 %v238, 7
      %v240 = vsub.s32 0, %v239
      %v241 = vrot.slane %v236, %v240
      %v243 = vadd.f32 %v234, %v241
      %v244 = vadd.f32 %v235, %v241
      %v245 = vld [vmem:[%s215] sm:$0xf]
      %v246 = vld [vmem:[%s215 + $0x4] sm:$0xf]
      %v247 = vunpack.c.l.bf16 %v245
      %v248 = vunpack.c.l.bf16 %v246
      %v249 = vadd.f32 %v243, %v247
      %v250 = vadd.f32 %v244, %v248
      %v251 = vpack.c.bf16 %v250, %v249
      %v253 = vunpack.c.l.b16 %v251
      %v254 = vunpack.c.h.b16 %v251
      %v255 = vpack.c.b16 %v253, %v253
      %v256 = vpack.c.b16 %v254, %v254
      %259 = vst [vmem:[%s221] sm:$0xf] %v255
      %260 = vst [vmem:[%s221 + $0x4] sm:$0xf] %v256
      %s261 = smul.u32 2, %s15
      %p262 = scmp.lt.s32.totalorder %s261, 3
      %s263 = scalar_select %p262, %s261, 3
      %s264 = smul.addr %s263, 4
      %s265 = scalar_lea.vmem %s4, %s264
      // Predicated region
      $region37: #{resnet_generator.29} parent=35 // pred_check
        %p266 = pneg %p127
      $region38: #{resnet_generator.29} parent=35 // pred_check_branch
        %268 = sbr.rel (%p266) target = $region40
      $region39: #{resnet_generator.29} parent=35 // pred_region
        %s269 = smul.u32 2, %s15
      $region40: #{resnet_generator.29} parent=35 // pred_fallthru
        _
    $region36: #{resnet_generator.29} parent=5 // pred_fallthru
      _
    %p270 = scmp.le.s32.totalorder 2, %s10
    // Predicated region
    $region41: #{resnet_generator.29} parent=5 // pred_check
      %p271 = pneg %p270
    $region42: #{resnet_generator.29} parent=5 // pred_check_branch
      %273 = sbr.rel (%p271) target = $region44
    $region43: #{resnet_generator.29} parent=5 // pred_region
      %s274 = ssub.s32 %s10, 2
      // Predicated region
      $region45: #{resnet_generator.29} parent=43 // pred_check
        %p275 = pneg %p133
      $region46: #{resnet_generator.29} parent=43 // pred_check_branch
        %277 = sbr.rel (%p275) target = $region48
      $region47: #{resnet_generator.29} parent=43 // pred_region
        %s278 = smul.u32 2, %s16
        %p279 = scmp.lt.s32.totalorder %s278, 3
        %s280 = scalar_select %p279, %s278, 3
        %s281 = smul.addr %s280, 4
        %s282 = scalar_lea.vmem %s4, %s281
      $region48: #{resnet_generator.29} parent=43 // pred_fallthru
        _
    $region44: #{resnet_generator.29} parent=5 // pred_fallthru
      _
  $region6: #{resnet_generator.29} parent=0 // loop_footer
    %s14 = sadd.s32 1, %s10
  $region7: #{resnet_generator.29} parent=0 // loop_footer_branch
    %9 = sbr.rel target = $region3
  $region8: #{resnet_generator.29} parent=0 // loop_exit
    _

// kernel: tile.28
$region0: #{tile.28}
  #allocation0 [shape = 's32[1]{0}', space=sflag, size = 0x4, scoped, tag = 'scoped memory for tile.28']
  %s0 = inlined_call_operand.vmem [shape: f32[16], index: 0, kind: input, shape index: {}]
  %s1 = inlined_call_operand.vmem [shape: f32[4,16], index: 1, kind: output, shape index: {}]
  // Predicated region
  $region2: #{tile.28} parent=0 // pred_check
    _
  $region3: #{tile.28} parent=0 // pred_check_branch
    %3 = sbr.rel (0) target = $region5
  $region4: #{tile.28} parent=0 // pred_region
    _
  $region5: #{tile.28} parent=0 // pred_fallthru
    _
  %v4 = vld [vmem:[%s0] ss:$0 sm:$0xff]
  %5 = vst [vmem:[%s1] sm:$0xf] %v4

// kernel: tile.29
$region0: #{tile.29}
  %s0 = inlined_call_operand.vmem [shape: f32[4,16], index: 0, kind: input, shape index: {}]
  %s1 = inlined_call_operand.vmem [shape: f32[64], index: 1, kind: output, shape index: {}]
  $region1: #{tile.29} parent=0
    #allocation0 [shape = 'u8[4096]{0}', space=vmem, size = 0x1000, scoped, tag = 'scoped mem for output reshape']
    #allocation1 [shape = 'u8[4096]{0}', space=vmem, size = 0x1000, scoped, tag = 'scoped mem for input reshape']
    %s3 = sshll.u32 1, 4
    %s4 = ssub.s32 %s3, 1
    %v5 = vld [vmem:[%s0] sm:%s4]
    %6 = vst [vmem:[#allocation1] sm:%s4] %v5
    %v7 = vld [vmem:[#allocation1] sm:$0x1]
    %vm8 = vcmask 130048
    %9 = vst.msk [vmem:[#allocation0] sm:$0x1] %vm8, %v7
    %s10 = scalar_lea.vmem [#allocation1], 3
    %v11 = vld [vmem:[%s10] sm:$0x1]
    %12 = vrot.lane.b32.xlu0 %v11, 48
    %v13 = vpop.permute.xlu0 %12
    %vm14 = vcmask 523648
    %15 = vst.msk [vmem:[#allocation0] sm:$0x1] %vm14, %v13
    %s16 = scalar_lea.vmem [#allocation1], 2
    %v17 = vld [vmem:[%s16] sm:$0x1]
    %18 = vrot.lane.b32.xlu0 %v17, 32
    %v19 = vpop.permute.xlu0 %18
    %vm20 = vcmask 392448
    %21 = vst.msk [vmem:[#allocation0] sm:$0x1] %vm20, %v19
    %s22 = scalar_lea.vmem [#allocation1], 1
    %v23 = vld [vmem:[%s22] sm:$0x1]
    %24 = vrot.lane.b32.xlu0 %v23, 16
    %v25 = vpop.permute.xlu0 %24
    %vm26 = vcmask 261248
    %27 = vst.msk [vmem:[#allocation0] sm:$0x1] %vm26, %v25
    %s29 = sshll.u32 1, 1
    %s30 = ssub.s32 %s29, 1
    %v32 = vld [vmem:[#allocation0] sm:%s30]
    %s33 = sshll.u32 1, 1
    %s34 = ssub.s32 %s33, 1
    %35 = vst [vmem:[%s1] sm:%s34] %v32

// kernel: resnet_generator.34
$region0: #{resnet_generator.34}
  #allocation0 [shape = 'u32[]', space=smem, size = 0x4, offset = 0x4, fixed_abs, tag = 'smem constant byte address 0x4 - core index']
  #allocation1 [shape = 'u32[144,128]{1,0:T(1,128)}', space=vmem, size = 0x12000, scoped, tag = 'internal scratch']
  %s0 = inlined_call_operand.vmem [shape: bf16[32,128], index: 0, kind: input, shape index: {}]
  %s1 = inlined_call_operand.vmem [shape: bf16[128,128], index: 1, kind: input, shape index: {}]
  %s2 = inlined_call_operand.vmem [shape: bf16[32,128], index: 2, kind: output, shape index: {0}]
  %s3 = inlined_call_operand.vmem [shape: f32[16,128], index: 3, kind: output, shape index: {1}]
  %4 = xla_tuple %s2, %s3
  %s5 = sld [smem:[#allocation0]]
  $region49: #{resnet_generator.34} parent=0
    _
  %s7 = ssub.s32 1, %s5
  %s8 = scalar_select 0, %s7, %s5
  loop: start=0, step=1, limit=4
  $region2: #{resnet_generator.34} parent=0 // loop_pre_header
    _
  $region3: #{resnet_generator.34} parent=0 // loop_header
    %s10 = sphi 0, %s14
    %p11 = scmp.ge.s32.totalorder %s10, 4
    %s20 = sphi 0, %s22
    %s23 = sphi 0, %s20
    %s24 = sphi 0, %s23
    %s40 = sphi 0, %s24
    %s44 = sphi 0, %s44
    %s46 = sphi 0, %s44
    %s47 = sphi 0, %s46
    %s61 = sphi 0, %s47
    %s67 = sphi 0, %s69
    %s70 = sphi 0, %s67
    %s71 = sphi 0, %s70
    %s87 = sphi 0, %s71
    %s93 = sphi 0, %s95
    %s96 = sphi 0, %s93
    %s97 = sphi 0, %s96
    %s113 = sphi 0, %s97
  $region4: #{resnet_generator.34} parent=0 // loop_header_branch
    %13 = sbr.rel (%p11) target = $region8
  $region5: #{resnet_generator.34} parent=0 // loop_body
    %s15 = ssub.s32 %s10, 1
    %s16 = ssub.s32 %s10, 2
    %s17 = sadd.s32 %s10, 1
    %s18 = ssub.s32 %s10, %s17
    %p19 = scmp.eq.s32.totalorder %s18, 0
    %s21 = sadd.s32 %s20, 1
    %s22 = scalar_select %p19, %s20, %s21
    %p25 = pneg %p19
    %p26 = scmp.eq.s32.totalorder %s10, 1
    %p27 = por %p25, %p26
    %p28 = scmp.ne.s32.totalorder %s20, %s23
    %p29 = scmp.eq.s32.totalorder %s10, 0
    %p30 = por %p28, %p29
    %p31 = scmp.ne.s32.totalorder %s20, %s23
    %p32 = scmp.eq.s32.totalorder %s15, 1
    %p33 = por %p31, %p32
    %p34 = scmp.ne.s32.totalorder %s23, %s24
    %p35 = scmp.eq.s32.totalorder %s15, 0
    %p36 = por %p34, %p35
    %p37 = scmp.ne.s32.totalorder %s23, %s24
    %p38 = scmp.eq.s32.totalorder %s16, 1
    %p39 = por %p37, %p38
    %p41 = scmp.ne.s32.totalorder %s24, %s40
    %p42 = scmp.eq.s32.totalorder %s16, 0
    %p43 = por %p41, %p42
    %s45 = sadd.s32 %s44, 1
    %p48 = scmp.eq.s32.totalorder %s10, 1
    %p49 = scmp.ne.s32.totalorder %s44, %s46
    %p50 = scmp.eq.s32.totalorder %s10, 0
    %p51 = por %p49, %p50
    %p52 = scmp.ne.s32.totalorder %s44, %s46
    %p53 = scmp.eq.s32.totalorder %s15, 1
    %p54 = por %p52, %p53
    %p55 = scmp.ne.s32.totalorder %s46, %s47
    %p56 = scmp.eq.s32.totalorder %s15, 0
    %p57 = por %p55, %p56
    %p58 = scmp.ne.s32.totalorder %s46, %s47
    %p59 = scmp.eq.s32.totalorder %s16, 1
    %p60 = por %p58, %p59
    %p62 = scmp.ne.s32.totalorder %s47, %s61
    %p63 = scmp.eq.s32.totalorder %s16, 0
    %p64 = por %p62, %p63
    %s65 = ssub.s32 %s10, %s17
    %p66 = scmp.eq.s32.totalorder %s65, 0
    %s68 = sadd.s32 %s67, 1
    %s69 = scalar_select %p66, %s67, %s68
    %p72 = pneg %p66
    %p73 = scmp.eq.s32.totalorder %s10, 1
    %p74 = por %p72, %p73
    %p75 = scmp.ne.s32.totalorder %s67, %s70
    %p76 = scmp.eq.s32.totalorder %s10, 0
    %p77 = por %p75, %p76
    %p78 = scmp.ne.s32.totalorder %s67, %s70
    %p79 = scmp.eq.s32.totalorder %s15, 1
    %p80 = por %p78, %p79
    %p81 = scmp.ne.s32.totalorder %s70, %s71
    %p82 = scmp.eq.s32.totalorder %s15, 0
    %p83 = por %p81, %p82
    %p84 = scmp.ne.s32.totalorder %s70, %s71
    %p85 = scmp.eq.s32.totalorder %s16, 1
    %p86 = por %p84, %p85
    %p88 = scmp.ne.s32.totalorder %s71, %s87
    %p89 = scmp.eq.s32.totalorder %s16, 0
    %p90 = por %p88, %p89
    %s91 = ssub.s32 %s10, %s17
    %p92 = scmp.eq.s32.totalorder %s91, 0
    %s94 = sadd.s32 %s93, 1
    %s95 = scalar_select %p92, %s93, %s94
    %p98 = pneg %p92
    %p99 = scmp.eq.s32.totalorder %s10, 1
    %p100 = por %p98, %p99
    %p101 = scmp.ne.s32.totalorder %s93, %s96
    %p102 = scmp.eq.s32.totalorder %s10, 0
    %p103 = por %p101, %p102
    %p104 = scmp.ne.s32.totalorder %s93, %s96
    %p105 = scmp.eq.s32.totalorder %s15, 1
    %p106 = por %p104, %p105
    %p107 = scmp.ne.s32.totalorder %s96, %s97
    %p108 = scmp.eq.s32.totalorder %s15, 0
    %p109 = por %p107, %p108
    %p110 = scmp.ne.s32.totalorder %s96, %s97
    %p111 = scmp.eq.s32.totalorder %s16, 1
    %p112 = por %p110, %p111
    %p114 = scmp.ne.s32.totalorder %s97, %s113
    %p115 = scmp.eq.s32.totalorder %s16, 0
    %p116 = por %p114, %p115
    %p117 = scmp.le.s32.totalorder 1, %s10
    %p118 = scmp.lt.s32.totalorder %s10, 3
    %p119 = pnand %p117, %p118
    %p120 = pneg %p119
    // Predicated region
    $region9: #{resnet_generator.34} parent=5 // pred_check
      _
    $region10: #{resnet_generator.34} parent=5 // pred_check_branch
      %122 = sbr.rel (%p119) target = $region12
    $region11: #{resnet_generator.34} parent=5 // pred_region
      %s123 = ssub.s32 %s10, 1
      // Predicated region
      $region13: #{resnet_generator.34} parent=11 // pred_check
        %p124 = pneg %p57
      $region14: #{resnet_generator.34} parent=11 // pred_check_branch
        %126 = sbr.rel (%p124) target = $region16
      $region15: #{resnet_generator.34} parent=11 // pred_region
        _
      $region16: #{resnet_generator.34} parent=11 // pred_fallthru
        _
    $region12: #{resnet_generator.34} parent=5 // pred_fallthru
      _
    %p127 = scmp.lt.s32.totalorder %s10, 2
    // Predicated region
    $region17: #{resnet_generator.34} parent=5 // pred_check
      %p128 = pneg %p127
    $region18: #{resnet_generator.34} parent=5 // pred_check_branch
      %130 = sbr.rel (%p128) target = $region20
    $region19: #{resnet_generator.34} parent=5 // pred_region
      // Predicated region
      $region21: #{resnet_generator.34} parent=19 // pred_check
        %p131 = pneg %p30
      $region22: #{resnet_generator.34} parent=19 // pred_check_branch
        %133 = sbr.rel (%p131) target = $region24
      $region23: #{resnet_generator.34} parent=19 // pred_region
        %s134 = smul.u32 2, %s10
        %p135 = scmp.lt.s32.totalorder %s134, 3
        %s136 = scalar_select %p135, %s134, 3
        %s137 = smul.addr %s136, 4
        %s138 = scalar_lea.vmem %s0, %s137
        %s139 = smul.u32 2, %s10
      $region24: #{resnet_generator.34} parent=19 // pred_fallthru
        _
    $region20: #{resnet_generator.34} parent=5 // pred_fallthru
      _
    %p140 = scmp.le.s32.totalorder 1, %s10
    %p141 = scmp.lt.s32.totalorder %s10, 3
    %p142 = pnand %p140, %p141
    %p143 = pneg %p142
    // Predicated region
    $region25: #{resnet_generator.34} parent=5 // pred_check
      _
    $region26: #{resnet_generator.34} parent=5 // pred_check_branch
      %145 = sbr.rel (%p142) target = $region28
    $region27: #{resnet_generator.34} parent=5 // pred_region
      %s146 = ssub.s32 %s10, 1
      %s147 = smul.u32 2, %s15
      %p148 = scmp.lt.s32.totalorder %s147, 3
      %s149 = scalar_select %p148, %s147, 3
      %s150 = smul.addr %s149, 4
      %s151 = scalar_lea.vmem %s0, %s150
      %p152 = pneg %p36
      %p153 = pneg %p33
      %p154 = pneg %p57
      %p155 = pneg %p54
      %p156 = pneg %p83
      %p157 = pneg %p80
      %s158 = smul.u32 2, %s15
      %p159 = scmp.lt.s32.totalorder %s158, 3
      %s160 = scalar_select %p159, %s158, 3
      %s161 = smul.addr %s160, 4
      %s162 = scalar_lea.vmem %s2, %s161
      %p163 = pneg %p109
      %p164 = pneg %p106
      %p165 = scmp.lt.s32.totalorder %s15, 1
      %s166 = scalar_select %p165, %s15, 1
      %s167 = smul.addr %s166, 8
      %s168 = scalar_lea.vmem %s3, %s167
      %s169 = smul.u32 2, %s15
      %p170 = scmp.lt.s32.totalorder %s169, 3
      %s171 = scalar_select %p170, %s169, 3
      %s172 = smul.addr %s171, 4
      %s173 = scalar_lea.vmem %s0, %s172
      %s174 = smul.u32 2, %s15
      %s175 = smul.u32 2, %s15
      %p176 = scmp.lt.s32.totalorder %s175, 3
      %s177 = scalar_select %p176, %s175, 3
      %s178 = smul.addr %s177, 4
      %s179 = scalar_lea.vmem %s2, %s178
      %s180 = smul.u32 2, %s15
      %p181 = scmp.lt.s32.totalorder %s15, 1
      %s182 = scalar_select %p181, %s15, 1
      %s183 = smul.addr %s182, 8
      %s184 = scalar_lea.vmem %s3, %s183
      %v186 = vld [vmem:[%s173] sm:$0xf]
      %v187 = vld [vmem:[%s173 + $0x4] sm:$0xf]
      %v188 = vld [vmem:[%s1] sm:$0xf]
      %v189 = vld [vmem:[%s1 + $0x4] sm:$0xf]
      %v190 = vld [vmem:[%s1 + $0x8] sm:$0xf]
      %v191 = vld [vmem:[%s1 + $0xc] sm:$0xf]
      %v192 = vld [vmem:[%s1 + $0x10] sm:$0xf]
      %v193 = vld [vmem:[%s1 + $0x14] sm:$0xf]
      %v194 = vld [vmem:[%s1 + $0x18] sm:$0xf]
      %v195 = vld [vmem:[%s1 + $0x1c] sm:$0xf]
      %v196 = vld [vmem:[%s1 + $0x20] sm:$0xf]
      %v197 = vld [vmem:[%s1 + $0x24] sm:$0xf]
      %v198 = vld [vmem:[%s1 + $0x28] sm:$0xf]
      %v199 = vld [vmem:[%s1 + $0x2c] sm:$0xf]
      %v200 = vld [vmem:[%s1 + $0x30] sm:$0xf]
      %v201 = vld [vmem:[%s1 + $0x34] sm:$0xf]
      %v202 = vld [vmem:[%s1 + $0x38] sm:$0xf]
      %v203 = vld [vmem:[%s1 + $0x3c] sm:$0xf]
      %v206 = vunpack.c.l.b16 %v186
      %v207 = vunpack.c.l.b16 %v187
      %v208 = vpack.c.b16 %v207, %v206
      %v226 = vunpack.c.l.b16 %v188
      %v227 = vunpack.c.l.b16 %v189
      %v228 = vunpack.c.l.b16 %v190
      %v229 = vunpack.c.l.b16 %v191
      %v230 = vunpack.c.l.b16 %v192
      %v231 = vunpack.c.l.b16 %v193
      %v232 = vunpack.c.l.b16 %v194
      %v233 = vunpack.c.l.b16 %v195
      %v234 = vunpack.c.l.b16 %v196
      %v235 = vunpack.c.l.b16 %v197
      %v236 = vunpack.c.l.b16 %v198
      %v237 = vunpack.c.l.b16 %v199
      %v238 = vunpack.c.l.b16 %v200
      %v239 = vunpack.c.l.b16 %v201
      %v240 = vunpack.c.l.b16 %v202
      %v241 = vunpack.c.l.b16 %v203
      %v242 = vpack.c.b16 %v227, %v226
      %v243 = vpack.c.b16 %v229, %v228
      %v244 = vpack.c.b16 %v231, %v230
      %v245 = vpack.c.b16 %v233, %v232
      %v246 = vpack.c.b16 %v235, %v234
      %v247 = vpack.c.b16 %v237, %v236
      %v248 = vpack.c.b16 %v239, %v238
      %v249 = vpack.c.b16 %v241, %v240
      %258 = vmatprep.subr.bf16.mxu0 0
      %259 = vmatpush1.bf16.msra.mxu0 %v249
      %260 = vmatprep.subr.bf16.mxu0 0
      %261 = vmatpush1.bf16.msra.mxu0 %v248
      %262 = vmatprep.subr.bf16.mxu0 0
      %263 = vmatpush1.bf16.msra.mxu0 %v247
      %264 = vmatprep.subr.bf16.mxu0 0
      %265 = vmatpush1.bf16.msra.mxu0 %v246
      %266 = vmatprep.subr.bf16.mxu0 0
      %267 = vmatpush1.bf16.msra.mxu0 %v245
      %268 = vmatprep.subr.bf16.mxu0 0
      %269 = vmatpush1.bf16.msra.mxu0 %v244
      %270 = vmatprep.subr.bf16.mxu0 0
      %271 = vmatpush1.bf16.msra.mxu0 %v243
      %272 = vmatprep.subr.bf16.mxu0 0
      %273 = vmatpush1.bf16.msra.mxu0 %v242
      %274 = vmatprep.subr.bf16.mxu0 0
      %275 = vmatpush2.bf16.msra.mxu0 0
      %276 = vmatprep.subr.bf16.mxu0 0
      %277 = vmatpush2.bf16.msra.mxu0 0
      %278 = vmatprep.subr.bf16.mxu0 0
      %279 = vmatpush2.bf16.msra.mxu0 0
      %280 = vmatprep.subr.bf16.mxu0 0
      %281 = vmatpush2.bf16.msra.mxu0 0
      %282 = vmatprep.subr.bf16.mxu0 0
      %283 = vmatpush2.bf16.msra.mxu0 0
      %284 = vmatprep.subr.bf16.mxu0 0
      %285 = vmatpush2.bf16.msra.mxu0 0
      %286 = vmatprep.subr.bf16.mxu0 0
      %287 = vmatpush2.bf16.msra.mxu0 0
      %288 = vmatprep.subr.bf16.mxu0 0
      %289 = vmatpush2.bf16.msra.mxu0 0
      %290 = vmatprep.mubr.bf16.mxu0 0
      %291 = vmatmul.mubr.bf16.gmra.mxu0 %v208
      %v292 = vpop.f32.mrf.mxu0
      %v293 = vadd.f32 0.0, %v292
      %v294 = vpop.f32.mrf.mxu0
      %v295 = vpop.f32.mrf.mxu0
      %v296 = vadd.f32 0.0, %v295
      %v297 = vpop.f32.mrf.mxu0
      %298 = vdwg.mxu0
      %v299 = vpack.c.bf16 %v296, %v293
      %v301 = vunpack.c.l.b16 %v299
      %v302 = vunpack.c.h.b16 %v299
      %v303 = vpack.c.b16 %v301, %v301
      %v304 = vpack.c.b16 %v302, %v302
      %307 = vst [vmem:[%s179] sm:$0xf] %v303
      %308 = vst [vmem:[%s179 + $0x4] sm:$0xf] %v304
      %v309 = vadd.f32 %v293, %v296
      %v310 = vrot.slane %v309, 4
      %v311 = vadd.f32 %v309, %v310
      %v312 = vrot.slane %v311, 2
      %v313 = vadd.f32 %v311, %v312
      %v314 = vrot.slane %v313, 1
      %v315 = vadd.f32 %v313, %v314
      %v316 = vmul.f32 %v293, %v293
      %v317 = vmul.f32 %v296, %v296
      %v318 = vadd.f32 %v316, %v317
      %v319 = vrot.slane %v318, 4
      %v320 = vadd.f32 %v318, %v319
      %v321 = vrot.slane %v320, 2
      %v322 = vadd.f32 %v320, %v321
      %v323 = vrot.slane %v322, 1
      %v324 = vadd.f32 %v322, %v323
      %vm325 = vcmask 1040384
      %v326 = vsel %vm325, %v315, %v324
      %vm327 = vcmask 1041408
      %v328 = vsel %vm327, %v326, 0.0
      %329 = vst [vmem:[%s184] sm:$0xff] %v328
      %s330 = smul.u32 2, %s15
      %p331 = scmp.lt.s32.totalorder %s330, 3
      %s332 = scalar_select %p331, %s330, 3
      %s333 = smul.addr %s332, 4
      %s334 = scalar_lea.vmem %s2, %s333
      %p335 = scmp.lt.s32.totalorder %s15, 1
      %s336 = scalar_select %p335, %s15, 1
      %s337 = smul.addr %s336, 8
      %s338 = scalar_lea.vmem %s3, %s337
      // Predicated region
      $region29: #{resnet_generator.34} parent=27 // pred_check
        %p339 = pneg %p80
      $region30: #{resnet_generator.34} parent=27 // pred_check_branch
        %341 = sbr.rel (%p339) target = $region32
      $region31: #{resnet_generator.34} parent=27 // pred_region
        %s342 = smul.u32 2, %s15
      $region32: #{resnet_generator.34} parent=27 // pred_fallthru
        _
      // Predicated region
      $region33: #{resnet_generator.34} parent=27 // pred_check
        %p343 = pneg %p106
      $region34: #{resnet_generator.34} parent=27 // pred_check_branch
        %345 = sbr.rel (%p343) target = $region36
      $region35: #{resnet_generator.34} parent=27 // pred_region
        _
      $region36: #{resnet_generator.34} parent=27 // pred_fallthru
        _
    $region28: #{resnet_generator.34} parent=5 // pred_fallthru
      _
    %p346 = scmp.le.s32.totalorder 2, %s10
    // Predicated region
    $region37: #{resnet_generator.34} parent=5 // pred_check
      %p347 = pneg %p346
    $region38: #{resnet_generator.34} parent=5 // pred_check_branch
      %349 = sbr.rel (%p347) target = $region40
    $region39: #{resnet_generator.34} parent=5 // pred_region
      %s350 = ssub.s32 %s10, 2
      // Predicated region
      $region41: #{resnet_generator.34} parent=39 // pred_check
        %p351 = pneg %p86
      $region42: #{resnet_generator.34} parent=39 // pred_check_branch
        %353 = sbr.rel (%p351) target = $region44
      $region43: #{resnet_generator.34} parent=39 // pred_region
        %s354 = smul.u32 2, %s16
        %p355 = scmp.lt.s32.totalorder %s354, 3
        %s356 = scalar_select %p355, %s354, 3
        %s357 = smul.addr %s356, 4
        %s358 = scalar_lea.vmem %s2, %s357
      $region44: #{resnet_generator.34} parent=39 // pred_fallthru
        _
      // Predicated region
      $region45: #{resnet_generator.34} parent=39 // pred_check
        %p359 = pneg %p112
      $region46: #{resnet_generator.34} parent=39 // pred_check_branch
        %361 = sbr.rel (%p359) target = $region48
      $region47: #{resnet_generator.34} parent=39 // pred_region
        %p362 = scmp.lt.s32.totalorder %s16, 1
        %s363 = scalar_select %p362, %s16, 1
        %s364 = smul.addr %s363, 8
        %s365 = scalar_lea.vmem %s3, %s364
      $region48: #{resnet_generator.34} parent=39 // pred_fallthru
        _
    $region40: #{resnet_generator.34} parent=5 // pred_fallthru
      _
  $region6: #{resnet_generator.34} parent=0 // loop_footer
    %s14 = sadd.s32 1, %s10
  $region7: #{resnet_generator.34} parent=0 // loop_footer_branch
    %9 = sbr.rel target = $region3
  $region8: #{resnet_generator.34} parent=0 // loop_exit
    _

// kernel: tile.38
$region0: #{tile.38}
  #allocation0 [shape = 's32[1]{0}', space=sflag, size = 0x4, scoped, tag = 'scoped memory for tile.38']
  %s0 = inlined_call_operand.vmem [shape: f32[8], index: 0, kind: input, shape index: {}]
  %s1 = inlined_call_operand.vmem [shape: f32[4,8], index: 1, kind: output, shape index: {}]
  // Predicated region
  $region2: #{tile.38} parent=0 // pred_check
    _
  $region3: #{tile.38} parent=0 // pred_check_branch
    %3 = sbr.rel (0) target = $region5
  $region4: #{tile.38} parent=0 // pred_region
    _
  $region5: #{tile.38} parent=0 // pred_fallthru
    _
  %v4 = vld [vmem:[%s0] ss:$0 sm:$0xff]
  %5 = vst [vmem:[%s1] sm:$0xf] %v4

// kernel: tile.39
$region0: #{tile.39}
  %s0 = inlined_call_operand.vmem [shape: f32[4,8], index: 0, kind: input, shape index: {}]
  %s1 = inlined_call_operand.vmem [shape: f32[32], index: 1, kind: output, shape index: {}]
  $region1: #{tile.39} parent=0
    #allocation0 [shape = 'u8[4096]{0}', space=vmem, size = 0x1000, scoped, tag = 'scoped mem for output reshape']
    #allocation1 [shape = 'u8[4096]{0}', space=vmem, size = 0x1000, scoped, tag = 'scoped mem for input reshape']
    %s3 = sshll.u32 1, 4
    %s4 = ssub.s32 %s3, 1
    %v5 = vld [vmem:[%s0] sm:%s4]
    %6 = vst [vmem:[#allocation1] sm:%s4] %v5
    %v7 = vld [vmem:[#allocation1] sm:$0x1]
    %vm8 = vcmask 64512
    %9 = vst.msk [vmem:[#allocation0] sm:$0x1] %vm8, %v7
    %s10 = scalar_lea.vmem [#allocation1], 3
    %v11 = vld [vmem:[%s10] sm:$0x1]
    %12 = vrot.lane.b32.xlu0 %v11, 24
    %v13 = vpop.permute.xlu0 %12
    %vm14 = vcmask 261312
    %15 = vst.msk [vmem:[#allocation0] sm:$0x1] %vm14, %v13
    %s16 = scalar_lea.vmem [#allocation1], 2
    %v17 = vld [vmem:[%s16] sm:$0x1]
    %18 = vrot.lane.b32.xlu0 %v17, 16
    %v19 = vpop.permute.xlu0 %18
    %vm20 = vcmask 195712
    %21 = vst.msk [vmem:[#allocation0] sm:$0x1] %vm20, %v19
    %s22 = scalar_lea.vmem [#allocation1], 1
    %v23 = vld [vmem:[%s22] sm:$0x1]
    %24 = vrot.lane.b32.xlu0 %v23, 8
    %v25 = vpop.permute.xlu0 %24
    %vm26 = vcmask 130112
    %27 = vst.msk [vmem:[#allocation0] sm:$0x1] %vm26, %v25
    %s29 = sshll.u32 1, 1
    %s30 = ssub.s32 %s29, 1
    %v32 = vld [vmem:[#allocation0] sm:%s30]
    %s33 = sshll.u32 1, 1
    %s34 = ssub.s32 %s33, 1
    %35 = vst [vmem:[%s1] sm:%s34] %v32

// kernel: resnet_generator.38
$region0: #{resnet_generator.38}
  #allocation0 [shape = 'u32[]', space=smem, size = 0x4, offset = 0x4, fixed_abs, tag = 'smem constant byte address 0x4 - core index']
  #allocation1 [shape = 'u32[144,128]{1,0:T(1,128)}', space=vmem, size = 0x12000, scoped, tag = 'internal scratch']
  %s0 = inlined_call_operand.vmem [shape: bf16[512,512], index: 0, kind: input, shape index: {}]
  %s1 = inlined_call_operand.vmem [shape: bf16[512,128], index: 1, kind: input, shape index: {}]
  %s2 = inlined_call_operand.vmem [shape: bf16[512,128], index: 2, kind: output, shape index: {0}]
  %s3 = inlined_call_operand.hbm [shape: f32[16,128], index: 3, kind: output, shape index: {1}]
  %4 = xla_tuple %s2, %s3
  %s5 = sld [smem:[#allocation0]]
  $region49: #{resnet_generator.38} parent=0
    _
  %s7 = ssub.s32 1, %s5
  %s8 = scalar_select 0, %s7, %s5
  $region1: #{resnet_generator.38} parent=0
    #allocation2 [shape = 'u8[8192]{0}', space=vmem, size = 0x2000, scoped, tag = 'output window, operand 1']
    #allocation3 [shape = 's32[2]{0}', space=sflag, size = 0x8, scoped, tag = 'scoped memory for resnet_generator.38']
    %9 = vsyncpa [#allocation3], 0
    %s10 = scalar_lea.sflag [#allocation3], 1
    %11 = vsyncpa %s10, 0
    loop: start=0, step=1, limit=4
    $region2: #{resnet_generator.38} parent=1 // loop_pre_header
      _
    $region3: #{resnet_generator.38} parent=1 // loop_header
      %s13 = sphi 0, %s17
      %p14 = scmp.ge.s32.totalorder %s13, 4
      %s23 = sphi 0, %s25
      %s26 = sphi 0, %s23
      %s27 = sphi 0, %s26
      %s43 = sphi 0, %s27
      %s47 = sphi 0, %s47
      %s49 = sphi 0, %s47
      %s50 = sphi 0, %s49
      %s64 = sphi 0, %s50
      %s70 = sphi 0, %s72
      %s73 = sphi 0, %s70
      %s74 = sphi 0, %s73
      %s90 = sphi 0, %s74
      %s96 = sphi 0, %s98
      %s99 = sphi 0, %s96
      %s100 = sphi 0, %s99
      %s116 = sphi 0, %s100
    $region4: #{resnet_generator.38} parent=1 // loop_header_branch
      %16 = sbr.rel (%p14) target = $region8
    $region5: #{resnet_generator.38} parent=1 // loop_body
      %s18 = ssub.s32 %s13, 1
      %s19 = ssub.s32 %s13, 2
      %s20 = sadd.s32 %s13, 1
      %s21 = ssub.s32 %s13, %s20
      %p22 = scmp.eq.s32.totalorder %s21, 0
      %s24 = sadd.s32 %s23, 1
      %s25 = scalar_select %p22, %s23, %s24
      %p28 = pneg %p22
      %p29 = scmp.eq.s32.totalorder %s13, 1
      %p30 = por %p28, %p29
      %p31 = scmp.ne.s32.totalorder %s23, %s26
      %p32 = scmp.eq.s32.totalorder %s13, 0
      %p33 = por %p31, %p32
      %p34 = scmp.ne.s32.totalorder %s23, %s26
      %p35 = scmp.eq.s32.totalorder %s18, 1
      %p36 = por %p34, %p35
      %p37 = scmp.ne.s32.totalorder %s26, %s27
      %p38 = scmp.eq.s32.totalorder %s18, 0
      %p39 = por %p37, %p38
      %p40 = scmp.ne.s32.totalorder %s26, %s27
      %p41 = scmp.eq.s32.totalorder %s19, 1
      %p42 = por %p40, %p41
      %p44 = scmp.ne.s32.totalorder %s27, %s43
      %p45 = scmp.eq.s32.totalorder %s19, 0
      %p46 = por %p44, %p45
      %s48 = sadd.s32 %s47, 1
      %p51 = scmp.eq.s32.totalorder %s13, 1
      %p52 = scmp.ne.s32.totalorder %s47, %s49
      %p53 = scmp.eq.s32.totalorder %s13, 0
      %p54 = por %p52, %p53
      %p55 = scmp.ne.s32.totalorder %s47, %s49
      %p56 = scmp.eq.s32.totalorder %s18, 1
      %p57 = por %p55, %p56
      %p58 = scmp.ne.s32.totalorder %s49, %s50
      %p59 = scmp.eq.s32.totalorder %s18, 0
      %p60 = por %p58, %p59
      %p61 = scmp.ne.s32.totalorder %s49, %s50
      %p62 = scmp.eq.s32.totalorder %s19, 1
      %p63 = por %p61, %p62
      %p65 = scmp.ne.s32.totalorder %s50, %s64
      %p66 = scmp.eq.s32.totalorder %s19, 0
      %p67 = por %p65, %p66
      %s68 = ssub.s32 %s13, %s20
      %p69 = scmp.eq.s32.totalorder %s68, 0
      %s71 = sadd.s32 %s70, 1
      %s72 = scalar_select %p69, %s70, %s71
      %p75 = pneg %p69
      %p76 = scmp.eq.s32.totalorder %s13, 1
      %p77 = por %p75, %p76
      %p78 = scmp.ne.s32.totalorder %s70, %s73
      %p79 = scmp.eq.s32.totalorder %s13, 0
      %p80 = por %p78, %p79
      %p81 = scmp.ne.s32.totalorder %s70, %s73
      %p82 = scmp.eq.s32.totalorder %s18, 1
      %p83 = por %p81, %p82
      %p84 = scmp.ne.s32.totalorder %s73, %s74
      %p85 = scmp.eq.s32.totalorder %s18, 0
      %p86 = por %p84, %p85
      %p87 = scmp.ne.s32.totalorder %s73, %s74
      %p88 = scmp.eq.s32.totalorder %s19, 1
      %p89 = por %p87, %p88
      %p91 = scmp.ne.s32.totalorder %s74, %s90
      %p92 = scmp.eq.s32.totalorder %s19, 0
      %p93 = por %p91, %p92
      %s94 = ssub.s32 %s13, %s20
      %p95 = scmp.eq.s32.totalorder %s94, 0
      %s97 = sadd.s32 %s96, 1
      %s98 = scalar_select %p95, %s96, %s97
      %p101 = pneg %p95
      %p102 = scmp.eq.s32.totalorder %s13, 1
      %p103 = por %p101, %p102
      %p104 = scmp.ne.s32.totalorder %s96, %s99
      %p105 = scmp.eq.s32.totalorder %s13, 0
      %p106 = por %p104, %p105
      %p107 = scmp.ne.s32.totalorder %s96, %s99
      %p108 = scmp.eq.s32.totalorder %s18, 1
      %p109 = por %p107, %p108
      %p110 = scmp.ne.s32.totalorder %s99, %s100
      %p111 = scmp.eq.s32.totalorder %s18, 0
      %p112 = por %p110, %p111
      %p113 = scmp.ne.s32.totalorder %s99, %s100
      %p114 = scmp.eq.s32.totalorder %s19, 1
      %p115 = por %p113, %p114
      %p117 = scmp.ne.s32.totalorder %s100, %s116
      %p118 = scmp.eq.s32.totalorder %s19, 0
      %p119 = por %p117, %p118
      %p120 = scmp.le.s32.totalorder 1, %s13
      %p121 = scmp.lt.s32.totalorder %s13, 3
      %p122 = pnand %p120, %p121
      %p123 = pneg %p122
      // Predicated region
      $region9: #{resnet_generator.38} parent=5 // pred_check
        _
      $region10: #{resnet_generator.38} parent=5 // pred_check_branch
        %125 = sbr.rel (%p122) target = $region12
      $region11: #{resnet_generator.38} parent=5 // pred_region
        %s126 = ssub.s32 %s13, 1
        // Predicated region
        $region13: #{resnet_generator.38} parent=11 // pred_check
          %p127 = pneg %p60
        $region14: #{resnet_generator.38} parent=11 // pred_check_branch
          %129 = sbr.rel (%p127) target = $region16
        $region15: #{resnet_generator.38} parent=11 // pred_region
          _
        $region16: #{resnet_generator.38} parent=11 // pred_fallthru
          _
      $region12: #{resnet_generator.38} parent=5 // pred_fallthru
        _
      %p130 = scmp.lt.s32.totalorder %s13, 2
      // Predicated region
      $region17: #{resnet_generator.38} parent=5 // pred_check
        %p131 = pneg %p130
      $region18: #{resnet_generator.38} parent=5 // pred_check_branch
        %133 = sbr.rel (%p131) target = $region20
      $region19: #{resnet_generator.38} parent=5 // pred_region
        // Predicated region
        $region21: #{resnet_generator.38} parent=19 // pred_check
          %p134 = pneg %p33
        $region22: #{resnet_generator.38} parent=19 // pred_check_branch
          %136 = sbr.rel (%p134) target = $region24
        $region23: #{resnet_generator.38} parent=19 // pred_region
          %s137 = smul.u32 32, %s13
          %p138 = scmp.lt.s32.totalorder %s137, 63
          %s139 = scalar_select %p138, %s137, 63
          %s140 = smul.addr %s139, 4
          %s141 = smul.addr %s140, 4
          %s142 = scalar_lea.vmem %s0, %s141
          %s143 = smul.u32 32, %s13
        $region24: #{resnet_generator.38} parent=19 // pred_fallthru
          _
      $region20: #{resnet_generator.38} parent=5 // pred_fallthru
        _
      %p144 = scmp.le.s32.totalorder 1, %s13
      %p145 = scmp.lt.s32.totalorder %s13, 3
      %p146 = pnand %p144, %p145
      %p147 = pneg %p146
      // Predicated region
      $region25: #{resnet_generator.38} parent=5 // pred_check
        _
      $region26: #{resnet_generator.38} parent=5 // pred_check_branch
        %149 = sbr.rel (%p146) target = $region28
      $region27: #{resnet_generator.38} parent=5 // pred_region
        %s150 = ssub.s32 %s13, 1
        %s151 = smul.u32 32, %s18
        %p152 = scmp.lt.s32.totalorder %s151, 63
        %s153 = scalar_select %p152, %s151, 63
        %s154 = smul.addr %s153, 4
        %s155 = smul.addr %s154, 4
        %s156 = scalar_lea.vmem %s0, %s155
        %p157 = pneg %p39
        %p158 = pneg %p36
        %p159 = pneg %p60
        %p160 = pneg %p57
        %p161 = pneg %p86
        %p162 = pneg %p83
        %s163 = smul.u32 32, %s18
        %p164 = scmp.lt.s32.totalorder %s163, 63
        %s165 = scalar_select %p164, %s163, 63
        %s166 = smul.addr %s165, 4
        %s167 = scalar_lea.vmem %s2, %s166
        %p168 = pneg %p112
        %p169 = pneg %p109
        %s170 = sand.u32 %s99, 1
        %s171 = scalar_lea.sflag [#allocation3], %s170
        %s172 = sand.u32 %s99, 1
        %s173 = smul.addr %s172, 8
        %s174 = scalar_lea.vmem [#allocation2], %s173
        %s175 = smul.u32 32, %s18
        %p176 = scmp.lt.s32.totalorder %s175, 63
        %s177 = scalar_select %p176, %s175, 63
        %s178 = smul.addr %s177, 4
        %s179 = smul.addr %s178, 4
        %s180 = scalar_lea.vmem %s0, %s179
        %s181 = smul.u32 32, %s18
        %s182 = smul.u32 32, %s18
        %p183 = scmp.lt.s32.totalorder %s182, 63
        %s184 = scalar_select %p183, %s182, 63
        %s185 = smul.addr %s184, 4
        %s186 = scalar_lea.vmem %s2, %s185
        %s187 = smul.u32 32, %s18
        %v189 = vld [vmem:[%s180] sm:$0xff]
        %v190 = vld [vmem:[%s180 + $0x8] sm:$0xff]
        %v191 = vld [vmem:[%s180 + $0x10] sm:$0xff]
        %v192 = vld [vmem:[%s180 + $0x18] sm:$0xff]
        %v193 = vld [vmem:[%s180 + $0x20] sm:$0xff]
        %v194 = vld [vmem:[%s180 + $0x28] sm:$0xff]
        %v195 = vld [vmem:[%s180 + $0x30] sm:$0xff]
        %v196 = vld [vmem:[%s180 + $0x38] sm:$0xff]
        %v197 = vld [vmem:[%s180 + $0x40] sm:$0xff]
        %v198 = vld [vmem:[%s180 + $0x48] sm:$0xff]
        %v199 = vld [vmem:[%s180 + $0x50] sm:$0xff]
        %v200 = vld [vmem:[%s180 + $0x58] sm:$0xff]
        %v201 = vld [vmem:[%s180 + $0x60] sm:$0xff]
        %v202 = vld [vmem:[%s180 + $0x68] sm:$0xff]
        %v203 = vld [vmem:[%s180 + $0x70] sm:$0xff]
        %v204 = vld [vmem:[%s180 + $0x78] sm:$0xff]
        %v205 = vld [vmem:[%s180 + $0x80] sm:$0xff]
        %v206 = vld [vmem:[%s180 + $0x88] sm:$0xff]
        %v207 = vld [vmem:[%s180 + $0x90] sm:$0xff]
        %v208 = vld [vmem:[%s180 + $0x98] sm:$0xff]
        %v209 = vld [vmem:[%s180 + $0xa0] sm:$0xff]
        %v210 = vld [vmem:[%s180 + $0xa8] sm:$0xff]
        %v211 = vld [vmem:[%s180 + $0xb0] sm:$0xff]
        %v212 = vld [vmem:[%s180 + $0xb8] sm:$0xff]
        %v213 = vld [vmem:[%s180 + $0xc0] sm:$0xff]
        %v214 = vld [vmem:[%s180 + $0xc8] sm:$0xff]
        %v215 = vld [vmem:[%s180 + $0xd0] sm:$0xff]
        %v216 = vld [vmem:[%s180 + $0xd8] sm:$0xff]
        %v217 = vld [vmem:[%s180 + $0xe0] sm:$0xff]
        %v218 = vld [vmem:[%s180 + $0xe8] sm:$0xff]
        %v219 = vld [vmem:[%s180 + $0xf0] sm:$0xff]
        %v220 = vld [vmem:[%s180 + $0xf8] sm:$0xff]
        %v221 = vld [vmem:[%s180 + $0x100] sm:$0xff]
        %v222 = vld [vmem:[%s180 + $0x108] sm:$0xff]
        %v223 = vld [vmem:[%s180 + $0x110] sm:$0xff]
        %v224 = vld [vmem:[%s180 + $0x118] sm:$0xff]
        %v225 = vld [vmem:[%s180 + $0x120] sm:$0xff]
        %v226 = vld [vmem:[%s180 + $0x128] sm:$0xff]
        %v227 = vld [vmem:[%s180 + $0x130] sm:$0xff]
        %v228 = vld [vmem:[%s180 + $0x138] sm:$0xff]
        %v229 = vld [vmem:[%s180 + $0x140] sm:$0xff]
        %v230 = vld [vmem:[%s180 + $0x148] sm:$0xff]
        %v231 = vld [vmem:[%s180 + $0x150] sm:$0xff]
        %v232 = vld [vmem:[%s180 + $0x158] sm:$0xff]
        %v233 = vld [vmem:[%s180 + $0x160] sm:$0xff]
        %v234 = vld [vmem:[%s180 + $0x168] sm:$0xff]
        %v235 = vld [vmem:[%s180 + $0x170] sm:$0xff]
        %v236 = vld [vmem:[%s180 + $0x178] sm:$0xff]
        %v237 = vld [vmem:[%s180 + $0x180] sm:$0xff]
        %v238 = vld [vmem:[%s180 + $0x188] sm:$0xff]
        %v239 = vld [vmem:[%s180 + $0x190] sm:$0xff]
        %v240 = vld [vmem:[%s180 + $0x198] sm:$0xff]
        %v241 = vld [vmem:[%s180 + $0x1a0] sm:$0xff]
        %v242 = vld [vmem:[%s180 + $0x1a8] sm:$0xff]
        %v243 = vld [vmem:[%s180 + $0x1b0] sm:$0xff]
        %v244 = vld [vmem:[%s180 + $0x1b8] sm:$0xff]
        %v245 = vld [vmem:[%s180 + $0x1c0] sm:$0xff]
        %v246 = vld [vmem:[%s180 + $0x1c8] sm:$0xff]
        %v247 = vld [vmem:[%s180 + $0x1d0] sm:$0xff]
        %v248 = vld [vmem:[%s180 + $0x1d8] sm:$0xff]
        %v249 = vld [vmem:[%s180 + $0x1e0] sm:$0xff]
        %v250 = vld [vmem:[%s180 + $0x1e8] sm:$0xff]
        %v251 = vld [vmem:[%s180 + $0x1f0] sm:$0xff]
        %v252 = vld [vmem:[%s180 + $0x1f8] sm:$0xff]
        %v253 = vld [vmem:[%s1] sm:$0xf]
        %v254 = vld [vmem:[%s1 + $0x4] sm:$0xf]
        %v255 = vld [vmem:[%s1 + $0x8] sm:$0xf]
        %v256 = vld [vmem:[%s1 + $0xc] sm:$0xf]
        %v257 = vld [vmem:[%s1 + $0x10] sm:$0xf]
        %v258 = vld [vmem:[%s1 + $0x14] sm:$0xf]
        %v259 = vld [vmem:[%s1 + $0x18] sm:$0xf]
        %v260 = vld [vmem:[%s1 + $0x1c] sm:$0xf]
        %v261 = vld [vmem:[%s1 + $0x20] sm:$0xf]
        %v262 = vld [vmem:[%s1 + $0x24] sm:$0xf]
        %v263 = vld [vmem:[%s1 + $0x28] sm:$0xf]
        %v264 = vld [vmem:[%s1 + $0x2c] sm:$0xf]
        %v265 = vld [vmem:[%s1 + $0x30] sm:$0xf]
        %v266 = vld [vmem:[%s1 + $0x34] sm:$0xf]
        %v267 = vld [vmem:[%s1 + $0x38] sm:$0xf]
        %v268 = vld [vmem:[%s1 + $0x3c] sm:$0xf]
        %v269 = vld [vmem:[%s1 + $0x40] sm:$0xf]
        %v270 = vld [vmem:[%s1 + $0x44] sm:$0xf]
        %v271 = vld [vmem:[%s1 + $0x48] sm:$0xf]
        %v272 = vld [vmem:[%s1 + $0x4c] sm:$0xf]
        %v273 = vld [vmem:[%s1 + $0x50] sm:$0xf]
        %v274 = vld [vmem:[%s1 + $0x54] sm:$0xf]
        %v275 = vld [vmem:[%s1 + $0x58] sm:$0xf]
        %v276 = vld [vmem:[%s1 + $0x5c] sm:$0xf]
        %v277 = vld [vmem:[%s1 + $0x60] sm:$0xf]
        %v278 = vld [vmem:[%s1 + $0x64] sm:$0xf]
        %v279 = vld [vmem:[%s1 + $0x68] sm:$0xf]
        %v280 = vld [vmem:[%s1 + $0x6c] sm:$0xf]
        %v281 = vld [vmem:[%s1 + $0x70] sm:$0xf]
        %v282 = vld [vmem:[%s1 + $0x74] sm:$0xf]
        %v283 = vld [vmem:[%s1 + $0x78] sm:$0xf]
        %v284 = vld [vmem:[%s1 + $0x7c] sm:$0xf]
        %v285 = vld [vmem:[%s1 + $0x80] sm:$0xf]
        %v286 = vld [vmem:[%s1 + $0x84] sm:$0xf]
        %v287 = vld [vmem:[%s1 + $0x88] sm:$0xf]
        %v288 = vld [vmem:[%s1 + $0x8c] sm:$0xf]
        %v289 = vld [vmem:[%s1 + $0x90] sm:$0xf]
        %v290 = vld [vmem:[%s1 + $0x94] sm:$0xf]
        %v291 = vld [vmem:[%s1 + $0x98] sm:$0xf]
        %v292 = vld [vmem:[%s1 + $0x9c] sm:$0xf]
        %v293 = vld [vmem:[%s1 + $0xa0] sm:$0xf]
        %v294 = vld [vmem:[%s1 + $0xa4] sm:$0xf]
        %v295 = vld [vmem:[%s1 + $0xa8] sm:$0xf]
        %v296 = vld [vmem:[%s1 + $0xac] sm:$0xf]
        %v297 = vld [vmem:[%s1 + $0xb0] sm:$0xf]
        %v298 = vld [vmem:[%s1 + $0xb4] sm:$0xf]
        %v299 = vld [vmem:[%s1 + $0xb8] sm:$0xf]
        %v300 = vld [vmem:[%s1 + $0xbc] sm:$0xf]
        %v301 = vld [vmem:[%s1 + $0xc0] sm:$0xf]
        %v302 = vld [vmem:[%s1 + $0xc4] sm:$0xf]
        %v303 = vld [vmem:[%s1 + $0xc8] sm:$0xf]
        %v304 = vld [vmem:[%s1 + $0xcc] sm:$0xf]
        %v305 = vld [vmem:[%s1 + $0xd0] sm:$0xf]
        %v306 = vld [vmem:[%s1 + $0xd4] sm:$0xf]
        %v307 = vld [vmem:[%s1 + $0xd8] sm:$0xf]
        %v308 = vld [vmem:[%s1 + $0xdc] sm:$0xf]
        %v309 = vld [vmem:[%s1 + $0xe0] sm:$0xf]
        %v310 = vld [vmem:[%s1 + $0xe4] sm:$0xf]
        %v311 = vld [vmem:[%s1 + $0xe8] sm:$0xf]
        %v312 = vld [vmem:[%s1 + $0xec] sm:$0xf]
        %v313 = vld [vmem:[%s1 + $0xf0] sm:$0xf]
        %v314 = vld [vmem:[%s1 + $0xf4] sm:$0xf]
        %v315 = vld [vmem:[%s1 + $0xf8] sm:$0xf]
        %v316 = vld [vmem:[%s1 + $0xfc] sm:$0xf]
        %v381 = vunpack.c.l.b16 %v189
        %v382 = vunpack.c.h.b16 %v189
        %v383 = vunpack.c.l.b16 %v190
        %v384 = vunpack.c.h.b16 %v190
        %v385 = vunpack.c.l.b16 %v191
        %v386 = vunpack.c.h.b16 %v191
        %v387 = vunpack.c.l.b16 %v192
        %v388 = vunpack.c.h.b16 %v192
        %v389 = vunpack.c.l.b16 %v193
        %v390 = vunpack.c.h.b16 %v193
        %v391 = vunpack.c.l.b16 %v194
        %v392 = vunpack.c.h.b16 %v194
        %v393 = vunpack.c.l.b16 %v195
        %v394 = vunpack.c.h.b16 %v195
        %v395 = vunpack.c.l.b16 %v196
        %v396 = vunpack.c.h.b16 %v196
        %v397 = vunpack.c.l.b16 %v197
        %v398 = vunpack.c.h.b16 %v197
        %v399 = vunpack.c.l.b16 %v198
        %v400 = vunpack.c.h.b16 %v198
        %v401 = vunpack.c.l.b16 %v199
        %v402 = vunpack.c.h.b16 %v199
        %v403 = vunpack.c.l.b16 %v200
        %v404 = vunpack.c.h.b16 %v200
        %v405 = vunpack.c.l.b16 %v201
        %v406 = vunpack.c.h.b16 %v201
        %v407 = vunpack.c.l.b16 %v202
        %v408 = vunpack.c.h.b16 %v202
        %v409 = vunpack.c.l.b16 %v203
        %v410 = vunpack.c.h.b16 %v203
        %v411 = vunpack.c.l.b16 %v204
        %v412 = vunpack.c.h.b16 %v204
        %v413 = vunpack.c.l.b16 %v205
        %v414 = vunpack.c.h.b16 %v205
        %v415 = vunpack.c.l.b16 %v206
        %v416 = vunpack.c.h.b16 %v206
        %v417 = vunpack.c.l.b16 %v207
        %v418 = vunpack.c.h.b16 %v207
        %v419 = vunpack.c.l.b16 %v208
        %v420 = vunpack.c.h.b16 %v208
        %v421 = vunpack.c.l.b16 %v209
        %v422 = vunpack.c.h.b16 %v209
        %v423 = vunpack.c.l.b16 %v210
        %v424 = vunpack.c.h.b16 %v210
        %v425 = vunpack.c.l.b16 %v211
        %v426 = vunpack.c.h.b16 %v211
        %v427 = vunpack.c.l.b16 %v212
        %v428 = vunpack.c.h.b16 %v212
        %v429 = vunpack.c.l.b16 %v213
        %v430 = vunpack.c.h.b16 %v213
        %v431 = vunpack.c.l.b16 %v214
        %v432 = vunpack.c.h.b16 %v214
        %v433 = vunpack.c.l.b16 %v215
        %v434 = vunpack.c.h.b16 %v215
        %v435 = vunpack.c.l.b16 %v216
        %v436 = vunpack.c.h.b16 %v216
        %v437 = vunpack.c.l.b16 %v217
        %v438 = vunpack.c.h.b16 %v217
        %v439 = vunpack.c.l.b16 %v218
        %v440 = vunpack.c.h.b16 %v218
        %v441 = vunpack.c.l.b16 %v219
        %v442 = vunpack.c.h.b16 %v219
        %v443 = vunpack.c.l.b16 %v220
        %v444 = vunpack.c.h.b16 %v220
        %v445 = vunpack.c.l.b16 %v221
        %v446 = vunpack.c.h.b16 %v221
        %v447 = vunpack.c.l.b16 %v222
        %v448 = vunpack.c.h.b16 %v222
        %v449 = vunpack.c.l.b16 %v223
        %v450 = vunpack.c.h.b16 %v223
        %v451 = vunpack.c.l.b16 %v224
        %v452 = vunpack.c.h.b16 %v224
        %v453 = vunpack.c.l.b16 %v225
        %v454 = vunpack.c.h.b16 %v225
        %v455 = vunpack.c.l.b16 %v226
        %v456 = vunpack.c.h.b16 %v226
        %v457 = vunpack.c.l.b16 %v227
        %v458 = vunpack.c.h.b16 %v227
        %v459 = vunpack.c.l.b16 %v228
        %v460 = vunpack.c.h.b16 %v228
        %v461 = vunpack.c.l.b16 %v229
        %v462 = vunpack.c.h.b16 %v229
        %v463 = vunpack.c.l.b16 %v230
        %v464 = vunpack.c.h.b16 %v230
        %v465 = vunpack.c.l.b16 %v231
        %v466 = vunpack.c.h.b16 %v231
        %v467 = vunpack.c.l.b16 %v232
        %v468 = vunpack.c.h.b16 %v232
        %v469 = vunpack.c.l.b16 %v233
        %v470 = vunpack.c.h.b16 %v233
        %v471 = vunpack.c.l.b16 %v234
        %v472 = vunpack.c.h.b16 %v234
        %v473 = vunpack.c.l.b16 %v235
        %v474 = vunpack.c.h.b16 %v235
        %v475 = vunpack.c.l.b16 %v236
        %v476 = vunpack.c.h.b16 %v236
        %v477 = vunpack.c.l.b16 %v237
        %v478 = vunpack.c.h.b16 %v237
        %v479 = vunpack.c.l.b16 %v238
        %v480 = vunpack.c.h.b16 %v238
        %v481 = vunpack.c.l.b16 %v239
        %v482 = vunpack.c.h.b16 %v239
        %v483 = vunpack.c.l.b16 %v240
        %v484 = vunpack.c.h.b16 %v240
        %v485 = vunpack.c.l.b16 %v241
        %v486 = vunpack.c.h.b16 %v241
        %v487 = vunpack.c.l.b16 %v242
        %v488 = vunpack.c.h.b16 %v242
        %v489 = vunpack.c.l.b16 %v243
        %v490 = vunpack.c.h.b16 %v243
        %v491 = vunpack.c.l.b16 %v244
        %v492 = vunpack.c.h.b16 %v244
        %v493 = vunpack.c.l.b16 %v245
        %v494 = vunpack.c.h.b16 %v245
        %v495 = vunpack.c.l.b16 %v246
        %v496 = vunpack.c.h.b16 %v246
        %v497 = vunpack.c.l.b16 %v247
        %v498 = vunpack.c.h.b16 %v247
        %v499 = vunpack.c.l.b16 %v248
        %v500 = vunpack.c.h.b16 %v248
        %v501 = vunpack.c.l.b16 %v249
        %v502 = vunpack.c.h.b16 %v249
        %v503 = vunpack.c.l.b16 %v250
        %v504 = vunpack.c.h.b16 %v250
        %v505 = vunpack.c.l.b16 %v251
        %v506 = vunpack.c.h.b16 %v251
        %v507 = vunpack.c.l.b16 %v252
        %v508 = vunpack.c.h.b16 %v252
        %v509 = vpack.c.b16 %v385, %v381
        %v510 = vpack.c.b16 %v386, %v382
        %v511 = vpack.c.b16 %v387, %v383
        %v512 = vpack.c.b16 %v388, %v384
        %v513 = vpack.c.b16 %v393, %v389
        %v514 = vpack.c.b16 %v394, %v390
        %v515 = vpack.c.b16 %v395, %v391
        %v516 = vpack.c.b16 %v396, %v392
        %v517 = vpack.c.b16 %v401, %v397
        %v518 = vpack.c.b16 %v402, %v398
        %v519 = vpack.c.b16 %v403, %v399
        %v520 = vpack.c.b16 %v404, %v400
        %v521 = vpack.c.b16 %v409, %v405
        %v522 = vpack.c.b16 %v410, %v406
        %v523 = vpack.c.b16 %v411, %v407
        %v524 = vpack.c.b16 %v412, %v408
        %v525 = vpack.c.b16 %v417, %v413
        %v526 = vpack.c.b16 %v418, %v414
        %v527 = vpack.c.b16 %v419, %v415
        %v528 = vpack.c.b16 %v420, %v416
        %v529 = vpack.c.b16 %v425, %v421
        %v530 = vpack.c.b16 %v426, %v422
        %v531 = vpack.c.b16 %v427, %v423
        %v532 = vpack.c.b16 %v428, %v424
        %v533 = vpack.c.b16 %v433, %v429
        %v534 = vpack.c.b16 %v434, %v430
        %v535 = vpack.c.b16 %v435, %v431
        %v536 = vpack.c.b16 %v436, %v432
        %v537 = vpack.c.b16 %v441, %v437
        %v538 = vpack.c.b16 %v442, %v438
        %v539 = vpack.c.b16 %v443, %v439
        %v540 = vpack.c.b16 %v444, %v440
        %v541 = vpack.c.b16 %v449, %v445
        %v542 = vpack.c.b16 %v450, %v446
        %v543 = vpack.c.b16 %v451, %v447
        %v544 = vpack.c.b16 %v452, %v448
        %v545 = vpack.c.b16 %v457, %v453
        %v546 = vpack.c.b16 %v458, %v454
        %v547 = vpack.c.b16 %v459, %v455
        %v548 = vpack.c.b16 %v460, %v456
        %v549 = vpack.c.b16 %v465, %v461
        %v550 = vpack.c.b16 %v466, %v462
        %v551 = vpack.c.b16 %v467, %v463
        %v552 = vpack.c.b16 %v468, %v464
        %v553 = vpack.c.b16 %v473, %v469
        %v554 = vpack.c.b16 %v474, %v470
        %v555 = vpack.c.b16 %v475, %v471
        %v556 = vpack.c.b16 %v476, %v472
        %v557 = vpack.c.b16 %v481, %v477
        %v558 = vpack.c.b16 %v482, %v478
        %v559 = vpack.c.b16 %v483, %v479
        %v560 = vpack.c.b16 %v484, %v480
        %v561 = vpack.c.b16 %v489, %v485
        %v562 = vpack.c.b16 %v490, %v486
        %v563 = vpack.c.b16 %v491, %v487
        %v564 = vpack.c.b16 %v492, %v488
        %v565 = vpack.c.b16 %v497, %v493
        %v566 = vpack.c.b16 %v498, %v494
        %v567 = vpack.c.b16 %v499, %v495
        %v568 = vpack.c.b16 %v500, %v496
        %v569 = vpack.c.b16 %v505, %v501
        %v570 = vpack.c.b16 %v506, %v502
        %v571 = vpack.c.b16 %v507, %v503
        %v572 = vpack.c.b16 %v508, %v504
        %v701 = vunpack.c.l.b16 %v253
        %v702 = vunpack.c.l.b16 %v254
        %v703 = vunpack.c.l.b16 %v255
        %v704 = vunpack.c.l.b16 %v256
        %v705 = vunpack.c.l.b16 %v257
        %v706 = vunpack.c.l.b16 %v258
        %v707 = vunpack.c.l.b16 %v259
        %v708 = vunpack.c.l.b16 %v260
        %v709 = vunpack.c.l.b16 %v261
        %v710 = vunpack.c.l.b16 %v262
        %v711 = vunpack.c.l.b16 %v263
        %v712 = vunpack.c.l.b16 %v264
        %v713 = vunpack.c.l.b16 %v265
        %v714 = vunpack.c.l.b16 %v266
        %v715 = vunpack.c.l.b16 %v267
        %v716 = vunpack.c.l.b16 %v268
        %v717 = vunpack.c.l.b16 %v269
        %v718 = vunpack.c.l.b16 %v270
        %v719 = vunpack.c.l.b16 %v271
        %v720 = vunpack.c.l.b16 %v272
        %v721 = vunpack.c.l.b16 %v273
        %v722 = vunpack.c.l.b16 %v274
        %v723 = vunpack.c.l.b16 %v275
        %v724 = vunpack.c.l.b16 %v276
        %v725 = vunpack.c.l.b16 %v277
        %v726 = vunpack.c.l.b16 %v278
        %v727 = vunpack.c.l.b16 %v279
        %v728 = vunpack.c.l.b16 %v280
        %v729 = vunpack.c.l.b16 %v281
        %v730 = vunpack.c.l.b16 %v282
        %v731 = vunpack.c.l.b16 %v283
        %v732 = vunpack.c.l.b16 %v284
        %v733 = vunpack.c.l.b16 %v285
        %v734 = vunpack.c.l.b16 %v286
        %v735 = vunpack.c.l.b16 %v287
        %v736 = vunpack.c.l.b16 %v288
        %v737 = vunpack.c.l.b16 %v289
        %v738 = vunpack.c.l.b16 %v290
        %v739 = vunpack.c.l.b16 %v291
        %v740 = vunpack.c.l.b16 %v292
        %v741 = vunpack.c.l.b16 %v293
        %v742 = vunpack.c.l.b16 %v294
        %v743 = vunpack.c.l.b16 %v295
        %v744 = vunpack.c.l.b16 %v296
        %v745 = vunpack.c.l.b16 %v297
        %v746 = vunpack.c.l.b16 %v298
        %v747 = vunpack.c.l.b16 %v299
        %v748 = vunpack.c.l.b16 %v300
        %v749 = vunpack.c.l.b16 %v301
        %v750 = vunpack.c.l.b16 %v302
        %v751 = vunpack.c.l.b16 %v303
        %v752 = vunpack.c.l.b16 %v304
        %v753 = vunpack.c.l.b16 %v305
        %v754 = vunpack.c.l.b16 %v306
        %v755 = vunpack.c.l.b16 %v307
        %v756 = vunpack.c.l.b16 %v308
        %v757 = vunpack.c.l.b16 %v309
        %v758 = vunpack.c.l.b16 %v310
        %v759 = vunpack.c.l.b16 %v311
        %v760 = vunpack.c.l.b16 %v312
        %v761 = vunpack.c.l.b16 %v313
        %v762 = vunpack.c.l.b16 %v314
        %v763 = vunpack.c.l.b16 %v315
        %v764 = vunpack.c.l.b16 %v316
        %v765 = vpack.c.b16 %v702, %v701
        %v766 = vpack.c.b16 %v704, %v703
        %v767 = vpack.c.b16 %v706, %v705
        %v768 = vpack.c.b16 %v708, %v707
        %v769 = vpack.c.b16 %v710, %v709
        %v770 = vpack.c.b16 %v712, %v711
        %v771 = vpack.c.b16 %v714, %v713
        %v772 = vpack.c.b16 %v716, %v715
        %v773 = vpack.c.b16 %v718, %v717
        %v774 = vpack.c.b16 %v720, %v719
        %v775 = vpack.c.b16 %v722, %v721
        %v776 = vpack.c.b16 %v724, %v723
        %v777 = vpack.c.b16 %v726, %v725
        %v778 = vpack.c.b16 %v728, %v727
        %v779 = vpack.c.b16 %v730, %v729
        %v780 = vpack.c.b16 %v732, %v731
        %v781 = vpack.c.b16 %v734, %v733
        %v782 = vpack.c.b16 %v736, %v735
        %v783 = vpack.c.b16 %v738, %v737
        %v784 = vpack.c.b16 %v740, %v739
        %v785 = vpack.c.b16 %v742, %v741
        %v786 = vpack.c.b16 %v744, %v743
        %v787 = vpack.c.b16 %v746, %v745
        %v788 = vpack.c.b16 %v748, %v747
        %v789 = vpack.c.b16 %v750, %v749
        %v790 = vpack.c.b16 %v752, %v751
        %v791 = vpack.c.b16 %v754, %v753
        %v792 = vpack.c.b16 %v756, %v755
        %v793 = vpack.c.b16 %v758, %v757
        %v794 = vpack.c.b16 %v760, %v759
        %v795 = vpack.c.b16 %v762, %v761
        %v796 = vpack.c.b16 %v764, %v763
        %829 = vmatprep.subr.bf16.mxu0 0
        %830 = vmatpush1.bf16.msra.mxu0 %v772
        %831 = vmatprep.subr.bf16.mxu0 0
        %832 = vmatpush1.bf16.msra.mxu0 %v771
        %833 = vmatprep.subr.bf16.mxu0 0
        %834 = vmatpush1.bf16.msra.mxu0 %v770
        %835 = vmatprep.subr.bf16.mxu0 0
        %836 = vmatpush1.bf16.msra.mxu0 %v769
        %837 = vmatprep.subr.bf16.mxu0 0
        %838 = vmatpush1.bf16.msra.mxu0 %v768
        %839 = vmatprep.subr.bf16.mxu0 0
        %840 = vmatpush1.bf16.msra.mxu0 %v767
        %841 = vmatprep.subr.bf16.mxu0 0
        %842 = vmatpush1.bf16.msra.mxu0 %v766
        %843 = vmatprep.subr.bf16.mxu0 0
        %844 = vmatpush1.bf16.msra.mxu0 %v765
        %845 = vmatprep.subr.bf16.mxu0 0
        %846 = vmatpush2.bf16.msra.mxu0 %v780
        %847 = vmatprep.subr.bf16.mxu0 0
        %848 = vmatpush2.bf16.msra.mxu0 %v779
        %849 = vmatprep.subr.bf16.mxu0 0
        %850 = vmatpush2.bf16.msra.mxu0 %v778
        %851 = vmatprep.subr.bf16.mxu0 0
        %852 = vmatpush2.bf16.msra.mxu0 %v777
        %853 = vmatprep.subr.bf16.mxu0 0
        %854 = vmatpush2.bf16.msra.mxu0 %v776
        %855 = vmatprep.subr.bf16.mxu0 0
        %856 = vmatpush2.bf16.msra.mxu0 %v775
        %857 = vmatprep.subr.bf16.mxu0 0
        %858 = vmatpush2.bf16.msra.mxu0 %v774
        %859 = vmatprep.subr.bf16.mxu0 0
        %860 = vmatpush2.bf16.msra.mxu0 %v773
        %861 = vmatprep.mubr.bf16.mxu0 %v510
        %862 = vmatmul.mubr.bf16.gmra.mxu0 %v509
        %v863 = vpop.f32.mrf.mxu0
        %v864 = vadd.f32 0.0, %v863
        %v865 = vpop.f32.mrf.mxu0
        %v866 = vpop.f32.mrf.mxu0
        %v867 = vadd.f32 0.0, %v866
        %v868 = vpop.f32.mrf.mxu0
        %869 = vmatprep.mubr.bf16.mxu0 %v514
        %870 = vmatmul.mubr.bf16.gmra.mxu0 %v513
        %v871 = vpop.f32.mrf.mxu0
        %v872 = vadd.f32 0.0, %v871
        %v873 = vpop.f32.mrf.mxu0
        %v874 = vpop.f32.mrf.mxu0
        %v875 = vadd.f32 0.0, %v874
        %v876 = vpop.f32.mrf.mxu0
        %877 = vmatprep.mubr.bf16.mxu0 %v518
        %878 = vmatmul.mubr.bf16.gmra.mxu0 %v517
        %v879 = vpop.f32.mrf.mxu0
        %v880 = vadd.f32 0.0, %v879
        %v881 = vpop.f32.mrf.mxu0
        %v882 = vpop.f32.mrf.mxu0
        %v883 = vadd.f32 0.0, %v882
        %v884 = vpop.f32.mrf.mxu0
        %885 = vmatprep.mubr.bf16.mxu0 %v522
        %886 = vmatmul.mubr.bf16.gmra.mxu0 %v521
        %v887 = vpop.f32.mrf.mxu0
        %v888 = vadd.f32 0.0, %v887
        %v889 = vpop.f32.mrf.mxu0
        %v890 = vpop.f32.mrf.mxu0
        %v891 = vadd.f32 0.0, %v890
        %v892 = vpop.f32.mrf.mxu0
        %893 = vmatprep.mubr.bf16.mxu0 %v526
        %894 = vmatmul.mubr.bf16.gmra.mxu0 %v525
        %v895 = vpop.f32.mrf.mxu0
        %v896 = vadd.f32 0.0, %v895
        %v897 = vpop.f32.mrf.mxu0
        %v898 = vpop.f32.mrf.mxu0
        %v899 = vadd.f32 0.0, %v898
        %v900 = vpop.f32.mrf.mxu0
        %901 = vmatprep.mubr.bf16.mxu0 %v530
        %902 = vmatmul.mubr.bf16.gmra.mxu0 %v529
        %v903 = vpop.f32.mrf.mxu0
        %v904 = vadd.f32 0.0, %v903
        %v905 = vpop.f32.mrf.mxu0
        %v906 = vpop.f32.mrf.mxu0
        %v907 = vadd.f32 0.0, %v906
        %v908 = vpop.f32.mrf.mxu0
        %909 = vmatprep.mubr.bf16.mxu0 %v534
        %910 = vmatmul.mubr.bf16.gmra.mxu0 %v533
        %v911 = vpop.f32.mrf.mxu0
        %v912 = vadd.f32 0.0, %v911
        %v913 = vpop.f32.mrf.mxu0
        %v914 = vpop.f32.mrf.mxu0
        %v915 = vadd.f32 0.0, %v914
        %v916 = vpop.f32.mrf.mxu0
        %917 = vmatprep.mubr.bf16.mxu0 %v538
        %918 = vmatmul.mubr.bf16.gmra.mxu0 %v537
        %v919 = vpop.f32.mrf.mxu0
        %v920 = vadd.f32 0.0, %v919
        %v921 = vpop.f32.mrf.mxu0
        %v922 = vpop.f32.mrf.mxu0
        %v923 = vadd.f32 0.0, %v922
        %v924 = vpop.f32.mrf.mxu0
        %925 = vmatprep.mubr.bf16.mxu0 %v542
        %926 = vmatmul.mubr.bf16.gmra.mxu0 %v541
        %v927 = vpop.f32.mrf.mxu0
        %v928 = vadd.f32 0.0, %v927
        %v929 = vpop.f32.mrf.mxu0
        %v930 = vpop.f32.mrf.mxu0
        %v931 = vadd.f32 0.0, %v930
        %v932 = vpop.f32.mrf.mxu0
        %933 = vmatprep.mubr.bf16.mxu0 %v546
        %934 = vmatmul.mubr.bf16.gmra.mxu0 %v545
        %v935 = vpop.f32.mrf.mxu0
        %v936 = vadd.f32 0.0, %v935
        %v937 = vpop.f32.mrf.mxu0
        %v938 = vpop.f32.mrf.mxu0
        %v939 = vadd.f32 0.0, %v938
        %v940 = vpop.f32.mrf.mxu0
        %941 = vmatprep.mubr.bf16.mxu0 %v550
        %942 = vmatmul.mubr.bf16.gmra.mxu0 %v549
        %v943 = vpop.f32.mrf.mxu0
        %v944 = vadd.f32 0.0, %v943
        %v945 = vpop.f32.mrf.mxu0
        %v946 = vpop.f32.mrf.mxu0
        %v947 = vadd.f32 0.0, %v946
        %v948 = vpop.f32.mrf.mxu0
        %949 = vmatprep.mubr.bf16.mxu0 %v554
        %950 = vmatmul.mubr.bf16.gmra.mxu0 %v553
        %v951 = vpop.f32.mrf.mxu0
        %v952 = vadd.f32 0.0, %v951
        %v953 = vpop.f32.mrf.mxu0
        %v954 = vpop.f32.mrf.mxu0
        %v955 = vadd.f32 0.0, %v954
        %v956 = vpop.f32.mrf.mxu0
        %957 = vmatprep.mubr.bf16.mxu0 %v558
        %958 = vmatmul.mubr.bf16.gmra.mxu0 %v557
        %v959 = vpop.f32.mrf.mxu0
        %v960 = vadd.f32 0.0, %v959
        %v961 = vpop.f32.mrf.mxu0
        %v962 = vpop.f32.mrf.mxu0
        %v963 = vadd.f32 0.0, %v962
        %v964 = vpop.f32.mrf.mxu0
        %965 = vmatprep.mubr.bf16.mxu0 %v562
        %966 = vmatmul.mubr.bf16.gmra.mxu0 %v561
        %v967 = vpop.f32.mrf.mxu0
        %v968 = vadd.f32 0.0, %v967
        %v969 = vpop.f32.mrf.mxu0
        %v970 = vpop.f32.mrf.mxu0
        %v971 = vadd.f32 0.0, %v970
        %v972 = vpop.f32.mrf.mxu0
        %973 = vmatprep.mubr.bf16.mxu0 %v566
        %974 = vmatmul.mubr.bf16.gmra.mxu0 %v565
        %v975 = vpop.f32.mrf.mxu0
        %v976 = vadd.f32 0.0, %v975
        %v977 = vpop.f32.mrf.mxu0
        %v978 = vpop.f32.mrf.mxu0
        %v979 = vadd.f32 0.0, %v978
        %v980 = vpop.f32.mrf.mxu0
        %981 = vmatprep.mubr.bf16.mxu0 %v570
        %982 = vmatmul.mubr.bf16.gmra.mxu0 %v569
        %v983 = vpop.f32.mrf.mxu0
        %v984 = vadd.f32 0.0, %v983
        %v985 = vpop.f32.mrf.mxu0
        %v986 = vpop.f32.mrf.mxu0
        %v987 = vadd.f32 0.0, %v986
        %v988 = vpop.f32.mrf.mxu0
        %989 = vdwg.mxu0
        %990 = vmatprep.subr.bf16.mxu0 0
        %991 = vmatpush1.bf16.msra.mxu0 %v788
        %992 = vmatprep.subr.bf16.mxu0 0
        %993 = vmatpush1.bf16.msra.mxu0 %v787
        %994 = vmatprep.subr.bf16.mxu0 0
        %995 = vmatpush1.bf16.msra.mxu0 %v786
        %996 = vmatprep.subr.bf16.mxu0 0
        %997 = vmatpush1.bf16.msra.mxu0 %v785
        %998 = vmatprep.subr.bf16.mxu0 0
        %999 = vmatpush1.bf16.msra.mxu0 %v784
        %1000 = vmatprep.subr.bf16.mxu0 0
        %1001 = vmatpush1.bf16.msra.mxu0 %v783
        %1002 = vmatprep.subr.bf16.mxu0 0
        %1003 = vmatpush1.bf16.msra.mxu0 %v782
        %1004 = vmatprep.subr.bf16.mxu0 0
        %1005 = vmatpush1.bf16.msra.mxu0 %v781
        %1006 = vmatprep.subr.bf16.mxu0 0
        %1007 = vmatpush2.bf16.msra.mxu0 %v796
        %1008 = vmatprep.subr.bf16.mxu0 0
        %1009 = vmatpush2.bf16.msra.mxu0 %v795
        %1010 = vmatprep.subr.bf16.mxu0 0
        %1011 = vmatpush2.bf16.msra.mxu0 %v794
        %1012 = vmatprep.subr.bf16.mxu0 0
        %1013 = vmatpush2.bf16.msra.mxu0 %v793
        %1014 = vmatprep.subr.bf16.mxu0 0
        %1015 = vmatpush2.bf16.msra.mxu0 %v792
        %1016 = vmatprep.subr.bf16.mxu0 0
        %1017 = vmatpush2.bf16.msra.mxu0 %v791
        %1018 = vmatprep.subr.bf16.mxu0 0
        %1019 = vmatpush2.bf16.msra.mxu0 %v790
        %1020 = vmatprep.subr.bf16.mxu0 0
        %1021 = vmatpush2.bf16.msra.mxu0 %v789
        %1022 = vmatprep.mubr.bf16.mxu0 %v512
        %1023 = vmatmul.mubr.bf16.gmra.mxu0 %v511
        %v1024 = vpop.f32.mrf.mxu0
        %v1025 = vadd.f32 %v864, %v1024
        %v1026 = vpop.f32.mrf.mxu0
        %v1027 = vpop.f32.mrf.mxu0
        %v1028 = vadd.f32 %v867, %v1027
        %v1029 = vpop.f32.mrf.mxu0
        %1030 = vmatprep.mubr.bf16.mxu0 %v516
        %1031 = vmatmul.mubr.bf16.gmra.mxu0 %v515
        %v1032 = vpop.f32.mrf.mxu0
        %v1033 = vadd.f32 %v872, %v1032
        %v1034 = vpop.f32.mrf.mxu0
        %v1035 = vpop.f32.mrf.mxu0
        %v1036 = vadd.f32 %v875, %v1035
        %v1037 = vpop.f32.mrf.mxu0
        %1038 = vmatprep.mubr.bf16.mxu0 %v520
        %1039 = vmatmul.mubr.bf16.gmra.mxu0 %v519
        %v1040 = vpop.f32.mrf.mxu0
        %v1041 = vadd.f32 %v880, %v1040
        %v1042 = vpop.f32.mrf.mxu0
        %v1043 = vpop.f32.mrf.mxu0
        %v1044 = vadd.f32 %v883, %v1043
        %v1045 = vpop.f32.mrf.mxu0
        %1046 = vmatprep.mubr.bf16.mxu0 %v524
        %1047 = vmatmul.mubr.bf16.gmra.mxu0 %v523
        %v1048 = vpop.f32.mrf.mxu0
        %v1049 = vadd.f32 %v888, %v1048
        %v1050 = vpop.f32.mrf.mxu0
        %v1051 = vpop.f32.mrf.mxu0
        %v1052 = vadd.f32 %v891, %v1051
        %v1053 = vpop.f32.mrf.mxu0
        %1054 = vmatprep.mubr.bf16.mxu0 %v528
        %1055 = vmatmul.mubr.bf16.gmra.mxu0 %v527
        %v1056 = vpop.f32.mrf.mxu0
        %v1057 = vadd.f32 %v896, %v1056
        %v1058 = vpop.f32.mrf.mxu0
        %v1059 = vpop.f32.mrf.mxu0
        %v1060 = vadd.f32 %v899, %v1059
        %v1061 = vpop.f32.mrf.mxu0
        %1062 = vmatprep.mubr.bf16.mxu0 %v532
        %1063 = vmatmul.mubr.bf16.gmra.mxu0 %v531
        %v1064 = vpop.f32.mrf.mxu0
        %v1065 = vadd.f32 %v904, %v1064
        %v1066 = vpop.f32.mrf.mxu0
        %v1067 = vpop.f32.mrf.mxu0
        %v1068 = vadd.f32 %v907, %v1067
        %v1069 = vpop.f32.mrf.mxu0
        %1070 = vmatprep.mubr.bf16.mxu0 %v536
        %1071 = vmatmul.mubr.bf16.gmra.mxu0 %v535
        %v1072 = vpop.f32.mrf.mxu0
        %v1073 = vadd.f32 %v912, %v1072
        %v1074 = vpop.f32.mrf.mxu0
        %v1075 = vpop.f32.mrf.mxu0
        %v1076 = vadd.f32 %v915, %v1075
        %v1077 = vpop.f32.mrf.mxu0
        %1078 = vmatprep.mubr.bf16.mxu0 %v540
        %1079 = vmatmul.mubr.bf16.gmra.mxu0 %v539
        %v1080 = vpop.f32.mrf.mxu0
        %v1081 = vadd.f32 %v920, %v1080
        %v1082 = vpop.f32.mrf.mxu0
        %v1083 = vpop.f32.mrf.mxu0
        %v1084 = vadd.f32 %v923, %v1083
        %v1085 = vpop.f32.mrf.mxu0
        %1086 = vmatprep.mubr.bf16.mxu0 %v544
        %1087 = vmatmul.mubr.bf16.gmra.mxu0 %v543
        %v1088 = vpop.f32.mrf.mxu0
        %v1089 = vadd.f32 %v928, %v1088
        %v1090 = vpop.f32.mrf.mxu0
        %v1091 = vpop.f32.mrf.mxu0
        %v1092 = vadd.f32 %v931, %v1091
        %v1093 = vpop.f32.mrf.mxu0
        %1094 = vmatprep.mubr.bf16.mxu0 %v548
        %1095 = vmatmul.mubr.bf16.gmra.mxu0 %v547
        %v1096 = vpop.f32.mrf.mxu0
        %v1097 = vadd.f32 %v936, %v1096
        %v1098 = vpop.f32.mrf.mxu0
        %v1099 = vpop.f32.mrf.mxu0
        %v1100 = vadd.f32 %v939, %v1099
        %v1101 = vpop.f32.mrf.mxu0
        %1102 = vmatprep.mubr.bf16.mxu0 %v552
        %1103 = vmatmul.mubr.bf16.gmra.mxu0 %v551
        %v1104 = vpop.f32.mrf.mxu0
        %v1105 = vadd.f32 %v944, %v1104
        %v1106 = vpop.f32.mrf.mxu0
        %v1107 = vpop.f32.mrf.mxu0
        %v1108 = vadd.f32 %v947, %v1107
        %v1109 = vpop.f32.mrf.mxu0
        %1110 = vmatprep.mubr.bf16.mxu0 %v556
        %1111 = vmatmul.mubr.bf16.gmra.mxu0 %v555
        %v1112 = vpop.f32.mrf.mxu0
        %v1113 = vadd.f32 %v952, %v1112
        %v1114 = vpop.f32.mrf.mxu0
        %v1115 = vpop.f32.mrf.mxu0
        %v1116 = vadd.f32 %v955, %v1115
        %v1117 = vpop.f32.mrf.mxu0
        %1118 = vmatprep.mubr.bf16.mxu0 %v560
        %1119 = vmatmul.mubr.bf16.gmra.mxu0 %v559
        %v1120 = vpop.f32.mrf.mxu0
        %v1121 = vadd.f32 %v960, %v1120
        %v1122 = vpop.f32.mrf.mxu0
        %v1123 = vpop.f32.mrf.mxu0
        %v1124 = vadd.f32 %v963, %v1123
        %v1125 = vpop.f32.mrf.mxu0
        %1126 = vmatprep.mubr.bf16.mxu0 %v564
        %1127 = vmatmul.mubr.bf16.gmra.mxu0 %v563
        %v1128 = vpop.f32.mrf.mxu0
        %v1129 = vadd.f32 %v968, %v1128
        %v1130 = vpop.f32.mrf.mxu0
        %v1131 = vpop.f32.mrf.mxu0
        %v1132 = vadd.f32 %v971, %v1131
        %v1133 = vpop.f32.mrf.mxu0
        %1134 = vmatprep.mubr.bf16.mxu0 %v568
        %1135 = vmatmul.mubr.bf16.gmra.mxu0 %v567
        %v1136 = vpop.f32.mrf.mxu0
        %v1137 = vadd.f32 %v976, %v1136
        %v1138 = vpop.f32.mrf.mxu0
        %v1139 = vpop.f32.mrf.mxu0
        %v1140 = vadd.f32 %v979, %v1139
        %v1141 = vpop.f32.mrf.mxu0
        %1142 = vmatprep.mubr.bf16.mxu0 %v572
        %1143 = vmatmul.mubr.bf16.gmra.mxu0 %v571
        %v1144 = vpop.f32.mrf.mxu0
        %v1145 = vadd.f32 %v984, %v1144
        %v1146 = vpop.f32.mrf.mxu0
        %v1147 = vpop.f32.mrf.mxu0
        %v1148 = vadd.f32 %v987, %v1147
        %v1149 = vpop.f32.mrf.mxu0
        %1150 = vdwg.mxu0
        %v1151 = vpack.c.bf16 %v1028, %v1025
        %v1152 = vpack.c.bf16 %v1036, %v1033
        %v1153 = vpack.c.bf16 %v1044, %v1041
        %v1154 = vpack.c.bf16 %v1052, %v1049
        %v1155 = vpack.c.bf16 %v1060, %v1057
        %v1156 = vpack.c.bf16 %v1068, %v1065
        %v1157 = vpack.c.bf16 %v1076, %v1073
        %v1158 = vpack.c.bf16 %v1084, %v1081
        %v1159 = vpack.c.bf16 %v1092, %v1089
        %v1160 = vpack.c.bf16 %v1100, %v1097
        %v1161 = vpack.c.bf16 %v1108, %v1105
        %v1162 = vpack.c.bf16 %v1116, %v1113
        %v1163 = vpack.c.bf16 %v1124, %v1121
        %v1164 = vpack.c.bf16 %v1132, %v1129
        %v1165 = vpack.c.bf16 %v1140, %v1137
        %v1166 = vpack.c.bf16 %v1148, %v1145
        %v1183 = vunpack.c.l.b16 %v1151
        %v1184 = vunpack.c.h.b16 %v1151
        %v1185 = vunpack.c.l.b16 %v1152
        %v1186 = vunpack.c.h.b16 %v1152
        %v1187 = vunpack.c.l.b16 %v1153
        %v1188 = vunpack.c.h.b16 %v1153
        %v1189 = vunpack.c.l.b16 %v1154
        %v1190 = vunpack.c.h.b16 %v1154
        %v1191 = vunpack.c.l.b16 %v1155
        %v1192 = vunpack.c.h.b16 %v1155
        %v1193 = vunpack.c.l.b16 %v1156
        %v1194 = vunpack.c.h.b16 %v1156
        %v1195 = vunpack.c.l.b16 %v1157
        %v1196 = vunpack.c.h.b16 %v1157
        %v1197 = vunpack.c.l.b16 %v1158
        %v1198 = vunpack.c.h.b16 %v1158
        %v1199 = vunpack.c.l.b16 %v1159
        %v1200 = vunpack.c.h.b16 %v1159
        %v1201 = vunpack.c.l.b16 %v1160
        %v1202 = vunpack.c.h.b16 %v1160
        %v1203 = vunpack.c.l.b16 %v1161
        %v1204 = vunpack.c.h.b16 %v1161
        %v1205 = vunpack.c.l.b16 %v1162
        %v1206 = vunpack.c.h.b16 %v1162
        %v1207 = vunpack.c.l.b16 %v1163
        %v1208 = vunpack.c.h.b16 %v1163
        %v1209 = vunpack.c.l.b16 %v1164
        %v1210 = vunpack.c.h.b16 %v1164
        %v1211 = vunpack.c.l.b16 %v1165
        %v1212 = vunpack.c.h.b16 %v1165
        %v1213 = vunpack.c.l.b16 %v1166
        %v1214 = vunpack.c.h.b16 %v1166
        %v1215 = vpack.c.b16 %v1183, %v1183
        %v1216 = vpack.c.b16 %v1184, %v1184
        %v1217 = vpack.c.b16 %v1185, %v1185
        %v1218 = vpack.c.b16 %v1186, %v1186
        %v1219 = vpack.c.b16 %v1187, %v1187
        %v1220 = vpack.c.b16 %v1188, %v1188
        %v1221 = vpack.c.b16 %v1189, %v1189
        %v1222 = vpack.c.b16 %v1190, %v1190
        %v1223 = vpack.c.b16 %v1191, %v1191
        %v1224 = vpack.c.b16 %v1192, %v1192
        %v1225 = vpack.c.b16 %v1193, %v1193
        %v1226 = vpack.c.b16 %v1194, %v1194
        %v1227 = vpack.c.b16 %v1195, %v1195
        %v1228 = vpack.c.b16 %v1196, %v1196
        %v1229 = vpack.c.b16 %v1197, %v1197
        %v1230 = vpack.c.b16 %v1198, %v1198
        %v1231 = vpack.c.b16 %v1199, %v1199
        %v1232 = vpack.c.b16 %v1200, %v1200
        %v1233 = vpack.c.b16 %v1201, %v1201
        %v1234 = vpack.c.b16 %v1202, %v1202
        %v1235 = vpack.c.b16 %v1203, %v1203
        %v1236 = vpack.c.b16 %v1204, %v1204
        %v1237 = vpack.c.b16 %v1205, %v1205
        %v1238 = vpack.c.b16 %v1206, %v1206
        %v1239 = vpack.c.b16 %v1207, %v1207
        %v1240 = vpack.c.b16 %v1208, %v1208
        %v1241 = vpack.c.b16 %v1209, %v1209
        %v1242 = vpack.c.b16 %v1210, %v1210
        %v1243 = vpack.c.b16 %v1211, %v1211
        %v1244 = vpack.c.b16 %v1212, %v1212
        %v1245 = vpack.c.b16 %v1213, %v1213
        %v1246 = vpack.c.b16 %v1214, %v1214
        %1279 = vst [vmem:[%s186] sm:$0xf] %v1215
        %1280 = vst [vmem:[%s186 + $0x4] sm:$0xf] %v1216
        %1281 = vst [vmem:[%s186 + $0x8] sm:$0xf] %v1217
        %1282 = vst [vmem:[%s186 + $0xc] sm:$0xf] %v1218
        %1283 = vst [vmem:[%s186 + $0x10] sm:$0xf] %v1219
        %1284 = vst [vmem:[%s186 + $0x14] sm:$0xf] %v1220
        %1285 = vst [vmem:[%s186 + $0x18] sm:$0xf] %v1221
        %1286 = vst [vmem:[%s186 + $0x1c] sm:$0xf] %v1222
        %1287 = vst [vmem:[%s186 + $0x20] sm:$0xf] %v1223
        %1288 = vst [vmem:[%s186 + $0x24] sm:$0xf] %v1224
        %1289 = vst [vmem:[%s186 + $0x28] sm:$0xf] %v1225
        %1290 = vst [vmem:[%s186 + $0x2c] sm:$0xf] %v1226
        %1291 = vst [vmem:[%s186 + $0x30] sm:$0xf] %v1227
        %1292 = vst [vmem:[%s186 + $0x34] sm:$0xf] %v1228
        %1293 = vst [vmem:[%s186 + $0x38] sm:$0xf] %v1229
        %1294 = vst [vmem:[%s186 + $0x3c] sm:$0xf] %v1230
        %1295 = vst [vmem:[%s186 + $0x40] sm:$0xf] %v1231
        %1296 = vst [vmem:[%s186 + $0x44] sm:$0xf] %v1232
        %1297 = vst [vmem:[%s186 + $0x48] sm:$0xf] %v1233
        %1298 = vst [vmem:[%s186 + $0x4c] sm:$0xf] %v1234
        %1299 = vst [vmem:[%s186 + $0x50] sm:$0xf] %v1235
        %1300 = vst [vmem:[%s186 + $0x54] sm:$0xf] %v1236
        %1301 = vst [vmem:[%s186 + $0x58] sm:$0xf] %v1237
        %1302 = vst [vmem:[%s186 + $0x5c] sm:$0xf] %v1238
        %1303 = vst [vmem:[%s186 + $0x60] sm:$0xf] %v1239
        %1304 = vst [vmem:[%s186 + $0x64] sm:$0xf] %v1240
        %1305 = vst [vmem:[%s186 + $0x68] sm:$0xf] %v1241
        %1306 = vst [vmem:[%s186 + $0x6c] sm:$0xf] %v1242
        %1307 = vst [vmem:[%s186 + $0x70] sm:$0xf] %v1243
        %1308 = vst [vmem:[%s186 + $0x74] sm:$0xf] %v1244
        %1309 = vst [vmem:[%s186 + $0x78] sm:$0xf] %v1245
        %1310 = vst [vmem:[%s186 + $0x7c] sm:$0xf] %v1246
        %v1311 = vadd.f32 %v1025, %v1028
        %v1312 = vadd.f32 %v1311, %v1033
        %v1313 = vadd.f32 %v1312, %v1036
        %v1314 = vadd.f32 %v1313, %v1041
        %v1315 = vadd.f32 %v1314, %v1044
        %v1316 = vadd.f32 %v1315, %v1049
        %v1317 = vadd.f32 %v1316, %v1052
        %v1318 = vadd.f32 %v1317, %v1057
        %v1319 = vadd.f32 %v1318, %v1060
        %v1320 = vadd.f32 %v1319, %v1065
        %v1321 = vadd.f32 %v1320, %v1068
        %v1322 = vadd.f32 %v1321, %v1073
        %v1323 = vadd.f32 %v1322, %v1076
        %v1324 = vadd.f32 %v1323, %v1081
        %v1325 = vadd.f32 %v1324, %v1084
        %v1326 = vadd.f32 %v1325, %v1089
        %v1327 = vadd.f32 %v1326, %v1092
        %v1328 = vadd.f32 %v1327, %v1097
        %v1329 = vadd.f32 %v1328, %v1100
        %v1330 = vadd.f32 %v1329, %v1105
        %v1331 = vadd.f32 %v1330, %v1108
        %v1332 = vadd.f32 %v1331, %v1113
        %v1333 = vadd.f32 %v1332, %v1116
        %v1334 = vadd.f32 %v1333, %v1121
        %v1335 = vadd.f32 %v1334, %v1124
        %v1336 = vadd.f32 %v1335, %v1129
        %v1337 = vadd.f32 %v1336, %v1132
        %v1338 = vadd.f32 %v1337, %v1137
        %v1339 = vadd.f32 %v1338, %v1140
        %v1340 = vadd.f32 %v1339, %v1145
        %v1341 = vadd.f32 %v1340, %v1148
        %v1342 = vrot.slane %v1341, 4
        %v1343 = vadd.f32 %v1341, %v1342
        %v1344 = vrot.slane %v1343, 2
        %v1345 = vadd.f32 %v1343, %v1344
        %v1346 = vrot.slane %v1345, 1
        %v1347 = vadd.f32 %v1345, %v1346
        %v1348 = vmul.f32 %v1025, %v1025
        %v1349 = vmul.f32 %v1028, %v1028
        %v1350 = vmul.f32 %v1033, %v1033
        %v1351 = vmul.f32 %v1036, %v1036
        %v1352 = vmul.f32 %v1041, %v1041
        %v1353 = vmul.f32 %v1044, %v1044
        %v1354 = vmul.f32 %v1049, %v1049
        %v1355 = vmul.f32 %v1052, %v1052
        %v1356 = vmul.f32 %v1057, %v1057
        %v1357 = vmul.f32 %v1060, %v1060
        %v1358 = vmul.f32 %v1065, %v1065
        %v1359 = vmul.f32 %v1068, %v1068
        %v1360 = vmul.f32 %v1073, %v1073
        %v1361 = vmul.f32 %v1076, %v1076
        %v1362 = vmul.f32 %v1081, %v1081
        %v1363 = vmul.f32 %v1084, %v1084
        %v1364 = vmul.f32 %v1089, %v1089
        %v1365 = vmul.f32 %v1092, %v1092
        %v1366 = vmul.f32 %v1097, %v1097
        %v1367 = vmul.f32 %v1100, %v1100
        %v1368 = vmul.f32 %v1105, %v1105
        %v1369 = vmul.f32 %v1108, %v1108
        %v1370 = vmul.f32 %v1113, %v1113
        %v1371 = vmul.f32 %v1116, %v1116
        %v1372 = vmul.f32 %v1121, %v1121
        %v1373 = vmul.f32 %v1124, %v1124
        %v1374 = vmul.f32 %v1129, %v1129
        %v1375 = vmul.f32 %v1132, %v1132
        %v1376 = vmul.f32 %v1137, %v1137
        %v1377 = vmul.f32 %v1140, %v1140
        %v1378 = vmul.f32 %v1145, %v1145
        %v1379 = vmul.f32 %v1148, %v1148
        %v1380 = vadd.f32 %v1348, %v1349
        %v1381 = vadd.f32 %v1380, %v1350
        %v1382 = vadd.f32 %v1381, %v1351
        %v1383 = vadd.f32 %v1382, %v1352
        %v1384 = vadd.f32 %v1383, %v1353
        %v1385 = vadd.f32 %v1384, %v1354
        %v1386 = vadd.f32 %v1385, %v1355
        %v1387 = vadd.f32 %v1386, %v1356
        %v1388 = vadd.f32 %v1387, %v1357
        %v1389 = vadd.f32 %v1388, %v1358
        %v1390 = vadd.f32 %v1389, %v1359
        %v1391 = vadd.f32 %v1390, %v1360
        %v1392 = vadd.f32 %v1391, %v1361
        %v1393 = vadd.f32 %v1392, %v1362
        %v1394 = vadd.f32 %v1393, %v1363
        %v1395 = vadd.f32 %v1394, %v1364
        %v1396 = vadd.f32 %v1395, %v1365
        %v1397 = vadd.f32 %v1396, %v1366
        %v1398 = vadd.f32 %v1397, %v1367
        %v1399 = vadd.f32 %v1398, %v1368
        %v1400 = vadd.f32 %v1399, %v1369
        %v1401 = vadd.f32 %v1400, %v1370
        %v1402 = vadd.f32 %v1401, %v1371
        %v1403 = vadd.f32 %v1402, %v1372
        %v1404 = vadd.f32 %v1403, %v1373
        %v1405 = vadd.f32 %v1404, %v1374
        %v1406 = vadd.f32 %v1405, %v1375
        %v1407 = vadd.f32 %v1406, %v1376
        %v1408 = vadd.f32 %v1407, %v1377
        %v1409 = vadd.f32 %v1408, %v1378
        %v1410 = vadd.f32 %v1409, %v1379
        %v1411 = vrot.slane %v1410, 4
        %v1412 = vadd.f32 %v1410, %v1411
        %v1413 = vrot.slane %v1412, 2
        %v1414 = vadd.f32 %v1412, %v1413
        %v1415 = vrot.slane %v1414, 1
        %v1416 = vadd.f32 %v1414, %v1415
        %vm1417 = vcmask 1040384
        %v1418 = vsel %vm1417, %v1347, %v1416
        %vm1419 = vcmask 1041408
        %v1420 = vsel %vm1419, %v1418, 0.0
        %1421 = vst [vmem:[%s174] sm:$0xff] %v1420
        %s1422 = smul.u32 32, %s18
        %p1423 = scmp.lt.s32.totalorder %s1422, 63
        %s1424 = scalar_select %p1423, %s1422, 63
        %s1425 = smul.addr %s1424, 4
        %s1426 = scalar_lea.vmem %s2, %s1425
        %s1427 = sand.u32 %s99, 1
        %s1428 = scalar_lea.sflag [#allocation3], %s1427
        %s1429 = sand.u32 %s99, 1
        %s1430 = smul.addr %s1429, 8
        %s1431 = scalar_lea.vmem [#allocation2], %s1430
        // Predicated region
        $region29: #{resnet_generator.38} parent=27 // pred_check
          %p1432 = pneg %p83
        $region30: #{resnet_generator.38} parent=27 // pred_check_branch
          %1434 = sbr.rel (%p1432) target = $region32
        $region31: #{resnet_generator.38} parent=27 // pred_region
          %s1435 = smul.u32 32, %s18
        $region32: #{resnet_generator.38} parent=27 // pred_fallthru
          _
        // Predicated region
        $region33: #{resnet_generator.38} parent=27 // pred_check
          %p1436 = pneg %p109
        $region34: #{resnet_generator.38} parent=27 // pred_check_branch
          %1438 = sbr.rel (%p1436) target = $region36
        $region35: #{resnet_generator.38} parent=27 // pred_region
          %s1440 = ssub.s32 128, 128
          %1441 = vsyncadd %s1428, %s1440
          %s1442 = smul.addr %s18, 128
          %s1443 = scalar_lea.hbm %s3, %s1442
          %s1445 = sshll.u32 %s1431, 4
          %s1446 = int_to_ptr.vmem [resolvable:$true] %s1445
          %1448 = dma.vmem_to_hbm [thread:$0]  %s1446, 128, %s1443, %s1428
        $region36: #{resnet_generator.38} parent=27 // pred_fallthru
          _
      $region28: #{resnet_generator.38} parent=5 // pred_fallthru
        _
      %p1449 = scmp.le.s32.totalorder 2, %s13
      // Predicated region
      $region37: #{resnet_generator.38} parent=5 // pred_check
        %p1450 = pneg %p1449
      $region38: #{resnet_generator.38} parent=5 // pred_check_branch
        %1452 = sbr.rel (%p1450) target = $region40
      $region39: #{resnet_generator.38} parent=5 // pred_region
        %s1453 = ssub.s32 %s13, 2
        // Predicated region
        $region41: #{resnet_generator.38} parent=39 // pred_check
          %p1454 = pneg %p89
        $region42: #{resnet_generator.38} parent=39 // pred_check_branch
          %1456 = sbr.rel (%p1454) target = $region44
        $region43: #{resnet_generator.38} parent=39 // pred_region
          %s1457 = smul.u32 32, %s19
          %p1458 = scmp.lt.s32.totalorder %s1457, 63
          %s1459 = scalar_select %p1458, %s1457, 63
          %s1460 = smul.addr %s1459, 4
          %s1461 = scalar_lea.vmem %s2, %s1460
        $region44: #{resnet_generator.38} parent=39 // pred_fallthru
          _
        // Predicated region
        $region45: #{resnet_generator.38} parent=39 // pred_check
          %p1462 = pneg %p115
        $region46: #{resnet_generator.38} parent=39 // pred_check_branch
          %1464 = sbr.rel (%p1462) target = $region48
        $region47: #{resnet_generator.38} parent=39 // pred_region
          %s1465 = sand.u32 %s100, 1
          %s1466 = scalar_lea.sflag [#allocation3], %s1465
          %s1467 = sand.u32 %s100, 1
          %s1468 = smul.addr %s1467, 8
          %s1469 = scalar_lea.vmem [#allocation2], %s1468
          %1470 = dma.done %s1466, 128
        $region48: #{resnet_generator.38} parent=39 // pred_fallthru
          _
      $region40: #{resnet_generator.38} parent=5 // pred_fallthru
        _
    $region6: #{resnet_generator.38} parent=1 // loop_footer
      %s17 = sadd.s32 1, %s13
    $region7: #{resnet_generator.38} parent=1 // loop_footer_branch
      %12 = sbr.rel target = $region3
    $region8: #{resnet_generator.38} parent=1 // loop_exit
      _
    %1471 = vsyncpa [#allocation3], 1
    %s1472 = scalar_lea.sflag [#allocation3], 1
    %1473 = vsyncpa %s1472, 1

// kernel: resnet_generator.39
$region0: #{resnet_generator.39}
  #allocation0 [shape = 'u32[]', space=smem, size = 0x4, offset = 0x4, fixed_abs, tag = 'smem constant byte address 0x4 - core index']
  #allocation1 [shape = 'u32[144,128]{1,0:T(1,128)}', space=vmem, size = 0x12000, scoped, tag = 'internal scratch']
  %s0 = inlined_call_operand.vmem [shape: bf16[512,128], index: 0, kind: input, shape index: {}]
  %s1 = inlined_call_operand.vmem [shape: f32[1,128], index: 1, kind: input, shape index: {}]
  %s2 = inlined_call_operand.vmem [shape: f32[1,128], index: 2, kind: input, shape index: {}]
  %s3 = inlined_call_operand.vmem [shape: f32[512,128], index: 3, kind: output, shape index: {}]
  %s4 = sld [smem:[#allocation0]]
  $region45: #{resnet_generator.39} parent=0
    _
  %s6 = ssub.s32 1, %s4
  %s7 = scalar_select 0, %s6, %s4
  loop: start=0, step=1, limit=4
  $region2: #{resnet_generator.39} parent=0 // loop_pre_header
    _
  $region3: #{resnet_generator.39} parent=0 // loop_header
    %s9 = sphi 0, %s13
    %p10 = scmp.ge.s32.totalorder %s9, 4
    %s19 = sphi 0, %s21
    %s22 = sphi 0, %s19
    %s23 = sphi 0, %s22
    %s39 = sphi 0, %s23
    %s43 = sphi 0, %s43
    %s45 = sphi 0, %s43
    %s46 = sphi 0, %s45
    %s60 = sphi 0, %s46
    %s64 = sphi 0, %s64
    %s66 = sphi 0, %s64
    %s67 = sphi 0, %s66
    %s81 = sphi 0, %s67
    %s87 = sphi 0, %s89
    %s90 = sphi 0, %s87
    %s91 = sphi 0, %s90
    %s107 = sphi 0, %s91
  $region4: #{resnet_generator.39} parent=0 // loop_header_branch
    %12 = sbr.rel (%p10) target = $region8
  $region5: #{resnet_generator.39} parent=0 // loop_body
    %s14 = ssub.s32 %s9, 1
    %s15 = ssub.s32 %s9, 2
    %s16 = sadd.s32 %s9, 1
    %s17 = ssub.s32 %s9, %s16
    %p18 = scmp.eq.s32.totalorder %s17, 0
    %s20 = sadd.s32 %s19, 1
    %s21 = scalar_select %p18, %s19, %s20
    %p24 = pneg %p18
    %p25 = scmp.eq.s32.totalorder %s9, 1
    %p26 = por %p24, %p25
    %p27 = scmp.ne.s32.totalorder %s19, %s22
    %p28 = scmp.eq.s32.totalorder %s9, 0
    %p29 = por %p27, %p28
    %p30 = scmp.ne.s32.totalorder %s19, %s22
    %p31 = scmp.eq.s32.totalorder %s14, 1
    %p32 = por %p30, %p31
    %p33 = scmp.ne.s32.totalorder %s22, %s23
    %p34 = scmp.eq.s32.totalorder %s14, 0
    %p35 = por %p33, %p34
    %p36 = scmp.ne.s32.totalorder %s22, %s23
    %p37 = scmp.eq.s32.totalorder %s15, 1
    %p38 = por %p36, %p37
    %p40 = scmp.ne.s32.totalorder %s23, %s39
    %p41 = scmp.eq.s32.totalorder %s15, 0
    %p42 = por %p40, %p41
    %s44 = sadd.s32 %s43, 1
    %p47 = scmp.eq.s32.totalorder %s9, 1
    %p48 = scmp.ne.s32.totalorder %s43, %s45
    %p49 = scmp.eq.s32.totalorder %s9, 0
    %p50 = por %p48, %p49
    %p51 = scmp.ne.s32.totalorder %s43, %s45
    %p52 = scmp.eq.s32.totalorder %s14, 1
    %p53 = por %p51, %p52
    %p54 = scmp.ne.s32.totalorder %s45, %s46
    %p55 = scmp.eq.s32.totalorder %s14, 0
    %p56 = por %p54, %p55
    %p57 = scmp.ne.s32.totalorder %s45, %s46
    %p58 = scmp.eq.s32.totalorder %s15, 1
    %p59 = por %p57, %p58
    %p61 = scmp.ne.s32.totalorder %s46, %s60
    %p62 = scmp.eq.s32.totalorder %s15, 0
    %p63 = por %p61, %p62
    %s65 = sadd.s32 %s64, 1
    %p68 = scmp.eq.s32.totalorder %s9, 1
    %p69 = scmp.ne.s32.totalorder %s64, %s66
    %p70 = scmp.eq.s32.totalorder %s9, 0
    %p71 = por %p69, %p70
    %p72 = scmp.ne.s32.totalorder %s64, %s66
    %p73 = scmp.eq.s32.totalorder %s14, 1
    %p74 = por %p72, %p73
    %p75 = scmp.ne.s32.totalorder %s66, %s67
    %p76 = scmp.eq.s32.totalorder %s14, 0
    %p77 = por %p75, %p76
    %p78 = scmp.ne.s32.totalorder %s66, %s67
    %p79 = scmp.eq.s32.totalorder %s15, 1
    %p80 = por %p78, %p79
    %p82 = scmp.ne.s32.totalorder %s67, %s81
    %p83 = scmp.eq.s32.totalorder %s15, 0
    %p84 = por %p82, %p83
    %s85 = ssub.s32 %s9, %s16
    %p86 = scmp.eq.s32.totalorder %s85, 0
    %s88 = sadd.s32 %s87, 1
    %s89 = scalar_select %p86, %s87, %s88
    %p92 = pneg %p86
    %p93 = scmp.eq.s32.totalorder %s9, 1
    %p94 = por %p92, %p93
    %p95 = scmp.ne.s32.totalorder %s87, %s90
    %p96 = scmp.eq.s32.totalorder %s9, 0
    %p97 = por %p95, %p96
    %p98 = scmp.ne.s32.totalorder %s87, %s90
    %p99 = scmp.eq.s32.totalorder %s14, 1
    %p100 = por %p98, %p99
    %p101 = scmp.ne.s32.totalorder %s90, %s91
    %p102 = scmp.eq.s32.totalorder %s14, 0
    %p103 = por %p101, %p102
    %p104 = scmp.ne.s32.totalorder %s90, %s91
    %p105 = scmp.eq.s32.totalorder %s15, 1
    %p106 = por %p104, %p105
    %p108 = scmp.ne.s32.totalorder %s91, %s107
    %p109 = scmp.eq.s32.totalorder %s15, 0
    %p110 = por %p108, %p109
    %p111 = scmp.le.s32.totalorder 1, %s9
    %p112 = scmp.lt.s32.totalorder %s9, 3
    %p113 = pnand %p111, %p112
    %p114 = pneg %p113
    // Predicated region
    $region9: #{resnet_generator.39} parent=5 // pred_check
      _
    $region10: #{resnet_generator.39} parent=5 // pred_check_branch
      %116 = sbr.rel (%p113) target = $region12
    $region11: #{resnet_generator.39} parent=5 // pred_region
      %s117 = ssub.s32 %s9, 1
      // Predicated region
      $region13: #{resnet_generator.39} parent=11 // pred_check
        %p118 = pneg %p56
      $region14: #{resnet_generator.39} parent=11 // pred_check_branch
        %120 = sbr.rel (%p118) target = $region16
      $region15: #{resnet_generator.39} parent=11 // pred_region
        _
      $region16: #{resnet_generator.39} parent=11 // pred_fallthru
        _
      // Predicated region
      $region17: #{resnet_generator.39} parent=11 // pred_check
        %p121 = pneg %p77
      $region18: #{resnet_generator.39} parent=11 // pred_check_branch
        %123 = sbr.rel (%p121) target = $region20
      $region19: #{resnet_generator.39} parent=11 // pred_region
        _
      $region20: #{resnet_generator.39} parent=11 // pred_fallthru
        _
    $region12: #{resnet_generator.39} parent=5 // pred_fallthru
      _
    %p124 = scmp.lt.s32.totalorder %s9, 2
    // Predicated region
    $region21: #{resnet_generator.39} parent=5 // pred_check
      %p125 = pneg %p124
    $region22: #{resnet_generator.39} parent=5 // pred_check_branch
      %127 = sbr.rel (%p125) target = $region24
    $region23: #{resnet_generator.39} parent=5 // pred_region
      // Predicated region
      $region25: #{resnet_generator.39} parent=23 // pred_check
        %p128 = pneg %p29
      $region26: #{resnet_generator.39} parent=23 // pred_check_branch
        %130 = sbr.rel (%p128) target = $region28
      $region27: #{resnet_generator.39} parent=23 // pred_region
        %s131 = smul.u32 32, %s9
        %p132 = scmp.lt.s32.totalorder %s131, 63
        %s133 = scalar_select %p132, %s131, 63
        %s134 = smul.addr %s133, 4
        %s135 = scalar_lea.vmem %s0, %s134
        %s136 = smul.u32 32, %s9
      $region28: #{resnet_generator.39} parent=23 // pred_fallthru
        _
    $region24: #{resnet_generator.39} parent=5 // pred_fallthru
      _
    %p137 = scmp.le.s32.totalorder 1, %s9
    %p138 = scmp.lt.s32.totalorder %s9, 3
    %p139 = pnand %p137, %p138
    %p140 = pneg %p139
    // Predicated region
    $region29: #{resnet_generator.39} parent=5 // pred_check
      _
    $region30: #{resnet_generator.39} parent=5 // pred_check_branch
      %142 = sbr.rel (%p139) target = $region32
    $region31: #{resnet_generator.39} parent=5 // pred_region
      %s143 = ssub.s32 %s9, 1
      %s144 = smul.u32 32, %s14
      %p145 = scmp.lt.s32.totalorder %s144, 63
      %s146 = scalar_select %p145, %s144, 63
      %s147 = smul.addr %s146, 4
      %s148 = scalar_lea.vmem %s0, %s147
      %p149 = pneg %p35
      %p150 = pneg %p32
      %p151 = pneg %p56
      %p152 = pneg %p53
      %p153 = pneg %p77
      %p154 = pneg %p74
      %p155 = pneg %p103
      %p156 = pneg %p100
      %s157 = smul.u32 32, %s14
      %p158 = scmp.lt.s32.totalorder %s157, 63
      %s159 = scalar_select %p158, %s157, 63
      %s160 = smul.addr %s159, 8
      %s161 = scalar_lea.vmem %s3, %s160
      %s162 = smul.u32 32, %s14
      %p163 = scmp.lt.s32.totalorder %s162, 63
      %s164 = scalar_select %p163, %s162, 63
      %s165 = smul.addr %s164, 4
      %s166 = scalar_lea.vmem %s0, %s165
      %s167 = smul.u32 32, %s14
      %s168 = smul.u32 32, %s14
      %p169 = scmp.lt.s32.totalorder %s168, 63
      %s170 = scalar_select %p169, %s168, 63
      %s171 = smul.addr %s170, 8
      %s172 = scalar_lea.vmem %s3, %s171
      %s173 = smul.u32 32, %s14
      %v174 = vld [vmem:[%s166] sm:$0xf]
      %v175 = vld [vmem:[%s166 + $0x4] sm:$0xf]
      %v176 = vld [vmem:[%s166 + $0x8] sm:$0xf]
      %v177 = vld [vmem:[%s166 + $0xc] sm:$0xf]
      %v178 = vld [vmem:[%s166 + $0x10] sm:$0xf]
      %v179 = vld [vmem:[%s166 + $0x14] sm:$0xf]
      %v180 = vld [vmem:[%s166 + $0x18] sm:$0xf]
      %v181 = vld [vmem:[%s166 + $0x1c] sm:$0xf]
      %v182 = vld [vmem:[%s166 + $0x20] sm:$0xf]
      %v183 = vld [vmem:[%s166 + $0x24] sm:$0xf]
      %v184 = vld [vmem:[%s166 + $0x28] sm:$0xf]
      %v185 = vld [vmem:[%s166 + $0x2c] sm:$0xf]
      %v186 = vld [vmem:[%s166 + $0x30] sm:$0xf]
      %v187 = vld [vmem:[%s166 + $0x34] sm:$0xf]
      %v188 = vld [vmem:[%s166 + $0x38] sm:$0xf]
      %v189 = vld [vmem:[%s166 + $0x3c] sm:$0xf]
      %v190 = vld [vmem:[%s166 + $0x40] sm:$0xf]
      %v191 = vld [vmem:[%s166 + $0x44] sm:$0xf]
      %v192 = vld [vmem:[%s166 + $0x48] sm:$0xf]
      %v193 = vld [vmem:[%s166 + $0x4c] sm:$0xf]
      %v194 = vld [vmem:[%s166 + $0x50] sm:$0xf]
      %v195 = vld [vmem:[%s166 + $0x54] sm:$0xf]
      %v196 = vld [vmem:[%s166 + $0x58] sm:$0xf]
      %v197 = vld [vmem:[%s166 + $0x5c] sm:$0xf]
      %v198 = vld [vmem:[%s166 + $0x60] sm:$0xf]
      %v199 = vld [vmem:[%s166 + $0x64] sm:$0xf]
      %v200 = vld [vmem:[%s166 + $0x68] sm:$0xf]
      %v201 = vld [vmem:[%s166 + $0x6c] sm:$0xf]
      %v202 = vld [vmem:[%s166 + $0x70] sm:$0xf]
      %v203 = vld [vmem:[%s166 + $0x74] sm:$0xf]
      %v204 = vld [vmem:[%s166 + $0x78] sm:$0xf]
      %v205 = vld [vmem:[%s166 + $0x7c] sm:$0xf]
      %v206 = vunpack.c.l.bf16 %v174
      %v207 = vunpack.c.l.bf16 %v175
      %v208 = vunpack.c.l.bf16 %v176
      %v209 = vunpack.c.l.bf16 %v177
      %v210 = vunpack.c.l.bf16 %v178
      %v211 = vunpack.c.l.bf16 %v179
      %v212 = vunpack.c.l.bf16 %v180
      %v213 = vunpack.c.l.bf16 %v181
      %v214 = vunpack.c.l.bf16 %v182
      %v215 = vunpack.c.l.bf16 %v183
      %v216 = vunpack.c.l.bf16 %v184
      %v217 = vunpack.c.l.bf16 %v185
      %v218 = vunpack.c.l.bf16 %v186
      %v219 = vunpack.c.l.bf16 %v187
      %v220 = vunpack.c.l.bf16 %v188
      %v221 = vunpack.c.l.bf16 %v189
      %v222 = vunpack.c.l.bf16 %v190
      %v223 = vunpack.c.l.bf16 %v191
      %v224 = vunpack.c.l.bf16 %v192
      %v225 = vunpack.c.l.bf16 %v193
      %v226 = vunpack.c.l.bf16 %v194
      %v227 = vunpack.c.l.bf16 %v195
      %v228 = vunpack.c.l.bf16 %v196
      %v229 = vunpack.c.l.bf16 %v197
      %v230 = vunpack.c.l.bf16 %v198
      %v231 = vunpack.c.l.bf16 %v199
      %v232 = vunpack.c.l.bf16 %v200
      %v233 = vunpack.c.l.bf16 %v201
      %v234 = vunpack.c.l.bf16 %v202
      %v235 = vunpack.c.l.bf16 %v203
      %v236 = vunpack.c.l.bf16 %v204
      %v237 = vunpack.c.l.bf16 %v205
      %v238 = vld [vmem:[%s1] sm:$0x1]
      %v240 = vlaneseq
      %v241 = vshrl.u32 %v240, 7
      %v242 = vsub.s32 0, %v241
      %v243 = vrot.slane %v238, %v242
      %v245 = vmul.f32 %v206, %v243
      %v246 = vmul.f32 %v207, %v243
      %v247 = vmul.f32 %v208, %v243
      %v248 = vmul.f32 %v209, %v243
      %v249 = vmul.f32 %v210, %v243
      %v250 = vmul.f32 %v211, %v243
      %v251 = vmul.f32 %v212, %v243
      %v252 = vmul.f32 %v213, %v243
      %v253 = vmul.f32 %v214, %v243
      %v254 = vmul.f32 %v215, %v243
      %v255 = vmul.f32 %v216, %v243
      %v256 = vmul.f32 %v217, %v243
      %v257 = vmul.f32 %v218, %v243
      %v258 = vmul.f32 %v219, %v243
      %v259 = vmul.f32 %v220, %v243
      %v260 = vmul.f32 %v221, %v243
      %v261 = vmul.f32 %v222, %v243
      %v262 = vmul.f32 %v223, %v243
      %v263 = vmul.f32 %v224, %v243
      %v264 = vmul.f32 %v225, %v243
      %v265 = vmul.f32 %v226, %v243
      %v266 = vmul.f32 %v227, %v243
      %v267 = vmul.f32 %v228, %v243
      %v268 = vmul.f32 %v229, %v243
      %v269 = vmul.f32 %v230, %v243
      %v270 = vmul.f32 %v231, %v243
      %v271 = vmul.f32 %v232, %v243
      %v272 = vmul.f32 %v233, %v243
      %v273 = vmul.f32 %v234, %v243
      %v274 = vmul.f32 %v235, %v243
      %v275 = vmul.f32 %v236, %v243
      %v276 = vmul.f32 %v237, %v243
      %v277 = vld [vmem:[%s2] sm:$0x1]
      %v279 = vlaneseq
      %v280 = vshrl.u32 %v279, 7
      %v281 = vsub.s32 0, %v280
      %v282 = vrot.slane %v277, %v281
      %v284 = vadd.f32 %v245, %v282
      %v285 = vadd.f32 %v246, %v282
      %v286 = vadd.f32 %v247, %v282
      %v287 = vadd.f32 %v248, %v282
      %v288 = vadd.f32 %v249, %v282
      %v289 = vadd.f32 %v250, %v282
      %v290 = vadd.f32 %v251, %v282
      %v291 = vadd.f32 %v252, %v282
      %v292 = vadd.f32 %v253, %v282
      %v293 = vadd.f32 %v254, %v282
      %v294 = vadd.f32 %v255, %v282
      %v295 = vadd.f32 %v256, %v282
      %v296 = vadd.f32 %v257, %v282
      %v297 = vadd.f32 %v258, %v282
      %v298 = vadd.f32 %v259, %v282
      %v299 = vadd.f32 %v260, %v282
      %v300 = vadd.f32 %v261, %v282
      %v301 = vadd.f32 %v262, %v282
      %v302 = vadd.f32 %v263, %v282
      %v303 = vadd.f32 %v264, %v282
      %v304 = vadd.f32 %v265, %v282
      %v305 = vadd.f32 %v266, %v282
      %v306 = vadd.f32 %v267, %v282
      %v307 = vadd.f32 %v268, %v282
      %v308 = vadd.f32 %v269, %v282
      %v309 = vadd.f32 %v270, %v282
      %v310 = vadd.f32 %v271, %v282
      %v311 = vadd.f32 %v272, %v282
      %v312 = vadd.f32 %v273, %v282
      %v313 = vadd.f32 %v274, %v282
      %v314 = vadd.f32 %v275, %v282
      %v315 = vadd.f32 %v276, %v282
      %v316 = vtanh.pop %v284
      %v317 = vtanh.pop %v285
      %v318 = vtanh.pop %v286
      %v319 = vtanh.pop %v287
      %v320 = vtanh.pop %v288
      %v321 = vtanh.pop %v289
      %v322 = vtanh.pop %v290
      %v323 = vtanh.pop %v291
      %v324 = vtanh.pop %v292
      %v325 = vtanh.pop %v293
      %v326 = vtanh.pop %v294
      %v327 = vtanh.pop %v295
      %v328 = vtanh.pop %v296
      %v329 = vtanh.pop %v297
      %v330 = vtanh.pop %v298
      %v331 = vtanh.pop %v299
      %v332 = vtanh.pop %v300
      %v333 = vtanh.pop %v301
      %v334 = vtanh.pop %v302
      %v335 = vtanh.pop %v303
      %v336 = vtanh.pop %v304
      %v337 = vtanh.pop %v305
      %v338 = vtanh.pop %v306
      %v339 = vtanh.pop %v307
      %v340 = vtanh.pop %v308
      %v341 = vtanh.pop %v309
      %v342 = vtanh.pop %v310
      %v343 = vtanh.pop %v311
      %v344 = vtanh.pop %v312
      %v345 = vtanh.pop %v313
      %v346 = vtanh.pop %v314
      %v347 = vtanh.pop %v315
      %348 = vst [vmem:[%s172] sm:$0xff] %v316
      %349 = vst [vmem:[%s172 + $0x8] sm:$0xff] %v317
      %350 = vst [vmem:[%s172 + $0x10] sm:$0xff] %v318
      %351 = vst [vmem:[%s172 + $0x18] sm:$0xff] %v319
      %352 = vst [vmem:[%s172 + $0x20] sm:$0xff] %v320
      %353 = vst [vmem:[%s172 + $0x28] sm:$0xff] %v321
      %354 = vst [vmem:[%s172 + $0x30] sm:$0xff] %v322
      %355 = vst [vmem:[%s172 + $0x38] sm:$0xff] %v323
      %356 = vst [vmem:[%s172 + $0x40] sm:$0xff] %v324
      %357 = vst [vmem:[%s172 + $0x48] sm:$0xff] %v325
      %358 = vst [vmem:[%s172 + $0x50] sm:$0xff] %v326
      %359 = vst [vmem:[%s172 + $0x58] sm:$0xff] %v327
      %360 = vst [vmem:[%s172 + $0x60] sm:$0xff] %v328
      %361 = vst [vmem:[%s172 + $0x68] sm:$0xff] %v329
      %362 = vst [vmem:[%s172 + $0x70] sm:$0xff] %v330
      %363 = vst [vmem:[%s172 + $0x78] sm:$0xff] %v331
      %364 = vst [vmem:[%s172 + $0x80] sm:$0xff] %v332
      %365 = vst [vmem:[%s172 + $0x88] sm:$0xff] %v333
      %366 = vst [vmem:[%s172 + $0x90] sm:$0xff] %v334
      %367 = vst [vmem:[%s172 + $0x98] sm:$0xff] %v335
      %368 = vst [vmem:[%s172 + $0xa0] sm:$0xff] %v336
      %369 = vst [vmem:[%s172 + $0xa8] sm:$0xff] %v337
      %370 = vst [vmem:[%s172 + $0xb0] sm:$0xff] %v338
      %371 = vst [vmem:[%s172 + $0xb8] sm:$0xff] %v339
      %372 = vst [vmem:[%s172 + $0xc0] sm:$0xff] %v340
      %373 = vst [vmem:[%s172 + $0xc8] sm:$0xff] %v341
      %374 = vst [vmem:[%s172 + $0xd0] sm:$0xff] %v342
      %375 = vst [vmem:[%s172 + $0xd8] sm:$0xff] %v343
      %376 = vst [vmem:[%s172 + $0xe0] sm:$0xff] %v344
      %377 = vst [vmem:[%s172 + $0xe8] sm:$0xff] %v345
      %378 = vst [vmem:[%s172 + $0xf0] sm:$0xff] %v346
      %379 = vst [vmem:[%s172 + $0xf8] sm:$0xff] %v347
      %s380 = smul.u32 32, %s14
      %p381 = scmp.lt.s32.totalorder %s380, 63
      %s382 = scalar_select %p381, %s380, 63
      %s383 = smul.addr %s382, 8
      %s384 = scalar_lea.vmem %s3, %s383
      // Predicated region
      $region33: #{resnet_generator.39} parent=31 // pred_check
        %p385 = pneg %p100
      $region34: #{resnet_generator.39} parent=31 // pred_check_branch
        %387 = sbr.rel (%p385) target = $region36
      $region35: #{resnet_generator.39} parent=31 // pred_region
        %s388 = smul.u32 32, %s14
      $region36: #{resnet_generator.39} parent=31 // pred_fallthru
        _
    $region32: #{resnet_generator.39} parent=5 // pred_fallthru
      _
    %p389 = scmp.le.s32.totalorder 2, %s9
    // Predicated region
    $region37: #{resnet_generator.39} parent=5 // pred_check
      %p390 = pneg %p389
    $region38: #{resnet_generator.39} parent=5 // pred_check_branch
      %392 = sbr.rel (%p390) target = $region40
    $region39: #{resnet_generator.39} parent=5 // pred_region
      %s393 = ssub.s32 %s9, 2
      // Predicated region
      $region41: #{resnet_generator.39} parent=39 // pred_check
        %p394 = pneg %p106
      $region42: #{resnet_generator.39} parent=39 // pred_check_branch
        %396 = sbr.rel (%p394) target = $region44
      $region43: #{resnet_generator.39} parent=39 // pred_region
        %s397 = smul.u32 32, %s15
        %p398 = scmp.lt.s32.totalorder %s397, 63
        %s399 = scalar_select %p398, %s397, 63
        %s400 = smul.addr %s399, 8
        %s401 = scalar_lea.vmem %s3, %s400
      $region44: #{resnet_generator.39} parent=39 // pred_fallthru
        _
    $region40: #{resnet_generator.39} parent=5 // pred_fallthru
      _
  $region6: #{resnet_generator.39} parent=0 // loop_footer
    %s13 = sadd.s32 1, %s9
  $region7: #{resnet_generator.39} parent=0 // loop_footer_branch
    %8 = sbr.rel target = $region3
  $region8: #{resnet_generator.39} parent=0 // loop_exit
    _

</llo_original>
